<compile_context>
chip_gen: v6e
topology: v6e:2x2x1
jax: 0.10.0
libtpu: 0.0.40
codegen_flags: <defaults>
</compile_context>

<pallas_src>
import functools

import jax
import jax.numpy as jnp
from jax.experimental import pallas as pl
from jax.experimental.pallas import tpu as pltpu


# ----------------------------------------------------------------------------
# Pallas kernels
# ----------------------------------------------------------------------------
def _matmul_bias_act_kernel(x_ref, w_ref, b_ref, o_ref, *, activation):
    acc = jnp.dot(x_ref[...], w_ref[...], preferred_element_type=jnp.float32)
    acc = acc + b_ref[...]
    if activation == "relu":
        acc = jnp.maximum(acc, 0.0)
    elif activation == "sigmoid":
        # exp on EUP + approx reciprocal (EUP slot) keeps the VALU free.
        acc = pl.reciprocal(1.0 + jnp.exp(-acc), approx=True)
    o_ref[...] = acc.astype(o_ref.dtype)


_LANE = 128
_MAX_TM = 512


def matmul_bias_act(x, w, b, activation="none", out_dtype=jnp.float32):
    """y = act(x @ w + b).  x: (M, K), w: (K, N), b: (N,).

    bf16 MXU operands, f32 accumulation; N zero-padded to a multiple of 128
    (lane-dense stores); M tiled (tm <= 512, rows padded if needed) with the
    M axis marked "parallel" for megacore sharding.
    """
    M, K = x.shape
    K2, N = w.shape
    assert K == K2

    x = x.astype(jnp.bfloat16)
    w = w.astype(jnp.bfloat16)
    b = b.astype(jnp.float32)

    # Lane-dense output columns.
    Np = _LANE * pl.cdiv(N, _LANE)
    if Np != N:
        w = jnp.pad(w, ((0, 0), (0, Np - N)))
        b = jnp.pad(b, ((0, Np - N),))

    # Row tiling (robust to M not dividing the tile).
    if M <= _MAX_TM:
        tm, Mp = M, M
    else:
        tm = _MAX_TM
        Mp = tm * pl.cdiv(M, tm)
        if Mp != M:
            x = jnp.pad(x, ((0, Mp - M), (0, 0)))

    kernel = functools.partial(_matmul_bias_act_kernel, activation=activation)
    y = pl.pallas_call(
        kernel,
        out_shape=jax.ShapeDtypeStruct((Mp, Np), out_dtype),
        grid_spec=pltpu.PrefetchScalarGridSpec(
            num_scalar_prefetch=0,
            grid=(Mp // tm,),
            in_specs=[
                pl.BlockSpec((tm, K), lambda i: (i, 0)),
                pl.BlockSpec((K, Np), lambda i: (0, 0)),
                pl.BlockSpec((1, Np), lambda i: (0, 0)),
            ],
            out_specs=pl.BlockSpec((tm, Np), lambda i: (i, 0)),
        ),
        compiler_params=pltpu.CompilerParams(dimension_semantics=("parallel",)),
    )(x, w, b.reshape(1, Np))
    return y[:M, :N]


def _latent_chain_kernel(h_ref, eps_ref,
                         wl_ref, bl_ref,
                         wmu_ref, bmu_ref, wlv_ref, blv_ref,
                         wd1_ref, bd1_ref, wd2_ref, bd2_ref,
                         mean_ref, logvar_ref, z_ref, h2_ref):
    """Fused: encoder FC -> (mean, logvar) -> reparam -> decoder FC1 -> FC2."""
    f32 = jnp.float32
    h1 = jnp.dot(h_ref[...], wl_ref[...], preferred_element_type=f32) + bl_ref[...]
    h1 = jnp.maximum(h1, 0.0)
    mean = jnp.dot(h1, wmu_ref[...], preferred_element_type=f32) + bmu_ref[...]
    logvar = jnp.dot(h1, wlv_ref[...], preferred_element_type=f32) + blv_ref[...]
    z = mean + jnp.exp(0.5 * logvar) * eps_ref[...]
    d1 = jnp.dot(z, wd1_ref[...], preferred_element_type=f32) + bd1_ref[...]
    d1 = jnp.maximum(d1, 0.0)
    d2 = jnp.dot(d1, wd2_ref[...], preferred_element_type=f32) + bd2_ref[...]
    d2 = jnp.maximum(d2, 0.0)
    mean_ref[...] = mean
    logvar_ref[...] = logvar
    z_ref[...] = z
    h2_ref[...] = d2


def latent_chain(h, eps, q):
    """h: (B, 1024) NHWC-flat encoder features, eps: (B, L)."""
    B = h.shape[0]
    L = eps.shape[1]
    out_shape = (
        jax.ShapeDtypeStruct((B, L), jnp.float32),      # mean
        jax.ShapeDtypeStruct((B, L), jnp.float32),      # logvar
        jax.ShapeDtypeStruct((B, L), jnp.float32),      # samples_qzx
        jax.ShapeDtypeStruct((B, 1024), jnp.float32),   # decoder hidden (NHWC-flat)
    )
    return pl.pallas_call(_latent_chain_kernel, out_shape=out_shape)(
        h.astype(jnp.float32), eps,
        q["w_lin"], q["b_lin"],
        q["w_mu"], q["b_mu"], q["w_lv"], q["b_lv"],
        q["w_d1"], q["b_d1"], q["w_d2"], q["b_d2"])


# ----------------------------------------------------------------------------
# NHWC im2col glue (plain JAX) + conv / transposed-conv wrappers
# ----------------------------------------------------------------------------
def _im2col_nhwc(x, k, stride, pad):
    """x: (B,H,W,C) -> (B*Ho*Wo, k*k*C) with (kh, kw, c) ordering (contiguous)."""
    if pad:
        x = jnp.pad(x, ((0, 0), (pad, pad), (pad, pad), (0, 0)))
    B, H, W, C = x.shape
    Ho = (H - k) // stride + 1
    Wo = (W - k) // stride + 1
    cols = []
    for i in range(k):
        for j in range(k):
            cols.append(x[:, i:i + stride * (Ho - 1) + 1:stride,
                          j:j + stride * (Wo - 1) + 1:stride, :])
    p = jnp.stack(cols, axis=3)                       # (B, Ho, Wo, k*k, C)
    return p.reshape(B * Ho * Wo, k * k * C), Ho, Wo


def conv2d_nhwc(x, wmat, b, k, stride, pad, activation, out_dtype=jnp.float32):
    """PyTorch-semantics Conv2d in NHWC.  wmat: (k*k*Cin, Cout), (kh,kw,ci) order."""
    B = x.shape[0]
    Cout = wmat.shape[1]
    patches, Ho, Wo = _im2col_nhwc(x.astype(jnp.bfloat16), k, stride, pad)
    y = matmul_bias_act(patches, wmat, b, activation, out_dtype)
    return y.reshape(B, Ho, Wo, Cout)


def conv_transpose2d_nhwc(x, wphase, b4, activation, out_dtype=jnp.float32):
    """PyTorch ConvTranspose2d(k=4, s=2, p=1) via sub-pixel phase decomposition.

    x: (B,H,W,Cin) NHWC.  wphase: (9*Cin, 4*Cout), K ordered (th,tw,ci),
    N ordered (rh,rw,co).  Output: (B, 2H, 2W, Cout)."""
    B, H, W, Cin = x.shape
    Cout = wphase.shape[1] // 4
    xp = jnp.pad(x.astype(jnp.bfloat16), ((0, 0), (1, 1), (1, 1), (0, 0)))
    cols = []
    for th in range(3):
        for tw in range(3):
            cols.append(xp[:, th:th + H, tw:tw + W, :])
    p = jnp.stack(cols, axis=3).reshape(B * H * W, 9 * Cin)
    y = matmul_bias_act(p, wphase, b4, activation, out_dtype)
    y = y.reshape(B, H, W, 2, 2, Cout).transpose(0, 1, 3, 2, 4, 5)
    return y.reshape(B, 2 * H, 2 * W, Cout)


# ----------------------------------------------------------------------------
# Parameter init (raw PyTorch layout) and one-time layout preparation
# ----------------------------------------------------------------------------
def init_params(key, n_chan, latent_dim):
    def norm(key, shape, fan_in):
        return jax.random.normal(key, shape, jnp.float32) * jnp.sqrt(2.0 / fan_in)

    ks = jax.random.split(key, 12)
    p = {}
    # Encoder: 4 convs (4x4, stride 2, pad 1), FC 1024->256, FC 256->2*latent
    p["conv1_w"] = norm(ks[0], (32, n_chan, 4, 4), n_chan * 16)
    p["conv1_b"] = jnp.zeros((32,), jnp.float32)
    p["conv2_w"] = norm(ks[1], (32, 32, 4, 4), 32 * 16)
    p["conv2_b"] = jnp.zeros((32,), jnp.float32)
    p["conv3_w"] = norm(ks[2], (64, 32, 4, 4), 32 * 16)
    p["conv3_b"] = jnp.zeros((64,), jnp.float32)
    p["conv4_w"] = norm(ks[3], (64, 64, 4, 4), 64 * 16)
    p["conv4_b"] = jnp.zeros((64,), jnp.float32)
    p["lin_w"] = norm(ks[4], (256, 64 * 4 * 4), 64 * 4 * 4)        # (out, in)
    p["lin_b"] = jnp.zeros((256,), jnp.float32)
    p["stats_w"] = norm(ks[5], (2 * latent_dim, 256), 256)
    p["stats_b"] = jnp.zeros((2 * latent_dim,), jnp.float32)
    # Decoder: FC latent->256, FC 256->1024, 4 transposed convs (4x4, s2, p1)
    p["lin1_w"] = norm(ks[6], (256, latent_dim), latent_dim)
    p["lin1_b"] = jnp.zeros((256,), jnp.float32)
    p["lin2_w"] = norm(ks[7], (1024, 256), 256)
    p["lin2_b"] = jnp.zeros((1024,), jnp.float32)
    p["convT1_w"] = norm(ks[8], (64, 64, 4, 4), 64 * 16)           # (in, out, k, k)
    p["convT1_b"] = jnp.zeros((64,), jnp.float32)
    p["convT2_w"] = norm(ks[9], (64, 32, 4, 4), 64 * 16)
    p["convT2_b"] = jnp.zeros((32,), jnp.float32)
    p["convT3_w"] = norm(ks[10], (32, 32, 4, 4), 32 * 16)
    p["convT3_b"] = jnp.zeros((32,), jnp.float32)
    p["convT4_w"] = norm(ks[11], (32, n_chan, 4, 4), 32 * 16)
    p["convT4_b"] = jnp.zeros((n_chan,), jnp.float32)
    return p


def _conv_weight_matrix(w):
    # (Cout, Cin, kh, kw) -> (kh*kw*Cin, Cout)  (matches NHWC im2col ordering)
    Cout, Cin, k, _ = w.shape
    return w.transpose(2, 3, 1, 0).reshape(k * k * Cin, Cout)


# ConvTranspose2d(k=4, s=2, p=1) phase decomposition (per spatial dim):
#   even outputs (r=0):  y[2m]   = x[m-1]*w[3] + x[m]*w[1]   -> taps (th=0,kh=3),(th=1,kh=1)
#   odd  outputs (r=1):  y[2m+1] = x[m]*w[2]   + x[m+1]*w[0] -> taps (th=1,kh=2),(th=2,kh=0)
_PHASE_TAPS = {0: ((0, 3), (1, 1)), 1: ((1, 2), (2, 0))}


def _deconv_phase_weight(w):
    # (Cin, Cout, 4, 4) -> (3*3*Cin, 2*2*Cout); K order (th,tw,ci), N order (rh,rw,co)
    Cin, Cout = w.shape[0], w.shape[1]
    W = jnp.zeros((3, 3, Cin, 2, 2, Cout), jnp.float32)
    for rh in (0, 1):
        for rw in (0, 1):
            for th, kh in _PHASE_TAPS[rh]:
                for tw, kw in _PHASE_TAPS[rw]:
                    W = W.at[th, tw, :, rh, rw, :].set(w[:, :, kh, kw])
    return W.reshape(9 * Cin, 4 * Cout)


def prepare_params(p, n_chan, latent_dim):
    """One-time weight re-layout (outside the per-forward path)."""
    bf16 = jnp.bfloat16
    q = {}
    # Encoder convs: im2col weight matrices (bf16 MXU operands).
    for i in (1, 2, 3, 4):
        q[f"conv{i}_w"] = _conv_weight_matrix(p[f"conv{i}_w"]).astype(bf16)
        q[f"conv{i}_b"] = p[f"conv{i}_b"]
    # Fused latent chain (f32): permute FC weights from NCHW-flat to NHWC-flat.
    lin_w = p["lin_w"].reshape(256, 64, 4, 4).transpose(0, 2, 3, 1).reshape(256, 1024)
    q["w_lin"] = lin_w.T                                         # (1024, 256)
    q["b_lin"] = p["lin_b"].reshape(1, -1)
    q["w_mu"] = p["stats_w"][0::2].T                             # (256, L)
    q["b_mu"] = p["stats_b"][0::2].reshape(1, -1)
    q["w_lv"] = p["stats_w"][1::2].T
    q["b_lv"] = p["stats_b"][1::2].reshape(1, -1)
    q["w_d1"] = p["lin1_w"].T                                    # (L, 256)
    q["b_d1"] = p["lin1_b"].reshape(1, -1)
    lin2_w = p["lin2_w"].reshape(64, 4, 4, 256).transpose(1, 2, 0, 3).reshape(1024, 256)
    q["w_d2"] = lin2_w.T                                         # (256, 1024)
    q["b_d2"] = p["lin2_b"].reshape(64, 4, 4).transpose(1, 2, 0).reshape(1, 1024)
    # Decoder transposed convs: phase-decomposed weights (bf16), tiled biases.
    for i in (1, 2, 3, 4):
        q[f"convT{i}_w"] = _deconv_phase_weight(p[f"convT{i}_w"]).astype(bf16)
        q[f"convT{i}_b"] = jnp.tile(p[f"convT{i}_b"], 4)
    return q


# ----------------------------------------------------------------------------
# Model forward (Locatello encoder / decoder)
# ----------------------------------------------------------------------------
def encoder_convs(q, x_nhwc):
    h = conv2d_nhwc(x_nhwc, q["conv1_w"], q["conv1_b"], 4, 2, 1, "relu", jnp.bfloat16)
    h = conv2d_nhwc(h, q["conv2_w"], q["conv2_b"], 4, 2, 1, "relu", jnp.bfloat16)
    h = conv2d_nhwc(h, q["conv3_w"], q["conv3_b"], 4, 2, 1, "relu", jnp.bfloat16)
    h = conv2d_nhwc(h, q["conv4_w"], q["conv4_b"], 4, 2, 1, "relu", jnp.float32)
    return h                                                     # (B, 4, 4, 64)


def decoder_convs(q, h):
    h = conv_transpose2d_nhwc(h, q["convT1_w"], q["convT1_b"], "relu", jnp.bfloat16)
    h = conv_transpose2d_nhwc(h, q["convT2_w"], q["convT2_b"], "relu", jnp.bfloat16)
    h = conv_transpose2d_nhwc(h, q["convT3_w"], q["convT3_b"], "relu", jnp.bfloat16)
    x = conv_transpose2d_nhwc(h, q["convT4_w"], q["convT4_b"], "sigmoid", jnp.float32)
    return x                                                     # (B, 64, 64, C)


def model_forward(q, x, eps):
    B = x.shape[0]
    x_nhwc = x.transpose(0, 2, 3, 1)                 # single entry transpose
    h = encoder_convs(q, x_nhwc).reshape(B, -1)      # (B, 1024) NHWC-flat
    mean, logvar, samples_qzx, d2 = latent_chain(h, eps, q)
    stats_qzx = jnp.stack([mean, logvar], axis=-1)   # (B, latent_dim, 2)
    recon_nhwc = decoder_convs(q, d2.reshape(B, 4, 4, 64))
    reconstructions = recon_nhwc.transpose(0, 3, 1, 2)   # single exit transpose
    return {
        "reconstructions": reconstructions,
        "stats_qzx": stats_qzx,
        "samples_qzx": samples_qzx,
    }


if __name__ == "__main__":
    key = jax.random.PRNGKey(0)
    k_param, k_x, k_eps = jax.random.split(key, 3)

    batch, n_chan, latent_dim = 2, 3, 10
    # Model only supports (C, 64, 64) images.
    x = jax.random.uniform(k_x, (batch, n_chan, 64, 64), jnp.float32)
    eps = jax.random.normal(k_eps, (batch, latent_dim), jnp.float32)

    raw_params = init_params(k_param, n_chan, latent_dim)
    params = prepare_params(raw_params, n_chan, latent_dim)   # one-time re-layout
    params = jax.tree_util.tree_map(jax.block_until_ready, params)

    fwd = jax.jit(model_forward)
    out = fwd(params, x, eps)
    jax.block_until_ready(out)

    assert out["reconstructions"].shape == (batch, n_chan, 64, 64)
    assert out["stats_qzx"].shape == (batch, latent_dim, 2)
    assert out["samples_qzx"].shape == (batch, latent_dim)
    assert bool(jnp.all(jnp.isfinite(out["reconstructions"])))
    print("KERNEL_OK")
</pallas_src>

<mosaic_0001>
module attributes {stable_mosaic.version = 11 : i64} {
  func.func @_matmul_bias_act_kernel(%arg0: i32, %arg1: memref<512x48xbf16, #tpu.memory_space<vmem>>, %arg2: memref<48x128xbf16, #tpu.memory_space<vmem>>, %arg3: memref<1x128xf32, #tpu.memory_space<vmem>>, %arg4: memref<512x128xbf16, #tpu.memory_space<vmem>>) attributes {dimension_semantics = [#tpu.dimension_semantics<parallel>], iteration_bounds = array<i64: 4>, scalar_prefetch = 0 : i64, scratch_operands = 0 : i64, tpu.core_type = #tpu.core_type<tc>, window_params = [{transform_indices = @transform_0, window_bounds = array<i64: 512, 48>}, {pipeline_mode = #tpu.pipeline_mode<synchronous>, transform_indices = @transform_1, window_bounds = array<i64: 48, 128>}, {pipeline_mode = #tpu.pipeline_mode<synchronous>, transform_indices = @transform_2, window_bounds = array<i64: 1, 128>}, {transform_indices = @transform_3, window_bounds = array<i64: 512, 128>}]} {
    %c0 = arith.constant 0 : index
    %c0_0 = arith.constant 0 : index
    %0 = vector.load %arg1[%c0, %c0_0] : memref<512x48xbf16, #tpu.memory_space<vmem>>, vector<512x48xbf16>
    %c0_1 = arith.constant 0 : index
    %c0_2 = arith.constant 0 : index
    %1 = vector.load %arg2[%c0_1, %c0_2] : memref<48x128xbf16, #tpu.memory_space<vmem>>, vector<48x128xbf16>
    %cst = arith.constant dense<0.000000e+00> : vector<512x128xf32>
    %2 = tpu.matmul %0, %1, %cst {dimension_numbers = #tpu.dot_dimension_numbers<[1], [0], [0], [1], [0, 0, 1, 1], [], []>} : vector<512x48xbf16>, vector<48x128xbf16>, vector<512x128xf32> -> vector<512x128xf32>
    %c0_3 = arith.constant 0 : index
    %c0_4 = arith.constant 0 : index
    %3 = vector.load %arg3[%c0_3, %c0_4] : memref<1x128xf32, #tpu.memory_space<vmem>>, vector<1x128xf32>
    %4 = vector.broadcast %3 : vector<1x128xf32> to vector<512x128xf32>
    %5 = arith.addf %2, %4 : vector<512x128xf32>
    %cst_5 = arith.constant 0.000000e+00 : f32
    %6 = vector.broadcast %cst_5 : f32 to vector<512x128xf32>
    %7 = arith.maximumf %5, %6 : vector<512x128xf32>
    %8 = arith.truncf %7 : vector<512x128xf32> to vector<512x128xbf16>
    %c0_6 = arith.constant 0 : index
    %c0_7 = arith.constant 0 : index
    %9 = vector.load %arg4[%c0_6, %c0_7] : memref<512x128xbf16, #tpu.memory_space<vmem>>, vector<512x128xbf16>
    tpu.vector_store %arg4[%c0_6, %c0_7], %8 {strides = array<i32>} : memref<512x128xbf16, #tpu.memory_space<vmem>>, vector<512x128xbf16>,
    return
  }
  func.func @transform_0(%arg0: i32) -> (i32, i32) {
    %c0_i32 = arith.constant 0 : i32
    %c0_i32_0 = arith.constant 0 : i32
    return %arg0, %c0_i32 : i32, i32
  }
  func.func @transform_1(%arg0: i32) -> (i32, i32) {
    %c0_i32 = arith.constant 0 : i32
    %c0_i32_0 = arith.constant 0 : i32
    %c0_i32_1 = arith.constant 0 : i32
    return %c0_i32, %c0_i32_0 : i32, i32
  }
  func.func @transform_2(%arg0: i32) -> (i32, i32) {
    %c0_i32 = arith.constant 0 : i32
    %c0_i32_0 = arith.constant 0 : i32
    %c0_i32_1 = arith.constant 0 : i32
    return %c0_i32, %c0_i32_0 : i32, i32
  }
  func.func @transform_3(%arg0: i32) -> (i32, i32) {
    %c0_i32 = arith.constant 0 : i32
    %c0_i32_0 = arith.constant 0 : i32
    return %arg0, %c0_i32 : i32, i32
  }
}

module attributes {stable_mosaic.version = 11 : i64} {
  func.func @_matmul_bias_act_kernel(%arg0: i32, %arg1: memref<512x512xbf16, #tpu.memory_space<vmem>>, %arg2: memref<512x128xbf16, #tpu.memory_space<vmem>>, %arg3: memref<1x128xf32, #tpu.memory_space<vmem>>, %arg4: memref<512x128xbf16, #tpu.memory_space<vmem>>) attributes {dimension_semantics = [#tpu.dimension_semantics<parallel>], iteration_bounds = array<i64: 1>, scalar_prefetch = 0 : i64, scratch_operands = 0 : i64, tpu.core_type = #tpu.core_type<tc>, window_params = [{transform_indices = @transform_0, window_bounds = array<i64: 512, 512>}, {pipeline_mode = #tpu.pipeline_mode<synchronous>, transform_indices = @transform_1, window_bounds = array<i64: 512, 128>}, {pipeline_mode = #tpu.pipeline_mode<synchronous>, transform_indices = @transform_2, window_bounds = array<i64: 1, 128>}, {transform_indices = @transform_3, window_bounds = array<i64: 512, 128>}]} {
    %c0 = arith.constant 0 : index
    %c0_0 = arith.constant 0 : index
    %0 = vector.load %arg1[%c0, %c0_0] : memref<512x512xbf16, #tpu.memory_space<vmem>>, vector<512x512xbf16>
    %c0_1 = arith.constant 0 : index
    %c0_2 = arith.constant 0 : index
    %1 = vector.load %arg2[%c0_1, %c0_2] : memref<512x128xbf16, #tpu.memory_space<vmem>>, vector<512x128xbf16>
    %cst = arith.constant dense<0.000000e+00> : vector<512x128xf32>
    %2 = tpu.matmul %0, %1, %cst {dimension_numbers = #tpu.dot_dimension_numbers<[1], [0], [0], [1], [0, 0, 1, 1], [], []>} : vector<512x512xbf16>, vector<512x128xbf16>, vector<512x128xf32> -> vector<512x128xf32>
    %c0_3 = arith.constant 0 : index
    %c0_4 = arith.constant 0 : index
    %3 = vector.load %arg3[%c0_3, %c0_4] : memref<1x128xf32, #tpu.memory_space<vmem>>, vector<1x128xf32>
    %4 = vector.broadcast %3 : vector<1x128xf32> to vector<512x128xf32>
    %5 = arith.addf %2, %4 : vector<512x128xf32>
    %cst_5 = arith.constant 0.000000e+00 : f32
    %6 = vector.broadcast %cst_5 : f32 to vector<512x128xf32>
    %7 = arith.maximumf %5, %6 : vector<512x128xf32>
    %8 = arith.truncf %7 : vector<512x128xf32> to vector<512x128xbf16>
    %c0_6 = arith.constant 0 : index
    %c0_7 = arith.constant 0 : index
    %9 = vector.load %arg4[%c0_6, %c0_7] : memref<512x128xbf16, #tpu.memory_space<vmem>>, vector<512x128xbf16>
    tpu.vector_store %arg4[%c0_6, %c0_7], %8 {strides = array<i32>} : memref<512x128xbf16, #tpu.memory_space<vmem>>, vector<512x128xbf16>,
    return
  }
  func.func @transform_0(%arg0: i32) -> (i32, i32) {
    %c0_i32 = arith.constant 0 : i32
    %c0_i32_0 = arith.constant 0 : i32
    return %arg0, %c0_i32 : i32, i32
  }
  func.func @transform_1(%arg0: i32) -> (i32, i32) {
    %c0_i32 = arith.constant 0 : i32
    %c0_i32_0 = arith.constant 0 : i32
    %c0_i32_1 = arith.constant 0 : i32
    return %c0_i32, %c0_i32_0 : i32, i32
  }
  func.func @transform_2(%arg0: i32) -> (i32, i32) {
    %c0_i32 = arith.constant 0 : i32
    %c0_i32_0 = arith.constant 0 : i32
    %c0_i32_1 = arith.constant 0 : i32
    return %c0_i32, %c0_i32_0 : i32, i32
  }
  func.func @transform_3(%arg0: i32) -> (i32, i32) {
    %c0_i32 = arith.constant 0 : i32
    %c0_i32_0 = arith.constant 0 : i32
    return %arg0, %c0_i32 : i32, i32
  }
}

module attributes {stable_mosaic.version = 11 : i64} {
  func.func @_matmul_bias_act_kernel(%arg0: i32, %arg1: memref<128x512xbf16, #tpu.memory_space<vmem>>, %arg2: memref<512x128xbf16, #tpu.memory_space<vmem>>, %arg3: memref<1x128xf32, #tpu.memory_space<vmem>>, %arg4: memref<128x128xbf16, #tpu.memory_space<vmem>>) attributes {dimension_semantics = [#tpu.dimension_semantics<parallel>], iteration_bounds = array<i64: 1>, scalar_prefetch = 0 : i64, scratch_operands = 0 : i64, tpu.core_type = #tpu.core_type<tc>, window_params = [{transform_indices = @transform_0, window_bounds = array<i64: 128, 512>}, {pipeline_mode = #tpu.pipeline_mode<synchronous>, transform_indices = @transform_1, window_bounds = array<i64: 512, 128>}, {pipeline_mode = #tpu.pipeline_mode<synchronous>, transform_indices = @transform_2, window_bounds = array<i64: 1, 128>}, {transform_indices = @transform_3, window_bounds = array<i64: 128, 128>}]} {
    %c0 = arith.constant 0 : index
    %c0_0 = arith.constant 0 : index
    %0 = vector.load %arg1[%c0, %c0_0] : memref<128x512xbf16, #tpu.memory_space<vmem>>, vector<128x512xbf16>
    %c0_1 = arith.constant 0 : index
    %c0_2 = arith.constant 0 : index
    %1 = vector.load %arg2[%c0_1, %c0_2] : memref<512x128xbf16, #tpu.memory_space<vmem>>, vector<512x128xbf16>
    %cst = arith.constant dense<0.000000e+00> : vector<128x128xf32>
    %2 = tpu.matmul %0, %1, %cst {dimension_numbers = #tpu.dot_dimension_numbers<[1], [0], [0], [1], [0, 0, 1, 1], [], []>} : vector<128x512xbf16>, vector<512x128xbf16>, vector<128x128xf32> -> vector<128x128xf32>
    %c0_3 = arith.constant 0 : index
    %c0_4 = arith.constant 0 : index
    %3 = vector.load %arg3[%c0_3, %c0_4] : memref<1x128xf32, #tpu.memory_space<vmem>>, vector<1x128xf32>
    %4 = vector.broadcast %3 : vector<1x128xf32> to vector<128x128xf32>
    %5 = arith.addf %2, %4 : vector<128x128xf32>
    %cst_5 = arith.constant 0.000000e+00 : f32
    %6 = vector.broadcast %cst_5 : f32 to vector<128x128xf32>
    %7 = arith.maximumf %5, %6 : vector<128x128xf32>
    %8 = arith.truncf %7 : vector<128x128xf32> to vector<128x128xbf16>
    %c0_6 = arith.constant 0 : index
    %c0_7 = arith.constant 0 : index
    %9 = vector.load %arg4[%c0_6, %c0_7] : memref<128x128xbf16, #tpu.memory_space<vmem>>, vector<128x128xbf16>
    tpu.vector_store %arg4[%c0_6, %c0_7], %8 {strides = array<i32>} : memref<128x128xbf16, #tpu.memory_space<vmem>>, vector<128x128xbf16>,
    return
  }
  func.func @transform_0(%arg0: i32) -> (i32, i32) {
    %c0_i32 = arith.constant 0 : i32
    %c0_i32_0 = arith.constant 0 : i32
    return %arg0, %c0_i32 : i32, i32
  }
  func.func @transform_1(%arg0: i32) -> (i32, i32) {
    %c0_i32 = arith.constant 0 : i32
    %c0_i32_0 = arith.constant 0 : i32
    %c0_i32_1 = arith.constant 0 : i32
    return %c0_i32, %c0_i32_0 : i32, i32
  }
  func.func @transform_2(%arg0: i32) -> (i32, i32) {
    %c0_i32 = arith.constant 0 : i32
    %c0_i32_0 = arith.constant 0 : i32
    %c0_i32_1 = arith.constant 0 : i32
    return %c0_i32, %c0_i32_0 : i32, i32
  }
  func.func @transform_3(%arg0: i32) -> (i32, i32) {
    %c0_i32 = arith.constant 0 : i32
    %c0_i32_0 = arith.constant 0 : i32
    return %arg0, %c0_i32 : i32, i32
  }
}

module attributes {stable_mosaic.version = 11 : i64} {
  func.func @_matmul_bias_act_kernel(%arg0: i32, %arg1: memref<32x1024xbf16, #tpu.memory_space<vmem>>, %arg2: memref<1024x128xbf16, #tpu.memory_space<vmem>>, %arg3: memref<1x128xf32, #tpu.memory_space<vmem>>, %arg4: memref<32x128xf32, #tpu.memory_space<vmem>>) attributes {dimension_semantics = [#tpu.dimension_semantics<parallel>], iteration_bounds = array<i64: 1>, scalar_prefetch = 0 : i64, scratch_operands = 0 : i64, tpu.core_type = #tpu.core_type<tc>, window_params = [{transform_indices = @transform_0, window_bounds = array<i64: 32, 1024>}, {pipeline_mode = #tpu.pipeline_mode<synchronous>, transform_indices = @transform_1, window_bounds = array<i64: 1024, 128>}, {pipeline_mode = #tpu.pipeline_mode<synchronous>, transform_indices = @transform_2, window_bounds = array<i64: 1, 128>}, {transform_indices = @transform_3, window_bounds = array<i64: 32, 128>}]} {
    %c0 = arith.constant 0 : index
    %c0_0 = arith.constant 0 : index
    %0 = vector.load %arg1[%c0, %c0_0] : memref<32x1024xbf16, #tpu.memory_space<vmem>>, vector<32x1024xbf16>
    %c0_1 = arith.constant 0 : index
    %c0_2 = arith.constant 0 : index
    %1 = vector.load %arg2[%c0_1, %c0_2] : memref<1024x128xbf16, #tpu.memory_space<vmem>>, vector<1024x128xbf16>
    %cst = arith.constant dense<0.000000e+00> : vector<32x128xf32>
    %2 = tpu.matmul %0, %1, %cst {dimension_numbers = #tpu.dot_dimension_numbers<[1], [0], [0], [1], [0, 0, 1, 1], [], []>} : vector<32x1024xbf16>, vector<1024x128xbf16>, vector<32x128xf32> -> vector<32x128xf32>
    %c0_3 = arith.constant 0 : index
    %c0_4 = arith.constant 0 : index
    %3 = vector.load %arg3[%c0_3, %c0_4] : memref<1x128xf32, #tpu.memory_space<vmem>>, vector<1x128xf32>
    %4 = vector.broadcast %3 : vector<1x128xf32> to vector<32x128xf32>
    %5 = arith.addf %2, %4 : vector<32x128xf32>
    %cst_5 = arith.constant 0.000000e+00 : f32
    %6 = vector.broadcast %cst_5 : f32 to vector<32x128xf32>
    %7 = arith.maximumf %5, %6 : vector<32x128xf32>
    %c0_6 = arith.constant 0 : index
    %c0_7 = arith.constant 0 : index
    %8 = vector.load %arg4[%c0_6, %c0_7] : memref<32x128xf32, #tpu.memory_space<vmem>>, vector<32x128xf32>
    tpu.vector_store %arg4[%c0_6, %c0_7], %7 {strides = array<i32>} : memref<32x128xf32, #tpu.memory_space<vmem>>, vector<32x128xf32>,
    return
  }
  func.func @transform_0(%arg0: i32) -> (i32, i32) {
    %c0_i32 = arith.constant 0 : i32
    %c0_i32_0 = arith.constant 0 : i32
    return %arg0, %c0_i32 : i32, i32
  }
  func.func @transform_1(%arg0: i32) -> (i32, i32) {
    %c0_i32 = arith.constant 0 : i32
    %c0_i32_0 = arith.constant 0 : i32
    %c0_i32_1 = arith.constant 0 : i32
    return %c0_i32, %c0_i32_0 : i32, i32
  }
  func.func @transform_2(%arg0: i32) -> (i32, i32) {
    %c0_i32 = arith.constant 0 : i32
    %c0_i32_0 = arith.constant 0 : i32
    %c0_i32_1 = arith.constant 0 : i32
    return %c0_i32, %c0_i32_0 : i32, i32
  }
  func.func @transform_3(%arg0: i32) -> (i32, i32) {
    %c0_i32 = arith.constant 0 : i32
    %c0_i32_0 = arith.constant 0 : i32
    return %arg0, %c0_i32 : i32, i32
  }
}

module attributes {stable_mosaic.version = 11 : i64} {
  func.func @_latent_chain_kernel(%arg0: memref<2x1024xf32, #tpu.memory_space<vmem>>, %arg1: memref<2x10xf32, #tpu.memory_space<vmem>>, %arg2: memref<1024x256xf32, #tpu.memory_space<vmem>>, %arg3: memref<1x256xf32, #tpu.memory_space<vmem>>, %arg4: memref<256x10xf32, #tpu.memory_space<vmem>>, %arg5: memref<1x10xf32, #tpu.memory_space<vmem>>, %arg6: memref<256x10xf32, #tpu.memory_space<vmem>>, %arg7: memref<1x10xf32, #tpu.memory_space<vmem>>, %arg8: memref<10x256xf32, #tpu.memory_space<vmem>>, %arg9: memref<1x256xf32, #tpu.memory_space<vmem>>, %arg10: memref<256x1024xf32, #tpu.memory_space<vmem>>, %arg11: memref<1x1024xf32, #tpu.memory_space<vmem>>, %arg12: memref<2x10xf32, #tpu.memory_space<vmem>>, %arg13: memref<2x10xf32, #tpu.memory_space<vmem>>, %arg14: memref<2x10xf32, #tpu.memory_space<vmem>>, %arg15: memref<2x1024xf32, #tpu.memory_space<vmem>>) attributes {dimension_semantics = [], scalar_prefetch = 0 : i64, scratch_operands = 0 : i64, tpu.core_type = #tpu.core_type<tc>} {
    %c0 = arith.constant 0 : index
    %c0_0 = arith.constant 0 : index
    %0 = vector.load %arg0[%c0, %c0_0] : memref<2x1024xf32, #tpu.memory_space<vmem>>, vector<2x1024xf32>
    %c0_1 = arith.constant 0 : index
    %c0_2 = arith.constant 0 : index
    %1 = vector.load %arg2[%c0_1, %c0_2] : memref<1024x256xf32, #tpu.memory_space<vmem>>, vector<1024x256xf32>
    %cst = arith.constant dense<0.000000e+00> : vector<2x256xf32>
    %2 = tpu.matmul %0, %1, %cst {dimension_numbers = #tpu.dot_dimension_numbers<[1], [0], [0], [1], [0, 0, 1, 1], [], []>} : vector<2x1024xf32>, vector<1024x256xf32>, vector<2x256xf32> -> vector<2x256xf32>
    %c0_3 = arith.constant 0 : index
    %c0_4 = arith.constant 0 : index
    %3 = vector.load %arg3[%c0_3, %c0_4] : memref<1x256xf32, #tpu.memory_space<vmem>>, vector<1x256xf32>
    %4 = vector.broadcast %3 : vector<1x256xf32> to vector<2x256xf32>
    %5 = arith.addf %2, %4 : vector<2x256xf32>
    %cst_5 = arith.constant 0.000000e+00 : f32
    %6 = vector.broadcast %cst_5 : f32 to vector<2x256xf32>
    %7 = arith.maximumf %5, %6 : vector<2x256xf32>
    %c0_6 = arith.constant 0 : index
    %c0_7 = arith.constant 0 : index
    %8 = vector.load %arg4[%c0_6, %c0_7] : memref<256x10xf32, #tpu.memory_space<vmem>>, vector<256x10xf32>
    %cst_8 = arith.constant dense<0.000000e+00> : vector<2x10xf32>
    %9 = tpu.matmul %7, %8, %cst_8 {dimension_numbers = #tpu.dot_dimension_numbers<[1], [0], [0], [1], [0, 0, 1, 1], [], []>} : vector<2x256xf32>, vector<256x10xf32>, vector<2x10xf32> -> vector<2x10xf32>
    %c0_9 = arith.constant 0 : index
    %c0_10 = arith.constant 0 : index
    %10 = vector.load %arg5[%c0_9, %c0_10] : memref<1x10xf32, #tpu.memory_space<vmem>>, vector<1x10xf32>
    %11 = vector.broadcast %10 : vector<1x10xf32> to vector<2x10xf32>
    %12 = arith.addf %9, %11 : vector<2x10xf32>
    %c0_11 = arith.constant 0 : index
    %c0_12 = arith.constant 0 : index
    %13 = vector.load %arg6[%c0_11, %c0_12] : memref<256x10xf32, #tpu.memory_space<vmem>>, vector<256x10xf32>
    %cst_13 = arith.constant dense<0.000000e+00> : vector<2x10xf32>
    %14 = tpu.matmul %7, %13, %cst_13 {dimension_numbers = #tpu.dot_dimension_numbers<[1], [0], [0], [1], [0, 0, 1, 1], [], []>} : vector<2x256xf32>, vector<256x10xf32>, vector<2x10xf32> -> vector<2x10xf32>
    %c0_14 = arith.constant 0 : index
    %c0_15 = arith.constant 0 : index
    %15 = vector.load %arg7[%c0_14, %c0_15] : memref<1x10xf32, #tpu.memory_space<vmem>>, vector<1x10xf32>
    %16 = vector.broadcast %15 : vector<1x10xf32> to vector<2x10xf32>
    %17 = arith.addf %14, %16 : vector<2x10xf32>
    %cst_16 = arith.constant 5.000000e-01 : f32
    %18 = vector.broadcast %cst_16 : f32 to vector<2x10xf32>
    %19 = arith.mulf %18, %17 : vector<2x10xf32>
    %20 = math.exp %19 : vector<2x10xf32>
    %c0_17 = arith.constant 0 : index
    %c0_18 = arith.constant 0 : index
    %21 = vector.load %arg1[%c0_17, %c0_18] : memref<2x10xf32, #tpu.memory_space<vmem>>, vector<2x10xf32>
    %22 = arith.mulf %20, %21 : vector<2x10xf32>
    %23 = arith.addf %12, %22 : vector<2x10xf32>
    %c0_19 = arith.constant 0 : index
    %c0_20 = arith.constant 0 : index
    %24 = vector.load %arg8[%c0_19, %c0_20] : memref<10x256xf32, #tpu.memory_space<vmem>>, vector<10x256xf32>
    %cst_21 = arith.constant dense<0.000000e+00> : vector<2x256xf32>
    %25 = tpu.matmul %23, %24, %cst_21 {dimension_numbers = #tpu.dot_dimension_numbers<[1], [0], [0], [1], [0, 0, 1, 1], [], []>} : vector<2x10xf32>, vector<10x256xf32>, vector<2x256xf32> -> vector<2x256xf32>
    %c0_22 = arith.constant 0 : index
    %c0_23 = arith.constant 0 : index
    %26 = vector.load %arg9[%c0_22, %c0_23] : memref<1x256xf32, #tpu.memory_space<vmem>>, vector<1x256xf32>
    %27 = vector.broadcast %26 : vector<1x256xf32> to vector<2x256xf32>
    %28 = arith.addf %25, %27 : vector<2x256xf32>
    %cst_24 = arith.constant 0.000000e+00 : f32
    %29 = vector.broadcast %cst_24 : f32 to vector<2x256xf32>
    %30 = arith.maximumf %28, %29 : vector<2x256xf32>
    %c0_25 = arith.constant 0 : index
    %c0_26 = arith.constant 0 : index
    %31 = vector.load %arg10[%c0_25, %c0_26] : memref<256x1024xf32, #tpu.memory_space<vmem>>, vector<256x1024xf32>
    %cst_27 = arith.constant dense<0.000000e+00> : vector<2x1024xf32>
    %32 = tpu.matmul %30, %31, %cst_27 {dimension_numbers = #tpu.dot_dimension_numbers<[1], [0], [0], [1], [0, 0, 1, 1], [], []>} : vector<2x256xf32>, vector<256x1024xf32>, vector<2x1024xf32> -> vector<2x1024xf32>
    %c0_28 = arith.constant 0 : index
    %c0_29 = arith.constant 0 : index
    %33 = vector.load %arg11[%c0_28, %c0_29] : memref<1x1024xf32, #tpu.memory_space<vmem>>, vector<1x1024xf32>
    %34 = vector.broadcast %33 : vector<1x1024xf32> to vector<2x1024xf32>
    %35 = arith.addf %32, %34 : vector<2x1024xf32>
    %cst_30 = arith.constant 0.000000e+00 : f32
    %36 = vector.broadcast %cst_30 : f32 to vector<2x1024xf32>
    %37 = arith.maximumf %35, %36 : vector<2x1024xf32>
    %c0_31 = arith.constant 0 : index
    %c0_32 = arith.constant 0 : index
    %38 = vector.load %arg12[%c0_31, %c0_32] : memref<2x10xf32, #tpu.memory_space<vmem>>, vector<2x10xf32>
    tpu.vector_store %arg12[%c0_31, %c0_32], %12 {strides = array<i32>} : memref<2x10xf32, #tpu.memory_space<vmem>>, vector<2x10xf32>,
    %c0_33 = arith.constant 0 : index
    %c0_34 = arith.constant 0 : index
    %39 = vector.load %arg13[%c0_33, %c0_34] : memref<2x10xf32, #tpu.memory_space<vmem>>, vector<2x10xf32>
    tpu.vector_store %arg13[%c0_33, %c0_34], %17 {strides = array<i32>} : memref<2x10xf32, #tpu.memory_space<vmem>>, vector<2x10xf32>,
    %c0_35 = arith.constant 0 : index
    %c0_36 = arith.constant 0 : index
    %40 = vector.load %arg14[%c0_35, %c0_36] : memref<2x10xf32, #tpu.memory_space<vmem>>, vector<2x10xf32>
    tpu.vector_store %arg14[%c0_35, %c0_36], %23 {strides = array<i32>} : memref<2x10xf32, #tpu.memory_space<vmem>>, vector<2x10xf32>,
    %c0_37 = arith.constant 0 : index
    %c0_38 = arith.constant 0 : index
    %41 = vector.load %arg15[%c0_37, %c0_38] : memref<2x1024xf32, #tpu.memory_space<vmem>>, vector<2x1024xf32>
    tpu.vector_store %arg15[%c0_37, %c0_38], %37 {strides = array<i32>} : memref<2x1024xf32, #tpu.memory_space<vmem>>, vector<2x1024xf32>,
    return
  }
}

module attributes {stable_mosaic.version = 11 : i64} {
  func.func @_matmul_bias_act_kernel(%arg0: i32, %arg1: memref<32x576xbf16, #tpu.memory_space<vmem>>, %arg2: memref<576x256xbf16, #tpu.memory_space<vmem>>, %arg3: memref<1x256xf32, #tpu.memory_space<vmem>>, %arg4: memref<32x256xbf16, #tpu.memory_space<vmem>>) attributes {dimension_semantics = [#tpu.dimension_semantics<parallel>], iteration_bounds = array<i64: 1>, scalar_prefetch = 0 : i64, scratch_operands = 0 : i64, tpu.core_type = #tpu.core_type<tc>, window_params = [{transform_indices = @transform_0, window_bounds = array<i64: 32, 576>}, {pipeline_mode = #tpu.pipeline_mode<synchronous>, transform_indices = @transform_1, window_bounds = array<i64: 576, 256>}, {pipeline_mode = #tpu.pipeline_mode<synchronous>, transform_indices = @transform_2, window_bounds = array<i64: 1, 256>}, {transform_indices = @transform_3, window_bounds = array<i64: 32, 256>}]} {
    %c0 = arith.constant 0 : index
    %c0_0 = arith.constant 0 : index
    %0 = vector.load %arg1[%c0, %c0_0] : memref<32x576xbf16, #tpu.memory_space<vmem>>, vector<32x576xbf16>
    %c0_1 = arith.constant 0 : index
    %c0_2 = arith.constant 0 : index
    %1 = vector.load %arg2[%c0_1, %c0_2] : memref<576x256xbf16, #tpu.memory_space<vmem>>, vector<576x256xbf16>
    %cst = arith.constant dense<0.000000e+00> : vector<32x256xf32>
    %2 = tpu.matmul %0, %1, %cst {dimension_numbers = #tpu.dot_dimension_numbers<[1], [0], [0], [1], [0, 0, 1, 1], [], []>} : vector<32x576xbf16>, vector<576x256xbf16>, vector<32x256xf32> -> vector<32x256xf32>
    %c0_3 = arith.constant 0 : index
    %c0_4 = arith.constant 0 : index
    %3 = vector.load %arg3[%c0_3, %c0_4] : memref<1x256xf32, #tpu.memory_space<vmem>>, vector<1x256xf32>
    %4 = vector.broadcast %3 : vector<1x256xf32> to vector<32x256xf32>
    %5 = arith.addf %2, %4 : vector<32x256xf32>
    %cst_5 = arith.constant 0.000000e+00 : f32
    %6 = vector.broadcast %cst_5 : f32 to vector<32x256xf32>
    %7 = arith.maximumf %5, %6 : vector<32x256xf32>
    %8 = arith.truncf %7 : vector<32x256xf32> to vector<32x256xbf16>
    %c0_6 = arith.constant 0 : index
    %c0_7 = arith.constant 0 : index
    %9 = vector.load %arg4[%c0_6, %c0_7] : memref<32x256xbf16, #tpu.memory_space<vmem>>, vector<32x256xbf16>
    tpu.vector_store %arg4[%c0_6, %c0_7], %8 {strides = array<i32>} : memref<32x256xbf16, #tpu.memory_space<vmem>>, vector<32x256xbf16>,
    return
  }
  func.func @transform_0(%arg0: i32) -> (i32, i32) {
    %c0_i32 = arith.constant 0 : i32
    %c0_i32_0 = arith.constant 0 : i32
    return %arg0, %c0_i32 : i32, i32
  }
  func.func @transform_1(%arg0: i32) -> (i32, i32) {
    %c0_i32 = arith.constant 0 : i32
    %c0_i32_0 = arith.constant 0 : i32
    %c0_i32_1 = arith.constant 0 : i32
    return %c0_i32, %c0_i32_0 : i32, i32
  }
  func.func @transform_2(%arg0: i32) -> (i32, i32) {
    %c0_i32 = arith.constant 0 : i32
    %c0_i32_0 = arith.constant 0 : i32
    %c0_i32_1 = arith.constant 0 : i32
    return %c0_i32, %c0_i32_0 : i32, i32
  }
  func.func @transform_3(%arg0: i32) -> (i32, i32) {
    %c0_i32 = arith.constant 0 : i32
    %c0_i32_0 = arith.constant 0 : i32
    return %arg0, %c0_i32 : i32, i32
  }
}

module attributes {stable_mosaic.version = 11 : i64} {
  func.func @_matmul_bias_act_kernel(%arg0: i32, %arg1: memref<128x576xbf16, #tpu.memory_space<vmem>>, %arg2: memref<576x128xbf16, #tpu.memory_space<vmem>>, %arg3: memref<1x128xf32, #tpu.memory_space<vmem>>, %arg4: memref<128x128xbf16, #tpu.memory_space<vmem>>) attributes {dimension_semantics = [#tpu.dimension_semantics<parallel>], iteration_bounds = array<i64: 1>, scalar_prefetch = 0 : i64, scratch_operands = 0 : i64, tpu.core_type = #tpu.core_type<tc>, window_params = [{transform_indices = @transform_0, window_bounds = array<i64: 128, 576>}, {pipeline_mode = #tpu.pipeline_mode<synchronous>, transform_indices = @transform_1, window_bounds = array<i64: 576, 128>}, {pipeline_mode = #tpu.pipeline_mode<synchronous>, transform_indices = @transform_2, window_bounds = array<i64: 1, 128>}, {transform_indices = @transform_3, window_bounds = array<i64: 128, 128>}]} {
    %c0 = arith.constant 0 : index
    %c0_0 = arith.constant 0 : index
    %0 = vector.load %arg1[%c0, %c0_0] : memref<128x576xbf16, #tpu.memory_space<vmem>>, vector<128x576xbf16>
    %c0_1 = arith.constant 0 : index
    %c0_2 = arith.constant 0 : index
    %1 = vector.load %arg2[%c0_1, %c0_2] : memref<576x128xbf16, #tpu.memory_space<vmem>>, vector<576x128xbf16>
    %cst = arith.constant dense<0.000000e+00> : vector<128x128xf32>
    %2 = tpu.matmul %0, %1, %cst {dimension_numbers = #tpu.dot_dimension_numbers<[1], [0], [0], [1], [0, 0, 1, 1], [], []>} : vector<128x576xbf16>, vector<576x128xbf16>, vector<128x128xf32> -> vector<128x128xf32>
    %c0_3 = arith.constant 0 : index
    %c0_4 = arith.constant 0 : index
    %3 = vector.load %arg3[%c0_3, %c0_4] : memref<1x128xf32, #tpu.memory_space<vmem>>, vector<1x128xf32>
    %4 = vector.broadcast %3 : vector<1x128xf32> to vector<128x128xf32>
    %5 = arith.addf %2, %4 : vector<128x128xf32>
    %cst_5 = arith.constant 0.000000e+00 : f32
    %6 = vector.broadcast %cst_5 : f32 to vector<128x128xf32>
    %7 = arith.maximumf %5, %6 : vector<128x128xf32>
    %8 = arith.truncf %7 : vector<128x128xf32> to vector<128x128xbf16>
    %c0_6 = arith.constant 0 : index
    %c0_7 = arith.constant 0 : index
    %9 = vector.load %arg4[%c0_6, %c0_7] : memref<128x128xbf16, #tpu.memory_space<vmem>>, vector<128x128xbf16>
    tpu.vector_store %arg4[%c0_6, %c0_7], %8 {strides = array<i32>} : memref<128x128xbf16, #tpu.memory_space<vmem>>, vector<128x128xbf16>,
    return
  }
  func.func @transform_0(%arg0: i32) -> (i32, i32) {
    %c0_i32 = arith.constant 0 : i32
    %c0_i32_0 = arith.constant 0 : i32
    return %arg0, %c0_i32 : i32, i32
  }
  func.func @transform_1(%arg0: i32) -> (i32, i32) {
    %c0_i32 = arith.constant 0 : i32
    %c0_i32_0 = arith.constant 0 : i32
    %c0_i32_1 = arith.constant 0 : i32
    return %c0_i32, %c0_i32_0 : i32, i32
  }
  func.func @transform_2(%arg0: i32) -> (i32, i32) {
    %c0_i32 = arith.constant 0 : i32
    %c0_i32_0 = arith.constant 0 : i32
    %c0_i32_1 = arith.constant 0 : i32
    return %c0_i32, %c0_i32_0 : i32, i32
  }
  func.func @transform_3(%arg0: i32) -> (i32, i32) {
    %c0_i32 = arith.constant 0 : i32
    %c0_i32_0 = arith.constant 0 : i32
    return %arg0, %c0_i32 : i32, i32
  }
}

module attributes {stable_mosaic.version = 11 : i64} {
  func.func @_matmul_bias_act_kernel(%arg0: i32, %arg1: memref<512x288xbf16, #tpu.memory_space<vmem>>, %arg2: memref<288x128xbf16, #tpu.memory_space<vmem>>, %arg3: memref<1x128xf32, #tpu.memory_space<vmem>>, %arg4: memref<512x128xbf16, #tpu.memory_space<vmem>>) attributes {dimension_semantics = [#tpu.dimension_semantics<parallel>], iteration_bounds = array<i64: 1>, scalar_prefetch = 0 : i64, scratch_operands = 0 : i64, tpu.core_type = #tpu.core_type<tc>, window_params = [{transform_indices = @transform_0, window_bounds = array<i64: 512, 288>}, {pipeline_mode = #tpu.pipeline_mode<synchronous>, transform_indices = @transform_1, window_bounds = array<i64: 288, 128>}, {pipeline_mode = #tpu.pipeline_mode<synchronous>, transform_indices = @transform_2, window_bounds = array<i64: 1, 128>}, {transform_indices = @transform_3, window_bounds = array<i64: 512, 128>}]} {
    %c0 = arith.constant 0 : index
    %c0_0 = arith.constant 0 : index
    %0 = vector.load %arg1[%c0, %c0_0] : memref<512x288xbf16, #tpu.memory_space<vmem>>, vector<512x288xbf16>
    %c0_1 = arith.constant 0 : index
    %c0_2 = arith.constant 0 : index
    %1 = vector.load %arg2[%c0_1, %c0_2] : memref<288x128xbf16, #tpu.memory_space<vmem>>, vector<288x128xbf16>
    %cst = arith.constant dense<0.000000e+00> : vector<512x128xf32>
    %2 = tpu.matmul %0, %1, %cst {dimension_numbers = #tpu.dot_dimension_numbers<[1], [0], [0], [1], [0, 0, 1, 1], [], []>} : vector<512x288xbf16>, vector<288x128xbf16>, vector<512x128xf32> -> vector<512x128xf32>
    %c0_3 = arith.constant 0 : index
    %c0_4 = arith.constant 0 : index
    %3 = vector.load %arg3[%c0_3, %c0_4] : memref<1x128xf32, #tpu.memory_space<vmem>>, vector<1x128xf32>
    %4 = vector.broadcast %3 : vector<1x128xf32> to vector<512x128xf32>
    %5 = arith.addf %2, %4 : vector<512x128xf32>
    %cst_5 = arith.constant 0.000000e+00 : f32
    %6 = vector.broadcast %cst_5 : f32 to vector<512x128xf32>
    %7 = arith.maximumf %5, %6 : vector<512x128xf32>
    %8 = arith.truncf %7 : vector<512x128xf32> to vector<512x128xbf16>
    %c0_6 = arith.constant 0 : index
    %c0_7 = arith.constant 0 : index
    %9 = vector.load %arg4[%c0_6, %c0_7] : memref<512x128xbf16, #tpu.memory_space<vmem>>, vector<512x128xbf16>
    tpu.vector_store %arg4[%c0_6, %c0_7], %8 {strides = array<i32>} : memref<512x128xbf16, #tpu.memory_space<vmem>>, vector<512x128xbf16>,
    return
  }
  func.func @transform_0(%arg0: i32) -> (i32, i32) {
    %c0_i32 = arith.constant 0 : i32
    %c0_i32_0 = arith.constant 0 : i32
    return %arg0, %c0_i32 : i32, i32
  }
  func.func @transform_1(%arg0: i32) -> (i32, i32) {
    %c0_i32 = arith.constant 0 : i32
    %c0_i32_0 = arith.constant 0 : i32
    %c0_i32_1 = arith.constant 0 : i32
    return %c0_i32, %c0_i32_0 : i32, i32
  }
  func.func @transform_2(%arg0: i32) -> (i32, i32) {
    %c0_i32 = arith.constant 0 : i32
    %c0_i32_0 = arith.constant 0 : i32
    %c0_i32_1 = arith.constant 0 : i32
    return %c0_i32, %c0_i32_0 : i32, i32
  }
  func.func @transform_3(%arg0: i32) -> (i32, i32) {
    %c0_i32 = arith.constant 0 : i32
    %c0_i32_0 = arith.constant 0 : i32
    return %arg0, %c0_i32 : i32, i32
  }
}

module attributes {stable_mosaic.version = 11 : i64} {
  func.func @_matmul_bias_act_kernel(%arg0: i32, %arg1: memref<512x288xbf16, #tpu.memory_space<vmem>>, %arg2: memref<288x128xbf16, #tpu.memory_space<vmem>>, %arg3: memref<1x128xf32, #tpu.memory_space<vmem>>, %arg4: memref<512x128xf32, #tpu.memory_space<vmem>>) attributes {dimension_semantics = [#tpu.dimension_semantics<parallel>], iteration_bounds = array<i64: 4>, scalar_prefetch = 0 : i64, scratch_operands = 0 : i64, tpu.core_type = #tpu.core_type<tc>, window_params = [{transform_indices = @transform_0, window_bounds = array<i64: 512, 288>}, {pipeline_mode = #tpu.pipeline_mode<synchronous>, transform_indices = @transform_1, window_bounds = array<i64: 288, 128>}, {pipeline_mode = #tpu.pipeline_mode<synchronous>, transform_indices = @transform_2, window_bounds = array<i64: 1, 128>}, {transform_indices = @transform_3, window_bounds = array<i64: 512, 128>}]} {
    %c0 = arith.constant 0 : index
    %c0_0 = arith.constant 0 : index
    %0 = vector.load %arg1[%c0, %c0_0] : memref<512x288xbf16, #tpu.memory_space<vmem>>, vector<512x288xbf16>
    %c0_1 = arith.constant 0 : index
    %c0_2 = arith.constant 0 : index
    %1 = vector.load %arg2[%c0_1, %c0_2] : memref<288x128xbf16, #tpu.memory_space<vmem>>, vector<288x128xbf16>
    %cst = arith.constant dense<0.000000e+00> : vector<512x128xf32>
    %2 = tpu.matmul %0, %1, %cst {dimension_numbers = #tpu.dot_dimension_numbers<[1], [0], [0], [1], [0, 0, 1, 1], [], []>} : vector<512x288xbf16>, vector<288x128xbf16>, vector<512x128xf32> -> vector<512x128xf32>
    %c0_3 = arith.constant 0 : index
    %c0_4 = arith.constant 0 : index
    %3 = vector.load %arg3[%c0_3, %c0_4] : memref<1x128xf32, #tpu.memory_space<vmem>>, vector<1x128xf32>
    %4 = vector.broadcast %3 : vector<1x128xf32> to vector<512x128xf32>
    %5 = arith.addf %2, %4 : vector<512x128xf32>
    %cst_5 = arith.constant 0.000000e+00 : f32
    %6 = vector.broadcast %cst_5 : f32 to vector<512x128xf32>
    %7 = arith.subf %6, %5 : vector<512x128xf32>
    %8 = math.exp %7 : vector<512x128xf32>
    %cst_6 = arith.constant 1.000000e+00 : f32
    %9 = vector.broadcast %cst_6 : f32 to vector<512x128xf32>
    %10 = arith.addf %9, %8 : vector<512x128xf32>
    %11 = tpu.reciprocal %10 {approx = true} : vector<512x128xf32> -> vector<512x128xf32>
    %c0_7 = arith.constant 0 : index
    %c0_8 = arith.constant 0 : index
    %12 = vector.load %arg4[%c0_7, %c0_8] : memref<512x128xf32, #tpu.memory_space<vmem>>, vector<512x128xf32>
    tpu.vector_store %arg4[%c0_7, %c0_8], %11 {strides = array<i32>} : memref<512x128xf32, #tpu.memory_space<vmem>>, vector<512x128xf32>,
    return
  }
  func.func @transform_0(%arg0: i32) -> (i32, i32) {
    %c0_i32 = arith.constant 0 : i32
    %c0_i32_0 = arith.constant 0 : i32
    return %arg0, %c0_i32 : i32, i32
  }
  func.func @transform_1(%arg0: i32) -> (i32, i32) {
    %c0_i32 = arith.constant 0 : i32
    %c0_i32_0 = arith.constant 0 : i32
    %c0_i32_1 = arith.constant 0 : i32
    return %c0_i32, %c0_i32_0 : i32, i32
  }
  func.func @transform_2(%arg0: i32) -> (i32, i32) {
    %c0_i32 = arith.constant 0 : i32
    %c0_i32_0 = arith.constant 0 : i32
    %c0_i32_1 = arith.constant 0 : i32
    return %c0_i32, %c0_i32_0 : i32, i32
  }
  func.func @transform_3(%arg0: i32) -> (i32, i32) {
    %c0_i32 = arith.constant 0 : i32
    %c0_i32_0 = arith.constant 0 : i32
    return %arg0, %c0_i32 : i32, i32
  }
}

</mosaic_0001>

<llo_original>
// kernel: model_forward.9
$region0: #{model_forward.9}
  #allocation0 [shape = 'u32[]', space=smem, size = 0x4, offset = 0x4, fixed_abs, tag = 'smem constant byte address 0x4 - core index']
  #allocation1 [shape = 'u32[144,128]{1,0:T(1,128)}', space=vmem, size = 0x12000, scoped, tag = 'internal scratch']
  %s0 = inlined_call_operand.vmem [shape: bf16[2048,48], index: 0, kind: input, shape index: {}]
  %s1 = inlined_call_operand.vmem [shape: bf16[48,128], index: 1, kind: input, shape index: {}]
  %s2 = inlined_call_operand.vmem [shape: f32[1,128], index: 2, kind: input, shape index: {}]
  %s3 = inlined_call_operand.vmem [shape: bf16[2048,128], index: 3, kind: output, shape index: {}]
  %s4 = sld [smem:[#allocation0]]
  $region45: #{model_forward.9} parent=0
    _
  %s6 = ssub.s32 1, %s4
  %s7 = scalar_select 0, %s6, %s4
  loop: start=0, step=1, limit=6
  $region2: #{model_forward.9} parent=0 // loop_pre_header
    _
  $region3: #{model_forward.9} parent=0 // loop_header
    %s9 = sphi 0, %s13
    %p10 = scmp.ge.s32.totalorder %s9, 6
    %s19 = sphi 0, %s21
    %s22 = sphi 0, %s19
    %s23 = sphi 0, %s22
    %s39 = sphi 0, %s23
    %s43 = sphi 0, %s43
    %s45 = sphi 0, %s43
    %s46 = sphi 0, %s45
    %s60 = sphi 0, %s46
    %s64 = sphi 0, %s64
    %s66 = sphi 0, %s64
    %s67 = sphi 0, %s66
    %s81 = sphi 0, %s67
    %s87 = sphi 0, %s89
    %s90 = sphi 0, %s87
    %s91 = sphi 0, %s90
    %s107 = sphi 0, %s91
  $region4: #{model_forward.9} parent=0 // loop_header_branch
    %12 = sbr.rel (%p10) target = $region8
  $region5: #{model_forward.9} parent=0 // loop_body
    %s14 = ssub.s32 %s9, 1
    %s15 = ssub.s32 %s9, 2
    %s16 = sadd.s32 %s9, 1
    %s17 = ssub.s32 %s9, %s16
    %p18 = scmp.eq.s32.totalorder %s17, 0
    %s20 = sadd.s32 %s19, 1
    %s21 = scalar_select %p18, %s19, %s20
    %p24 = pneg %p18
    %p25 = scmp.eq.s32.totalorder %s9, 3
    %p26 = por %p24, %p25
    %p27 = scmp.ne.s32.totalorder %s19, %s22
    %p28 = scmp.eq.s32.totalorder %s9, 0
    %p29 = por %p27, %p28
    %p30 = scmp.ne.s32.totalorder %s19, %s22
    %p31 = scmp.eq.s32.totalorder %s14, 3
    %p32 = por %p30, %p31
    %p33 = scmp.ne.s32.totalorder %s22, %s23
    %p34 = scmp.eq.s32.totalorder %s14, 0
    %p35 = por %p33, %p34
    %p36 = scmp.ne.s32.totalorder %s22, %s23
    %p37 = scmp.eq.s32.totalorder %s15, 3
    %p38 = por %p36, %p37
    %p40 = scmp.ne.s32.totalorder %s23, %s39
    %p41 = scmp.eq.s32.totalorder %s15, 0
    %p42 = por %p40, %p41
    %s44 = sadd.s32 %s43, 1
    %p47 = scmp.eq.s32.totalorder %s9, 3
    %p48 = scmp.ne.s32.totalorder %s43, %s45
    %p49 = scmp.eq.s32.totalorder %s9, 0
    %p50 = por %p48, %p49
    %p51 = scmp.ne.s32.totalorder %s43, %s45
    %p52 = scmp.eq.s32.totalorder %s14, 3
    %p53 = por %p51, %p52
    %p54 = scmp.ne.s32.totalorder %s45, %s46
    %p55 = scmp.eq.s32.totalorder %s14, 0
    %p56 = por %p54, %p55
    %p57 = scmp.ne.s32.totalorder %s45, %s46
    %p58 = scmp.eq.s32.totalorder %s15, 3
    %p59 = por %p57, %p58
    %p61 = scmp.ne.s32.totalorder %s46, %s60
    %p62 = scmp.eq.s32.totalorder %s15, 0
    %p63 = por %p61, %p62
    %s65 = sadd.s32 %s64, 1
    %p68 = scmp.eq.s32.totalorder %s9, 3
    %p69 = scmp.ne.s32.totalorder %s64, %s66
    %p70 = scmp.eq.s32.totalorder %s9, 0
    %p71 = por %p69, %p70
    %p72 = scmp.ne.s32.totalorder %s64, %s66
    %p73 = scmp.eq.s32.totalorder %s14, 3
    %p74 = por %p72, %p73
    %p75 = scmp.ne.s32.totalorder %s66, %s67
    %p76 = scmp.eq.s32.totalorder %s14, 0
    %p77 = por %p75, %p76
    %p78 = scmp.ne.s32.totalorder %s66, %s67
    %p79 = scmp.eq.s32.totalorder %s15, 3
    %p80 = por %p78, %p79
    %p82 = scmp.ne.s32.totalorder %s67, %s81
    %p83 = scmp.eq.s32.totalorder %s15, 0
    %p84 = por %p82, %p83
    %s85 = ssub.s32 %s9, %s16
    %p86 = scmp.eq.s32.totalorder %s85, 0
    %s88 = sadd.s32 %s87, 1
    %s89 = scalar_select %p86, %s87, %s88
    %p92 = pneg %p86
    %p93 = scmp.eq.s32.totalorder %s9, 3
    %p94 = por %p92, %p93
    %p95 = scmp.ne.s32.totalorder %s87, %s90
    %p96 = scmp.eq.s32.totalorder %s9, 0
    %p97 = por %p95, %p96
    %p98 = scmp.ne.s32.totalorder %s87, %s90
    %p99 = scmp.eq.s32.totalorder %s14, 3
    %p100 = por %p98, %p99
    %p101 = scmp.ne.s32.totalorder %s90, %s91
    %p102 = scmp.eq.s32.totalorder %s14, 0
    %p103 = por %p101, %p102
    %p104 = scmp.ne.s32.totalorder %s90, %s91
    %p105 = scmp.eq.s32.totalorder %s15, 3
    %p106 = por %p104, %p105
    %p108 = scmp.ne.s32.totalorder %s91, %s107
    %p109 = scmp.eq.s32.totalorder %s15, 0
    %p110 = por %p108, %p109
    %p111 = scmp.le.s32.totalorder 1, %s9
    %p112 = scmp.lt.s32.totalorder %s9, 5
    %p113 = pnand %p111, %p112
    %p114 = pneg %p113
    // Predicated region
    $region9: #{model_forward.9} parent=5 // pred_check
      _
    $region10: #{model_forward.9} parent=5 // pred_check_branch
      %116 = sbr.rel (%p113) target = $region12
    $region11: #{model_forward.9} parent=5 // pred_region
      %s117 = ssub.s32 %s9, 1
      // Predicated region
      $region13: #{model_forward.9} parent=11 // pred_check
        %p118 = pneg %p56
      $region14: #{model_forward.9} parent=11 // pred_check_branch
        %120 = sbr.rel (%p118) target = $region16
      $region15: #{model_forward.9} parent=11 // pred_region
        _
      $region16: #{model_forward.9} parent=11 // pred_fallthru
        _
      // Predicated region
      $region17: #{model_forward.9} parent=11 // pred_check
        %p121 = pneg %p77
      $region18: #{model_forward.9} parent=11 // pred_check_branch
        %123 = sbr.rel (%p121) target = $region20
      $region19: #{model_forward.9} parent=11 // pred_region
        _
      $region20: #{model_forward.9} parent=11 // pred_fallthru
        _
    $region12: #{model_forward.9} parent=5 // pred_fallthru
      _
    %p124 = scmp.lt.s32.totalorder %s9, 4
    // Predicated region
    $region21: #{model_forward.9} parent=5 // pred_check
      %p125 = pneg %p124
    $region22: #{model_forward.9} parent=5 // pred_check_branch
      %127 = sbr.rel (%p125) target = $region24
    $region23: #{model_forward.9} parent=5 // pred_region
      // Predicated region
      $region25: #{model_forward.9} parent=23 // pred_check
        %p128 = pneg %p29
      $region26: #{model_forward.9} parent=23 // pred_check_branch
        %130 = sbr.rel (%p128) target = $region28
      $region27: #{model_forward.9} parent=23 // pred_region
        %s131 = smul.u32 64, %s9
        %p132 = scmp.lt.s32.totalorder %s131, 255
        %s133 = scalar_select %p132, %s131, 255
        %s134 = smul.addr %s133, 4
        %s135 = scalar_lea.vmem %s0, %s134
        %s136 = smul.u32 64, %s9
      $region28: #{model_forward.9} parent=23 // pred_fallthru
        _
    $region24: #{model_forward.9} parent=5 // pred_fallthru
      _
    %p137 = scmp.le.s32.totalorder 1, %s9
    %p138 = scmp.lt.s32.totalorder %s9, 5
    %p139 = pnand %p137, %p138
    %p140 = pneg %p139
    // Predicated region
    $region29: #{model_forward.9} parent=5 // pred_check
      _
    $region30: #{model_forward.9} parent=5 // pred_check_branch
      %142 = sbr.rel (%p139) target = $region32
    $region31: #{model_forward.9} parent=5 // pred_region
      %s143 = ssub.s32 %s9, 1
      %s144 = smul.u32 64, %s14
      %p145 = scmp.lt.s32.totalorder %s144, 255
      %s146 = scalar_select %p145, %s144, 255
      %s147 = smul.addr %s146, 4
      %s148 = scalar_lea.vmem %s0, %s147
      %p149 = pneg %p35
      %p150 = pneg %p32
      %p151 = pneg %p56
      %p152 = pneg %p53
      %p153 = pneg %p77
      %p154 = pneg %p74
      %p155 = pneg %p103
      %p156 = pneg %p100
      %s157 = smul.u32 64, %s14
      %p158 = scmp.lt.s32.totalorder %s157, 255
      %s159 = scalar_select %p158, %s157, 255
      %s160 = smul.addr %s159, 4
      %s161 = scalar_lea.vmem %s3, %s160
      %s162 = smul.u32 64, %s14
      %p163 = scmp.lt.s32.totalorder %s162, 255
      %s164 = scalar_select %p163, %s162, 255
      %s165 = smul.addr %s164, 4
      %s166 = scalar_lea.vmem %s0, %s165
      %s167 = smul.u32 64, %s14
      %s168 = smul.u32 64, %s14
      %p169 = scmp.lt.s32.totalorder %s168, 255
      %s170 = scalar_select %p169, %s168, 255
      %s171 = smul.addr %s170, 4
      %s172 = scalar_lea.vmem %s3, %s171
      %s173 = smul.u32 64, %s14
      %v175 = vld [vmem:[%s166] sm:$0xf]
      %v176 = vld [vmem:[%s166 + $0x4] sm:$0xf]
      %v177 = vld [vmem:[%s166 + $0x8] sm:$0xf]
      %v178 = vld [vmem:[%s166 + $0xc] sm:$0xf]
      %v179 = vld [vmem:[%s166 + $0x10] sm:$0xf]
      %v180 = vld [vmem:[%s166 + $0x14] sm:$0xf]
      %v181 = vld [vmem:[%s166 + $0x18] sm:$0xf]
      %v182 = vld [vmem:[%s166 + $0x1c] sm:$0xf]
      %v183 = vld [vmem:[%s166 + $0x20] sm:$0xf]
      %v184 = vld [vmem:[%s166 + $0x24] sm:$0xf]
      %v185 = vld [vmem:[%s166 + $0x28] sm:$0xf]
      %v186 = vld [vmem:[%s166 + $0x2c] sm:$0xf]
      %v187 = vld [vmem:[%s166 + $0x30] sm:$0xf]
      %v188 = vld [vmem:[%s166 + $0x34] sm:$0xf]
      %v189 = vld [vmem:[%s166 + $0x38] sm:$0xf]
      %v190 = vld [vmem:[%s166 + $0x3c] sm:$0xf]
      %v191 = vld [vmem:[%s166 + $0x40] sm:$0xf]
      %v192 = vld [vmem:[%s166 + $0x44] sm:$0xf]
      %v193 = vld [vmem:[%s166 + $0x48] sm:$0xf]
      %v194 = vld [vmem:[%s166 + $0x4c] sm:$0xf]
      %v195 = vld [vmem:[%s166 + $0x50] sm:$0xf]
      %v196 = vld [vmem:[%s166 + $0x54] sm:$0xf]
      %v197 = vld [vmem:[%s166 + $0x58] sm:$0xf]
      %v198 = vld [vmem:[%s166 + $0x5c] sm:$0xf]
      %v199 = vld [vmem:[%s166 + $0x60] sm:$0xf]
      %v200 = vld [vmem:[%s166 + $0x64] sm:$0xf]
      %v201 = vld [vmem:[%s166 + $0x68] sm:$0xf]
      %v202 = vld [vmem:[%s166 + $0x6c] sm:$0xf]
      %v203 = vld [vmem:[%s166 + $0x70] sm:$0xf]
      %v204 = vld [vmem:[%s166 + $0x74] sm:$0xf]
      %v205 = vld [vmem:[%s166 + $0x78] sm:$0xf]
      %v206 = vld [vmem:[%s166 + $0x7c] sm:$0xf]
      %v207 = vld [vmem:[%s166 + $0x80] sm:$0xf]
      %v208 = vld [vmem:[%s166 + $0x84] sm:$0xf]
      %v209 = vld [vmem:[%s166 + $0x88] sm:$0xf]
      %v210 = vld [vmem:[%s166 + $0x8c] sm:$0xf]
      %v211 = vld [vmem:[%s166 + $0x90] sm:$0xf]
      %v212 = vld [vmem:[%s166 + $0x94] sm:$0xf]
      %v213 = vld [vmem:[%s166 + $0x98] sm:$0xf]
      %v214 = vld [vmem:[%s166 + $0x9c] sm:$0xf]
      %v215 = vld [vmem:[%s166 + $0xa0] sm:$0xf]
      %v216 = vld [vmem:[%s166 + $0xa4] sm:$0xf]
      %v217 = vld [vmem:[%s166 + $0xa8] sm:$0xf]
      %v218 = vld [vmem:[%s166 + $0xac] sm:$0xf]
      %v219 = vld [vmem:[%s166 + $0xb0] sm:$0xf]
      %v220 = vld [vmem:[%s166 + $0xb4] sm:$0xf]
      %v221 = vld [vmem:[%s166 + $0xb8] sm:$0xf]
      %v222 = vld [vmem:[%s166 + $0xbc] sm:$0xf]
      %v223 = vld [vmem:[%s166 + $0xc0] sm:$0xf]
      %v224 = vld [vmem:[%s166 + $0xc4] sm:$0xf]
      %v225 = vld [vmem:[%s166 + $0xc8] sm:$0xf]
      %v226 = vld [vmem:[%s166 + $0xcc] sm:$0xf]
      %v227 = vld [vmem:[%s166 + $0xd0] sm:$0xf]
      %v228 = vld [vmem:[%s166 + $0xd4] sm:$0xf]
      %v229 = vld [vmem:[%s166 + $0xd8] sm:$0xf]
      %v230 = vld [vmem:[%s166 + $0xdc] sm:$0xf]
      %v231 = vld [vmem:[%s166 + $0xe0] sm:$0xf]
      %v232 = vld [vmem:[%s166 + $0xe4] sm:$0xf]
      %v233 = vld [vmem:[%s166 + $0xe8] sm:$0xf]
      %v234 = vld [vmem:[%s166 + $0xec] sm:$0xf]
      %v235 = vld [vmem:[%s166 + $0xf0] sm:$0xf]
      %v236 = vld [vmem:[%s166 + $0xf4] sm:$0xf]
      %v237 = vld [vmem:[%s166 + $0xf8] sm:$0xf]
      %v238 = vld [vmem:[%s166 + $0xfc] sm:$0xf]
      %v239 = vld [vmem:[%s1] sm:$0xf]
      %v240 = vld [vmem:[%s1 + $0x4] sm:$0xf]
      %v241 = vld [vmem:[%s1 + $0x8] sm:$0xf]
      %v242 = vld [vmem:[%s1 + $0xc] sm:$0xf]
      %v243 = vld [vmem:[%s1 + $0x10] sm:$0xf]
      %v244 = vld [vmem:[%s1 + $0x14] sm:$0xf]
      %v245 = vld [vmem:[%s2] sm:$0x1]
      %v247 = vlaneseq
      %v248 = vshrl.u32 %v247, 7
      %v249 = vsub.s32 0, %v248
      %v250 = vrot.slane %v245, %v249
      %v316 = vunpack.c.l.b16 %v175
      %v317 = vunpack.c.l.b16 %v176
      %v318 = vunpack.c.l.b16 %v177
      %v319 = vunpack.c.l.b16 %v178
      %v320 = vunpack.c.l.b16 %v179
      %v321 = vunpack.c.l.b16 %v180
      %v322 = vunpack.c.l.b16 %v181
      %v323 = vunpack.c.l.b16 %v182
      %v324 = vunpack.c.l.b16 %v183
      %v325 = vunpack.c.l.b16 %v184
      %v326 = vunpack.c.l.b16 %v185
      %v327 = vunpack.c.l.b16 %v186
      %v328 = vunpack.c.l.b16 %v187
      %v329 = vunpack.c.l.b16 %v188
      %v330 = vunpack.c.l.b16 %v189
      %v331 = vunpack.c.l.b16 %v190
      %v332 = vunpack.c.l.b16 %v191
      %v333 = vunpack.c.l.b16 %v192
      %v334 = vunpack.c.l.b16 %v193
      %v335 = vunpack.c.l.b16 %v194
      %v336 = vunpack.c.l.b16 %v195
      %v337 = vunpack.c.l.b16 %v196
      %v338 = vunpack.c.l.b16 %v197
      %v339 = vunpack.c.l.b16 %v198
      %v340 = vunpack.c.l.b16 %v199
      %v341 = vunpack.c.l.b16 %v200
      %v342 = vunpack.c.l.b16 %v201
      %v343 = vunpack.c.l.b16 %v202
      %v344 = vunpack.c.l.b16 %v203
      %v345 = vunpack.c.l.b16 %v204
      %v346 = vunpack.c.l.b16 %v205
      %v347 = vunpack.c.l.b16 %v206
      %v348 = vunpack.c.l.b16 %v207
      %v349 = vunpack.c.l.b16 %v208
      %v350 = vunpack.c.l.b16 %v209
      %v351 = vunpack.c.l.b16 %v210
      %v352 = vunpack.c.l.b16 %v211
      %v353 = vunpack.c.l.b16 %v212
      %v354 = vunpack.c.l.b16 %v213
      %v355 = vunpack.c.l.b16 %v214
      %v356 = vunpack.c.l.b16 %v215
      %v357 = vunpack.c.l.b16 %v216
      %v358 = vunpack.c.l.b16 %v217
      %v359 = vunpack.c.l.b16 %v218
      %v360 = vunpack.c.l.b16 %v219
      %v361 = vunpack.c.l.b16 %v220
      %v362 = vunpack.c.l.b16 %v221
      %v363 = vunpack.c.l.b16 %v222
      %v364 = vunpack.c.l.b16 %v223
      %v365 = vunpack.c.l.b16 %v224
      %v366 = vunpack.c.l.b16 %v225
      %v367 = vunpack.c.l.b16 %v226
      %v368 = vunpack.c.l.b16 %v227
      %v369 = vunpack.c.l.b16 %v228
      %v370 = vunpack.c.l.b16 %v229
      %v371 = vunpack.c.l.b16 %v230
      %v372 = vunpack.c.l.b16 %v231
      %v373 = vunpack.c.l.b16 %v232
      %v374 = vunpack.c.l.b16 %v233
      %v375 = vunpack.c.l.b16 %v234
      %v376 = vunpack.c.l.b16 %v235
      %v377 = vunpack.c.l.b16 %v236
      %v378 = vunpack.c.l.b16 %v237
      %v379 = vunpack.c.l.b16 %v238
      %v380 = vpack.c.b16 %v317, %v316
      %v381 = vpack.c.b16 %v319, %v318
      %v382 = vpack.c.b16 %v321, %v320
      %v383 = vpack.c.b16 %v323, %v322
      %v384 = vpack.c.b16 %v325, %v324
      %v385 = vpack.c.b16 %v327, %v326
      %v386 = vpack.c.b16 %v329, %v328
      %v387 = vpack.c.b16 %v331, %v330
      %v388 = vpack.c.b16 %v333, %v332
      %v389 = vpack.c.b16 %v335, %v334
      %v390 = vpack.c.b16 %v337, %v336
      %v391 = vpack.c.b16 %v339, %v338
      %v392 = vpack.c.b16 %v341, %v340
      %v393 = vpack.c.b16 %v343, %v342
      %v394 = vpack.c.b16 %v345, %v344
      %v395 = vpack.c.b16 %v347, %v346
      %v396 = vpack.c.b16 %v349, %v348
      %v397 = vpack.c.b16 %v351, %v350
      %v398 = vpack.c.b16 %v353, %v352
      %v399 = vpack.c.b16 %v355, %v354
      %v400 = vpack.c.b16 %v357, %v356
      %v401 = vpack.c.b16 %v359, %v358
      %v402 = vpack.c.b16 %v361, %v360
      %v403 = vpack.c.b16 %v363, %v362
      %v404 = vpack.c.b16 %v365, %v364
      %v405 = vpack.c.b16 %v367, %v366
      %v406 = vpack.c.b16 %v369, %v368
      %v407 = vpack.c.b16 %v371, %v370
      %v408 = vpack.c.b16 %v373, %v372
      %v409 = vpack.c.b16 %v375, %v374
      %v410 = vpack.c.b16 %v377, %v376
      %v411 = vpack.c.b16 %v379, %v378
      %v418 = vunpack.c.l.b16 %v239
      %v419 = vunpack.c.l.b16 %v240
      %v420 = vunpack.c.l.b16 %v241
      %v421 = vunpack.c.l.b16 %v242
      %v422 = vunpack.c.l.b16 %v243
      %v423 = vunpack.c.l.b16 %v244
      %v424 = vpack.c.b16 %v419, %v418
      %v425 = vpack.c.b16 %v421, %v420
      %v426 = vpack.c.b16 %v423, %v422
      %vm430 = vcmask 392192
      %v432 = vsel %vm430, %v380, 0
      %v435 = vsel %vm430, %v381, 0
      %v438 = vsel %vm430, %v382, 0
      %v441 = vsel %vm430, %v383, 0
      %v444 = vsel %vm430, %v384, 0
      %v447 = vsel %vm430, %v385, 0
      %v450 = vsel %vm430, %v386, 0
      %v453 = vsel %vm430, %v387, 0
      %v456 = vsel %vm430, %v388, 0
      %v459 = vsel %vm430, %v389, 0
      %v462 = vsel %vm430, %v390, 0
      %v465 = vsel %vm430, %v391, 0
      %v468 = vsel %vm430, %v392, 0
      %v471 = vsel %vm430, %v393, 0
      %v474 = vsel %vm430, %v394, 0
      %v477 = vsel %vm430, %v395, 0
      %v480 = vsel %vm430, %v396, 0
      %v483 = vsel %vm430, %v397, 0
      %v486 = vsel %vm430, %v398, 0
      %v489 = vsel %vm430, %v399, 0
      %v492 = vsel %vm430, %v400, 0
      %v495 = vsel %vm430, %v401, 0
      %v498 = vsel %vm430, %v402, 0
      %v501 = vsel %vm430, %v403, 0
      %v504 = vsel %vm430, %v404, 0
      %v507 = vsel %vm430, %v405, 0
      %v510 = vsel %vm430, %v406, 0
      %v513 = vsel %vm430, %v407, 0
      %v516 = vsel %vm430, %v408, 0
      %v519 = vsel %vm430, %v409, 0
      %v522 = vsel %vm430, %v410, 0
      %v525 = vsel %vm430, %v411, 0
      %527 = vmatprep.subr.bf16.mxu0 0
      %528 = vmatpush1.bf16.msra.mxu0 0
      %529 = vmatprep.subr.bf16.mxu0 0
      %530 = vmatpush1.bf16.msra.mxu0 0
      %531 = vmatprep.subr.bf16.mxu0 0
      %532 = vmatpush1.bf16.msra.mxu0 0
      %533 = vmatprep.subr.bf16.mxu0 0
      %534 = vmatpush1.bf16.msra.mxu0 0
      %535 = vmatprep.subr.bf16.mxu0 0
      %536 = vmatpush1.bf16.msra.mxu0 0
      %537 = vmatprep.subr.bf16.mxu0 0
      %538 = vmatpush1.bf16.msra.mxu0 %v426
      %539 = vmatprep.subr.bf16.mxu0 0
      %540 = vmatpush1.bf16.msra.mxu0 %v425
      %541 = vmatprep.subr.bf16.mxu0 0
      %542 = vmatpush1.bf16.msra.mxu0 %v424
      %543 = vmatprep.subr.bf16.mxu0 0
      %544 = vmatpush2.bf16.msra.mxu0 0
      %545 = vmatprep.subr.bf16.mxu0 0
      %546 = vmatpush2.bf16.msra.mxu0 0
      %547 = vmatprep.subr.bf16.mxu0 0
      %548 = vmatpush2.bf16.msra.mxu0 0
      %549 = vmatprep.subr.bf16.mxu0 0
      %550 = vmatpush2.bf16.msra.mxu0 0
      %551 = vmatprep.subr.bf16.mxu0 0
      %552 = vmatpush2.bf16.msra.mxu0 0
      %553 = vmatprep.subr.bf16.mxu0 0
      %554 = vmatpush2.bf16.msra.mxu0 0
      %555 = vmatprep.subr.bf16.mxu0 0
      %556 = vmatpush2.bf16.msra.mxu0 0
      %557 = vmatprep.subr.bf16.mxu0 0
      %558 = vmatpush2.bf16.msra.mxu0 0
      %559 = vmatprep.mubr.bf16.mxu0 0
      %560 = vmatmul.mubr.bf16.gmra.mxu0 %v432
      %v561 = vpop.f32.mrf.mxu0
      %v562 = vadd.f32 %v250, %v561
      %v563 = vpop.f32.mrf.mxu0
      %v564 = vpop.f32.mrf.mxu0
      %v565 = vadd.f32 %v250, %v564
      %v566 = vpop.f32.mrf.mxu0
      %567 = vmatprep.mubr.bf16.mxu0 0
      %568 = vmatmul.mubr.bf16.gmra.mxu0 %v435
      %v569 = vpop.f32.mrf.mxu0
      %v570 = vadd.f32 %v250, %v569
      %v571 = vpop.f32.mrf.mxu0
      %v572 = vpop.f32.mrf.mxu0
      %v573 = vadd.f32 %v250, %v572
      %v574 = vpop.f32.mrf.mxu0
      %575 = vmatprep.mubr.bf16.mxu0 0
      %576 = vmatmul.mubr.bf16.gmra.mxu0 %v438
      %v577 = vpop.f32.mrf.mxu0
      %v578 = vadd.f32 %v250, %v577
      %v579 = vpop.f32.mrf.mxu0
      %v580 = vpop.f32.mrf.mxu0
      %v581 = vadd.f32 %v250, %v580
      %v582 = vpop.f32.mrf.mxu0
      %583 = vmatprep.mubr.bf16.mxu0 0
      %584 = vmatmul.mubr.bf16.gmra.mxu0 %v441
      %v585 = vpop.f32.mrf.mxu0
      %v586 = vadd.f32 %v250, %v585
      %v587 = vpop.f32.mrf.mxu0
      %v588 = vpop.f32.mrf.mxu0
      %v589 = vadd.f32 %v250, %v588
      %v590 = vpop.f32.mrf.mxu0
      %591 = vmatprep.mubr.bf16.mxu0 0
      %592 = vmatmul.mubr.bf16.gmra.mxu0 %v444
      %v593 = vpop.f32.mrf.mxu0
      %v594 = vadd.f32 %v250, %v593
      %v595 = vpop.f32.mrf.mxu0
      %v596 = vpop.f32.mrf.mxu0
      %v597 = vadd.f32 %v250, %v596
      %v598 = vpop.f32.mrf.mxu0
      %599 = vmatprep.mubr.bf16.mxu0 0
      %600 = vmatmul.mubr.bf16.gmra.mxu0 %v447
      %v601 = vpop.f32.mrf.mxu0
      %v602 = vadd.f32 %v250, %v601
      %v603 = vpop.f32.mrf.mxu0
      %v604 = vpop.f32.mrf.mxu0
      %v605 = vadd.f32 %v250, %v604
      %v606 = vpop.f32.mrf.mxu0
      %607 = vmatprep.mubr.bf16.mxu0 0
      %608 = vmatmul.mubr.bf16.gmra.mxu0 %v450
      %v609 = vpop.f32.mrf.mxu0
      %v610 = vadd.f32 %v250, %v609
      %v611 = vpop.f32.mrf.mxu0
      %v612 = vpop.f32.mrf.mxu0
      %v613 = vadd.f32 %v250, %v612
      %v614 = vpop.f32.mrf.mxu0
      %615 = vmatprep.mubr.bf16.mxu0 0
      %616 = vmatmul.mubr.bf16.gmra.mxu0 %v453
      %v617 = vpop.f32.mrf.mxu0
      %v618 = vadd.f32 %v250, %v617
      %v619 = vpop.f32.mrf.mxu0
      %v620 = vpop.f32.mrf.mxu0
      %v621 = vadd.f32 %v250, %v620
      %v622 = vpop.f32.mrf.mxu0
      %623 = vmatprep.mubr.bf16.mxu0 0
      %624 = vmatmul.mubr.bf16.gmra.mxu0 %v456
      %v625 = vpop.f32.mrf.mxu0
      %v626 = vadd.f32 %v250, %v625
      %v627 = vpop.f32.mrf.mxu0
      %v628 = vpop.f32.mrf.mxu0
      %v629 = vadd.f32 %v250, %v628
      %v630 = vpop.f32.mrf.mxu0
      %631 = vmatprep.mubr.bf16.mxu0 0
      %632 = vmatmul.mubr.bf16.gmra.mxu0 %v459
      %v633 = vpop.f32.mrf.mxu0
      %v634 = vadd.f32 %v250, %v633
      %v635 = vpop.f32.mrf.mxu0
      %v636 = vpop.f32.mrf.mxu0
      %v637 = vadd.f32 %v250, %v636
      %v638 = vpop.f32.mrf.mxu0
      %639 = vmatprep.mubr.bf16.mxu0 0
      %640 = vmatmul.mubr.bf16.gmra.mxu0 %v462
      %v641 = vpop.f32.mrf.mxu0
      %v642 = vadd.f32 %v250, %v641
      %v643 = vpop.f32.mrf.mxu0
      %v644 = vpop.f32.mrf.mxu0
      %v645 = vadd.f32 %v250, %v644
      %v646 = vpop.f32.mrf.mxu0
      %647 = vmatprep.mubr.bf16.mxu0 0
      %648 = vmatmul.mubr.bf16.gmra.mxu0 %v465
      %v649 = vpop.f32.mrf.mxu0
      %v650 = vadd.f32 %v250, %v649
      %v651 = vpop.f32.mrf.mxu0
      %v652 = vpop.f32.mrf.mxu0
      %v653 = vadd.f32 %v250, %v652
      %v654 = vpop.f32.mrf.mxu0
      %655 = vmatprep.mubr.bf16.mxu0 0
      %656 = vmatmul.mubr.bf16.gmra.mxu0 %v468
      %v657 = vpop.f32.mrf.mxu0
      %v658 = vadd.f32 %v250, %v657
      %v659 = vpop.f32.mrf.mxu0
      %v660 = vpop.f32.mrf.mxu0
      %v661 = vadd.f32 %v250, %v660
      %v662 = vpop.f32.mrf.mxu0
      %663 = vmatprep.mubr.bf16.mxu0 0
      %664 = vmatmul.mubr.bf16.gmra.mxu0 %v471
      %v665 = vpop.f32.mrf.mxu0
      %v666 = vadd.f32 %v250, %v665
      %v667 = vpop.f32.mrf.mxu0
      %v668 = vpop.f32.mrf.mxu0
      %v669 = vadd.f32 %v250, %v668
      %v670 = vpop.f32.mrf.mxu0
      %671 = vmatprep.mubr.bf16.mxu0 0
      %672 = vmatmul.mubr.bf16.gmra.mxu0 %v474
      %v673 = vpop.f32.mrf.mxu0
      %v674 = vadd.f32 %v250, %v673
      %v675 = vpop.f32.mrf.mxu0
      %v676 = vpop.f32.mrf.mxu0
      %v677 = vadd.f32 %v250, %v676
      %v678 = vpop.f32.mrf.mxu0
      %679 = vmatprep.mubr.bf16.mxu0 0
      %680 = vmatmul.mubr.bf16.gmra.mxu0 %v477
      %v681 = vpop.f32.mrf.mxu0
      %v682 = vadd.f32 %v250, %v681
      %v683 = vpop.f32.mrf.mxu0
      %v684 = vpop.f32.mrf.mxu0
      %v685 = vadd.f32 %v250, %v684
      %v686 = vpop.f32.mrf.mxu0
      %687 = vmatprep.mubr.bf16.mxu0 0
      %688 = vmatmul.mubr.bf16.gmra.mxu0 %v480
      %v689 = vpop.f32.mrf.mxu0
      %v690 = vadd.f32 %v250, %v689
      %v691 = vpop.f32.mrf.mxu0
      %v692 = vpop.f32.mrf.mxu0
      %v693 = vadd.f32 %v250, %v692
      %v694 = vpop.f32.mrf.mxu0
      %695 = vmatprep.mubr.bf16.mxu0 0
      %696 = vmatmul.mubr.bf16.gmra.mxu0 %v483
      %v697 = vpop.f32.mrf.mxu0
      %v698 = vadd.f32 %v250, %v697
      %v699 = vpop.f32.mrf.mxu0
      %v700 = vpop.f32.mrf.mxu0
      %v701 = vadd.f32 %v250, %v700
      %v702 = vpop.f32.mrf.mxu0
      %703 = vmatprep.mubr.bf16.mxu0 0
      %704 = vmatmul.mubr.bf16.gmra.mxu0 %v486
      %v705 = vpop.f32.mrf.mxu0
      %v706 = vadd.f32 %v250, %v705
      %v707 = vpop.f32.mrf.mxu0
      %v708 = vpop.f32.mrf.mxu0
      %v709 = vadd.f32 %v250, %v708
      %v710 = vpop.f32.mrf.mxu0
      %711 = vmatprep.mubr.bf16.mxu0 0
      %712 = vmatmul.mubr.bf16.gmra.mxu0 %v489
      %v713 = vpop.f32.mrf.mxu0
      %v714 = vadd.f32 %v250, %v713
      %v715 = vpop.f32.mrf.mxu0
      %v716 = vpop.f32.mrf.mxu0
      %v717 = vadd.f32 %v250, %v716
      %v718 = vpop.f32.mrf.mxu0
      %719 = vmatprep.mubr.bf16.mxu0 0
      %720 = vmatmul.mubr.bf16.gmra.mxu0 %v492
      %v721 = vpop.f32.mrf.mxu0
      %v722 = vadd.f32 %v250, %v721
      %v723 = vpop.f32.mrf.mxu0
      %v724 = vpop.f32.mrf.mxu0
      %v725 = vadd.f32 %v250, %v724
      %v726 = vpop.f32.mrf.mxu0
      %727 = vmatprep.mubr.bf16.mxu0 0
      %728 = vmatmul.mubr.bf16.gmra.mxu0 %v495
      %v729 = vpop.f32.mrf.mxu0
      %v730 = vadd.f32 %v250, %v729
      %v731 = vpop.f32.mrf.mxu0
      %v732 = vpop.f32.mrf.mxu0
      %v733 = vadd.f32 %v250, %v732
      %v734 = vpop.f32.mrf.mxu0
      %735 = vmatprep.mubr.bf16.mxu0 0
      %736 = vmatmul.mubr.bf16.gmra.mxu0 %v498
      %v737 = vpop.f32.mrf.mxu0
      %v738 = vadd.f32 %v250, %v737
      %v739 = vpop.f32.mrf.mxu0
      %v740 = vpop.f32.mrf.mxu0
      %v741 = vadd.f32 %v250, %v740
      %v742 = vpop.f32.mrf.mxu0
      %743 = vmatprep.mubr.bf16.mxu0 0
      %744 = vmatmul.mubr.bf16.gmra.mxu0 %v501
      %v745 = vpop.f32.mrf.mxu0
      %v746 = vadd.f32 %v250, %v745
      %v747 = vpop.f32.mrf.mxu0
      %v748 = vpop.f32.mrf.mxu0
      %v749 = vadd.f32 %v250, %v748
      %v750 = vpop.f32.mrf.mxu0
      %751 = vmatprep.mubr.bf16.mxu0 0
      %752 = vmatmul.mubr.bf16.gmra.mxu0 %v504
      %v753 = vpop.f32.mrf.mxu0
      %v754 = vadd.f32 %v250, %v753
      %v755 = vpop.f32.mrf.mxu0
      %v756 = vpop.f32.mrf.mxu0
      %v757 = vadd.f32 %v250, %v756
      %v758 = vpop.f32.mrf.mxu0
      %759 = vmatprep.mubr.bf16.mxu0 0
      %760 = vmatmul.mubr.bf16.gmra.mxu0 %v507
      %v761 = vpop.f32.mrf.mxu0
      %v762 = vadd.f32 %v250, %v761
      %v763 = vpop.f32.mrf.mxu0
      %v764 = vpop.f32.mrf.mxu0
      %v765 = vadd.f32 %v250, %v764
      %v766 = vpop.f32.mrf.mxu0
      %767 = vmatprep.mubr.bf16.mxu0 0
      %768 = vmatmul.mubr.bf16.gmra.mxu0 %v510
      %v769 = vpop.f32.mrf.mxu0
      %v770 = vadd.f32 %v250, %v769
      %v771 = vpop.f32.mrf.mxu0
      %v772 = vpop.f32.mrf.mxu0
      %v773 = vadd.f32 %v250, %v772
      %v774 = vpop.f32.mrf.mxu0
      %775 = vmatprep.mubr.bf16.mxu0 0
      %776 = vmatmul.mubr.bf16.gmra.mxu0 %v513
      %v777 = vpop.f32.mrf.mxu0
      %v778 = vadd.f32 %v250, %v777
      %v779 = vpop.f32.mrf.mxu0
      %v780 = vpop.f32.mrf.mxu0
      %v781 = vadd.f32 %v250, %v780
      %v782 = vpop.f32.mrf.mxu0
      %783 = vmatprep.mubr.bf16.mxu0 0
      %784 = vmatmul.mubr.bf16.gmra.mxu0 %v516
      %v785 = vpop.f32.mrf.mxu0
      %v786 = vadd.f32 %v250, %v785
      %v787 = vpop.f32.mrf.mxu0
      %v788 = vpop.f32.mrf.mxu0
      %v789 = vadd.f32 %v250, %v788
      %v790 = vpop.f32.mrf.mxu0
      %791 = vmatprep.mubr.bf16.mxu0 0
      %792 = vmatmul.mubr.bf16.gmra.mxu0 %v519
      %v793 = vpop.f32.mrf.mxu0
      %v794 = vadd.f32 %v250, %v793
      %v795 = vpop.f32.mrf.mxu0
      %v796 = vpop.f32.mrf.mxu0
      %v797 = vadd.f32 %v250, %v796
      %v798 = vpop.f32.mrf.mxu0
      %799 = vmatprep.mubr.bf16.mxu0 0
      %800 = vmatmul.mubr.bf16.gmra.mxu0 %v522
      %v801 = vpop.f32.mrf.mxu0
      %v802 = vadd.f32 %v250, %v801
      %v803 = vpop.f32.mrf.mxu0
      %v804 = vpop.f32.mrf.mxu0
      %v805 = vadd.f32 %v250, %v804
      %v806 = vpop.f32.mrf.mxu0
      %807 = vmatprep.mubr.bf16.mxu0 0
      %808 = vmatmul.mubr.bf16.gmra.mxu0 %v525
      %v809 = vpop.f32.mrf.mxu0
      %v810 = vadd.f32 %v250, %v809
      %v811 = vpop.f32.mrf.mxu0
      %v812 = vpop.f32.mrf.mxu0
      %v813 = vadd.f32 %v250, %v812
      %v814 = vpop.f32.mrf.mxu0
      %815 = vdwg.mxu0
      %v816 = vmax.f32 %v562, 0.0
      %v817 = vmax.f32 %v565, 0.0
      %v818 = vmax.f32 %v570, 0.0
      %v819 = vmax.f32 %v573, 0.0
      %v820 = vmax.f32 %v578, 0.0
      %v821 = vmax.f32 %v581, 0.0
      %v822 = vmax.f32 %v586, 0.0
      %v823 = vmax.f32 %v589, 0.0
      %v824 = vmax.f32 %v594, 0.0
      %v825 = vmax.f32 %v597, 0.0
      %v826 = vmax.f32 %v602, 0.0
      %v827 = vmax.f32 %v605, 0.0
      %v828 = vmax.f32 %v610, 0.0
      %v829 = vmax.f32 %v613, 0.0
      %v830 = vmax.f32 %v618, 0.0
      %v831 = vmax.f32 %v621, 0.0
      %v832 = vmax.f32 %v626, 0.0
      %v833 = vmax.f32 %v629, 0.0
      %v834 = vmax.f32 %v634, 0.0
      %v835 = vmax.f32 %v637, 0.0
      %v836 = vmax.f32 %v642, 0.0
      %v837 = vmax.f32 %v645, 0.0
      %v838 = vmax.f32 %v650, 0.0
      %v839 = vmax.f32 %v653, 0.0
      %v840 = vmax.f32 %v658, 0.0
      %v841 = vmax.f32 %v661, 0.0
      %v842 = vmax.f32 %v666, 0.0
      %v843 = vmax.f32 %v669, 0.0
      %v844 = vmax.f32 %v674, 0.0
      %v845 = vmax.f32 %v677, 0.0
      %v846 = vmax.f32 %v682, 0.0
      %v847 = vmax.f32 %v685, 0.0
      %v848 = vmax.f32 %v690, 0.0
      %v849 = vmax.f32 %v693, 0.0
      %v850 = vmax.f32 %v698, 0.0
      %v851 = vmax.f32 %v701, 0.0
      %v852 = vmax.f32 %v706, 0.0
      %v853 = vmax.f32 %v709, 0.0
      %v854 = vmax.f32 %v714, 0.0
      %v855 = vmax.f32 %v717, 0.0
      %v856 = vmax.f32 %v722, 0.0
      %v857 = vmax.f32 %v725, 0.0
      %v858 = vmax.f32 %v730, 0.0
      %v859 = vmax.f32 %v733, 0.0
      %v860 = vmax.f32 %v738, 0.0
      %v861 = vmax.f32 %v741, 0.0
      %v862 = vmax.f32 %v746, 0.0
      %v863 = vmax.f32 %v749, 0.0
      %v864 = vmax.f32 %v754, 0.0
      %v865 = vmax.f32 %v757, 0.0
      %v866 = vmax.f32 %v762, 0.0
      %v867 = vmax.f32 %v765, 0.0
      %v868 = vmax.f32 %v770, 0.0
      %v869 = vmax.f32 %v773, 0.0
      %v870 = vmax.f32 %v778, 0.0
      %v871 = vmax.f32 %v781, 0.0
      %v872 = vmax.f32 %v786, 0.0
      %v873 = vmax.f32 %v789, 0.0
      %v874 = vmax.f32 %v794, 0.0
      %v875 = vmax.f32 %v797, 0.0
      %v876 = vmax.f32 %v802, 0.0
      %v877 = vmax.f32 %v805, 0.0
      %v878 = vmax.f32 %v810, 0.0
      %v879 = vmax.f32 %v813, 0.0
      %v880 = vpack.c.bf16 %v817, %v816
      %v881 = vpack.c.bf16 %v819, %v818
      %v882 = vpack.c.bf16 %v821, %v820
      %v883 = vpack.c.bf16 %v823, %v822
      %v884 = vpack.c.bf16 %v825, %v824
      %v885 = vpack.c.bf16 %v827, %v826
      %v886 = vpack.c.bf16 %v829, %v828
      %v887 = vpack.c.bf16 %v831, %v830
      %v888 = vpack.c.bf16 %v833, %v832
      %v889 = vpack.c.bf16 %v835, %v834
      %v890 = vpack.c.bf16 %v837, %v836
      %v891 = vpack.c.bf16 %v839, %v838
      %v892 = vpack.c.bf16 %v841, %v840
      %v893 = vpack.c.bf16 %v843, %v842
      %v894 = vpack.c.bf16 %v845, %v844
      %v895 = vpack.c.bf16 %v847, %v846
      %v896 = vpack.c.bf16 %v849, %v848
      %v897 = vpack.c.bf16 %v851, %v850
      %v898 = vpack.c.bf16 %v853, %v852
      %v899 = vpack.c.bf16 %v855, %v854
      %v900 = vpack.c.bf16 %v857, %v856
      %v901 = vpack.c.bf16 %v859, %v858
      %v902 = vpack.c.bf16 %v861, %v860
      %v903 = vpack.c.bf16 %v863, %v862
      %v904 = vpack.c.bf16 %v865, %v864
      %v905 = vpack.c.bf16 %v867, %v866
      %v906 = vpack.c.bf16 %v869, %v868
      %v907 = vpack.c.bf16 %v871, %v870
      %v908 = vpack.c.bf16 %v873, %v872
      %v909 = vpack.c.bf16 %v875, %v874
      %v910 = vpack.c.bf16 %v877, %v876
      %v911 = vpack.c.bf16 %v879, %v878
      %v944 = vunpack.c.l.b16 %v880
      %v945 = vunpack.c.h.b16 %v880
      %v946 = vunpack.c.l.b16 %v881
      %v947 = vunpack.c.h.b16 %v881
      %v948 = vunpack.c.l.b16 %v882
      %v949 = vunpack.c.h.b16 %v882
      %v950 = vunpack.c.l.b16 %v883
      %v951 = vunpack.c.h.b16 %v883
      %v952 = vunpack.c.l.b16 %v884
      %v953 = vunpack.c.h.b16 %v884
      %v954 = vunpack.c.l.b16 %v885
      %v955 = vunpack.c.h.b16 %v885
      %v956 = vunpack.c.l.b16 %v886
      %v957 = vunpack.c.h.b16 %v886
      %v958 = vunpack.c.l.b16 %v887
      %v959 = vunpack.c.h.b16 %v887
      %v960 = vunpack.c.l.b16 %v888
      %v961 = vunpack.c.h.b16 %v888
      %v962 = vunpack.c.l.b16 %v889
      %v963 = vunpack.c.h.b16 %v889
      %v964 = vunpack.c.l.b16 %v890
      %v965 = vunpack.c.h.b16 %v890
      %v966 = vunpack.c.l.b16 %v891
      %v967 = vunpack.c.h.b16 %v891
      %v968 = vunpack.c.l.b16 %v892
      %v969 = vunpack.c.h.b16 %v892
      %v970 = vunpack.c.l.b16 %v893
      %v971 = vunpack.c.h.b16 %v893
      %v972 = vunpack.c.l.b16 %v894
      %v973 = vunpack.c.h.b16 %v894
      %v974 = vunpack.c.l.b16 %v895
      %v975 = vunpack.c.h.b16 %v895
      %v976 = vunpack.c.l.b16 %v896
      %v977 = vunpack.c.h.b16 %v896
      %v978 = vunpack.c.l.b16 %v897
      %v979 = vunpack.c.h.b16 %v897
      %v980 = vunpack.c.l.b16 %v898
      %v981 = vunpack.c.h.b16 %v898
      %v982 = vunpack.c.l.b16 %v899
      %v983 = vunpack.c.h.b16 %v899
      %v984 = vunpack.c.l.b16 %v900
      %v985 = vunpack.c.h.b16 %v900
      %v986 = vunpack.c.l.b16 %v901
      %v987 = vunpack.c.h.b16 %v901
      %v988 = vunpack.c.l.b16 %v902
      %v989 = vunpack.c.h.b16 %v902
      %v990 = vunpack.c.l.b16 %v903
      %v991 = vunpack.c.h.b16 %v903
      %v992 = vunpack.c.l.b16 %v904
      %v993 = vunpack.c.h.b16 %v904
      %v994 = vunpack.c.l.b16 %v905
      %v995 = vunpack.c.h.b16 %v905
      %v996 = vunpack.c.l.b16 %v906
      %v997 = vunpack.c.h.b16 %v906
      %v998 = vunpack.c.l.b16 %v907
      %v999 = vunpack.c.h.b16 %v907
      %v1000 = vunpack.c.l.b16 %v908
      %v1001 = vunpack.c.h.b16 %v908
      %v1002 = vunpack.c.l.b16 %v909
      %v1003 = vunpack.c.h.b16 %v909
      %v1004 = vunpack.c.l.b16 %v910
      %v1005 = vunpack.c.h.b16 %v910
      %v1006 = vunpack.c.l.b16 %v911
      %v1007 = vunpack.c.h.b16 %v911
      %v1008 = vpack.c.b16 %v944, %v944
      %v1009 = vpack.c.b16 %v945, %v945
      %v1010 = vpack.c.b16 %v946, %v946
      %v1011 = vpack.c.b16 %v947, %v947
      %v1012 = vpack.c.b16 %v948, %v948
      %v1013 = vpack.c.b16 %v949, %v949
      %v1014 = vpack.c.b16 %v950, %v950
      %v1015 = vpack.c.b16 %v951, %v951
      %v1016 = vpack.c.b16 %v952, %v952
      %v1017 = vpack.c.b16 %v953, %v953
      %v1018 = vpack.c.b16 %v954, %v954
      %v1019 = vpack.c.b16 %v955, %v955
      %v1020 = vpack.c.b16 %v956, %v956
      %v1021 = vpack.c.b16 %v957, %v957
      %v1022 = vpack.c.b16 %v958, %v958
      %v1023 = vpack.c.b16 %v959, %v959
      %v1024 = vpack.c.b16 %v960, %v960
      %v1025 = vpack.c.b16 %v961, %v961
      %v1026 = vpack.c.b16 %v962, %v962
      %v1027 = vpack.c.b16 %v963, %v963
      %v1028 = vpack.c.b16 %v964, %v964
      %v1029 = vpack.c.b16 %v965, %v965
      %v1030 = vpack.c.b16 %v966, %v966
      %v1031 = vpack.c.b16 %v967, %v967
      %v1032 = vpack.c.b16 %v968, %v968
      %v1033 = vpack.c.b16 %v969, %v969
      %v1034 = vpack.c.b16 %v970, %v970
      %v1035 = vpack.c.b16 %v971, %v971
      %v1036 = vpack.c.b16 %v972, %v972
      %v1037 = vpack.c.b16 %v973, %v973
      %v1038 = vpack.c.b16 %v974, %v974
      %v1039 = vpack.c.b16 %v975, %v975
      %v1040 = vpack.c.b16 %v976, %v976
      %v1041 = vpack.c.b16 %v977, %v977
      %v1042 = vpack.c.b16 %v978, %v978
      %v1043 = vpack.c.b16 %v979, %v979
      %v1044 = vpack.c.b16 %v980, %v980
      %v1045 = vpack.c.b16 %v981, %v981
      %v1046 = vpack.c.b16 %v982, %v982
      %v1047 = vpack.c.b16 %v983, %v983
      %v1048 = vpack.c.b16 %v984, %v984
      %v1049 = vpack.c.b16 %v985, %v985
      %v1050 = vpack.c.b16 %v986, %v986
      %v1051 = vpack.c.b16 %v987, %v987
      %v1052 = vpack.c.b16 %v988, %v988
      %v1053 = vpack.c.b16 %v989, %v989
      %v1054 = vpack.c.b16 %v990, %v990
      %v1055 = vpack.c.b16 %v991, %v991
      %v1056 = vpack.c.b16 %v992, %v992
      %v1057 = vpack.c.b16 %v993, %v993
      %v1058 = vpack.c.b16 %v994, %v994
      %v1059 = vpack.c.b16 %v995, %v995
      %v1060 = vpack.c.b16 %v996, %v996
      %v1061 = vpack.c.b16 %v997, %v997
      %v1062 = vpack.c.b16 %v998, %v998
      %v1063 = vpack.c.b16 %v999, %v999
      %v1064 = vpack.c.b16 %v1000, %v1000
      %v1065 = vpack.c.b16 %v1001, %v1001
      %v1066 = vpack.c.b16 %v1002, %v1002
      %v1067 = vpack.c.b16 %v1003, %v1003
      %v1068 = vpack.c.b16 %v1004, %v1004
      %v1069 = vpack.c.b16 %v1005, %v1005
      %v1070 = vpack.c.b16 %v1006, %v1006
      %v1071 = vpack.c.b16 %v1007, %v1007
      %1136 = vst [vmem:[%s172] sm:$0xf] %v1008
      %1137 = vst [vmem:[%s172 + $0x4] sm:$0xf] %v1009
      %1138 = vst [vmem:[%s172 + $0x8] sm:$0xf] %v1010
      %1139 = vst [vmem:[%s172 + $0xc] sm:$0xf] %v1011
      %1140 = vst [vmem:[%s172 + $0x10] sm:$0xf] %v1012
      %1141 = vst [vmem:[%s172 + $0x14] sm:$0xf] %v1013
      %1142 = vst [vmem:[%s172 + $0x18] sm:$0xf] %v1014
      %1143 = vst [vmem:[%s172 + $0x1c] sm:$0xf] %v1015
      %1144 = vst [vmem:[%s172 + $0x20] sm:$0xf] %v1016
      %1145 = vst [vmem:[%s172 + $0x24] sm:$0xf] %v1017
      %1146 = vst [vmem:[%s172 + $0x28] sm:$0xf] %v1018
      %1147 = vst [vmem:[%s172 + $0x2c] sm:$0xf] %v1019
      %1148 = vst [vmem:[%s172 + $0x30] sm:$0xf] %v1020
      %1149 = vst [vmem:[%s172 + $0x34] sm:$0xf] %v1021
      %1150 = vst [vmem:[%s172 + $0x38] sm:$0xf] %v1022
      %1151 = vst [vmem:[%s172 + $0x3c] sm:$0xf] %v1023
      %1152 = vst [vmem:[%s172 + $0x40] sm:$0xf] %v1024
      %1153 = vst [vmem:[%s172 + $0x44] sm:$0xf] %v1025
      %1154 = vst [vmem:[%s172 + $0x48] sm:$0xf] %v1026
      %1155 = vst [vmem:[%s172 + $0x4c] sm:$0xf] %v1027
      %1156 = vst [vmem:[%s172 + $0x50] sm:$0xf] %v1028
      %1157 = vst [vmem:[%s172 + $0x54] sm:$0xf] %v1029
      %1158 = vst [vmem:[%s172 + $0x58] sm:$0xf] %v1030
      %1159 = vst [vmem:[%s172 + $0x5c] sm:$0xf] %v1031
      %1160 = vst [vmem:[%s172 + $0x60] sm:$0xf] %v1032
      %1161 = vst [vmem:[%s172 + $0x64] sm:$0xf] %v1033
      %1162 = vst [vmem:[%s172 + $0x68] sm:$0xf] %v1034
      %1163 = vst [vmem:[%s172 + $0x6c] sm:$0xf] %v1035
      %1164 = vst [vmem:[%s172 + $0x70] sm:$0xf] %v1036
      %1165 = vst [vmem:[%s172 + $0x74] sm:$0xf] %v1037
      %1166 = vst [vmem:[%s172 + $0x78] sm:$0xf] %v1038
      %1167 = vst [vmem:[%s172 + $0x7c] sm:$0xf] %v1039
      %1168 = vst [vmem:[%s172 + $0x80] sm:$0xf] %v1040
      %1169 = vst [vmem:[%s172 + $0x84] sm:$0xf] %v1041
      %1170 = vst [vmem:[%s172 + $0x88] sm:$0xf] %v1042
      %1171 = vst [vmem:[%s172 + $0x8c] sm:$0xf] %v1043
      %1172 = vst [vmem:[%s172 + $0x90] sm:$0xf] %v1044
      %1173 = vst [vmem:[%s172 + $0x94] sm:$0xf] %v1045
      %1174 = vst [vmem:[%s172 + $0x98] sm:$0xf] %v1046
      %1175 = vst [vmem:[%s172 + $0x9c] sm:$0xf] %v1047
      %1176 = vst [vmem:[%s172 + $0xa0] sm:$0xf] %v1048
      %1177 = vst [vmem:[%s172 + $0xa4] sm:$0xf] %v1049
      %1178 = vst [vmem:[%s172 + $0xa8] sm:$0xf] %v1050
      %1179 = vst [vmem:[%s172 + $0xac] sm:$0xf] %v1051
      %1180 = vst [vmem:[%s172 + $0xb0] sm:$0xf] %v1052
      %1181 = vst [vmem:[%s172 + $0xb4] sm:$0xf] %v1053
      %1182 = vst [vmem:[%s172 + $0xb8] sm:$0xf] %v1054
      %1183 = vst [vmem:[%s172 + $0xbc] sm:$0xf] %v1055
      %1184 = vst [vmem:[%s172 + $0xc0] sm:$0xf] %v1056
      %1185 = vst [vmem:[%s172 + $0xc4] sm:$0xf] %v1057
      %1186 = vst [vmem:[%s172 + $0xc8] sm:$0xf] %v1058
      %1187 = vst [vmem:[%s172 + $0xcc] sm:$0xf] %v1059
      %1188 = vst [vmem:[%s172 + $0xd0] sm:$0xf] %v1060
      %1189 = vst [vmem:[%s172 + $0xd4] sm:$0xf] %v1061
      %1190 = vst [vmem:[%s172 + $0xd8] sm:$0xf] %v1062
      %1191 = vst [vmem:[%s172 + $0xdc] sm:$0xf] %v1063
      %1192 = vst [vmem:[%s172 + $0xe0] sm:$0xf] %v1064
      %1193 = vst [vmem:[%s172 + $0xe4] sm:$0xf] %v1065
      %1194 = vst [vmem:[%s172 + $0xe8] sm:$0xf] %v1066
      %1195 = vst [vmem:[%s172 + $0xec] sm:$0xf] %v1067
      %1196 = vst [vmem:[%s172 + $0xf0] sm:$0xf] %v1068
      %1197 = vst [vmem:[%s172 + $0xf4] sm:$0xf] %v1069
      %1198 = vst [vmem:[%s172 + $0xf8] sm:$0xf] %v1070
      %1199 = vst [vmem:[%s172 + $0xfc] sm:$0xf] %v1071
      %s1200 = smul.u32 64, %s14
      %p1201 = scmp.lt.s32.totalorder %s1200, 255
      %s1202 = scalar_select %p1201, %s1200, 255
      %s1203 = smul.addr %s1202, 4
      %s1204 = scalar_lea.vmem %s3, %s1203
      // Predicated region
      $region33: #{model_forward.9} parent=31 // pred_check
        %p1205 = pneg %p100
      $region34: #{model_forward.9} parent=31 // pred_check_branch
        %1207 = sbr.rel (%p1205) target = $region36
      $region35: #{model_forward.9} parent=31 // pred_region
        %s1208 = smul.u32 64, %s14
      $region36: #{model_forward.9} parent=31 // pred_fallthru
        _
    $region32: #{model_forward.9} parent=5 // pred_fallthru
      _
    %p1209 = scmp.le.s32.totalorder 2, %s9
    // Predicated region
    $region37: #{model_forward.9} parent=5 // pred_check
      %p1210 = pneg %p1209
    $region38: #{model_forward.9} parent=5 // pred_check_branch
      %1212 = sbr.rel (%p1210) target = $region40
    $region39: #{model_forward.9} parent=5 // pred_region
      %s1213 = ssub.s32 %s9, 2
      // Predicated region
      $region41: #{model_forward.9} parent=39 // pred_check
        %p1214 = pneg %p106
      $region42: #{model_forward.9} parent=39 // pred_check_branch
        %1216 = sbr.rel (%p1214) target = $region44
      $region43: #{model_forward.9} parent=39 // pred_region
        %s1217 = smul.u32 64, %s15
        %p1218 = scmp.lt.s32.totalorder %s1217, 255
        %s1219 = scalar_select %p1218, %s1217, 255
        %s1220 = smul.addr %s1219, 4
        %s1221 = scalar_lea.vmem %s3, %s1220
      $region44: #{model_forward.9} parent=39 // pred_fallthru
        _
    $region40: #{model_forward.9} parent=5 // pred_fallthru
      _
  $region6: #{model_forward.9} parent=0 // loop_footer
    %s13 = sadd.s32 1, %s9
  $region7: #{model_forward.9} parent=0 // loop_footer_branch
    %8 = sbr.rel target = $region3
  $region8: #{model_forward.9} parent=0 // loop_exit
    _

// kernel: model_forward.10
$region0: #{model_forward.10}
  #allocation0 [shape = 'u32[]', space=smem, size = 0x4, offset = 0x4, fixed_abs, tag = 'smem constant byte address 0x4 - core index']
  #allocation1 [shape = 'u32[144,128]{1,0:T(1,128)}', space=vmem, size = 0x12000, scoped, tag = 'internal scratch']
  %s0 = inlined_call_operand.vmem [shape: bf16[512,512], index: 0, kind: input, shape index: {}]
  %s1 = inlined_call_operand.vmem [shape: bf16[512,128], index: 1, kind: input, shape index: {}]
  %s2 = inlined_call_operand.vmem [shape: f32[1,128], index: 2, kind: input, shape index: {}]
  %s3 = inlined_call_operand.vmem [shape: bf16[512,128], index: 3, kind: output, shape index: {}]
  %s4 = sld [smem:[#allocation0]]
  $region22: #{model_forward.10} parent=0
    _
  %s6 = ssub.s32 1, %s4
  %s7 = scalar_select 0, %s6, %s4
  // Predicated region
  $region2: #{model_forward.10} parent=0 // pred_check
    _
  $region3: #{model_forward.10} parent=0 // pred_check_branch
    %9 = sbr.rel (0) target = $region5
  $region4: #{model_forward.10} parent=0 // pred_region
    _
  $region5: #{model_forward.10} parent=0 // pred_fallthru
    _
  // Predicated region
  $region6: #{model_forward.10} parent=0 // pred_check
    _
  $region7: #{model_forward.10} parent=0 // pred_check_branch
    %11 = sbr.rel (0) target = $region9
  $region8: #{model_forward.10} parent=0 // pred_region
    _
  $region9: #{model_forward.10} parent=0 // pred_fallthru
    _
  // Predicated region
  $region10: #{model_forward.10} parent=0 // pred_check
    _
  $region11: #{model_forward.10} parent=0 // pred_check_branch
    %13 = sbr.rel (0) target = $region13
  $region12: #{model_forward.10} parent=0 // pred_region
    _
  $region13: #{model_forward.10} parent=0 // pred_fallthru
    _
  %v15 = vld [vmem:[%s0] sm:$0xff]
  %v16 = vld [vmem:[%s0 + $0x8] sm:$0xff]
  %v17 = vld [vmem:[%s0 + $0x10] sm:$0xff]
  %v18 = vld [vmem:[%s0 + $0x18] sm:$0xff]
  %v19 = vld [vmem:[%s0 + $0x20] sm:$0xff]
  %v20 = vld [vmem:[%s0 + $0x28] sm:$0xff]
  %v21 = vld [vmem:[%s0 + $0x30] sm:$0xff]
  %v22 = vld [vmem:[%s0 + $0x38] sm:$0xff]
  %v23 = vld [vmem:[%s0 + $0x40] sm:$0xff]
  %v24 = vld [vmem:[%s0 + $0x48] sm:$0xff]
  %v25 = vld [vmem:[%s0 + $0x50] sm:$0xff]
  %v26 = vld [vmem:[%s0 + $0x58] sm:$0xff]
  %v27 = vld [vmem:[%s0 + $0x60] sm:$0xff]
  %v28 = vld [vmem:[%s0 + $0x68] sm:$0xff]
  %v29 = vld [vmem:[%s0 + $0x70] sm:$0xff]
  %v30 = vld [vmem:[%s0 + $0x78] sm:$0xff]
  %v31 = vld [vmem:[%s0 + $0x80] sm:$0xff]
  %v32 = vld [vmem:[%s0 + $0x88] sm:$0xff]
  %v33 = vld [vmem:[%s0 + $0x90] sm:$0xff]
  %v34 = vld [vmem:[%s0 + $0x98] sm:$0xff]
  %v35 = vld [vmem:[%s0 + $0xa0] sm:$0xff]
  %v36 = vld [vmem:[%s0 + $0xa8] sm:$0xff]
  %v37 = vld [vmem:[%s0 + $0xb0] sm:$0xff]
  %v38 = vld [vmem:[%s0 + $0xb8] sm:$0xff]
  %v39 = vld [vmem:[%s0 + $0xc0] sm:$0xff]
  %v40 = vld [vmem:[%s0 + $0xc8] sm:$0xff]
  %v41 = vld [vmem:[%s0 + $0xd0] sm:$0xff]
  %v42 = vld [vmem:[%s0 + $0xd8] sm:$0xff]
  %v43 = vld [vmem:[%s0 + $0xe0] sm:$0xff]
  %v44 = vld [vmem:[%s0 + $0xe8] sm:$0xff]
  %v45 = vld [vmem:[%s0 + $0xf0] sm:$0xff]
  %v46 = vld [vmem:[%s0 + $0xf8] sm:$0xff]
  %v47 = vld [vmem:[%s0 + $0x100] sm:$0xff]
  %v48 = vld [vmem:[%s0 + $0x108] sm:$0xff]
  %v49 = vld [vmem:[%s0 + $0x110] sm:$0xff]
  %v50 = vld [vmem:[%s0 + $0x118] sm:$0xff]
  %v51 = vld [vmem:[%s0 + $0x120] sm:$0xff]
  %v52 = vld [vmem:[%s0 + $0x128] sm:$0xff]
  %v53 = vld [vmem:[%s0 + $0x130] sm:$0xff]
  %v54 = vld [vmem:[%s0 + $0x138] sm:$0xff]
  %v55 = vld [vmem:[%s0 + $0x140] sm:$0xff]
  %v56 = vld [vmem:[%s0 + $0x148] sm:$0xff]
  %v57 = vld [vmem:[%s0 + $0x150] sm:$0xff]
  %v58 = vld [vmem:[%s0 + $0x158] sm:$0xff]
  %v59 = vld [vmem:[%s0 + $0x160] sm:$0xff]
  %v60 = vld [vmem:[%s0 + $0x168] sm:$0xff]
  %v61 = vld [vmem:[%s0 + $0x170] sm:$0xff]
  %v62 = vld [vmem:[%s0 + $0x178] sm:$0xff]
  %v63 = vld [vmem:[%s0 + $0x180] sm:$0xff]
  %v64 = vld [vmem:[%s0 + $0x188] sm:$0xff]
  %v65 = vld [vmem:[%s0 + $0x190] sm:$0xff]
  %v66 = vld [vmem:[%s0 + $0x198] sm:$0xff]
  %v67 = vld [vmem:[%s0 + $0x1a0] sm:$0xff]
  %v68 = vld [vmem:[%s0 + $0x1a8] sm:$0xff]
  %v69 = vld [vmem:[%s0 + $0x1b0] sm:$0xff]
  %v70 = vld [vmem:[%s0 + $0x1b8] sm:$0xff]
  %v71 = vld [vmem:[%s0 + $0x1c0] sm:$0xff]
  %v72 = vld [vmem:[%s0 + $0x1c8] sm:$0xff]
  %v73 = vld [vmem:[%s0 + $0x1d0] sm:$0xff]
  %v74 = vld [vmem:[%s0 + $0x1d8] sm:$0xff]
  %v75 = vld [vmem:[%s0 + $0x1e0] sm:$0xff]
  %v76 = vld [vmem:[%s0 + $0x1e8] sm:$0xff]
  %v77 = vld [vmem:[%s0 + $0x1f0] sm:$0xff]
  %v78 = vld [vmem:[%s0 + $0x1f8] sm:$0xff]
  %v79 = vld [vmem:[%s0 + $0x200] sm:$0xff]
  %v80 = vld [vmem:[%s0 + $0x208] sm:$0xff]
  %v81 = vld [vmem:[%s0 + $0x210] sm:$0xff]
  %v82 = vld [vmem:[%s0 + $0x218] sm:$0xff]
  %v83 = vld [vmem:[%s0 + $0x220] sm:$0xff]
  %v84 = vld [vmem:[%s0 + $0x228] sm:$0xff]
  %v85 = vld [vmem:[%s0 + $0x230] sm:$0xff]
  %v86 = vld [vmem:[%s0 + $0x238] sm:$0xff]
  %v87 = vld [vmem:[%s0 + $0x240] sm:$0xff]
  %v88 = vld [vmem:[%s0 + $0x248] sm:$0xff]
  %v89 = vld [vmem:[%s0 + $0x250] sm:$0xff]
  %v90 = vld [vmem:[%s0 + $0x258] sm:$0xff]
  %v91 = vld [vmem:[%s0 + $0x260] sm:$0xff]
  %v92 = vld [vmem:[%s0 + $0x268] sm:$0xff]
  %v93 = vld [vmem:[%s0 + $0x270] sm:$0xff]
  %v94 = vld [vmem:[%s0 + $0x278] sm:$0xff]
  %v95 = vld [vmem:[%s0 + $0x280] sm:$0xff]
  %v96 = vld [vmem:[%s0 + $0x288] sm:$0xff]
  %v97 = vld [vmem:[%s0 + $0x290] sm:$0xff]
  %v98 = vld [vmem:[%s0 + $0x298] sm:$0xff]
  %v99 = vld [vmem:[%s0 + $0x2a0] sm:$0xff]
  %v100 = vld [vmem:[%s0 + $0x2a8] sm:$0xff]
  %v101 = vld [vmem:[%s0 + $0x2b0] sm:$0xff]
  %v102 = vld [vmem:[%s0 + $0x2b8] sm:$0xff]
  %v103 = vld [vmem:[%s0 + $0x2c0] sm:$0xff]
  %v104 = vld [vmem:[%s0 + $0x2c8] sm:$0xff]
  %v105 = vld [vmem:[%s0 + $0x2d0] sm:$0xff]
  %v106 = vld [vmem:[%s0 + $0x2d8] sm:$0xff]
  %v107 = vld [vmem:[%s0 + $0x2e0] sm:$0xff]
  %v108 = vld [vmem:[%s0 + $0x2e8] sm:$0xff]
  %v109 = vld [vmem:[%s0 + $0x2f0] sm:$0xff]
  %v110 = vld [vmem:[%s0 + $0x2f8] sm:$0xff]
  %v111 = vld [vmem:[%s0 + $0x300] sm:$0xff]
  %v112 = vld [vmem:[%s0 + $0x308] sm:$0xff]
  %v113 = vld [vmem:[%s0 + $0x310] sm:$0xff]
  %v114 = vld [vmem:[%s0 + $0x318] sm:$0xff]
  %v115 = vld [vmem:[%s0 + $0x320] sm:$0xff]
  %v116 = vld [vmem:[%s0 + $0x328] sm:$0xff]
  %v117 = vld [vmem:[%s0 + $0x330] sm:$0xff]
  %v118 = vld [vmem:[%s0 + $0x338] sm:$0xff]
  %v119 = vld [vmem:[%s0 + $0x340] sm:$0xff]
  %v120 = vld [vmem:[%s0 + $0x348] sm:$0xff]
  %v121 = vld [vmem:[%s0 + $0x350] sm:$0xff]
  %v122 = vld [vmem:[%s0 + $0x358] sm:$0xff]
  %v123 = vld [vmem:[%s0 + $0x360] sm:$0xff]
  %v124 = vld [vmem:[%s0 + $0x368] sm:$0xff]
  %v125 = vld [vmem:[%s0 + $0x370] sm:$0xff]
  %v126 = vld [vmem:[%s0 + $0x378] sm:$0xff]
  %v127 = vld [vmem:[%s0 + $0x380] sm:$0xff]
  %v128 = vld [vmem:[%s0 + $0x388] sm:$0xff]
  %v129 = vld [vmem:[%s0 + $0x390] sm:$0xff]
  %v130 = vld [vmem:[%s0 + $0x398] sm:$0xff]
  %v131 = vld [vmem:[%s0 + $0x3a0] sm:$0xff]
  %v132 = vld [vmem:[%s0 + $0x3a8] sm:$0xff]
  %v133 = vld [vmem:[%s0 + $0x3b0] sm:$0xff]
  %v134 = vld [vmem:[%s0 + $0x3b8] sm:$0xff]
  %v135 = vld [vmem:[%s0 + $0x3c0] sm:$0xff]
  %v136 = vld [vmem:[%s0 + $0x3c8] sm:$0xff]
  %v137 = vld [vmem:[%s0 + $0x3d0] sm:$0xff]
  %v138 = vld [vmem:[%s0 + $0x3d8] sm:$0xff]
  %v139 = vld [vmem:[%s0 + $0x3e0] sm:$0xff]
  %v140 = vld [vmem:[%s0 + $0x3e8] sm:$0xff]
  %v141 = vld [vmem:[%s0 + $0x3f0] sm:$0xff]
  %v142 = vld [vmem:[%s0 + $0x3f8] sm:$0xff]
  %v143 = vld [vmem:[%s1] sm:$0xf]
  %v144 = vld [vmem:[%s1 + $0x4] sm:$0xf]
  %v145 = vld [vmem:[%s1 + $0x8] sm:$0xf]
  %v146 = vld [vmem:[%s1 + $0xc] sm:$0xf]
  %v147 = vld [vmem:[%s1 + $0x10] sm:$0xf]
  %v148 = vld [vmem:[%s1 + $0x14] sm:$0xf]
  %v149 = vld [vmem:[%s1 + $0x18] sm:$0xf]
  %v150 = vld [vmem:[%s1 + $0x1c] sm:$0xf]
  %v151 = vld [vmem:[%s1 + $0x20] sm:$0xf]
  %v152 = vld [vmem:[%s1 + $0x24] sm:$0xf]
  %v153 = vld [vmem:[%s1 + $0x28] sm:$0xf]
  %v154 = vld [vmem:[%s1 + $0x2c] sm:$0xf]
  %v155 = vld [vmem:[%s1 + $0x30] sm:$0xf]
  %v156 = vld [vmem:[%s1 + $0x34] sm:$0xf]
  %v157 = vld [vmem:[%s1 + $0x38] sm:$0xf]
  %v158 = vld [vmem:[%s1 + $0x3c] sm:$0xf]
  %v159 = vld [vmem:[%s1 + $0x40] sm:$0xf]
  %v160 = vld [vmem:[%s1 + $0x44] sm:$0xf]
  %v161 = vld [vmem:[%s1 + $0x48] sm:$0xf]
  %v162 = vld [vmem:[%s1 + $0x4c] sm:$0xf]
  %v163 = vld [vmem:[%s1 + $0x50] sm:$0xf]
  %v164 = vld [vmem:[%s1 + $0x54] sm:$0xf]
  %v165 = vld [vmem:[%s1 + $0x58] sm:$0xf]
  %v166 = vld [vmem:[%s1 + $0x5c] sm:$0xf]
  %v167 = vld [vmem:[%s1 + $0x60] sm:$0xf]
  %v168 = vld [vmem:[%s1 + $0x64] sm:$0xf]
  %v169 = vld [vmem:[%s1 + $0x68] sm:$0xf]
  %v170 = vld [vmem:[%s1 + $0x6c] sm:$0xf]
  %v171 = vld [vmem:[%s1 + $0x70] sm:$0xf]
  %v172 = vld [vmem:[%s1 + $0x74] sm:$0xf]
  %v173 = vld [vmem:[%s1 + $0x78] sm:$0xf]
  %v174 = vld [vmem:[%s1 + $0x7c] sm:$0xf]
  %v175 = vld [vmem:[%s1 + $0x80] sm:$0xf]
  %v176 = vld [vmem:[%s1 + $0x84] sm:$0xf]
  %v177 = vld [vmem:[%s1 + $0x88] sm:$0xf]
  %v178 = vld [vmem:[%s1 + $0x8c] sm:$0xf]
  %v179 = vld [vmem:[%s1 + $0x90] sm:$0xf]
  %v180 = vld [vmem:[%s1 + $0x94] sm:$0xf]
  %v181 = vld [vmem:[%s1 + $0x98] sm:$0xf]
  %v182 = vld [vmem:[%s1 + $0x9c] sm:$0xf]
  %v183 = vld [vmem:[%s1 + $0xa0] sm:$0xf]
  %v184 = vld [vmem:[%s1 + $0xa4] sm:$0xf]
  %v185 = vld [vmem:[%s1 + $0xa8] sm:$0xf]
  %v186 = vld [vmem:[%s1 + $0xac] sm:$0xf]
  %v187 = vld [vmem:[%s1 + $0xb0] sm:$0xf]
  %v188 = vld [vmem:[%s1 + $0xb4] sm:$0xf]
  %v189 = vld [vmem:[%s1 + $0xb8] sm:$0xf]
  %v190 = vld [vmem:[%s1 + $0xbc] sm:$0xf]
  %v191 = vld [vmem:[%s1 + $0xc0] sm:$0xf]
  %v192 = vld [vmem:[%s1 + $0xc4] sm:$0xf]
  %v193 = vld [vmem:[%s1 + $0xc8] sm:$0xf]
  %v194 = vld [vmem:[%s1 + $0xcc] sm:$0xf]
  %v195 = vld [vmem:[%s1 + $0xd0] sm:$0xf]
  %v196 = vld [vmem:[%s1 + $0xd4] sm:$0xf]
  %v197 = vld [vmem:[%s1 + $0xd8] sm:$0xf]
  %v198 = vld [vmem:[%s1 + $0xdc] sm:$0xf]
  %v199 = vld [vmem:[%s1 + $0xe0] sm:$0xf]
  %v200 = vld [vmem:[%s1 + $0xe4] sm:$0xf]
  %v201 = vld [vmem:[%s1 + $0xe8] sm:$0xf]
  %v202 = vld [vmem:[%s1 + $0xec] sm:$0xf]
  %v203 = vld [vmem:[%s1 + $0xf0] sm:$0xf]
  %v204 = vld [vmem:[%s1 + $0xf4] sm:$0xf]
  %v205 = vld [vmem:[%s1 + $0xf8] sm:$0xf]
  %v206 = vld [vmem:[%s1 + $0xfc] sm:$0xf]
  %v207 = vld [vmem:[%s2] sm:$0x1]
  %v209 = vlaneseq
  %v210 = vshrl.u32 %v209, 7
  %v211 = vsub.s32 0, %v210
  %v212 = vrot.slane %v207, %v211
  %v342 = vunpack.c.l.b16 %v15
  %v343 = vunpack.c.h.b16 %v15
  %v344 = vunpack.c.l.b16 %v16
  %v345 = vunpack.c.h.b16 %v16
  %v346 = vunpack.c.l.b16 %v17
  %v347 = vunpack.c.h.b16 %v17
  %v348 = vunpack.c.l.b16 %v18
  %v349 = vunpack.c.h.b16 %v18
  %v350 = vunpack.c.l.b16 %v19
  %v351 = vunpack.c.h.b16 %v19
  %v352 = vunpack.c.l.b16 %v20
  %v353 = vunpack.c.h.b16 %v20
  %v354 = vunpack.c.l.b16 %v21
  %v355 = vunpack.c.h.b16 %v21
  %v356 = vunpack.c.l.b16 %v22
  %v357 = vunpack.c.h.b16 %v22
  %v358 = vunpack.c.l.b16 %v23
  %v359 = vunpack.c.h.b16 %v23
  %v360 = vunpack.c.l.b16 %v24
  %v361 = vunpack.c.h.b16 %v24
  %v362 = vunpack.c.l.b16 %v25
  %v363 = vunpack.c.h.b16 %v25
  %v364 = vunpack.c.l.b16 %v26
  %v365 = vunpack.c.h.b16 %v26
  %v366 = vunpack.c.l.b16 %v27
  %v367 = vunpack.c.h.b16 %v27
  %v368 = vunpack.c.l.b16 %v28
  %v369 = vunpack.c.h.b16 %v28
  %v370 = vunpack.c.l.b16 %v29
  %v371 = vunpack.c.h.b16 %v29
  %v372 = vunpack.c.l.b16 %v30
  %v373 = vunpack.c.h.b16 %v30
  %v374 = vunpack.c.l.b16 %v31
  %v375 = vunpack.c.h.b16 %v31
  %v376 = vunpack.c.l.b16 %v32
  %v377 = vunpack.c.h.b16 %v32
  %v378 = vunpack.c.l.b16 %v33
  %v379 = vunpack.c.h.b16 %v33
  %v380 = vunpack.c.l.b16 %v34
  %v381 = vunpack.c.h.b16 %v34
  %v382 = vunpack.c.l.b16 %v35
  %v383 = vunpack.c.h.b16 %v35
  %v384 = vunpack.c.l.b16 %v36
  %v385 = vunpack.c.h.b16 %v36
  %v386 = vunpack.c.l.b16 %v37
  %v387 = vunpack.c.h.b16 %v37
  %v388 = vunpack.c.l.b16 %v38
  %v389 = vunpack.c.h.b16 %v38
  %v390 = vunpack.c.l.b16 %v39
  %v391 = vunpack.c.h.b16 %v39
  %v392 = vunpack.c.l.b16 %v40
  %v393 = vunpack.c.h.b16 %v40
  %v394 = vunpack.c.l.b16 %v41
  %v395 = vunpack.c.h.b16 %v41
  %v396 = vunpack.c.l.b16 %v42
  %v397 = vunpack.c.h.b16 %v42
  %v398 = vunpack.c.l.b16 %v43
  %v399 = vunpack.c.h.b16 %v43
  %v400 = vunpack.c.l.b16 %v44
  %v401 = vunpack.c.h.b16 %v44
  %v402 = vunpack.c.l.b16 %v45
  %v403 = vunpack.c.h.b16 %v45
  %v404 = vunpack.c.l.b16 %v46
  %v405 = vunpack.c.h.b16 %v46
  %v406 = vunpack.c.l.b16 %v47
  %v407 = vunpack.c.h.b16 %v47
  %v408 = vunpack.c.l.b16 %v48
  %v409 = vunpack.c.h.b16 %v48
  %v410 = vunpack.c.l.b16 %v49
  %v411 = vunpack.c.h.b16 %v49
  %v412 = vunpack.c.l.b16 %v50
  %v413 = vunpack.c.h.b16 %v50
  %v414 = vunpack.c.l.b16 %v51
  %v415 = vunpack.c.h.b16 %v51
  %v416 = vunpack.c.l.b16 %v52
  %v417 = vunpack.c.h.b16 %v52
  %v418 = vunpack.c.l.b16 %v53
  %v419 = vunpack.c.h.b16 %v53
  %v420 = vunpack.c.l.b16 %v54
  %v421 = vunpack.c.h.b16 %v54
  %v422 = vunpack.c.l.b16 %v55
  %v423 = vunpack.c.h.b16 %v55
  %v424 = vunpack.c.l.b16 %v56
  %v425 = vunpack.c.h.b16 %v56
  %v426 = vunpack.c.l.b16 %v57
  %v427 = vunpack.c.h.b16 %v57
  %v428 = vunpack.c.l.b16 %v58
  %v429 = vunpack.c.h.b16 %v58
  %v430 = vunpack.c.l.b16 %v59
  %v431 = vunpack.c.h.b16 %v59
  %v432 = vunpack.c.l.b16 %v60
  %v433 = vunpack.c.h.b16 %v60
  %v434 = vunpack.c.l.b16 %v61
  %v435 = vunpack.c.h.b16 %v61
  %v436 = vunpack.c.l.b16 %v62
  %v437 = vunpack.c.h.b16 %v62
  %v438 = vunpack.c.l.b16 %v63
  %v439 = vunpack.c.h.b16 %v63
  %v440 = vunpack.c.l.b16 %v64
  %v441 = vunpack.c.h.b16 %v64
  %v442 = vunpack.c.l.b16 %v65
  %v443 = vunpack.c.h.b16 %v65
  %v444 = vunpack.c.l.b16 %v66
  %v445 = vunpack.c.h.b16 %v66
  %v446 = vunpack.c.l.b16 %v67
  %v447 = vunpack.c.h.b16 %v67
  %v448 = vunpack.c.l.b16 %v68
  %v449 = vunpack.c.h.b16 %v68
  %v450 = vunpack.c.l.b16 %v69
  %v451 = vunpack.c.h.b16 %v69
  %v452 = vunpack.c.l.b16 %v70
  %v453 = vunpack.c.h.b16 %v70
  %v454 = vunpack.c.l.b16 %v71
  %v455 = vunpack.c.h.b16 %v71
  %v456 = vunpack.c.l.b16 %v72
  %v457 = vunpack.c.h.b16 %v72
  %v458 = vunpack.c.l.b16 %v73
  %v459 = vunpack.c.h.b16 %v73
  %v460 = vunpack.c.l.b16 %v74
  %v461 = vunpack.c.h.b16 %v74
  %v462 = vunpack.c.l.b16 %v75
  %v463 = vunpack.c.h.b16 %v75
  %v464 = vunpack.c.l.b16 %v76
  %v465 = vunpack.c.h.b16 %v76
  %v466 = vunpack.c.l.b16 %v77
  %v467 = vunpack.c.h.b16 %v77
  %v468 = vunpack.c.l.b16 %v78
  %v469 = vunpack.c.h.b16 %v78
  %v470 = vunpack.c.l.b16 %v79
  %v471 = vunpack.c.h.b16 %v79
  %v472 = vunpack.c.l.b16 %v80
  %v473 = vunpack.c.h.b16 %v80
  %v474 = vunpack.c.l.b16 %v81
  %v475 = vunpack.c.h.b16 %v81
  %v476 = vunpack.c.l.b16 %v82
  %v477 = vunpack.c.h.b16 %v82
  %v478 = vunpack.c.l.b16 %v83
  %v479 = vunpack.c.h.b16 %v83
  %v480 = vunpack.c.l.b16 %v84
  %v481 = vunpack.c.h.b16 %v84
  %v482 = vunpack.c.l.b16 %v85
  %v483 = vunpack.c.h.b16 %v85
  %v484 = vunpack.c.l.b16 %v86
  %v485 = vunpack.c.h.b16 %v86
  %v486 = vunpack.c.l.b16 %v87
  %v487 = vunpack.c.h.b16 %v87
  %v488 = vunpack.c.l.b16 %v88
  %v489 = vunpack.c.h.b16 %v88
  %v490 = vunpack.c.l.b16 %v89
  %v491 = vunpack.c.h.b16 %v89
  %v492 = vunpack.c.l.b16 %v90
  %v493 = vunpack.c.h.b16 %v90
  %v494 = vunpack.c.l.b16 %v91
  %v495 = vunpack.c.h.b16 %v91
  %v496 = vunpack.c.l.b16 %v92
  %v497 = vunpack.c.h.b16 %v92
  %v498 = vunpack.c.l.b16 %v93
  %v499 = vunpack.c.h.b16 %v93
  %v500 = vunpack.c.l.b16 %v94
  %v501 = vunpack.c.h.b16 %v94
  %v502 = vunpack.c.l.b16 %v95
  %v503 = vunpack.c.h.b16 %v95
  %v504 = vunpack.c.l.b16 %v96
  %v505 = vunpack.c.h.b16 %v96
  %v506 = vunpack.c.l.b16 %v97
  %v507 = vunpack.c.h.b16 %v97
  %v508 = vunpack.c.l.b16 %v98
  %v509 = vunpack.c.h.b16 %v98
  %v510 = vunpack.c.l.b16 %v99
  %v511 = vunpack.c.h.b16 %v99
  %v512 = vunpack.c.l.b16 %v100
  %v513 = vunpack.c.h.b16 %v100
  %v514 = vunpack.c.l.b16 %v101
  %v515 = vunpack.c.h.b16 %v101
  %v516 = vunpack.c.l.b16 %v102
  %v517 = vunpack.c.h.b16 %v102
  %v518 = vunpack.c.l.b16 %v103
  %v519 = vunpack.c.h.b16 %v103
  %v520 = vunpack.c.l.b16 %v104
  %v521 = vunpack.c.h.b16 %v104
  %v522 = vunpack.c.l.b16 %v105
  %v523 = vunpack.c.h.b16 %v105
  %v524 = vunpack.c.l.b16 %v106
  %v525 = vunpack.c.h.b16 %v106
  %v526 = vunpack.c.l.b16 %v107
  %v527 = vunpack.c.h.b16 %v107
  %v528 = vunpack.c.l.b16 %v108
  %v529 = vunpack.c.h.b16 %v108
  %v530 = vunpack.c.l.b16 %v109
  %v531 = vunpack.c.h.b16 %v109
  %v532 = vunpack.c.l.b16 %v110
  %v533 = vunpack.c.h.b16 %v110
  %v534 = vunpack.c.l.b16 %v111
  %v535 = vunpack.c.h.b16 %v111
  %v536 = vunpack.c.l.b16 %v112
  %v537 = vunpack.c.h.b16 %v112
  %v538 = vunpack.c.l.b16 %v113
  %v539 = vunpack.c.h.b16 %v113
  %v540 = vunpack.c.l.b16 %v114
  %v541 = vunpack.c.h.b16 %v114
  %v542 = vunpack.c.l.b16 %v115
  %v543 = vunpack.c.h.b16 %v115
  %v544 = vunpack.c.l.b16 %v116
  %v545 = vunpack.c.h.b16 %v116
  %v546 = vunpack.c.l.b16 %v117
  %v547 = vunpack.c.h.b16 %v117
  %v548 = vunpack.c.l.b16 %v118
  %v549 = vunpack.c.h.b16 %v118
  %v550 = vunpack.c.l.b16 %v119
  %v551 = vunpack.c.h.b16 %v119
  %v552 = vunpack.c.l.b16 %v120
  %v553 = vunpack.c.h.b16 %v120
  %v554 = vunpack.c.l.b16 %v121
  %v555 = vunpack.c.h.b16 %v121
  %v556 = vunpack.c.l.b16 %v122
  %v557 = vunpack.c.h.b16 %v122
  %v558 = vunpack.c.l.b16 %v123
  %v559 = vunpack.c.h.b16 %v123
  %v560 = vunpack.c.l.b16 %v124
  %v561 = vunpack.c.h.b16 %v124
  %v562 = vunpack.c.l.b16 %v125
  %v563 = vunpack.c.h.b16 %v125
  %v564 = vunpack.c.l.b16 %v126
  %v565 = vunpack.c.h.b16 %v126
  %v566 = vunpack.c.l.b16 %v127
  %v567 = vunpack.c.h.b16 %v127
  %v568 = vunpack.c.l.b16 %v128
  %v569 = vunpack.c.h.b16 %v128
  %v570 = vunpack.c.l.b16 %v129
  %v571 = vunpack.c.h.b16 %v129
  %v572 = vunpack.c.l.b16 %v130
  %v573 = vunpack.c.h.b16 %v130
  %v574 = vunpack.c.l.b16 %v131
  %v575 = vunpack.c.h.b16 %v131
  %v576 = vunpack.c.l.b16 %v132
  %v577 = vunpack.c.h.b16 %v132
  %v578 = vunpack.c.l.b16 %v133
  %v579 = vunpack.c.h.b16 %v133
  %v580 = vunpack.c.l.b16 %v134
  %v581 = vunpack.c.h.b16 %v134
  %v582 = vunpack.c.l.b16 %v135
  %v583 = vunpack.c.h.b16 %v135
  %v584 = vunpack.c.l.b16 %v136
  %v585 = vunpack.c.h.b16 %v136
  %v586 = vunpack.c.l.b16 %v137
  %v587 = vunpack.c.h.b16 %v137
  %v588 = vunpack.c.l.b16 %v138
  %v589 = vunpack.c.h.b16 %v138
  %v590 = vunpack.c.l.b16 %v139
  %v591 = vunpack.c.h.b16 %v139
  %v592 = vunpack.c.l.b16 %v140
  %v593 = vunpack.c.h.b16 %v140
  %v594 = vunpack.c.l.b16 %v141
  %v595 = vunpack.c.h.b16 %v141
  %v596 = vunpack.c.l.b16 %v142
  %v597 = vunpack.c.h.b16 %v142
  %v598 = vpack.c.b16 %v346, %v342
  %v599 = vpack.c.b16 %v347, %v343
  %v600 = vpack.c.b16 %v348, %v344
  %v601 = vpack.c.b16 %v349, %v345
  %v602 = vpack.c.b16 %v354, %v350
  %v603 = vpack.c.b16 %v355, %v351
  %v604 = vpack.c.b16 %v356, %v352
  %v605 = vpack.c.b16 %v357, %v353
  %v606 = vpack.c.b16 %v362, %v358
  %v607 = vpack.c.b16 %v363, %v359
  %v608 = vpack.c.b16 %v364, %v360
  %v609 = vpack.c.b16 %v365, %v361
  %v610 = vpack.c.b16 %v370, %v366
  %v611 = vpack.c.b16 %v371, %v367
  %v612 = vpack.c.b16 %v372, %v368
  %v613 = vpack.c.b16 %v373, %v369
  %v614 = vpack.c.b16 %v378, %v374
  %v615 = vpack.c.b16 %v379, %v375
  %v616 = vpack.c.b16 %v380, %v376
  %v617 = vpack.c.b16 %v381, %v377
  %v618 = vpack.c.b16 %v386, %v382
  %v619 = vpack.c.b16 %v387, %v383
  %v620 = vpack.c.b16 %v388, %v384
  %v621 = vpack.c.b16 %v389, %v385
  %v622 = vpack.c.b16 %v394, %v390
  %v623 = vpack.c.b16 %v395, %v391
  %v624 = vpack.c.b16 %v396, %v392
  %v625 = vpack.c.b16 %v397, %v393
  %v626 = vpack.c.b16 %v402, %v398
  %v627 = vpack.c.b16 %v403, %v399
  %v628 = vpack.c.b16 %v404, %v400
  %v629 = vpack.c.b16 %v405, %v401
  %v630 = vpack.c.b16 %v410, %v406
  %v631 = vpack.c.b16 %v411, %v407
  %v632 = vpack.c.b16 %v412, %v408
  %v633 = vpack.c.b16 %v413, %v409
  %v634 = vpack.c.b16 %v418, %v414
  %v635 = vpack.c.b16 %v419, %v415
  %v636 = vpack.c.b16 %v420, %v416
  %v637 = vpack.c.b16 %v421, %v417
  %v638 = vpack.c.b16 %v426, %v422
  %v639 = vpack.c.b16 %v427, %v423
  %v640 = vpack.c.b16 %v428, %v424
  %v641 = vpack.c.b16 %v429, %v425
  %v642 = vpack.c.b16 %v434, %v430
  %v643 = vpack.c.b16 %v435, %v431
  %v644 = vpack.c.b16 %v436, %v432
  %v645 = vpack.c.b16 %v437, %v433
  %v646 = vpack.c.b16 %v442, %v438
  %v647 = vpack.c.b16 %v443, %v439
  %v648 = vpack.c.b16 %v444, %v440
  %v649 = vpack.c.b16 %v445, %v441
  %v650 = vpack.c.b16 %v450, %v446
  %v651 = vpack.c.b16 %v451, %v447
  %v652 = vpack.c.b16 %v452, %v448
  %v653 = vpack.c.b16 %v453, %v449
  %v654 = vpack.c.b16 %v458, %v454
  %v655 = vpack.c.b16 %v459, %v455
  %v656 = vpack.c.b16 %v460, %v456
  %v657 = vpack.c.b16 %v461, %v457
  %v658 = vpack.c.b16 %v466, %v462
  %v659 = vpack.c.b16 %v467, %v463
  %v660 = vpack.c.b16 %v468, %v464
  %v661 = vpack.c.b16 %v469, %v465
  %v662 = vpack.c.b16 %v474, %v470
  %v663 = vpack.c.b16 %v475, %v471
  %v664 = vpack.c.b16 %v476, %v472
  %v665 = vpack.c.b16 %v477, %v473
  %v666 = vpack.c.b16 %v482, %v478
  %v667 = vpack.c.b16 %v483, %v479
  %v668 = vpack.c.b16 %v484, %v480
  %v669 = vpack.c.b16 %v485, %v481
  %v670 = vpack.c.b16 %v490, %v486
  %v671 = vpack.c.b16 %v491, %v487
  %v672 = vpack.c.b16 %v492, %v488
  %v673 = vpack.c.b16 %v493, %v489
  %v674 = vpack.c.b16 %v498, %v494
  %v675 = vpack.c.b16 %v499, %v495
  %v676 = vpack.c.b16 %v500, %v496
  %v677 = vpack.c.b16 %v501, %v497
  %v678 = vpack.c.b16 %v506, %v502
  %v679 = vpack.c.b16 %v507, %v503
  %v680 = vpack.c.b16 %v508, %v504
  %v681 = vpack.c.b16 %v509, %v505
  %v682 = vpack.c.b16 %v514, %v510
  %v683 = vpack.c.b16 %v515, %v511
  %v684 = vpack.c.b16 %v516, %v512
  %v685 = vpack.c.b16 %v517, %v513
  %v686 = vpack.c.b16 %v522, %v518
  %v687 = vpack.c.b16 %v523, %v519
  %v688 = vpack.c.b16 %v524, %v520
  %v689 = vpack.c.b16 %v525, %v521
  %v690 = vpack.c.b16 %v530, %v526
  %v691 = vpack.c.b16 %v531, %v527
  %v692 = vpack.c.b16 %v532, %v528
  %v693 = vpack.c.b16 %v533, %v529
  %v694 = vpack.c.b16 %v538, %v534
  %v695 = vpack.c.b16 %v539, %v535
  %v696 = vpack.c.b16 %v540, %v536
  %v697 = vpack.c.b16 %v541, %v537
  %v698 = vpack.c.b16 %v546, %v542
  %v699 = vpack.c.b16 %v547, %v543
  %v700 = vpack.c.b16 %v548, %v544
  %v701 = vpack.c.b16 %v549, %v545
  %v702 = vpack.c.b16 %v554, %v550
  %v703 = vpack.c.b16 %v555, %v551
  %v704 = vpack.c.b16 %v556, %v552
  %v705 = vpack.c.b16 %v557, %v553
  %v706 = vpack.c.b16 %v562, %v558
  %v707 = vpack.c.b16 %v563, %v559
  %v708 = vpack.c.b16 %v564, %v560
  %v709 = vpack.c.b16 %v565, %v561
  %v710 = vpack.c.b16 %v570, %v566
  %v711 = vpack.c.b16 %v571, %v567
  %v712 = vpack.c.b16 %v572, %v568
  %v713 = vpack.c.b16 %v573, %v569
  %v714 = vpack.c.b16 %v578, %v574
  %v715 = vpack.c.b16 %v579, %v575
  %v716 = vpack.c.b16 %v580, %v576
  %v717 = vpack.c.b16 %v581, %v577
  %v718 = vpack.c.b16 %v586, %v582
  %v719 = vpack.c.b16 %v587, %v583
  %v720 = vpack.c.b16 %v588, %v584
  %v721 = vpack.c.b16 %v589, %v585
  %v722 = vpack.c.b16 %v594, %v590
  %v723 = vpack.c.b16 %v595, %v591
  %v724 = vpack.c.b16 %v596, %v592
  %v725 = vpack.c.b16 %v597, %v593
  %v918 = vunpack.c.l.b16 %v143
  %v919 = vunpack.c.l.b16 %v144
  %v920 = vunpack.c.l.b16 %v145
  %v921 = vunpack.c.l.b16 %v146
  %v922 = vunpack.c.l.b16 %v147
  %v923 = vunpack.c.l.b16 %v148
  %v924 = vunpack.c.l.b16 %v149
  %v925 = vunpack.c.l.b16 %v150
  %v926 = vunpack.c.l.b16 %v151
  %v927 = vunpack.c.l.b16 %v152
  %v928 = vunpack.c.l.b16 %v153
  %v929 = vunpack.c.l.b16 %v154
  %v930 = vunpack.c.l.b16 %v155
  %v931 = vunpack.c.l.b16 %v156
  %v932 = vunpack.c.l.b16 %v157
  %v933 = vunpack.c.l.b16 %v158
  %v934 = vunpack.c.l.b16 %v159
  %v935 = vunpack.c.l.b16 %v160
  %v936 = vunpack.c.l.b16 %v161
  %v937 = vunpack.c.l.b16 %v162
  %v938 = vunpack.c.l.b16 %v163
  %v939 = vunpack.c.l.b16 %v164
  %v940 = vunpack.c.l.b16 %v165
  %v941 = vunpack.c.l.b16 %v166
  %v942 = vunpack.c.l.b16 %v167
  %v943 = vunpack.c.l.b16 %v168
  %v944 = vunpack.c.l.b16 %v169
  %v945 = vunpack.c.l.b16 %v170
  %v946 = vunpack.c.l.b16 %v171
  %v947 = vunpack.c.l.b16 %v172
  %v948 = vunpack.c.l.b16 %v173
  %v949 = vunpack.c.l.b16 %v174
  %v950 = vunpack.c.l.b16 %v175
  %v951 = vunpack.c.l.b16 %v176
  %v952 = vunpack.c.l.b16 %v177
  %v953 = vunpack.c.l.b16 %v178
  %v954 = vunpack.c.l.b16 %v179
  %v955 = vunpack.c.l.b16 %v180
  %v956 = vunpack.c.l.b16 %v181
  %v957 = vunpack.c.l.b16 %v182
  %v958 = vunpack.c.l.b16 %v183
  %v959 = vunpack.c.l.b16 %v184
  %v960 = vunpack.c.l.b16 %v185
  %v961 = vunpack.c.l.b16 %v186
  %v962 = vunpack.c.l.b16 %v187
  %v963 = vunpack.c.l.b16 %v188
  %v964 = vunpack.c.l.b16 %v189
  %v965 = vunpack.c.l.b16 %v190
  %v966 = vunpack.c.l.b16 %v191
  %v967 = vunpack.c.l.b16 %v192
  %v968 = vunpack.c.l.b16 %v193
  %v969 = vunpack.c.l.b16 %v194
  %v970 = vunpack.c.l.b16 %v195
  %v971 = vunpack.c.l.b16 %v196
  %v972 = vunpack.c.l.b16 %v197
  %v973 = vunpack.c.l.b16 %v198
  %v974 = vunpack.c.l.b16 %v199
  %v975 = vunpack.c.l.b16 %v200
  %v976 = vunpack.c.l.b16 %v201
  %v977 = vunpack.c.l.b16 %v202
  %v978 = vunpack.c.l.b16 %v203
  %v979 = vunpack.c.l.b16 %v204
  %v980 = vunpack.c.l.b16 %v205
  %v981 = vunpack.c.l.b16 %v206
  %v982 = vpack.c.b16 %v919, %v918
  %v983 = vpack.c.b16 %v921, %v920
  %v984 = vpack.c.b16 %v923, %v922
  %v985 = vpack.c.b16 %v925, %v924
  %v986 = vpack.c.b16 %v927, %v926
  %v987 = vpack.c.b16 %v929, %v928
  %v988 = vpack.c.b16 %v931, %v930
  %v989 = vpack.c.b16 %v933, %v932
  %v990 = vpack.c.b16 %v935, %v934
  %v991 = vpack.c.b16 %v937, %v936
  %v992 = vpack.c.b16 %v939, %v938
  %v993 = vpack.c.b16 %v941, %v940
  %v994 = vpack.c.b16 %v943, %v942
  %v995 = vpack.c.b16 %v945, %v944
  %v996 = vpack.c.b16 %v947, %v946
  %v997 = vpack.c.b16 %v949, %v948
  %v998 = vpack.c.b16 %v951, %v950
  %v999 = vpack.c.b16 %v953, %v952
  %v1000 = vpack.c.b16 %v955, %v954
  %v1001 = vpack.c.b16 %v957, %v956
  %v1002 = vpack.c.b16 %v959, %v958
  %v1003 = vpack.c.b16 %v961, %v960
  %v1004 = vpack.c.b16 %v963, %v962
  %v1005 = vpack.c.b16 %v965, %v964
  %v1006 = vpack.c.b16 %v967, %v966
  %v1007 = vpack.c.b16 %v969, %v968
  %v1008 = vpack.c.b16 %v971, %v970
  %v1009 = vpack.c.b16 %v973, %v972
  %v1010 = vpack.c.b16 %v975, %v974
  %v1011 = vpack.c.b16 %v977, %v976
  %v1012 = vpack.c.b16 %v979, %v978
  %v1013 = vpack.c.b16 %v981, %v980
  %1046 = vmatprep.subr.bf16.mxu0 0
  %1047 = vmatpush1.bf16.msra.mxu0 %v989
  %1048 = vmatprep.subr.bf16.mxu0 0
  %1049 = vmatpush1.bf16.msra.mxu0 %v988
  %1050 = vmatprep.subr.bf16.mxu0 0
  %1051 = vmatpush1.bf16.msra.mxu0 %v987
  %1052 = vmatprep.subr.bf16.mxu0 0
  %1053 = vmatpush1.bf16.msra.mxu0 %v986
  %1054 = vmatprep.subr.bf16.mxu0 0
  %1055 = vmatpush1.bf16.msra.mxu0 %v985
  %1056 = vmatprep.subr.bf16.mxu0 0
  %1057 = vmatpush1.bf16.msra.mxu0 %v984
  %1058 = vmatprep.subr.bf16.mxu0 0
  %1059 = vmatpush1.bf16.msra.mxu0 %v983
  %1060 = vmatprep.subr.bf16.mxu0 0
  %1061 = vmatpush1.bf16.msra.mxu0 %v982
  %1062 = vmatprep.subr.bf16.mxu0 0
  %1063 = vmatpush2.bf16.msra.mxu0 %v997
  %1064 = vmatprep.subr.bf16.mxu0 0
  %1065 = vmatpush2.bf16.msra.mxu0 %v996
  %1066 = vmatprep.subr.bf16.mxu0 0
  %1067 = vmatpush2.bf16.msra.mxu0 %v995
  %1068 = vmatprep.subr.bf16.mxu0 0
  %1069 = vmatpush2.bf16.msra.mxu0 %v994
  %1070 = vmatprep.subr.bf16.mxu0 0
  %1071 = vmatpush2.bf16.msra.mxu0 %v993
  %1072 = vmatprep.subr.bf16.mxu0 0
  %1073 = vmatpush2.bf16.msra.mxu0 %v992
  %1074 = vmatprep.subr.bf16.mxu0 0
  %1075 = vmatpush2.bf16.msra.mxu0 %v991
  %1076 = vmatprep.subr.bf16.mxu0 0
  %1077 = vmatpush2.bf16.msra.mxu0 %v990
  %1078 = vmatprep.mubr.bf16.mxu0 %v599
  %1079 = vmatmul.mubr.bf16.gmra.mxu0 %v598
  %v1080 = vpop.f32.mrf.mxu0
  %v1081 = vadd.f32 %v212, %v1080
  %v1082 = vpop.f32.mrf.mxu0
  %v1083 = vpop.f32.mrf.mxu0
  %v1084 = vadd.f32 %v212, %v1083
  %v1085 = vpop.f32.mrf.mxu0
  %1086 = vmatprep.mubr.bf16.mxu0 %v603
  %1087 = vmatmul.mubr.bf16.gmra.mxu0 %v602
  %v1088 = vpop.f32.mrf.mxu0
  %v1089 = vadd.f32 %v212, %v1088
  %v1090 = vpop.f32.mrf.mxu0
  %v1091 = vpop.f32.mrf.mxu0
  %v1092 = vadd.f32 %v212, %v1091
  %v1093 = vpop.f32.mrf.mxu0
  %1094 = vmatprep.mubr.bf16.mxu0 %v607
  %1095 = vmatmul.mubr.bf16.gmra.mxu0 %v606
  %v1096 = vpop.f32.mrf.mxu0
  %v1097 = vadd.f32 %v212, %v1096
  %v1098 = vpop.f32.mrf.mxu0
  %v1099 = vpop.f32.mrf.mxu0
  %v1100 = vadd.f32 %v212, %v1099
  %v1101 = vpop.f32.mrf.mxu0
  %1102 = vmatprep.mubr.bf16.mxu0 %v611
  %1103 = vmatmul.mubr.bf16.gmra.mxu0 %v610
  %v1104 = vpop.f32.mrf.mxu0
  %v1105 = vadd.f32 %v212, %v1104
  %v1106 = vpop.f32.mrf.mxu0
  %v1107 = vpop.f32.mrf.mxu0
  %v1108 = vadd.f32 %v212, %v1107
  %v1109 = vpop.f32.mrf.mxu0
  %1110 = vmatprep.mubr.bf16.mxu0 %v615
  %1111 = vmatmul.mubr.bf16.gmra.mxu0 %v614
  %v1112 = vpop.f32.mrf.mxu0
  %v1113 = vadd.f32 %v212, %v1112
  %v1114 = vpop.f32.mrf.mxu0
  %v1115 = vpop.f32.mrf.mxu0
  %v1116 = vadd.f32 %v212, %v1115
  %v1117 = vpop.f32.mrf.mxu0
  %1118 = vmatprep.mubr.bf16.mxu0 %v619
  %1119 = vmatmul.mubr.bf16.gmra.mxu0 %v618
  %v1120 = vpop.f32.mrf.mxu0
  %v1121 = vadd.f32 %v212, %v1120
  %v1122 = vpop.f32.mrf.mxu0
  %v1123 = vpop.f32.mrf.mxu0
  %v1124 = vadd.f32 %v212, %v1123
  %v1125 = vpop.f32.mrf.mxu0
  %1126 = vmatprep.mubr.bf16.mxu0 %v623
  %1127 = vmatmul.mubr.bf16.gmra.mxu0 %v622
  %v1128 = vpop.f32.mrf.mxu0
  %v1129 = vadd.f32 %v212, %v1128
  %v1130 = vpop.f32.mrf.mxu0
  %v1131 = vpop.f32.mrf.mxu0
  %v1132 = vadd.f32 %v212, %v1131
  %v1133 = vpop.f32.mrf.mxu0
  %1134 = vmatprep.mubr.bf16.mxu0 %v627
  %1135 = vmatmul.mubr.bf16.gmra.mxu0 %v626
  %v1136 = vpop.f32.mrf.mxu0
  %v1137 = vadd.f32 %v212, %v1136
  %v1138 = vpop.f32.mrf.mxu0
  %v1139 = vpop.f32.mrf.mxu0
  %v1140 = vadd.f32 %v212, %v1139
  %v1141 = vpop.f32.mrf.mxu0
  %1142 = vmatprep.mubr.bf16.mxu0 %v631
  %1143 = vmatmul.mubr.bf16.gmra.mxu0 %v630
  %v1144 = vpop.f32.mrf.mxu0
  %v1145 = vadd.f32 %v212, %v1144
  %v1146 = vpop.f32.mrf.mxu0
  %v1147 = vpop.f32.mrf.mxu0
  %v1148 = vadd.f32 %v212, %v1147
  %v1149 = vpop.f32.mrf.mxu0
  %1150 = vmatprep.mubr.bf16.mxu0 %v635
  %1151 = vmatmul.mubr.bf16.gmra.mxu0 %v634
  %v1152 = vpop.f32.mrf.mxu0
  %v1153 = vadd.f32 %v212, %v1152
  %v1154 = vpop.f32.mrf.mxu0
  %v1155 = vpop.f32.mrf.mxu0
  %v1156 = vadd.f32 %v212, %v1155
  %v1157 = vpop.f32.mrf.mxu0
  %1158 = vmatprep.mubr.bf16.mxu0 %v639
  %1159 = vmatmul.mubr.bf16.gmra.mxu0 %v638
  %v1160 = vpop.f32.mrf.mxu0
  %v1161 = vadd.f32 %v212, %v1160
  %v1162 = vpop.f32.mrf.mxu0
  %v1163 = vpop.f32.mrf.mxu0
  %v1164 = vadd.f32 %v212, %v1163
  %v1165 = vpop.f32.mrf.mxu0
  %1166 = vmatprep.mubr.bf16.mxu0 %v643
  %1167 = vmatmul.mubr.bf16.gmra.mxu0 %v642
  %v1168 = vpop.f32.mrf.mxu0
  %v1169 = vadd.f32 %v212, %v1168
  %v1170 = vpop.f32.mrf.mxu0
  %v1171 = vpop.f32.mrf.mxu0
  %v1172 = vadd.f32 %v212, %v1171
  %v1173 = vpop.f32.mrf.mxu0
  %1174 = vmatprep.mubr.bf16.mxu0 %v647
  %1175 = vmatmul.mubr.bf16.gmra.mxu0 %v646
  %v1176 = vpop.f32.mrf.mxu0
  %v1177 = vadd.f32 %v212, %v1176
  %v1178 = vpop.f32.mrf.mxu0
  %v1179 = vpop.f32.mrf.mxu0
  %v1180 = vadd.f32 %v212, %v1179
  %v1181 = vpop.f32.mrf.mxu0
  %1182 = vmatprep.mubr.bf16.mxu0 %v651
  %1183 = vmatmul.mubr.bf16.gmra.mxu0 %v650
  %v1184 = vpop.f32.mrf.mxu0
  %v1185 = vadd.f32 %v212, %v1184
  %v1186 = vpop.f32.mrf.mxu0
  %v1187 = vpop.f32.mrf.mxu0
  %v1188 = vadd.f32 %v212, %v1187
  %v1189 = vpop.f32.mrf.mxu0
  %1190 = vmatprep.mubr.bf16.mxu0 %v655
  %1191 = vmatmul.mubr.bf16.gmra.mxu0 %v654
  %v1192 = vpop.f32.mrf.mxu0
  %v1193 = vadd.f32 %v212, %v1192
  %v1194 = vpop.f32.mrf.mxu0
  %v1195 = vpop.f32.mrf.mxu0
  %v1196 = vadd.f32 %v212, %v1195
  %v1197 = vpop.f32.mrf.mxu0
  %1198 = vmatprep.mubr.bf16.mxu0 %v659
  %1199 = vmatmul.mubr.bf16.gmra.mxu0 %v658
  %v1200 = vpop.f32.mrf.mxu0
  %v1201 = vadd.f32 %v212, %v1200
  %v1202 = vpop.f32.mrf.mxu0
  %v1203 = vpop.f32.mrf.mxu0
  %v1204 = vadd.f32 %v212, %v1203
  %v1205 = vpop.f32.mrf.mxu0
  %1206 = vmatprep.mubr.bf16.mxu0 %v663
  %1207 = vmatmul.mubr.bf16.gmra.mxu0 %v662
  %v1208 = vpop.f32.mrf.mxu0
  %v1209 = vadd.f32 %v212, %v1208
  %v1210 = vpop.f32.mrf.mxu0
  %v1211 = vpop.f32.mrf.mxu0
  %v1212 = vadd.f32 %v212, %v1211
  %v1213 = vpop.f32.mrf.mxu0
  %1214 = vmatprep.mubr.bf16.mxu0 %v667
  %1215 = vmatmul.mubr.bf16.gmra.mxu0 %v666
  %v1216 = vpop.f32.mrf.mxu0
  %v1217 = vadd.f32 %v212, %v1216
  %v1218 = vpop.f32.mrf.mxu0
  %v1219 = vpop.f32.mrf.mxu0
  %v1220 = vadd.f32 %v212, %v1219
  %v1221 = vpop.f32.mrf.mxu0
  %1222 = vmatprep.mubr.bf16.mxu0 %v671
  %1223 = vmatmul.mubr.bf16.gmra.mxu0 %v670
  %v1224 = vpop.f32.mrf.mxu0
  %v1225 = vadd.f32 %v212, %v1224
  %v1226 = vpop.f32.mrf.mxu0
  %v1227 = vpop.f32.mrf.mxu0
  %v1228 = vadd.f32 %v212, %v1227
  %v1229 = vpop.f32.mrf.mxu0
  %1230 = vmatprep.mubr.bf16.mxu0 %v675
  %1231 = vmatmul.mubr.bf16.gmra.mxu0 %v674
  %v1232 = vpop.f32.mrf.mxu0
  %v1233 = vadd.f32 %v212, %v1232
  %v1234 = vpop.f32.mrf.mxu0
  %v1235 = vpop.f32.mrf.mxu0
  %v1236 = vadd.f32 %v212, %v1235
  %v1237 = vpop.f32.mrf.mxu0
  %1238 = vmatprep.mubr.bf16.mxu0 %v679
  %1239 = vmatmul.mubr.bf16.gmra.mxu0 %v678
  %v1240 = vpop.f32.mrf.mxu0
  %v1241 = vadd.f32 %v212, %v1240
  %v1242 = vpop.f32.mrf.mxu0
  %v1243 = vpop.f32.mrf.mxu0
  %v1244 = vadd.f32 %v212, %v1243
  %v1245 = vpop.f32.mrf.mxu0
  %1246 = vmatprep.mubr.bf16.mxu0 %v683
  %1247 = vmatmul.mubr.bf16.gmra.mxu0 %v682
  %v1248 = vpop.f32.mrf.mxu0
  %v1249 = vadd.f32 %v212, %v1248
  %v1250 = vpop.f32.mrf.mxu0
  %v1251 = vpop.f32.mrf.mxu0
  %v1252 = vadd.f32 %v212, %v1251
  %v1253 = vpop.f32.mrf.mxu0
  %1254 = vmatprep.mubr.bf16.mxu0 %v687
  %1255 = vmatmul.mubr.bf16.gmra.mxu0 %v686
  %v1256 = vpop.f32.mrf.mxu0
  %v1257 = vadd.f32 %v212, %v1256
  %v1258 = vpop.f32.mrf.mxu0
  %v1259 = vpop.f32.mrf.mxu0
  %v1260 = vadd.f32 %v212, %v1259
  %v1261 = vpop.f32.mrf.mxu0
  %1262 = vmatprep.mubr.bf16.mxu0 %v691
  %1263 = vmatmul.mubr.bf16.gmra.mxu0 %v690
  %v1264 = vpop.f32.mrf.mxu0
  %v1265 = vadd.f32 %v212, %v1264
  %v1266 = vpop.f32.mrf.mxu0
  %v1267 = vpop.f32.mrf.mxu0
  %v1268 = vadd.f32 %v212, %v1267
  %v1269 = vpop.f32.mrf.mxu0
  %1270 = vmatprep.mubr.bf16.mxu0 %v695
  %1271 = vmatmul.mubr.bf16.gmra.mxu0 %v694
  %v1272 = vpop.f32.mrf.mxu0
  %v1273 = vadd.f32 %v212, %v1272
  %v1274 = vpop.f32.mrf.mxu0
  %v1275 = vpop.f32.mrf.mxu0
  %v1276 = vadd.f32 %v212, %v1275
  %v1277 = vpop.f32.mrf.mxu0
  %1278 = vmatprep.mubr.bf16.mxu0 %v699
  %1279 = vmatmul.mubr.bf16.gmra.mxu0 %v698
  %v1280 = vpop.f32.mrf.mxu0
  %v1281 = vadd.f32 %v212, %v1280
  %v1282 = vpop.f32.mrf.mxu0
  %v1283 = vpop.f32.mrf.mxu0
  %v1284 = vadd.f32 %v212, %v1283
  %v1285 = vpop.f32.mrf.mxu0
  %1286 = vmatprep.mubr.bf16.mxu0 %v703
  %1287 = vmatmul.mubr.bf16.gmra.mxu0 %v702
  %v1288 = vpop.f32.mrf.mxu0
  %v1289 = vadd.f32 %v212, %v1288
  %v1290 = vpop.f32.mrf.mxu0
  %v1291 = vpop.f32.mrf.mxu0
  %v1292 = vadd.f32 %v212, %v1291
  %v1293 = vpop.f32.mrf.mxu0
  %1294 = vmatprep.mubr.bf16.mxu0 %v707
  %1295 = vmatmul.mubr.bf16.gmra.mxu0 %v706
  %v1296 = vpop.f32.mrf.mxu0
  %v1297 = vadd.f32 %v212, %v1296
  %v1298 = vpop.f32.mrf.mxu0
  %v1299 = vpop.f32.mrf.mxu0
  %v1300 = vadd.f32 %v212, %v1299
  %v1301 = vpop.f32.mrf.mxu0
  %1302 = vmatprep.mubr.bf16.mxu0 %v711
  %1303 = vmatmul.mubr.bf16.gmra.mxu0 %v710
  %v1304 = vpop.f32.mrf.mxu0
  %v1305 = vadd.f32 %v212, %v1304
  %v1306 = vpop.f32.mrf.mxu0
  %v1307 = vpop.f32.mrf.mxu0
  %v1308 = vadd.f32 %v212, %v1307
  %v1309 = vpop.f32.mrf.mxu0
  %1310 = vmatprep.mubr.bf16.mxu0 %v715
  %1311 = vmatmul.mubr.bf16.gmra.mxu0 %v714
  %v1312 = vpop.f32.mrf.mxu0
  %v1313 = vadd.f32 %v212, %v1312
  %v1314 = vpop.f32.mrf.mxu0
  %v1315 = vpop.f32.mrf.mxu0
  %v1316 = vadd.f32 %v212, %v1315
  %v1317 = vpop.f32.mrf.mxu0
  %1318 = vmatprep.mubr.bf16.mxu0 %v719
  %1319 = vmatmul.mubr.bf16.gmra.mxu0 %v718
  %v1320 = vpop.f32.mrf.mxu0
  %v1321 = vadd.f32 %v212, %v1320
  %v1322 = vpop.f32.mrf.mxu0
  %v1323 = vpop.f32.mrf.mxu0
  %v1324 = vadd.f32 %v212, %v1323
  %v1325 = vpop.f32.mrf.mxu0
  %1326 = vmatprep.mubr.bf16.mxu0 %v723
  %1327 = vmatmul.mubr.bf16.gmra.mxu0 %v722
  %v1328 = vpop.f32.mrf.mxu0
  %v1329 = vadd.f32 %v212, %v1328
  %v1330 = vpop.f32.mrf.mxu0
  %v1331 = vpop.f32.mrf.mxu0
  %v1332 = vadd.f32 %v212, %v1331
  %v1333 = vpop.f32.mrf.mxu0
  %1334 = vdwg.mxu0
  %1335 = vmatprep.subr.bf16.mxu0 0
  %1336 = vmatpush1.bf16.msra.mxu0 %v1005
  %1337 = vmatprep.subr.bf16.mxu0 0
  %1338 = vmatpush1.bf16.msra.mxu0 %v1004
  %1339 = vmatprep.subr.bf16.mxu0 0
  %1340 = vmatpush1.bf16.msra.mxu0 %v1003
  %1341 = vmatprep.subr.bf16.mxu0 0
  %1342 = vmatpush1.bf16.msra.mxu0 %v1002
  %1343 = vmatprep.subr.bf16.mxu0 0
  %1344 = vmatpush1.bf16.msra.mxu0 %v1001
  %1345 = vmatprep.subr.bf16.mxu0 0
  %1346 = vmatpush1.bf16.msra.mxu0 %v1000
  %1347 = vmatprep.subr.bf16.mxu0 0
  %1348 = vmatpush1.bf16.msra.mxu0 %v999
  %1349 = vmatprep.subr.bf16.mxu0 0
  %1350 = vmatpush1.bf16.msra.mxu0 %v998
  %1351 = vmatprep.subr.bf16.mxu0 0
  %1352 = vmatpush2.bf16.msra.mxu0 %v1013
  %1353 = vmatprep.subr.bf16.mxu0 0
  %1354 = vmatpush2.bf16.msra.mxu0 %v1012
  %1355 = vmatprep.subr.bf16.mxu0 0
  %1356 = vmatpush2.bf16.msra.mxu0 %v1011
  %1357 = vmatprep.subr.bf16.mxu0 0
  %1358 = vmatpush2.bf16.msra.mxu0 %v1010
  %1359 = vmatprep.subr.bf16.mxu0 0
  %1360 = vmatpush2.bf16.msra.mxu0 %v1009
  %1361 = vmatprep.subr.bf16.mxu0 0
  %1362 = vmatpush2.bf16.msra.mxu0 %v1008
  %1363 = vmatprep.subr.bf16.mxu0 0
  %1364 = vmatpush2.bf16.msra.mxu0 %v1007
  %1365 = vmatprep.subr.bf16.mxu0 0
  %1366 = vmatpush2.bf16.msra.mxu0 %v1006
  %1367 = vmatprep.mubr.bf16.mxu0 %v601
  %1368 = vmatmul.mubr.bf16.gmra.mxu0 %v600
  %v1369 = vpop.f32.mrf.mxu0
  %v1370 = vadd.f32 %v1081, %v1369
  %v1371 = vpop.f32.mrf.mxu0
  %v1372 = vpop.f32.mrf.mxu0
  %v1373 = vadd.f32 %v1084, %v1372
  %v1374 = vpop.f32.mrf.mxu0
  %1375 = vmatprep.mubr.bf16.mxu0 %v605
  %1376 = vmatmul.mubr.bf16.gmra.mxu0 %v604
  %v1377 = vpop.f32.mrf.mxu0
  %v1378 = vadd.f32 %v1089, %v1377
  %v1379 = vpop.f32.mrf.mxu0
  %v1380 = vpop.f32.mrf.mxu0
  %v1381 = vadd.f32 %v1092, %v1380
  %v1382 = vpop.f32.mrf.mxu0
  %1383 = vmatprep.mubr.bf16.mxu0 %v609
  %1384 = vmatmul.mubr.bf16.gmra.mxu0 %v608
  %v1385 = vpop.f32.mrf.mxu0
  %v1386 = vadd.f32 %v1097, %v1385
  %v1387 = vpop.f32.mrf.mxu0
  %v1388 = vpop.f32.mrf.mxu0
  %v1389 = vadd.f32 %v1100, %v1388
  %v1390 = vpop.f32.mrf.mxu0
  %1391 = vmatprep.mubr.bf16.mxu0 %v613
  %1392 = vmatmul.mubr.bf16.gmra.mxu0 %v612
  %v1393 = vpop.f32.mrf.mxu0
  %v1394 = vadd.f32 %v1105, %v1393
  %v1395 = vpop.f32.mrf.mxu0
  %v1396 = vpop.f32.mrf.mxu0
  %v1397 = vadd.f32 %v1108, %v1396
  %v1398 = vpop.f32.mrf.mxu0
  %1399 = vmatprep.mubr.bf16.mxu0 %v617
  %1400 = vmatmul.mubr.bf16.gmra.mxu0 %v616
  %v1401 = vpop.f32.mrf.mxu0
  %v1402 = vadd.f32 %v1113, %v1401
  %v1403 = vpop.f32.mrf.mxu0
  %v1404 = vpop.f32.mrf.mxu0
  %v1405 = vadd.f32 %v1116, %v1404
  %v1406 = vpop.f32.mrf.mxu0
  %1407 = vmatprep.mubr.bf16.mxu0 %v621
  %1408 = vmatmul.mubr.bf16.gmra.mxu0 %v620
  %v1409 = vpop.f32.mrf.mxu0
  %v1410 = vadd.f32 %v1121, %v1409
  %v1411 = vpop.f32.mrf.mxu0
  %v1412 = vpop.f32.mrf.mxu0
  %v1413 = vadd.f32 %v1124, %v1412
  %v1414 = vpop.f32.mrf.mxu0
  %1415 = vmatprep.mubr.bf16.mxu0 %v625
  %1416 = vmatmul.mubr.bf16.gmra.mxu0 %v624
  %v1417 = vpop.f32.mrf.mxu0
  %v1418 = vadd.f32 %v1129, %v1417
  %v1419 = vpop.f32.mrf.mxu0
  %v1420 = vpop.f32.mrf.mxu0
  %v1421 = vadd.f32 %v1132, %v1420
  %v1422 = vpop.f32.mrf.mxu0
  %1423 = vmatprep.mubr.bf16.mxu0 %v629
  %1424 = vmatmul.mubr.bf16.gmra.mxu0 %v628
  %v1425 = vpop.f32.mrf.mxu0
  %v1426 = vadd.f32 %v1137, %v1425
  %v1427 = vpop.f32.mrf.mxu0
  %v1428 = vpop.f32.mrf.mxu0
  %v1429 = vadd.f32 %v1140, %v1428
  %v1430 = vpop.f32.mrf.mxu0
  %1431 = vmatprep.mubr.bf16.mxu0 %v633
  %1432 = vmatmul.mubr.bf16.gmra.mxu0 %v632
  %v1433 = vpop.f32.mrf.mxu0
  %v1434 = vadd.f32 %v1145, %v1433
  %v1435 = vpop.f32.mrf.mxu0
  %v1436 = vpop.f32.mrf.mxu0
  %v1437 = vadd.f32 %v1148, %v1436
  %v1438 = vpop.f32.mrf.mxu0
  %1439 = vmatprep.mubr.bf16.mxu0 %v637
  %1440 = vmatmul.mubr.bf16.gmra.mxu0 %v636
  %v1441 = vpop.f32.mrf.mxu0
  %v1442 = vadd.f32 %v1153, %v1441
  %v1443 = vpop.f32.mrf.mxu0
  %v1444 = vpop.f32.mrf.mxu0
  %v1445 = vadd.f32 %v1156, %v1444
  %v1446 = vpop.f32.mrf.mxu0
  %1447 = vmatprep.mubr.bf16.mxu0 %v641
  %1448 = vmatmul.mubr.bf16.gmra.mxu0 %v640
  %v1449 = vpop.f32.mrf.mxu0
  %v1450 = vadd.f32 %v1161, %v1449
  %v1451 = vpop.f32.mrf.mxu0
  %v1452 = vpop.f32.mrf.mxu0
  %v1453 = vadd.f32 %v1164, %v1452
  %v1454 = vpop.f32.mrf.mxu0
  %1455 = vmatprep.mubr.bf16.mxu0 %v645
  %1456 = vmatmul.mubr.bf16.gmra.mxu0 %v644
  %v1457 = vpop.f32.mrf.mxu0
  %v1458 = vadd.f32 %v1169, %v1457
  %v1459 = vpop.f32.mrf.mxu0
  %v1460 = vpop.f32.mrf.mxu0
  %v1461 = vadd.f32 %v1172, %v1460
  %v1462 = vpop.f32.mrf.mxu0
  %1463 = vmatprep.mubr.bf16.mxu0 %v649
  %1464 = vmatmul.mubr.bf16.gmra.mxu0 %v648
  %v1465 = vpop.f32.mrf.mxu0
  %v1466 = vadd.f32 %v1177, %v1465
  %v1467 = vpop.f32.mrf.mxu0
  %v1468 = vpop.f32.mrf.mxu0
  %v1469 = vadd.f32 %v1180, %v1468
  %v1470 = vpop.f32.mrf.mxu0
  %1471 = vmatprep.mubr.bf16.mxu0 %v653
  %1472 = vmatmul.mubr.bf16.gmra.mxu0 %v652
  %v1473 = vpop.f32.mrf.mxu0
  %v1474 = vadd.f32 %v1185, %v1473
  %v1475 = vpop.f32.mrf.mxu0
  %v1476 = vpop.f32.mrf.mxu0
  %v1477 = vadd.f32 %v1188, %v1476
  %v1478 = vpop.f32.mrf.mxu0
  %1479 = vmatprep.mubr.bf16.mxu0 %v657
  %1480 = vmatmul.mubr.bf16.gmra.mxu0 %v656
  %v1481 = vpop.f32.mrf.mxu0
  %v1482 = vadd.f32 %v1193, %v1481
  %v1483 = vpop.f32.mrf.mxu0
  %v1484 = vpop.f32.mrf.mxu0
  %v1485 = vadd.f32 %v1196, %v1484
  %v1486 = vpop.f32.mrf.mxu0
  %1487 = vmatprep.mubr.bf16.mxu0 %v661
  %1488 = vmatmul.mubr.bf16.gmra.mxu0 %v660
  %v1489 = vpop.f32.mrf.mxu0
  %v1490 = vadd.f32 %v1201, %v1489
  %v1491 = vpop.f32.mrf.mxu0
  %v1492 = vpop.f32.mrf.mxu0
  %v1493 = vadd.f32 %v1204, %v1492
  %v1494 = vpop.f32.mrf.mxu0
  %1495 = vmatprep.mubr.bf16.mxu0 %v665
  %1496 = vmatmul.mubr.bf16.gmra.mxu0 %v664
  %v1497 = vpop.f32.mrf.mxu0
  %v1498 = vadd.f32 %v1209, %v1497
  %v1499 = vpop.f32.mrf.mxu0
  %v1500 = vpop.f32.mrf.mxu0
  %v1501 = vadd.f32 %v1212, %v1500
  %v1502 = vpop.f32.mrf.mxu0
  %1503 = vmatprep.mubr.bf16.mxu0 %v669
  %1504 = vmatmul.mubr.bf16.gmra.mxu0 %v668
  %v1505 = vpop.f32.mrf.mxu0
  %v1506 = vadd.f32 %v1217, %v1505
  %v1507 = vpop.f32.mrf.mxu0
  %v1508 = vpop.f32.mrf.mxu0
  %v1509 = vadd.f32 %v1220, %v1508
  %v1510 = vpop.f32.mrf.mxu0
  %1511 = vmatprep.mubr.bf16.mxu0 %v673
  %1512 = vmatmul.mubr.bf16.gmra.mxu0 %v672
  %v1513 = vpop.f32.mrf.mxu0
  %v1514 = vadd.f32 %v1225, %v1513
  %v1515 = vpop.f32.mrf.mxu0
  %v1516 = vpop.f32.mrf.mxu0
  %v1517 = vadd.f32 %v1228, %v1516
  %v1518 = vpop.f32.mrf.mxu0
  %1519 = vmatprep.mubr.bf16.mxu0 %v677
  %1520 = vmatmul.mubr.bf16.gmra.mxu0 %v676
  %v1521 = vpop.f32.mrf.mxu0
  %v1522 = vadd.f32 %v1233, %v1521
  %v1523 = vpop.f32.mrf.mxu0
  %v1524 = vpop.f32.mrf.mxu0
  %v1525 = vadd.f32 %v1236, %v1524
  %v1526 = vpop.f32.mrf.mxu0
  %1527 = vmatprep.mubr.bf16.mxu0 %v681
  %1528 = vmatmul.mubr.bf16.gmra.mxu0 %v680
  %v1529 = vpop.f32.mrf.mxu0
  %v1530 = vadd.f32 %v1241, %v1529
  %v1531 = vpop.f32.mrf.mxu0
  %v1532 = vpop.f32.mrf.mxu0
  %v1533 = vadd.f32 %v1244, %v1532
  %v1534 = vpop.f32.mrf.mxu0
  %1535 = vmatprep.mubr.bf16.mxu0 %v685
  %1536 = vmatmul.mubr.bf16.gmra.mxu0 %v684
  %v1537 = vpop.f32.mrf.mxu0
  %v1538 = vadd.f32 %v1249, %v1537
  %v1539 = vpop.f32.mrf.mxu0
  %v1540 = vpop.f32.mrf.mxu0
  %v1541 = vadd.f32 %v1252, %v1540
  %v1542 = vpop.f32.mrf.mxu0
  %1543 = vmatprep.mubr.bf16.mxu0 %v689
  %1544 = vmatmul.mubr.bf16.gmra.mxu0 %v688
  %v1545 = vpop.f32.mrf.mxu0
  %v1546 = vadd.f32 %v1257, %v1545
  %v1547 = vpop.f32.mrf.mxu0
  %v1548 = vpop.f32.mrf.mxu0
  %v1549 = vadd.f32 %v1260, %v1548
  %v1550 = vpop.f32.mrf.mxu0
  %1551 = vmatprep.mubr.bf16.mxu0 %v693
  %1552 = vmatmul.mubr.bf16.gmra.mxu0 %v692
  %v1553 = vpop.f32.mrf.mxu0
  %v1554 = vadd.f32 %v1265, %v1553
  %v1555 = vpop.f32.mrf.mxu0
  %v1556 = vpop.f32.mrf.mxu0
  %v1557 = vadd.f32 %v1268, %v1556
  %v1558 = vpop.f32.mrf.mxu0
  %1559 = vmatprep.mubr.bf16.mxu0 %v697
  %1560 = vmatmul.mubr.bf16.gmra.mxu0 %v696
  %v1561 = vpop.f32.mrf.mxu0
  %v1562 = vadd.f32 %v1273, %v1561
  %v1563 = vpop.f32.mrf.mxu0
  %v1564 = vpop.f32.mrf.mxu0
  %v1565 = vadd.f32 %v1276, %v1564
  %v1566 = vpop.f32.mrf.mxu0
  %1567 = vmatprep.mubr.bf16.mxu0 %v701
  %1568 = vmatmul.mubr.bf16.gmra.mxu0 %v700
  %v1569 = vpop.f32.mrf.mxu0
  %v1570 = vadd.f32 %v1281, %v1569
  %v1571 = vpop.f32.mrf.mxu0
  %v1572 = vpop.f32.mrf.mxu0
  %v1573 = vadd.f32 %v1284, %v1572
  %v1574 = vpop.f32.mrf.mxu0
  %1575 = vmatprep.mubr.bf16.mxu0 %v705
  %1576 = vmatmul.mubr.bf16.gmra.mxu0 %v704
  %v1577 = vpop.f32.mrf.mxu0
  %v1578 = vadd.f32 %v1289, %v1577
  %v1579 = vpop.f32.mrf.mxu0
  %v1580 = vpop.f32.mrf.mxu0
  %v1581 = vadd.f32 %v1292, %v1580
  %v1582 = vpop.f32.mrf.mxu0
  %1583 = vmatprep.mubr.bf16.mxu0 %v709
  %1584 = vmatmul.mubr.bf16.gmra.mxu0 %v708
  %v1585 = vpop.f32.mrf.mxu0
  %v1586 = vadd.f32 %v1297, %v1585
  %v1587 = vpop.f32.mrf.mxu0
  %v1588 = vpop.f32.mrf.mxu0
  %v1589 = vadd.f32 %v1300, %v1588
  %v1590 = vpop.f32.mrf.mxu0
  %1591 = vmatprep.mubr.bf16.mxu0 %v713
  %1592 = vmatmul.mubr.bf16.gmra.mxu0 %v712
  %v1593 = vpop.f32.mrf.mxu0
  %v1594 = vadd.f32 %v1305, %v1593
  %v1595 = vpop.f32.mrf.mxu0
  %v1596 = vpop.f32.mrf.mxu0
  %v1597 = vadd.f32 %v1308, %v1596
  %v1598 = vpop.f32.mrf.mxu0
  %1599 = vmatprep.mubr.bf16.mxu0 %v717
  %1600 = vmatmul.mubr.bf16.gmra.mxu0 %v716
  %v1601 = vpop.f32.mrf.mxu0
  %v1602 = vadd.f32 %v1313, %v1601
  %v1603 = vpop.f32.mrf.mxu0
  %v1604 = vpop.f32.mrf.mxu0
  %v1605 = vadd.f32 %v1316, %v1604
  %v1606 = vpop.f32.mrf.mxu0
  %1607 = vmatprep.mubr.bf16.mxu0 %v721
  %1608 = vmatmul.mubr.bf16.gmra.mxu0 %v720
  %v1609 = vpop.f32.mrf.mxu0
  %v1610 = vadd.f32 %v1321, %v1609
  %v1611 = vpop.f32.mrf.mxu0
  %v1612 = vpop.f32.mrf.mxu0
  %v1613 = vadd.f32 %v1324, %v1612
  %v1614 = vpop.f32.mrf.mxu0
  %1615 = vmatprep.mubr.bf16.mxu0 %v725
  %1616 = vmatmul.mubr.bf16.gmra.mxu0 %v724
  %v1617 = vpop.f32.mrf.mxu0
  %v1618 = vadd.f32 %v1329, %v1617
  %v1619 = vpop.f32.mrf.mxu0
  %v1620 = vpop.f32.mrf.mxu0
  %v1621 = vadd.f32 %v1332, %v1620
  %v1622 = vpop.f32.mrf.mxu0
  %1623 = vdwg.mxu0
  %v1624 = vmax.f32 %v1370, 0.0
  %v1625 = vmax.f32 %v1373, 0.0
  %v1626 = vmax.f32 %v1378, 0.0
  %v1627 = vmax.f32 %v1381, 0.0
  %v1628 = vmax.f32 %v1386, 0.0
  %v1629 = vmax.f32 %v1389, 0.0
  %v1630 = vmax.f32 %v1394, 0.0
  %v1631 = vmax.f32 %v1397, 0.0
  %v1632 = vmax.f32 %v1402, 0.0
  %v1633 = vmax.f32 %v1405, 0.0
  %v1634 = vmax.f32 %v1410, 0.0
  %v1635 = vmax.f32 %v1413, 0.0
  %v1636 = vmax.f32 %v1418, 0.0
  %v1637 = vmax.f32 %v1421, 0.0
  %v1638 = vmax.f32 %v1426, 0.0
  %v1639 = vmax.f32 %v1429, 0.0
  %v1640 = vmax.f32 %v1434, 0.0
  %v1641 = vmax.f32 %v1437, 0.0
  %v1642 = vmax.f32 %v1442, 0.0
  %v1643 = vmax.f32 %v1445, 0.0
  %v1644 = vmax.f32 %v1450, 0.0
  %v1645 = vmax.f32 %v1453, 0.0
  %v1646 = vmax.f32 %v1458, 0.0
  %v1647 = vmax.f32 %v1461, 0.0
  %v1648 = vmax.f32 %v1466, 0.0
  %v1649 = vmax.f32 %v1469, 0.0
  %v1650 = vmax.f32 %v1474, 0.0
  %v1651 = vmax.f32 %v1477, 0.0
  %v1652 = vmax.f32 %v1482, 0.0
  %v1653 = vmax.f32 %v1485, 0.0
  %v1654 = vmax.f32 %v1490, 0.0
  %v1655 = vmax.f32 %v1493, 0.0
  %v1656 = vmax.f32 %v1498, 0.0
  %v1657 = vmax.f32 %v1501, 0.0
  %v1658 = vmax.f32 %v1506, 0.0
  %v1659 = vmax.f32 %v1509, 0.0
  %v1660 = vmax.f32 %v1514, 0.0
  %v1661 = vmax.f32 %v1517, 0.0
  %v1662 = vmax.f32 %v1522, 0.0
  %v1663 = vmax.f32 %v1525, 0.0
  %v1664 = vmax.f32 %v1530, 0.0
  %v1665 = vmax.f32 %v1533, 0.0
  %v1666 = vmax.f32 %v1538, 0.0
  %v1667 = vmax.f32 %v1541, 0.0
  %v1668 = vmax.f32 %v1546, 0.0
  %v1669 = vmax.f32 %v1549, 0.0
  %v1670 = vmax.f32 %v1554, 0.0
  %v1671 = vmax.f32 %v1557, 0.0
  %v1672 = vmax.f32 %v1562, 0.0
  %v1673 = vmax.f32 %v1565, 0.0
  %v1674 = vmax.f32 %v1570, 0.0
  %v1675 = vmax.f32 %v1573, 0.0
  %v1676 = vmax.f32 %v1578, 0.0
  %v1677 = vmax.f32 %v1581, 0.0
  %v1678 = vmax.f32 %v1586, 0.0
  %v1679 = vmax.f32 %v1589, 0.0
  %v1680 = vmax.f32 %v1594, 0.0
  %v1681 = vmax.f32 %v1597, 0.0
  %v1682 = vmax.f32 %v1602, 0.0
  %v1683 = vmax.f32 %v1605, 0.0
  %v1684 = vmax.f32 %v1610, 0.0
  %v1685 = vmax.f32 %v1613, 0.0
  %v1686 = vmax.f32 %v1618, 0.0
  %v1687 = vmax.f32 %v1621, 0.0
  %v1688 = vpack.c.bf16 %v1625, %v1624
  %v1689 = vpack.c.bf16 %v1627, %v1626
  %v1690 = vpack.c.bf16 %v1629, %v1628
  %v1691 = vpack.c.bf16 %v1631, %v1630
  %v1692 = vpack.c.bf16 %v1633, %v1632
  %v1693 = vpack.c.bf16 %v1635, %v1634
  %v1694 = vpack.c.bf16 %v1637, %v1636
  %v1695 = vpack.c.bf16 %v1639, %v1638
  %v1696 = vpack.c.bf16 %v1641, %v1640
  %v1697 = vpack.c.bf16 %v1643, %v1642
  %v1698 = vpack.c.bf16 %v1645, %v1644
  %v1699 = vpack.c.bf16 %v1647, %v1646
  %v1700 = vpack.c.bf16 %v1649, %v1648
  %v1701 = vpack.c.bf16 %v1651, %v1650
  %v1702 = vpack.c.bf16 %v1653, %v1652
  %v1703 = vpack.c.bf16 %v1655, %v1654
  %v1704 = vpack.c.bf16 %v1657, %v1656
  %v1705 = vpack.c.bf16 %v1659, %v1658
  %v1706 = vpack.c.bf16 %v1661, %v1660
  %v1707 = vpack.c.bf16 %v1663, %v1662
  %v1708 = vpack.c.bf16 %v1665, %v1664
  %v1709 = vpack.c.bf16 %v1667, %v1666
  %v1710 = vpack.c.bf16 %v1669, %v1668
  %v1711 = vpack.c.bf16 %v1671, %v1670
  %v1712 = vpack.c.bf16 %v1673, %v1672
  %v1713 = vpack.c.bf16 %v1675, %v1674
  %v1714 = vpack.c.bf16 %v1677, %v1676
  %v1715 = vpack.c.bf16 %v1679, %v1678
  %v1716 = vpack.c.bf16 %v1681, %v1680
  %v1717 = vpack.c.bf16 %v1683, %v1682
  %v1718 = vpack.c.bf16 %v1685, %v1684
  %v1719 = vpack.c.bf16 %v1687, %v1686
  %v1752 = vunpack.c.l.b16 %v1688
  %v1753 = vunpack.c.h.b16 %v1688
  %v1754 = vunpack.c.l.b16 %v1689
  %v1755 = vunpack.c.h.b16 %v1689
  %v1756 = vunpack.c.l.b16 %v1690
  %v1757 = vunpack.c.h.b16 %v1690
  %v1758 = vunpack.c.l.b16 %v1691
  %v1759 = vunpack.c.h.b16 %v1691
  %v1760 = vunpack.c.l.b16 %v1692
  %v1761 = vunpack.c.h.b16 %v1692
  %v1762 = vunpack.c.l.b16 %v1693
  %v1763 = vunpack.c.h.b16 %v1693
  %v1764 = vunpack.c.l.b16 %v1694
  %v1765 = vunpack.c.h.b16 %v1694
  %v1766 = vunpack.c.l.b16 %v1695
  %v1767 = vunpack.c.h.b16 %v1695
  %v1768 = vunpack.c.l.b16 %v1696
  %v1769 = vunpack.c.h.b16 %v1696
  %v1770 = vunpack.c.l.b16 %v1697
  %v1771 = vunpack.c.h.b16 %v1697
  %v1772 = vunpack.c.l.b16 %v1698
  %v1773 = vunpack.c.h.b16 %v1698
  %v1774 = vunpack.c.l.b16 %v1699
  %v1775 = vunpack.c.h.b16 %v1699
  %v1776 = vunpack.c.l.b16 %v1700
  %v1777 = vunpack.c.h.b16 %v1700
  %v1778 = vunpack.c.l.b16 %v1701
  %v1779 = vunpack.c.h.b16 %v1701
  %v1780 = vunpack.c.l.b16 %v1702
  %v1781 = vunpack.c.h.b16 %v1702
  %v1782 = vunpack.c.l.b16 %v1703
  %v1783 = vunpack.c.h.b16 %v1703
  %v1784 = vunpack.c.l.b16 %v1704
  %v1785 = vunpack.c.h.b16 %v1704
  %v1786 = vunpack.c.l.b16 %v1705
  %v1787 = vunpack.c.h.b16 %v1705
  %v1788 = vunpack.c.l.b16 %v1706
  %v1789 = vunpack.c.h.b16 %v1706
  %v1790 = vunpack.c.l.b16 %v1707
  %v1791 = vunpack.c.h.b16 %v1707
  %v1792 = vunpack.c.l.b16 %v1708
  %v1793 = vunpack.c.h.b16 %v1708
  %v1794 = vunpack.c.l.b16 %v1709
  %v1795 = vunpack.c.h.b16 %v1709
  %v1796 = vunpack.c.l.b16 %v1710
  %v1797 = vunpack.c.h.b16 %v1710
  %v1798 = vunpack.c.l.b16 %v1711
  %v1799 = vunpack.c.h.b16 %v1711
  %v1800 = vunpack.c.l.b16 %v1712
  %v1801 = vunpack.c.h.b16 %v1712
  %v1802 = vunpack.c.l.b16 %v1713
  %v1803 = vunpack.c.h.b16 %v1713
  %v1804 = vunpack.c.l.b16 %v1714
  %v1805 = vunpack.c.h.b16 %v1714
  %v1806 = vunpack.c.l.b16 %v1715
  %v1807 = vunpack.c.h.b16 %v1715
  %v1808 = vunpack.c.l.b16 %v1716
  %v1809 = vunpack.c.h.b16 %v1716
  %v1810 = vunpack.c.l.b16 %v1717
  %v1811 = vunpack.c.h.b16 %v1717
  %v1812 = vunpack.c.l.b16 %v1718
  %v1813 = vunpack.c.h.b16 %v1718
  %v1814 = vunpack.c.l.b16 %v1719
  %v1815 = vunpack.c.h.b16 %v1719
  %v1816 = vpack.c.b16 %v1752, %v1752
  %v1817 = vpack.c.b16 %v1753, %v1753
  %v1818 = vpack.c.b16 %v1754, %v1754
  %v1819 = vpack.c.b16 %v1755, %v1755
  %v1820 = vpack.c.b16 %v1756, %v1756
  %v1821 = vpack.c.b16 %v1757, %v1757
  %v1822 = vpack.c.b16 %v1758, %v1758
  %v1823 = vpack.c.b16 %v1759, %v1759
  %v1824 = vpack.c.b16 %v1760, %v1760
  %v1825 = vpack.c.b16 %v1761, %v1761
  %v1826 = vpack.c.b16 %v1762, %v1762
  %v1827 = vpack.c.b16 %v1763, %v1763
  %v1828 = vpack.c.b16 %v1764, %v1764
  %v1829 = vpack.c.b16 %v1765, %v1765
  %v1830 = vpack.c.b16 %v1766, %v1766
  %v1831 = vpack.c.b16 %v1767, %v1767
  %v1832 = vpack.c.b16 %v1768, %v1768
  %v1833 = vpack.c.b16 %v1769, %v1769
  %v1834 = vpack.c.b16 %v1770, %v1770
  %v1835 = vpack.c.b16 %v1771, %v1771
  %v1836 = vpack.c.b16 %v1772, %v1772
  %v1837 = vpack.c.b16 %v1773, %v1773
  %v1838 = vpack.c.b16 %v1774, %v1774
  %v1839 = vpack.c.b16 %v1775, %v1775
  %v1840 = vpack.c.b16 %v1776, %v1776
  %v1841 = vpack.c.b16 %v1777, %v1777
  %v1842 = vpack.c.b16 %v1778, %v1778
  %v1843 = vpack.c.b16 %v1779, %v1779
  %v1844 = vpack.c.b16 %v1780, %v1780
  %v1845 = vpack.c.b16 %v1781, %v1781
  %v1846 = vpack.c.b16 %v1782, %v1782
  %v1847 = vpack.c.b16 %v1783, %v1783
  %v1848 = vpack.c.b16 %v1784, %v1784
  %v1849 = vpack.c.b16 %v1785, %v1785
  %v1850 = vpack.c.b16 %v1786, %v1786
  %v1851 = vpack.c.b16 %v1787, %v1787
  %v1852 = vpack.c.b16 %v1788, %v1788
  %v1853 = vpack.c.b16 %v1789, %v1789
  %v1854 = vpack.c.b16 %v1790, %v1790
  %v1855 = vpack.c.b16 %v1791, %v1791
  %v1856 = vpack.c.b16 %v1792, %v1792
  %v1857 = vpack.c.b16 %v1793, %v1793
  %v1858 = vpack.c.b16 %v1794, %v1794
  %v1859 = vpack.c.b16 %v1795, %v1795
  %v1860 = vpack.c.b16 %v1796, %v1796
  %v1861 = vpack.c.b16 %v1797, %v1797
  %v1862 = vpack.c.b16 %v1798, %v1798
  %v1863 = vpack.c.b16 %v1799, %v1799
  %v1864 = vpack.c.b16 %v1800, %v1800
  %v1865 = vpack.c.b16 %v1801, %v1801
  %v1866 = vpack.c.b16 %v1802, %v1802
  %v1867 = vpack.c.b16 %v1803, %v1803
  %v1868 = vpack.c.b16 %v1804, %v1804
  %v1869 = vpack.c.b16 %v1805, %v1805
  %v1870 = vpack.c.b16 %v1806, %v1806
  %v1871 = vpack.c.b16 %v1807, %v1807
  %v1872 = vpack.c.b16 %v1808, %v1808
  %v1873 = vpack.c.b16 %v1809, %v1809
  %v1874 = vpack.c.b16 %v1810, %v1810
  %v1875 = vpack.c.b16 %v1811, %v1811
  %v1876 = vpack.c.b16 %v1812, %v1812
  %v1877 = vpack.c.b16 %v1813, %v1813
  %v1878 = vpack.c.b16 %v1814, %v1814
  %v1879 = vpack.c.b16 %v1815, %v1815
  %1944 = vst [vmem:[%s3] sm:$0xf] %v1816
  %1945 = vst [vmem:[%s3 + $0x4] sm:$0xf] %v1817
  %1946 = vst [vmem:[%s3 + $0x8] sm:$0xf] %v1818
  %1947 = vst [vmem:[%s3 + $0xc] sm:$0xf] %v1819
  %1948 = vst [vmem:[%s3 + $0x10] sm:$0xf] %v1820
  %1949 = vst [vmem:[%s3 + $0x14] sm:$0xf] %v1821
  %1950 = vst [vmem:[%s3 + $0x18] sm:$0xf] %v1822
  %1951 = vst [vmem:[%s3 + $0x1c] sm:$0xf] %v1823
  %1952 = vst [vmem:[%s3 + $0x20] sm:$0xf] %v1824
  %1953 = vst [vmem:[%s3 + $0x24] sm:$0xf] %v1825
  %1954 = vst [vmem:[%s3 + $0x28] sm:$0xf] %v1826
  %1955 = vst [vmem:[%s3 + $0x2c] sm:$0xf] %v1827
  %1956 = vst [vmem:[%s3 + $0x30] sm:$0xf] %v1828
  %1957 = vst [vmem:[%s3 + $0x34] sm:$0xf] %v1829
  %1958 = vst [vmem:[%s3 + $0x38] sm:$0xf] %v1830
  %1959 = vst [vmem:[%s3 + $0x3c] sm:$0xf] %v1831
  %1960 = vst [vmem:[%s3 + $0x40] sm:$0xf] %v1832
  %1961 = vst [vmem:[%s3 + $0x44] sm:$0xf] %v1833
  %1962 = vst [vmem:[%s3 + $0x48] sm:$0xf] %v1834
  %1963 = vst [vmem:[%s3 + $0x4c] sm:$0xf] %v1835
  %1964 = vst [vmem:[%s3 + $0x50] sm:$0xf] %v1836
  %1965 = vst [vmem:[%s3 + $0x54] sm:$0xf] %v1837
  %1966 = vst [vmem:[%s3 + $0x58] sm:$0xf] %v1838
  %1967 = vst [vmem:[%s3 + $0x5c] sm:$0xf] %v1839
  %1968 = vst [vmem:[%s3 + $0x60] sm:$0xf] %v1840
  %1969 = vst [vmem:[%s3 + $0x64] sm:$0xf] %v1841
  %1970 = vst [vmem:[%s3 + $0x68] sm:$0xf] %v1842
  %1971 = vst [vmem:[%s3 + $0x6c] sm:$0xf] %v1843
  %1972 = vst [vmem:[%s3 + $0x70] sm:$0xf] %v1844
  %1973 = vst [vmem:[%s3 + $0x74] sm:$0xf] %v1845
  %1974 = vst [vmem:[%s3 + $0x78] sm:$0xf] %v1846
  %1975 = vst [vmem:[%s3 + $0x7c] sm:$0xf] %v1847
  %1976 = vst [vmem:[%s3 + $0x80] sm:$0xf] %v1848
  %1977 = vst [vmem:[%s3 + $0x84] sm:$0xf] %v1849
  %1978 = vst [vmem:[%s3 + $0x88] sm:$0xf] %v1850
  %1979 = vst [vmem:[%s3 + $0x8c] sm:$0xf] %v1851
  %1980 = vst [vmem:[%s3 + $0x90] sm:$0xf] %v1852
  %1981 = vst [vmem:[%s3 + $0x94] sm:$0xf] %v1853
  %1982 = vst [vmem:[%s3 + $0x98] sm:$0xf] %v1854
  %1983 = vst [vmem:[%s3 + $0x9c] sm:$0xf] %v1855
  %1984 = vst [vmem:[%s3 + $0xa0] sm:$0xf] %v1856
  %1985 = vst [vmem:[%s3 + $0xa4] sm:$0xf] %v1857
  %1986 = vst [vmem:[%s3 + $0xa8] sm:$0xf] %v1858
  %1987 = vst [vmem:[%s3 + $0xac] sm:$0xf] %v1859
  %1988 = vst [vmem:[%s3 + $0xb0] sm:$0xf] %v1860
  %1989 = vst [vmem:[%s3 + $0xb4] sm:$0xf] %v1861
  %1990 = vst [vmem:[%s3 + $0xb8] sm:$0xf] %v1862
  %1991 = vst [vmem:[%s3 + $0xbc] sm:$0xf] %v1863
  %1992 = vst [vmem:[%s3 + $0xc0] sm:$0xf] %v1864
  %1993 = vst [vmem:[%s3 + $0xc4] sm:$0xf] %v1865
  %1994 = vst [vmem:[%s3 + $0xc8] sm:$0xf] %v1866
  %1995 = vst [vmem:[%s3 + $0xcc] sm:$0xf] %v1867
  %1996 = vst [vmem:[%s3 + $0xd0] sm:$0xf] %v1868
  %1997 = vst [vmem:[%s3 + $0xd4] sm:$0xf] %v1869
  %1998 = vst [vmem:[%s3 + $0xd8] sm:$0xf] %v1870
  %1999 = vst [vmem:[%s3 + $0xdc] sm:$0xf] %v1871
  %2000 = vst [vmem:[%s3 + $0xe0] sm:$0xf] %v1872
  %2001 = vst [vmem:[%s3 + $0xe4] sm:$0xf] %v1873
  %2002 = vst [vmem:[%s3 + $0xe8] sm:$0xf] %v1874
  %2003 = vst [vmem:[%s3 + $0xec] sm:$0xf] %v1875
  %2004 = vst [vmem:[%s3 + $0xf0] sm:$0xf] %v1876
  %2005 = vst [vmem:[%s3 + $0xf4] sm:$0xf] %v1877
  %2006 = vst [vmem:[%s3 + $0xf8] sm:$0xf] %v1878
  %2007 = vst [vmem:[%s3 + $0xfc] sm:$0xf] %v1879
  // Predicated region
  $region14: #{model_forward.10} parent=0 // pred_check
    _
  $region15: #{model_forward.10} parent=0 // pred_check_branch
    %2009 = sbr.rel (0) target = $region17
  $region16: #{model_forward.10} parent=0 // pred_region
    _
  $region17: #{model_forward.10} parent=0 // pred_fallthru
    _
  // Predicated region
  $region18: #{model_forward.10} parent=0 // pred_check
    _
  $region19: #{model_forward.10} parent=0 // pred_check_branch
    %2011 = sbr.rel (0) target = $region21
  $region20: #{model_forward.10} parent=0 // pred_region
    _
  $region21: #{model_forward.10} parent=0 // pred_fallthru
    _

// kernel: model_forward.11
$region0: #{model_forward.11}
  #allocation0 [shape = 'u32[]', space=smem, size = 0x4, offset = 0x4, fixed_abs, tag = 'smem constant byte address 0x4 - core index']
  #allocation1 [shape = 'u32[144,128]{1,0:T(1,128)}', space=vmem, size = 0x12000, scoped, tag = 'internal scratch']
  %s0 = inlined_call_operand.vmem [shape: bf16[128,512], index: 0, kind: input, shape index: {}]
  %s1 = inlined_call_operand.vmem [shape: bf16[512,128], index: 1, kind: input, shape index: {}]
  %s2 = inlined_call_operand.vmem [shape: f32[1,128], index: 2, kind: input, shape index: {}]
  %s3 = inlined_call_operand.vmem [shape: bf16[128,128], index: 3, kind: output, shape index: {}]
  %s4 = sld [smem:[#allocation0]]
  $region22: #{model_forward.11} parent=0
    _
  %s6 = ssub.s32 1, %s4
  %s7 = scalar_select 0, %s6, %s4
  // Predicated region
  $region2: #{model_forward.11} parent=0 // pred_check
    _
  $region3: #{model_forward.11} parent=0 // pred_check_branch
    %9 = sbr.rel (0) target = $region5
  $region4: #{model_forward.11} parent=0 // pred_region
    _
  $region5: #{model_forward.11} parent=0 // pred_fallthru
    _
  // Predicated region
  $region6: #{model_forward.11} parent=0 // pred_check
    _
  $region7: #{model_forward.11} parent=0 // pred_check_branch
    %11 = sbr.rel (0) target = $region9
  $region8: #{model_forward.11} parent=0 // pred_region
    _
  $region9: #{model_forward.11} parent=0 // pred_fallthru
    _
  // Predicated region
  $region10: #{model_forward.11} parent=0 // pred_check
    _
  $region11: #{model_forward.11} parent=0 // pred_check_branch
    %13 = sbr.rel (0) target = $region13
  $region12: #{model_forward.11} parent=0 // pred_region
    _
  $region13: #{model_forward.11} parent=0 // pred_fallthru
    _
  %v15 = vld [vmem:[%s0] sm:$0xff]
  %v16 = vld [vmem:[%s0 + $0x8] sm:$0xff]
  %v17 = vld [vmem:[%s0 + $0x10] sm:$0xff]
  %v18 = vld [vmem:[%s0 + $0x18] sm:$0xff]
  %v19 = vld [vmem:[%s0 + $0x20] sm:$0xff]
  %v20 = vld [vmem:[%s0 + $0x28] sm:$0xff]
  %v21 = vld [vmem:[%s0 + $0x30] sm:$0xff]
  %v22 = vld [vmem:[%s0 + $0x38] sm:$0xff]
  %v23 = vld [vmem:[%s0 + $0x40] sm:$0xff]
  %v24 = vld [vmem:[%s0 + $0x48] sm:$0xff]
  %v25 = vld [vmem:[%s0 + $0x50] sm:$0xff]
  %v26 = vld [vmem:[%s0 + $0x58] sm:$0xff]
  %v27 = vld [vmem:[%s0 + $0x60] sm:$0xff]
  %v28 = vld [vmem:[%s0 + $0x68] sm:$0xff]
  %v29 = vld [vmem:[%s0 + $0x70] sm:$0xff]
  %v30 = vld [vmem:[%s0 + $0x78] sm:$0xff]
  %v31 = vld [vmem:[%s0 + $0x80] sm:$0xff]
  %v32 = vld [vmem:[%s0 + $0x88] sm:$0xff]
  %v33 = vld [vmem:[%s0 + $0x90] sm:$0xff]
  %v34 = vld [vmem:[%s0 + $0x98] sm:$0xff]
  %v35 = vld [vmem:[%s0 + $0xa0] sm:$0xff]
  %v36 = vld [vmem:[%s0 + $0xa8] sm:$0xff]
  %v37 = vld [vmem:[%s0 + $0xb0] sm:$0xff]
  %v38 = vld [vmem:[%s0 + $0xb8] sm:$0xff]
  %v39 = vld [vmem:[%s0 + $0xc0] sm:$0xff]
  %v40 = vld [vmem:[%s0 + $0xc8] sm:$0xff]
  %v41 = vld [vmem:[%s0 + $0xd0] sm:$0xff]
  %v42 = vld [vmem:[%s0 + $0xd8] sm:$0xff]
  %v43 = vld [vmem:[%s0 + $0xe0] sm:$0xff]
  %v44 = vld [vmem:[%s0 + $0xe8] sm:$0xff]
  %v45 = vld [vmem:[%s0 + $0xf0] sm:$0xff]
  %v46 = vld [vmem:[%s0 + $0xf8] sm:$0xff]
  %v47 = vld [vmem:[%s1] sm:$0xf]
  %v48 = vld [vmem:[%s1 + $0x4] sm:$0xf]
  %v49 = vld [vmem:[%s1 + $0x8] sm:$0xf]
  %v50 = vld [vmem:[%s1 + $0xc] sm:$0xf]
  %v51 = vld [vmem:[%s1 + $0x10] sm:$0xf]
  %v52 = vld [vmem:[%s1 + $0x14] sm:$0xf]
  %v53 = vld [vmem:[%s1 + $0x18] sm:$0xf]
  %v54 = vld [vmem:[%s1 + $0x1c] sm:$0xf]
  %v55 = vld [vmem:[%s1 + $0x20] sm:$0xf]
  %v56 = vld [vmem:[%s1 + $0x24] sm:$0xf]
  %v57 = vld [vmem:[%s1 + $0x28] sm:$0xf]
  %v58 = vld [vmem:[%s1 + $0x2c] sm:$0xf]
  %v59 = vld [vmem:[%s1 + $0x30] sm:$0xf]
  %v60 = vld [vmem:[%s1 + $0x34] sm:$0xf]
  %v61 = vld [vmem:[%s1 + $0x38] sm:$0xf]
  %v62 = vld [vmem:[%s1 + $0x3c] sm:$0xf]
  %v63 = vld [vmem:[%s1 + $0x40] sm:$0xf]
  %v64 = vld [vmem:[%s1 + $0x44] sm:$0xf]
  %v65 = vld [vmem:[%s1 + $0x48] sm:$0xf]
  %v66 = vld [vmem:[%s1 + $0x4c] sm:$0xf]
  %v67 = vld [vmem:[%s1 + $0x50] sm:$0xf]
  %v68 = vld [vmem:[%s1 + $0x54] sm:$0xf]
  %v69 = vld [vmem:[%s1 + $0x58] sm:$0xf]
  %v70 = vld [vmem:[%s1 + $0x5c] sm:$0xf]
  %v71 = vld [vmem:[%s1 + $0x60] sm:$0xf]
  %v72 = vld [vmem:[%s1 + $0x64] sm:$0xf]
  %v73 = vld [vmem:[%s1 + $0x68] sm:$0xf]
  %v74 = vld [vmem:[%s1 + $0x6c] sm:$0xf]
  %v75 = vld [vmem:[%s1 + $0x70] sm:$0xf]
  %v76 = vld [vmem:[%s1 + $0x74] sm:$0xf]
  %v77 = vld [vmem:[%s1 + $0x78] sm:$0xf]
  %v78 = vld [vmem:[%s1 + $0x7c] sm:$0xf]
  %v79 = vld [vmem:[%s1 + $0x80] sm:$0xf]
  %v80 = vld [vmem:[%s1 + $0x84] sm:$0xf]
  %v81 = vld [vmem:[%s1 + $0x88] sm:$0xf]
  %v82 = vld [vmem:[%s1 + $0x8c] sm:$0xf]
  %v83 = vld [vmem:[%s1 + $0x90] sm:$0xf]
  %v84 = vld [vmem:[%s1 + $0x94] sm:$0xf]
  %v85 = vld [vmem:[%s1 + $0x98] sm:$0xf]
  %v86 = vld [vmem:[%s1 + $0x9c] sm:$0xf]
  %v87 = vld [vmem:[%s1 + $0xa0] sm:$0xf]
  %v88 = vld [vmem:[%s1 + $0xa4] sm:$0xf]
  %v89 = vld [vmem:[%s1 + $0xa8] sm:$0xf]
  %v90 = vld [vmem:[%s1 + $0xac] sm:$0xf]
  %v91 = vld [vmem:[%s1 + $0xb0] sm:$0xf]
  %v92 = vld [vmem:[%s1 + $0xb4] sm:$0xf]
  %v93 = vld [vmem:[%s1 + $0xb8] sm:$0xf]
  %v94 = vld [vmem:[%s1 + $0xbc] sm:$0xf]
  %v95 = vld [vmem:[%s1 + $0xc0] sm:$0xf]
  %v96 = vld [vmem:[%s1 + $0xc4] sm:$0xf]
  %v97 = vld [vmem:[%s1 + $0xc8] sm:$0xf]
  %v98 = vld [vmem:[%s1 + $0xcc] sm:$0xf]
  %v99 = vld [vmem:[%s1 + $0xd0] sm:$0xf]
  %v100 = vld [vmem:[%s1 + $0xd4] sm:$0xf]
  %v101 = vld [vmem:[%s1 + $0xd8] sm:$0xf]
  %v102 = vld [vmem:[%s1 + $0xdc] sm:$0xf]
  %v103 = vld [vmem:[%s1 + $0xe0] sm:$0xf]
  %v104 = vld [vmem:[%s1 + $0xe4] sm:$0xf]
  %v105 = vld [vmem:[%s1 + $0xe8] sm:$0xf]
  %v106 = vld [vmem:[%s1 + $0xec] sm:$0xf]
  %v107 = vld [vmem:[%s1 + $0xf0] sm:$0xf]
  %v108 = vld [vmem:[%s1 + $0xf4] sm:$0xf]
  %v109 = vld [vmem:[%s1 + $0xf8] sm:$0xf]
  %v110 = vld [vmem:[%s1 + $0xfc] sm:$0xf]
  %v111 = vld [vmem:[%s2] sm:$0x1]
  %v113 = vlaneseq
  %v114 = vshrl.u32 %v113, 7
  %v115 = vsub.s32 0, %v114
  %v116 = vrot.slane %v111, %v115
  %v150 = vunpack.c.l.b16 %v15
  %v151 = vunpack.c.h.b16 %v15
  %v152 = vunpack.c.l.b16 %v16
  %v153 = vunpack.c.h.b16 %v16
  %v154 = vunpack.c.l.b16 %v17
  %v155 = vunpack.c.h.b16 %v17
  %v156 = vunpack.c.l.b16 %v18
  %v157 = vunpack.c.h.b16 %v18
  %v158 = vunpack.c.l.b16 %v19
  %v159 = vunpack.c.h.b16 %v19
  %v160 = vunpack.c.l.b16 %v20
  %v161 = vunpack.c.h.b16 %v20
  %v162 = vunpack.c.l.b16 %v21
  %v163 = vunpack.c.h.b16 %v21
  %v164 = vunpack.c.l.b16 %v22
  %v165 = vunpack.c.h.b16 %v22
  %v166 = vunpack.c.l.b16 %v23
  %v167 = vunpack.c.h.b16 %v23
  %v168 = vunpack.c.l.b16 %v24
  %v169 = vunpack.c.h.b16 %v24
  %v170 = vunpack.c.l.b16 %v25
  %v171 = vunpack.c.h.b16 %v25
  %v172 = vunpack.c.l.b16 %v26
  %v173 = vunpack.c.h.b16 %v26
  %v174 = vunpack.c.l.b16 %v27
  %v175 = vunpack.c.h.b16 %v27
  %v176 = vunpack.c.l.b16 %v28
  %v177 = vunpack.c.h.b16 %v28
  %v178 = vunpack.c.l.b16 %v29
  %v179 = vunpack.c.h.b16 %v29
  %v180 = vunpack.c.l.b16 %v30
  %v181 = vunpack.c.h.b16 %v30
  %v182 = vunpack.c.l.b16 %v31
  %v183 = vunpack.c.h.b16 %v31
  %v184 = vunpack.c.l.b16 %v32
  %v185 = vunpack.c.h.b16 %v32
  %v186 = vunpack.c.l.b16 %v33
  %v187 = vunpack.c.h.b16 %v33
  %v188 = vunpack.c.l.b16 %v34
  %v189 = vunpack.c.h.b16 %v34
  %v190 = vunpack.c.l.b16 %v35
  %v191 = vunpack.c.h.b16 %v35
  %v192 = vunpack.c.l.b16 %v36
  %v193 = vunpack.c.h.b16 %v36
  %v194 = vunpack.c.l.b16 %v37
  %v195 = vunpack.c.h.b16 %v37
  %v196 = vunpack.c.l.b16 %v38
  %v197 = vunpack.c.h.b16 %v38
  %v198 = vunpack.c.l.b16 %v39
  %v199 = vunpack.c.h.b16 %v39
  %v200 = vunpack.c.l.b16 %v40
  %v201 = vunpack.c.h.b16 %v40
  %v202 = vunpack.c.l.b16 %v41
  %v203 = vunpack.c.h.b16 %v41
  %v204 = vunpack.c.l.b16 %v42
  %v205 = vunpack.c.h.b16 %v42
  %v206 = vunpack.c.l.b16 %v43
  %v207 = vunpack.c.h.b16 %v43
  %v208 = vunpack.c.l.b16 %v44
  %v209 = vunpack.c.h.b16 %v44
  %v210 = vunpack.c.l.b16 %v45
  %v211 = vunpack.c.h.b16 %v45
  %v212 = vunpack.c.l.b16 %v46
  %v213 = vunpack.c.h.b16 %v46
  %v214 = vpack.c.b16 %v154, %v150
  %v215 = vpack.c.b16 %v155, %v151
  %v216 = vpack.c.b16 %v156, %v152
  %v217 = vpack.c.b16 %v157, %v153
  %v218 = vpack.c.b16 %v162, %v158
  %v219 = vpack.c.b16 %v163, %v159
  %v220 = vpack.c.b16 %v164, %v160
  %v221 = vpack.c.b16 %v165, %v161
  %v222 = vpack.c.b16 %v170, %v166
  %v223 = vpack.c.b16 %v171, %v167
  %v224 = vpack.c.b16 %v172, %v168
  %v225 = vpack.c.b16 %v173, %v169
  %v226 = vpack.c.b16 %v178, %v174
  %v227 = vpack.c.b16 %v179, %v175
  %v228 = vpack.c.b16 %v180, %v176
  %v229 = vpack.c.b16 %v181, %v177
  %v230 = vpack.c.b16 %v186, %v182
  %v231 = vpack.c.b16 %v187, %v183
  %v232 = vpack.c.b16 %v188, %v184
  %v233 = vpack.c.b16 %v189, %v185
  %v234 = vpack.c.b16 %v194, %v190
  %v235 = vpack.c.b16 %v195, %v191
  %v236 = vpack.c.b16 %v196, %v192
  %v237 = vpack.c.b16 %v197, %v193
  %v238 = vpack.c.b16 %v202, %v198
  %v239 = vpack.c.b16 %v203, %v199
  %v240 = vpack.c.b16 %v204, %v200
  %v241 = vpack.c.b16 %v205, %v201
  %v242 = vpack.c.b16 %v210, %v206
  %v243 = vpack.c.b16 %v211, %v207
  %v244 = vpack.c.b16 %v212, %v208
  %v245 = vpack.c.b16 %v213, %v209
  %v342 = vunpack.c.l.b16 %v47
  %v343 = vunpack.c.l.b16 %v48
  %v344 = vunpack.c.l.b16 %v49
  %v345 = vunpack.c.l.b16 %v50
  %v346 = vunpack.c.l.b16 %v51
  %v347 = vunpack.c.l.b16 %v52
  %v348 = vunpack.c.l.b16 %v53
  %v349 = vunpack.c.l.b16 %v54
  %v350 = vunpack.c.l.b16 %v55
  %v351 = vunpack.c.l.b16 %v56
  %v352 = vunpack.c.l.b16 %v57
  %v353 = vunpack.c.l.b16 %v58
  %v354 = vunpack.c.l.b16 %v59
  %v355 = vunpack.c.l.b16 %v60
  %v356 = vunpack.c.l.b16 %v61
  %v357 = vunpack.c.l.b16 %v62
  %v358 = vunpack.c.l.b16 %v63
  %v359 = vunpack.c.l.b16 %v64
  %v360 = vunpack.c.l.b16 %v65
  %v361 = vunpack.c.l.b16 %v66
  %v362 = vunpack.c.l.b16 %v67
  %v363 = vunpack.c.l.b16 %v68
  %v364 = vunpack.c.l.b16 %v69
  %v365 = vunpack.c.l.b16 %v70
  %v366 = vunpack.c.l.b16 %v71
  %v367 = vunpack.c.l.b16 %v72
  %v368 = vunpack.c.l.b16 %v73
  %v369 = vunpack.c.l.b16 %v74
  %v370 = vunpack.c.l.b16 %v75
  %v371 = vunpack.c.l.b16 %v76
  %v372 = vunpack.c.l.b16 %v77
  %v373 = vunpack.c.l.b16 %v78
  %v374 = vunpack.c.l.b16 %v79
  %v375 = vunpack.c.l.b16 %v80
  %v376 = vunpack.c.l.b16 %v81
  %v377 = vunpack.c.l.b16 %v82
  %v378 = vunpack.c.l.b16 %v83
  %v379 = vunpack.c.l.b16 %v84
  %v380 = vunpack.c.l.b16 %v85
  %v381 = vunpack.c.l.b16 %v86
  %v382 = vunpack.c.l.b16 %v87
  %v383 = vunpack.c.l.b16 %v88
  %v384 = vunpack.c.l.b16 %v89
  %v385 = vunpack.c.l.b16 %v90
  %v386 = vunpack.c.l.b16 %v91
  %v387 = vunpack.c.l.b16 %v92
  %v388 = vunpack.c.l.b16 %v93
  %v389 = vunpack.c.l.b16 %v94
  %v390 = vunpack.c.l.b16 %v95
  %v391 = vunpack.c.l.b16 %v96
  %v392 = vunpack.c.l.b16 %v97
  %v393 = vunpack.c.l.b16 %v98
  %v394 = vunpack.c.l.b16 %v99
  %v395 = vunpack.c.l.b16 %v100
  %v396 = vunpack.c.l.b16 %v101
  %v397 = vunpack.c.l.b16 %v102
  %v398 = vunpack.c.l.b16 %v103
  %v399 = vunpack.c.l.b16 %v104
  %v400 = vunpack.c.l.b16 %v105
  %v401 = vunpack.c.l.b16 %v106
  %v402 = vunpack.c.l.b16 %v107
  %v403 = vunpack.c.l.b16 %v108
  %v404 = vunpack.c.l.b16 %v109
  %v405 = vunpack.c.l.b16 %v110
  %v406 = vpack.c.b16 %v343, %v342
  %v407 = vpack.c.b16 %v345, %v344
  %v408 = vpack.c.b16 %v347, %v346
  %v409 = vpack.c.b16 %v349, %v348
  %v410 = vpack.c.b16 %v351, %v350
  %v411 = vpack.c.b16 %v353, %v352
  %v412 = vpack.c.b16 %v355, %v354
  %v413 = vpack.c.b16 %v357, %v356
  %v414 = vpack.c.b16 %v359, %v358
  %v415 = vpack.c.b16 %v361, %v360
  %v416 = vpack.c.b16 %v363, %v362
  %v417 = vpack.c.b16 %v365, %v364
  %v418 = vpack.c.b16 %v367, %v366
  %v419 = vpack.c.b16 %v369, %v368
  %v420 = vpack.c.b16 %v371, %v370
  %v421 = vpack.c.b16 %v373, %v372
  %v422 = vpack.c.b16 %v375, %v374
  %v423 = vpack.c.b16 %v377, %v376
  %v424 = vpack.c.b16 %v379, %v378
  %v425 = vpack.c.b16 %v381, %v380
  %v426 = vpack.c.b16 %v383, %v382
  %v427 = vpack.c.b16 %v385, %v384
  %v428 = vpack.c.b16 %v387, %v386
  %v429 = vpack.c.b16 %v389, %v388
  %v430 = vpack.c.b16 %v391, %v390
  %v431 = vpack.c.b16 %v393, %v392
  %v432 = vpack.c.b16 %v395, %v394
  %v433 = vpack.c.b16 %v397, %v396
  %v434 = vpack.c.b16 %v399, %v398
  %v435 = vpack.c.b16 %v401, %v400
  %v436 = vpack.c.b16 %v403, %v402
  %v437 = vpack.c.b16 %v405, %v404
  %470 = vmatprep.subr.bf16.mxu0 0
  %471 = vmatpush1.bf16.msra.mxu0 %v413
  %472 = vmatprep.subr.bf16.mxu0 0
  %473 = vmatpush1.bf16.msra.mxu0 %v412
  %474 = vmatprep.subr.bf16.mxu0 0
  %475 = vmatpush1.bf16.msra.mxu0 %v411
  %476 = vmatprep.subr.bf16.mxu0 0
  %477 = vmatpush1.bf16.msra.mxu0 %v410
  %478 = vmatprep.subr.bf16.mxu0 0
  %479 = vmatpush1.bf16.msra.mxu0 %v409
  %480 = vmatprep.subr.bf16.mxu0 0
  %481 = vmatpush1.bf16.msra.mxu0 %v408
  %482 = vmatprep.subr.bf16.mxu0 0
  %483 = vmatpush1.bf16.msra.mxu0 %v407
  %484 = vmatprep.subr.bf16.mxu0 0
  %485 = vmatpush1.bf16.msra.mxu0 %v406
  %486 = vmatprep.subr.bf16.mxu0 0
  %487 = vmatpush2.bf16.msra.mxu0 %v421
  %488 = vmatprep.subr.bf16.mxu0 0
  %489 = vmatpush2.bf16.msra.mxu0 %v420
  %490 = vmatprep.subr.bf16.mxu0 0
  %491 = vmatpush2.bf16.msra.mxu0 %v419
  %492 = vmatprep.subr.bf16.mxu0 0
  %493 = vmatpush2.bf16.msra.mxu0 %v418
  %494 = vmatprep.subr.bf16.mxu0 0
  %495 = vmatpush2.bf16.msra.mxu0 %v417
  %496 = vmatprep.subr.bf16.mxu0 0
  %497 = vmatpush2.bf16.msra.mxu0 %v416
  %498 = vmatprep.subr.bf16.mxu0 0
  %499 = vmatpush2.bf16.msra.mxu0 %v415
  %500 = vmatprep.subr.bf16.mxu0 0
  %501 = vmatpush2.bf16.msra.mxu0 %v414
  %502 = vmatprep.mubr.bf16.mxu0 %v215
  %503 = vmatmul.mubr.bf16.gmra.mxu0 %v214
  %v504 = vpop.f32.mrf.mxu0
  %v505 = vadd.f32 %v116, %v504
  %v506 = vpop.f32.mrf.mxu0
  %v507 = vpop.f32.mrf.mxu0
  %v508 = vadd.f32 %v116, %v507
  %v509 = vpop.f32.mrf.mxu0
  %510 = vmatprep.mubr.bf16.mxu0 %v219
  %511 = vmatmul.mubr.bf16.gmra.mxu0 %v218
  %v512 = vpop.f32.mrf.mxu0
  %v513 = vadd.f32 %v116, %v512
  %v514 = vpop.f32.mrf.mxu0
  %v515 = vpop.f32.mrf.mxu0
  %v516 = vadd.f32 %v116, %v515
  %v517 = vpop.f32.mrf.mxu0
  %518 = vmatprep.mubr.bf16.mxu0 %v223
  %519 = vmatmul.mubr.bf16.gmra.mxu0 %v222
  %v520 = vpop.f32.mrf.mxu0
  %v521 = vadd.f32 %v116, %v520
  %v522 = vpop.f32.mrf.mxu0
  %v523 = vpop.f32.mrf.mxu0
  %v524 = vadd.f32 %v116, %v523
  %v525 = vpop.f32.mrf.mxu0
  %526 = vmatprep.mubr.bf16.mxu0 %v227
  %527 = vmatmul.mubr.bf16.gmra.mxu0 %v226
  %v528 = vpop.f32.mrf.mxu0
  %v529 = vadd.f32 %v116, %v528
  %v530 = vpop.f32.mrf.mxu0
  %v531 = vpop.f32.mrf.mxu0
  %v532 = vadd.f32 %v116, %v531
  %v533 = vpop.f32.mrf.mxu0
  %534 = vmatprep.mubr.bf16.mxu0 %v231
  %535 = vmatmul.mubr.bf16.gmra.mxu0 %v230
  %v536 = vpop.f32.mrf.mxu0
  %v537 = vadd.f32 %v116, %v536
  %v538 = vpop.f32.mrf.mxu0
  %v539 = vpop.f32.mrf.mxu0
  %v540 = vadd.f32 %v116, %v539
  %v541 = vpop.f32.mrf.mxu0
  %542 = vmatprep.mubr.bf16.mxu0 %v235
  %543 = vmatmul.mubr.bf16.gmra.mxu0 %v234
  %v544 = vpop.f32.mrf.mxu0
  %v545 = vadd.f32 %v116, %v544
  %v546 = vpop.f32.mrf.mxu0
  %v547 = vpop.f32.mrf.mxu0
  %v548 = vadd.f32 %v116, %v547
  %v549 = vpop.f32.mrf.mxu0
  %550 = vmatprep.mubr.bf16.mxu0 %v239
  %551 = vmatmul.mubr.bf16.gmra.mxu0 %v238
  %v552 = vpop.f32.mrf.mxu0
  %v553 = vadd.f32 %v116, %v552
  %v554 = vpop.f32.mrf.mxu0
  %v555 = vpop.f32.mrf.mxu0
  %v556 = vadd.f32 %v116, %v555
  %v557 = vpop.f32.mrf.mxu0
  %558 = vmatprep.mubr.bf16.mxu0 %v243
  %559 = vmatmul.mubr.bf16.gmra.mxu0 %v242
  %v560 = vpop.f32.mrf.mxu0
  %v561 = vadd.f32 %v116, %v560
  %v562 = vpop.f32.mrf.mxu0
  %v563 = vpop.f32.mrf.mxu0
  %v564 = vadd.f32 %v116, %v563
  %v565 = vpop.f32.mrf.mxu0
  %566 = vdwg.mxu0
  %567 = vmatprep.subr.bf16.mxu0 0
  %568 = vmatpush1.bf16.msra.mxu0 %v429
  %569 = vmatprep.subr.bf16.mxu0 0
  %570 = vmatpush1.bf16.msra.mxu0 %v428
  %571 = vmatprep.subr.bf16.mxu0 0
  %572 = vmatpush1.bf16.msra.mxu0 %v427
  %573 = vmatprep.subr.bf16.mxu0 0
  %574 = vmatpush1.bf16.msra.mxu0 %v426
  %575 = vmatprep.subr.bf16.mxu0 0
  %576 = vmatpush1.bf16.msra.mxu0 %v425
  %577 = vmatprep.subr.bf16.mxu0 0
  %578 = vmatpush1.bf16.msra.mxu0 %v424
  %579 = vmatprep.subr.bf16.mxu0 0
  %580 = vmatpush1.bf16.msra.mxu0 %v423
  %581 = vmatprep.subr.bf16.mxu0 0
  %582 = vmatpush1.bf16.msra.mxu0 %v422
  %583 = vmatprep.subr.bf16.mxu0 0
  %584 = vmatpush2.bf16.msra.mxu0 %v437
  %585 = vmatprep.subr.bf16.mxu0 0
  %586 = vmatpush2.bf16.msra.mxu0 %v436
  %587 = vmatprep.subr.bf16.mxu0 0
  %588 = vmatpush2.bf16.msra.mxu0 %v435
  %589 = vmatprep.subr.bf16.mxu0 0
  %590 = vmatpush2.bf16.msra.mxu0 %v434
  %591 = vmatprep.subr.bf16.mxu0 0
  %592 = vmatpush2.bf16.msra.mxu0 %v433
  %593 = vmatprep.subr.bf16.mxu0 0
  %594 = vmatpush2.bf16.msra.mxu0 %v432
  %595 = vmatprep.subr.bf16.mxu0 0
  %596 = vmatpush2.bf16.msra.mxu0 %v431
  %597 = vmatprep.subr.bf16.mxu0 0
  %598 = vmatpush2.bf16.msra.mxu0 %v430
  %599 = vmatprep.mubr.bf16.mxu0 %v217
  %600 = vmatmul.mubr.bf16.gmra.mxu0 %v216
  %v601 = vpop.f32.mrf.mxu0
  %v602 = vadd.f32 %v505, %v601
  %v603 = vpop.f32.mrf.mxu0
  %v604 = vpop.f32.mrf.mxu0
  %v605 = vadd.f32 %v508, %v604
  %v606 = vpop.f32.mrf.mxu0
  %607 = vmatprep.mubr.bf16.mxu0 %v221
  %608 = vmatmul.mubr.bf16.gmra.mxu0 %v220
  %v609 = vpop.f32.mrf.mxu0
  %v610 = vadd.f32 %v513, %v609
  %v611 = vpop.f32.mrf.mxu0
  %v612 = vpop.f32.mrf.mxu0
  %v613 = vadd.f32 %v516, %v612
  %v614 = vpop.f32.mrf.mxu0
  %615 = vmatprep.mubr.bf16.mxu0 %v225
  %616 = vmatmul.mubr.bf16.gmra.mxu0 %v224
  %v617 = vpop.f32.mrf.mxu0
  %v618 = vadd.f32 %v521, %v617
  %v619 = vpop.f32.mrf.mxu0
  %v620 = vpop.f32.mrf.mxu0
  %v621 = vadd.f32 %v524, %v620
  %v622 = vpop.f32.mrf.mxu0
  %623 = vmatprep.mubr.bf16.mxu0 %v229
  %624 = vmatmul.mubr.bf16.gmra.mxu0 %v228
  %v625 = vpop.f32.mrf.mxu0
  %v626 = vadd.f32 %v529, %v625
  %v627 = vpop.f32.mrf.mxu0
  %v628 = vpop.f32.mrf.mxu0
  %v629 = vadd.f32 %v532, %v628
  %v630 = vpop.f32.mrf.mxu0
  %631 = vmatprep.mubr.bf16.mxu0 %v233
  %632 = vmatmul.mubr.bf16.gmra.mxu0 %v232
  %v633 = vpop.f32.mrf.mxu0
  %v634 = vadd.f32 %v537, %v633
  %v635 = vpop.f32.mrf.mxu0
  %v636 = vpop.f32.mrf.mxu0
  %v637 = vadd.f32 %v540, %v636
  %v638 = vpop.f32.mrf.mxu0
  %639 = vmatprep.mubr.bf16.mxu0 %v237
  %640 = vmatmul.mubr.bf16.gmra.mxu0 %v236
  %v641 = vpop.f32.mrf.mxu0
  %v642 = vadd.f32 %v545, %v641
  %v643 = vpop.f32.mrf.mxu0
  %v644 = vpop.f32.mrf.mxu0
  %v645 = vadd.f32 %v548, %v644
  %v646 = vpop.f32.mrf.mxu0
  %647 = vmatprep.mubr.bf16.mxu0 %v241
  %648 = vmatmul.mubr.bf16.gmra.mxu0 %v240
  %v649 = vpop.f32.mrf.mxu0
  %v650 = vadd.f32 %v553, %v649
  %v651 = vpop.f32.mrf.mxu0
  %v652 = vpop.f32.mrf.mxu0
  %v653 = vadd.f32 %v556, %v652
  %v654 = vpop.f32.mrf.mxu0
  %655 = vmatprep.mubr.bf16.mxu0 %v245
  %656 = vmatmul.mubr.bf16.gmra.mxu0 %v244
  %v657 = vpop.f32.mrf.mxu0
  %v658 = vadd.f32 %v561, %v657
  %v659 = vpop.f32.mrf.mxu0
  %v660 = vpop.f32.mrf.mxu0
  %v661 = vadd.f32 %v564, %v660
  %v662 = vpop.f32.mrf.mxu0
  %663 = vdwg.mxu0
  %v664 = vmax.f32 %v602, 0.0
  %v665 = vmax.f32 %v605, 0.0
  %v666 = vmax.f32 %v610, 0.0
  %v667 = vmax.f32 %v613, 0.0
  %v668 = vmax.f32 %v618, 0.0
  %v669 = vmax.f32 %v621, 0.0
  %v670 = vmax.f32 %v626, 0.0
  %v671 = vmax.f32 %v629, 0.0
  %v672 = vmax.f32 %v634, 0.0
  %v673 = vmax.f32 %v637, 0.0
  %v674 = vmax.f32 %v642, 0.0
  %v675 = vmax.f32 %v645, 0.0
  %v676 = vmax.f32 %v650, 0.0
  %v677 = vmax.f32 %v653, 0.0
  %v678 = vmax.f32 %v658, 0.0
  %v679 = vmax.f32 %v661, 0.0
  %v680 = vpack.c.bf16 %v665, %v664
  %v681 = vpack.c.bf16 %v667, %v666
  %v682 = vpack.c.bf16 %v669, %v668
  %v683 = vpack.c.bf16 %v671, %v670
  %v684 = vpack.c.bf16 %v673, %v672
  %v685 = vpack.c.bf16 %v675, %v674
  %v686 = vpack.c.bf16 %v677, %v676
  %v687 = vpack.c.bf16 %v679, %v678
  %v696 = vunpack.c.l.b16 %v680
  %v697 = vunpack.c.h.b16 %v680
  %v698 = vunpack.c.l.b16 %v681
  %v699 = vunpack.c.h.b16 %v681
  %v700 = vunpack.c.l.b16 %v682
  %v701 = vunpack.c.h.b16 %v682
  %v702 = vunpack.c.l.b16 %v683
  %v703 = vunpack.c.h.b16 %v683
  %v704 = vunpack.c.l.b16 %v684
  %v705 = vunpack.c.h.b16 %v684
  %v706 = vunpack.c.l.b16 %v685
  %v707 = vunpack.c.h.b16 %v685
  %v708 = vunpack.c.l.b16 %v686
  %v709 = vunpack.c.h.b16 %v686
  %v710 = vunpack.c.l.b16 %v687
  %v711 = vunpack.c.h.b16 %v687
  %v712 = vpack.c.b16 %v696, %v696
  %v713 = vpack.c.b16 %v697, %v697
  %v714 = vpack.c.b16 %v698, %v698
  %v715 = vpack.c.b16 %v699, %v699
  %v716 = vpack.c.b16 %v700, %v700
  %v717 = vpack.c.b16 %v701, %v701
  %v718 = vpack.c.b16 %v702, %v702
  %v719 = vpack.c.b16 %v703, %v703
  %v720 = vpack.c.b16 %v704, %v704
  %v721 = vpack.c.b16 %v705, %v705
  %v722 = vpack.c.b16 %v706, %v706
  %v723 = vpack.c.b16 %v707, %v707
  %v724 = vpack.c.b16 %v708, %v708
  %v725 = vpack.c.b16 %v709, %v709
  %v726 = vpack.c.b16 %v710, %v710
  %v727 = vpack.c.b16 %v711, %v711
  %744 = vst [vmem:[%s3] sm:$0xf] %v712
  %745 = vst [vmem:[%s3 + $0x4] sm:$0xf] %v713
  %746 = vst [vmem:[%s3 + $0x8] sm:$0xf] %v714
  %747 = vst [vmem:[%s3 + $0xc] sm:$0xf] %v715
  %748 = vst [vmem:[%s3 + $0x10] sm:$0xf] %v716
  %749 = vst [vmem:[%s3 + $0x14] sm:$0xf] %v717
  %750 = vst [vmem:[%s3 + $0x18] sm:$0xf] %v718
  %751 = vst [vmem:[%s3 + $0x1c] sm:$0xf] %v719
  %752 = vst [vmem:[%s3 + $0x20] sm:$0xf] %v720
  %753 = vst [vmem:[%s3 + $0x24] sm:$0xf] %v721
  %754 = vst [vmem:[%s3 + $0x28] sm:$0xf] %v722
  %755 = vst [vmem:[%s3 + $0x2c] sm:$0xf] %v723
  %756 = vst [vmem:[%s3 + $0x30] sm:$0xf] %v724
  %757 = vst [vmem:[%s3 + $0x34] sm:$0xf] %v725
  %758 = vst [vmem:[%s3 + $0x38] sm:$0xf] %v726
  %759 = vst [vmem:[%s3 + $0x3c] sm:$0xf] %v727
  // Predicated region
  $region14: #{model_forward.11} parent=0 // pred_check
    _
  $region15: #{model_forward.11} parent=0 // pred_check_branch
    %761 = sbr.rel (0) target = $region17
  $region16: #{model_forward.11} parent=0 // pred_region
    _
  $region17: #{model_forward.11} parent=0 // pred_fallthru
    _
  // Predicated region
  $region18: #{model_forward.11} parent=0 // pred_check
    _
  $region19: #{model_forward.11} parent=0 // pred_check_branch
    %763 = sbr.rel (0) target = $region21
  $region20: #{model_forward.11} parent=0 // pred_region
    _
  $region21: #{model_forward.11} parent=0 // pred_fallthru
    _

// kernel: model_forward.12
$region0: #{model_forward.12}
  #allocation0 [shape = 'u32[]', space=smem, size = 0x4, offset = 0x4, fixed_abs, tag = 'smem constant byte address 0x4 - core index']
  #allocation1 [shape = 'u32[144,128]{1,0:T(1,128)}', space=vmem, size = 0x12000, scoped, tag = 'internal scratch']
  %s0 = inlined_call_operand.vmem [shape: bf16[32,1024], index: 0, kind: input, shape index: {}]
  %s1 = inlined_call_operand.vmem [shape: bf16[1024,128], index: 1, kind: input, shape index: {}]
  %s2 = inlined_call_operand.vmem [shape: f32[1,128], index: 2, kind: input, shape index: {}]
  %s3 = inlined_call_operand.vmem [shape: f32[32,128], index: 3, kind: output, shape index: {}]
  %s4 = sld [smem:[#allocation0]]
  $region22: #{model_forward.12} parent=0
    _
  %s6 = ssub.s32 1, %s4
  %s7 = scalar_select 0, %s6, %s4
  // Predicated region
  $region2: #{model_forward.12} parent=0 // pred_check
    _
  $region3: #{model_forward.12} parent=0 // pred_check_branch
    %9 = sbr.rel (0) target = $region5
  $region4: #{model_forward.12} parent=0 // pred_region
    _
  $region5: #{model_forward.12} parent=0 // pred_fallthru
    _
  // Predicated region
  $region6: #{model_forward.12} parent=0 // pred_check
    _
  $region7: #{model_forward.12} parent=0 // pred_check_branch
    %11 = sbr.rel (0) target = $region9
  $region8: #{model_forward.12} parent=0 // pred_region
    _
  $region9: #{model_forward.12} parent=0 // pred_fallthru
    _
  // Predicated region
  $region10: #{model_forward.12} parent=0 // pred_check
    _
  $region11: #{model_forward.12} parent=0 // pred_check_branch
    %13 = sbr.rel (0) target = $region13
  $region12: #{model_forward.12} parent=0 // pred_region
    _
  $region13: #{model_forward.12} parent=0 // pred_fallthru
    _
  %v15 = vld [vmem:[%s0] sm:$0xff]
  %v16 = vld [vmem:[%s0 + $0x8] sm:$0xff]
  %v17 = vld [vmem:[%s0 + $0x10] sm:$0xff]
  %v18 = vld [vmem:[%s0 + $0x18] sm:$0xff]
  %v19 = vld [vmem:[%s0 + $0x20] sm:$0xff]
  %v20 = vld [vmem:[%s0 + $0x28] sm:$0xff]
  %v21 = vld [vmem:[%s0 + $0x30] sm:$0xff]
  %v22 = vld [vmem:[%s0 + $0x38] sm:$0xff]
  %v23 = vld [vmem:[%s0 + $0x40] sm:$0xff]
  %v24 = vld [vmem:[%s0 + $0x48] sm:$0xff]
  %v25 = vld [vmem:[%s0 + $0x50] sm:$0xff]
  %v26 = vld [vmem:[%s0 + $0x58] sm:$0xff]
  %v27 = vld [vmem:[%s0 + $0x60] sm:$0xff]
  %v28 = vld [vmem:[%s0 + $0x68] sm:$0xff]
  %v29 = vld [vmem:[%s0 + $0x70] sm:$0xff]
  %v30 = vld [vmem:[%s0 + $0x78] sm:$0xff]
  %v31 = vld [vmem:[%s1] sm:$0xf]
  %v32 = vld [vmem:[%s1 + $0x4] sm:$0xf]
  %v33 = vld [vmem:[%s1 + $0x8] sm:$0xf]
  %v34 = vld [vmem:[%s1 + $0xc] sm:$0xf]
  %v35 = vld [vmem:[%s1 + $0x10] sm:$0xf]
  %v36 = vld [vmem:[%s1 + $0x14] sm:$0xf]
  %v37 = vld [vmem:[%s1 + $0x18] sm:$0xf]
  %v38 = vld [vmem:[%s1 + $0x1c] sm:$0xf]
  %v39 = vld [vmem:[%s1 + $0x20] sm:$0xf]
  %v40 = vld [vmem:[%s1 + $0x24] sm:$0xf]
  %v41 = vld [vmem:[%s1 + $0x28] sm:$0xf]
  %v42 = vld [vmem:[%s1 + $0x2c] sm:$0xf]
  %v43 = vld [vmem:[%s1 + $0x30] sm:$0xf]
  %v44 = vld [vmem:[%s1 + $0x34] sm:$0xf]
  %v45 = vld [vmem:[%s1 + $0x38] sm:$0xf]
  %v46 = vld [vmem:[%s1 + $0x3c] sm:$0xf]
  %v47 = vld [vmem:[%s1 + $0x40] sm:$0xf]
  %v48 = vld [vmem:[%s1 + $0x44] sm:$0xf]
  %v49 = vld [vmem:[%s1 + $0x48] sm:$0xf]
  %v50 = vld [vmem:[%s1 + $0x4c] sm:$0xf]
  %v51 = vld [vmem:[%s1 + $0x50] sm:$0xf]
  %v52 = vld [vmem:[%s1 + $0x54] sm:$0xf]
  %v53 = vld [vmem:[%s1 + $0x58] sm:$0xf]
  %v54 = vld [vmem:[%s1 + $0x5c] sm:$0xf]
  %v55 = vld [vmem:[%s1 + $0x60] sm:$0xf]
  %v56 = vld [vmem:[%s1 + $0x64] sm:$0xf]
  %v57 = vld [vmem:[%s1 + $0x68] sm:$0xf]
  %v58 = vld [vmem:[%s1 + $0x6c] sm:$0xf]
  %v59 = vld [vmem:[%s1 + $0x70] sm:$0xf]
  %v60 = vld [vmem:[%s1 + $0x74] sm:$0xf]
  %v61 = vld [vmem:[%s1 + $0x78] sm:$0xf]
  %v62 = vld [vmem:[%s1 + $0x7c] sm:$0xf]
  %v63 = vld [vmem:[%s1 + $0x80] sm:$0xf]
  %v64 = vld [vmem:[%s1 + $0x84] sm:$0xf]
  %v65 = vld [vmem:[%s1 + $0x88] sm:$0xf]
  %v66 = vld [vmem:[%s1 + $0x8c] sm:$0xf]
  %v67 = vld [vmem:[%s1 + $0x90] sm:$0xf]
  %v68 = vld [vmem:[%s1 + $0x94] sm:$0xf]
  %v69 = vld [vmem:[%s1 + $0x98] sm:$0xf]
  %v70 = vld [vmem:[%s1 + $0x9c] sm:$0xf]
  %v71 = vld [vmem:[%s1 + $0xa0] sm:$0xf]
  %v72 = vld [vmem:[%s1 + $0xa4] sm:$0xf]
  %v73 = vld [vmem:[%s1 + $0xa8] sm:$0xf]
  %v74 = vld [vmem:[%s1 + $0xac] sm:$0xf]
  %v75 = vld [vmem:[%s1 + $0xb0] sm:$0xf]
  %v76 = vld [vmem:[%s1 + $0xb4] sm:$0xf]
  %v77 = vld [vmem:[%s1 + $0xb8] sm:$0xf]
  %v78 = vld [vmem:[%s1 + $0xbc] sm:$0xf]
  %v79 = vld [vmem:[%s1 + $0xc0] sm:$0xf]
  %v80 = vld [vmem:[%s1 + $0xc4] sm:$0xf]
  %v81 = vld [vmem:[%s1 + $0xc8] sm:$0xf]
  %v82 = vld [vmem:[%s1 + $0xcc] sm:$0xf]
  %v83 = vld [vmem:[%s1 + $0xd0] sm:$0xf]
  %v84 = vld [vmem:[%s1 + $0xd4] sm:$0xf]
  %v85 = vld [vmem:[%s1 + $0xd8] sm:$0xf]
  %v86 = vld [vmem:[%s1 + $0xdc] sm:$0xf]
  %v87 = vld [vmem:[%s1 + $0xe0] sm:$0xf]
  %v88 = vld [vmem:[%s1 + $0xe4] sm:$0xf]
  %v89 = vld [vmem:[%s1 + $0xe8] sm:$0xf]
  %v90 = vld [vmem:[%s1 + $0xec] sm:$0xf]
  %v91 = vld [vmem:[%s1 + $0xf0] sm:$0xf]
  %v92 = vld [vmem:[%s1 + $0xf4] sm:$0xf]
  %v93 = vld [vmem:[%s1 + $0xf8] sm:$0xf]
  %v94 = vld [vmem:[%s1 + $0xfc] sm:$0xf]
  %v95 = vld [vmem:[%s1 + $0x100] sm:$0xf]
  %v96 = vld [vmem:[%s1 + $0x104] sm:$0xf]
  %v97 = vld [vmem:[%s1 + $0x108] sm:$0xf]
  %v98 = vld [vmem:[%s1 + $0x10c] sm:$0xf]
  %v99 = vld [vmem:[%s1 + $0x110] sm:$0xf]
  %v100 = vld [vmem:[%s1 + $0x114] sm:$0xf]
  %v101 = vld [vmem:[%s1 + $0x118] sm:$0xf]
  %v102 = vld [vmem:[%s1 + $0x11c] sm:$0xf]
  %v103 = vld [vmem:[%s1 + $0x120] sm:$0xf]
  %v104 = vld [vmem:[%s1 + $0x124] sm:$0xf]
  %v105 = vld [vmem:[%s1 + $0x128] sm:$0xf]
  %v106 = vld [vmem:[%s1 + $0x12c] sm:$0xf]
  %v107 = vld [vmem:[%s1 + $0x130] sm:$0xf]
  %v108 = vld [vmem:[%s1 + $0x134] sm:$0xf]
  %v109 = vld [vmem:[%s1 + $0x138] sm:$0xf]
  %v110 = vld [vmem:[%s1 + $0x13c] sm:$0xf]
  %v111 = vld [vmem:[%s1 + $0x140] sm:$0xf]
  %v112 = vld [vmem:[%s1 + $0x144] sm:$0xf]
  %v113 = vld [vmem:[%s1 + $0x148] sm:$0xf]
  %v114 = vld [vmem:[%s1 + $0x14c] sm:$0xf]
  %v115 = vld [vmem:[%s1 + $0x150] sm:$0xf]
  %v116 = vld [vmem:[%s1 + $0x154] sm:$0xf]
  %v117 = vld [vmem:[%s1 + $0x158] sm:$0xf]
  %v118 = vld [vmem:[%s1 + $0x15c] sm:$0xf]
  %v119 = vld [vmem:[%s1 + $0x160] sm:$0xf]
  %v120 = vld [vmem:[%s1 + $0x164] sm:$0xf]
  %v121 = vld [vmem:[%s1 + $0x168] sm:$0xf]
  %v122 = vld [vmem:[%s1 + $0x16c] sm:$0xf]
  %v123 = vld [vmem:[%s1 + $0x170] sm:$0xf]
  %v124 = vld [vmem:[%s1 + $0x174] sm:$0xf]
  %v125 = vld [vmem:[%s1 + $0x178] sm:$0xf]
  %v126 = vld [vmem:[%s1 + $0x17c] sm:$0xf]
  %v127 = vld [vmem:[%s1 + $0x180] sm:$0xf]
  %v128 = vld [vmem:[%s1 + $0x184] sm:$0xf]
  %v129 = vld [vmem:[%s1 + $0x188] sm:$0xf]
  %v130 = vld [vmem:[%s1 + $0x18c] sm:$0xf]
  %v131 = vld [vmem:[%s1 + $0x190] sm:$0xf]
  %v132 = vld [vmem:[%s1 + $0x194] sm:$0xf]
  %v133 = vld [vmem:[%s1 + $0x198] sm:$0xf]
  %v134 = vld [vmem:[%s1 + $0x19c] sm:$0xf]
  %v135 = vld [vmem:[%s1 + $0x1a0] sm:$0xf]
  %v136 = vld [vmem:[%s1 + $0x1a4] sm:$0xf]
  %v137 = vld [vmem:[%s1 + $0x1a8] sm:$0xf]
  %v138 = vld [vmem:[%s1 + $0x1ac] sm:$0xf]
  %v139 = vld [vmem:[%s1 + $0x1b0] sm:$0xf]
  %v140 = vld [vmem:[%s1 + $0x1b4] sm:$0xf]
  %v141 = vld [vmem:[%s1 + $0x1b8] sm:$0xf]
  %v142 = vld [vmem:[%s1 + $0x1bc] sm:$0xf]
  %v143 = vld [vmem:[%s1 + $0x1c0] sm:$0xf]
  %v144 = vld [vmem:[%s1 + $0x1c4] sm:$0xf]
  %v145 = vld [vmem:[%s1 + $0x1c8] sm:$0xf]
  %v146 = vld [vmem:[%s1 + $0x1cc] sm:$0xf]
  %v147 = vld [vmem:[%s1 + $0x1d0] sm:$0xf]
  %v148 = vld [vmem:[%s1 + $0x1d4] sm:$0xf]
  %v149 = vld [vmem:[%s1 + $0x1d8] sm:$0xf]
  %v150 = vld [vmem:[%s1 + $0x1dc] sm:$0xf]
  %v151 = vld [vmem:[%s1 + $0x1e0] sm:$0xf]
  %v152 = vld [vmem:[%s1 + $0x1e4] sm:$0xf]
  %v153 = vld [vmem:[%s1 + $0x1e8] sm:$0xf]
  %v154 = vld [vmem:[%s1 + $0x1ec] sm:$0xf]
  %v155 = vld [vmem:[%s1 + $0x1f0] sm:$0xf]
  %v156 = vld [vmem:[%s1 + $0x1f4] sm:$0xf]
  %v157 = vld [vmem:[%s1 + $0x1f8] sm:$0xf]
  %v158 = vld [vmem:[%s1 + $0x1fc] sm:$0xf]
  %v159 = vld [vmem:[%s2] sm:$0x1]
  %v161 = vlaneseq
  %v162 = vshrl.u32 %v161, 7
  %v163 = vsub.s32 0, %v162
  %v164 = vrot.slane %v159, %v163
  %v182 = vunpack.c.l.b16 %v15
  %v183 = vunpack.c.h.b16 %v15
  %v184 = vunpack.c.l.b16 %v16
  %v185 = vunpack.c.h.b16 %v16
  %v186 = vunpack.c.l.b16 %v17
  %v187 = vunpack.c.h.b16 %v17
  %v188 = vunpack.c.l.b16 %v18
  %v189 = vunpack.c.h.b16 %v18
  %v190 = vunpack.c.l.b16 %v19
  %v191 = vunpack.c.h.b16 %v19
  %v192 = vunpack.c.l.b16 %v20
  %v193 = vunpack.c.h.b16 %v20
  %v194 = vunpack.c.l.b16 %v21
  %v195 = vunpack.c.h.b16 %v21
  %v196 = vunpack.c.l.b16 %v22
  %v197 = vunpack.c.h.b16 %v22
  %v198 = vunpack.c.l.b16 %v23
  %v199 = vunpack.c.h.b16 %v23
  %v200 = vunpack.c.l.b16 %v24
  %v201 = vunpack.c.h.b16 %v24
  %v202 = vunpack.c.l.b16 %v25
  %v203 = vunpack.c.h.b16 %v25
  %v204 = vunpack.c.l.b16 %v26
  %v205 = vunpack.c.h.b16 %v26
  %v206 = vunpack.c.l.b16 %v27
  %v207 = vunpack.c.h.b16 %v27
  %v208 = vunpack.c.l.b16 %v28
  %v209 = vunpack.c.h.b16 %v28
  %v210 = vunpack.c.l.b16 %v29
  %v211 = vunpack.c.h.b16 %v29
  %v212 = vunpack.c.l.b16 %v30
  %v213 = vunpack.c.h.b16 %v30
  %v214 = vpack.c.b16 %v190, %v182
  %v215 = vpack.c.b16 %v191, %v183
  %v216 = vpack.c.b16 %v192, %v184
  %v217 = vpack.c.b16 %v193, %v185
  %v218 = vpack.c.b16 %v194, %v186
  %v219 = vpack.c.b16 %v195, %v187
  %v220 = vpack.c.b16 %v196, %v188
  %v221 = vpack.c.b16 %v197, %v189
  %v222 = vpack.c.b16 %v206, %v198
  %v223 = vpack.c.b16 %v207, %v199
  %v224 = vpack.c.b16 %v208, %v200
  %v225 = vpack.c.b16 %v209, %v201
  %v226 = vpack.c.b16 %v210, %v202
  %v227 = vpack.c.b16 %v211, %v203
  %v228 = vpack.c.b16 %v212, %v204
  %v229 = vpack.c.b16 %v213, %v205
  %v374 = vunpack.c.l.b16 %v31
  %v375 = vunpack.c.l.b16 %v32
  %v376 = vunpack.c.l.b16 %v33
  %v377 = vunpack.c.l.b16 %v34
  %v378 = vunpack.c.l.b16 %v35
  %v379 = vunpack.c.l.b16 %v36
  %v380 = vunpack.c.l.b16 %v37
  %v381 = vunpack.c.l.b16 %v38
  %v382 = vunpack.c.l.b16 %v39
  %v383 = vunpack.c.l.b16 %v40
  %v384 = vunpack.c.l.b16 %v41
  %v385 = vunpack.c.l.b16 %v42
  %v386 = vunpack.c.l.b16 %v43
  %v387 = vunpack.c.l.b16 %v44
  %v388 = vunpack.c.l.b16 %v45
  %v389 = vunpack.c.l.b16 %v46
  %v390 = vunpack.c.l.b16 %v47
  %v391 = vunpack.c.l.b16 %v48
  %v392 = vunpack.c.l.b16 %v49
  %v393 = vunpack.c.l.b16 %v50
  %v394 = vunpack.c.l.b16 %v51
  %v395 = vunpack.c.l.b16 %v52
  %v396 = vunpack.c.l.b16 %v53
  %v397 = vunpack.c.l.b16 %v54
  %v398 = vunpack.c.l.b16 %v55
  %v399 = vunpack.c.l.b16 %v56
  %v400 = vunpack.c.l.b16 %v57
  %v401 = vunpack.c.l.b16 %v58
  %v402 = vunpack.c.l.b16 %v59
  %v403 = vunpack.c.l.b16 %v60
  %v404 = vunpack.c.l.b16 %v61
  %v405 = vunpack.c.l.b16 %v62
  %v406 = vunpack.c.l.b16 %v63
  %v407 = vunpack.c.l.b16 %v64
  %v408 = vunpack.c.l.b16 %v65
  %v409 = vunpack.c.l.b16 %v66
  %v410 = vunpack.c.l.b16 %v67
  %v411 = vunpack.c.l.b16 %v68
  %v412 = vunpack.c.l.b16 %v69
  %v413 = vunpack.c.l.b16 %v70
  %v414 = vunpack.c.l.b16 %v71
  %v415 = vunpack.c.l.b16 %v72
  %v416 = vunpack.c.l.b16 %v73
  %v417 = vunpack.c.l.b16 %v74
  %v418 = vunpack.c.l.b16 %v75
  %v419 = vunpack.c.l.b16 %v76
  %v420 = vunpack.c.l.b16 %v77
  %v421 = vunpack.c.l.b16 %v78
  %v422 = vunpack.c.l.b16 %v79
  %v423 = vunpack.c.l.b16 %v80
  %v424 = vunpack.c.l.b16 %v81
  %v425 = vunpack.c.l.b16 %v82
  %v426 = vunpack.c.l.b16 %v83
  %v427 = vunpack.c.l.b16 %v84
  %v428 = vunpack.c.l.b16 %v85
  %v429 = vunpack.c.l.b16 %v86
  %v430 = vunpack.c.l.b16 %v87
  %v431 = vunpack.c.l.b16 %v88
  %v432 = vunpack.c.l.b16 %v89
  %v433 = vunpack.c.l.b16 %v90
  %v434 = vunpack.c.l.b16 %v91
  %v435 = vunpack.c.l.b16 %v92
  %v436 = vunpack.c.l.b16 %v93
  %v437 = vunpack.c.l.b16 %v94
  %v438 = vunpack.c.l.b16 %v95
  %v439 = vunpack.c.l.b16 %v96
  %v440 = vunpack.c.l.b16 %v97
  %v441 = vunpack.c.l.b16 %v98
  %v442 = vunpack.c.l.b16 %v99
  %v443 = vunpack.c.l.b16 %v100
  %v444 = vunpack.c.l.b16 %v101
  %v445 = vunpack.c.l.b16 %v102
  %v446 = vunpack.c.l.b16 %v103
  %v447 = vunpack.c.l.b16 %v104
  %v448 = vunpack.c.l.b16 %v105
  %v449 = vunpack.c.l.b16 %v106
  %v450 = vunpack.c.l.b16 %v107
  %v451 = vunpack.c.l.b16 %v108
  %v452 = vunpack.c.l.b16 %v109
  %v453 = vunpack.c.l.b16 %v110
  %v454 = vunpack.c.l.b16 %v111
  %v455 = vunpack.c.l.b16 %v112
  %v456 = vunpack.c.l.b16 %v113
  %v457 = vunpack.c.l.b16 %v114
  %v458 = vunpack.c.l.b16 %v115
  %v459 = vunpack.c.l.b16 %v116
  %v460 = vunpack.c.l.b16 %v117
  %v461 = vunpack.c.l.b16 %v118
  %v462 = vunpack.c.l.b16 %v119
  %v463 = vunpack.c.l.b16 %v120
  %v464 = vunpack.c.l.b16 %v121
  %v465 = vunpack.c.l.b16 %v122
  %v466 = vunpack.c.l.b16 %v123
  %v467 = vunpack.c.l.b16 %v124
  %v468 = vunpack.c.l.b16 %v125
  %v469 = vunpack.c.l.b16 %v126
  %v470 = vunpack.c.l.b16 %v127
  %v471 = vunpack.c.l.b16 %v128
  %v472 = vunpack.c.l.b16 %v129
  %v473 = vunpack.c.l.b16 %v130
  %v474 = vunpack.c.l.b16 %v131
  %v475 = vunpack.c.l.b16 %v132
  %v476 = vunpack.c.l.b16 %v133
  %v477 = vunpack.c.l.b16 %v134
  %v478 = vunpack.c.l.b16 %v135
  %v479 = vunpack.c.l.b16 %v136
  %v480 = vunpack.c.l.b16 %v137
  %v481 = vunpack.c.l.b16 %v138
  %v482 = vunpack.c.l.b16 %v139
  %v483 = vunpack.c.l.b16 %v140
  %v484 = vunpack.c.l.b16 %v141
  %v485 = vunpack.c.l.b16 %v142
  %v486 = vunpack.c.l.b16 %v143
  %v487 = vunpack.c.l.b16 %v144
  %v488 = vunpack.c.l.b16 %v145
  %v489 = vunpack.c.l.b16 %v146
  %v490 = vunpack.c.l.b16 %v147
  %v491 = vunpack.c.l.b16 %v148
  %v492 = vunpack.c.l.b16 %v149
  %v493 = vunpack.c.l.b16 %v150
  %v494 = vunpack.c.l.b16 %v151
  %v495 = vunpack.c.l.b16 %v152
  %v496 = vunpack.c.l.b16 %v153
  %v497 = vunpack.c.l.b16 %v154
  %v498 = vunpack.c.l.b16 %v155
  %v499 = vunpack.c.l.b16 %v156
  %v500 = vunpack.c.l.b16 %v157
  %v501 = vunpack.c.l.b16 %v158
  %v502 = vpack.c.b16 %v375, %v374
  %v503 = vpack.c.b16 %v377, %v376
  %v504 = vpack.c.b16 %v379, %v378
  %v505 = vpack.c.b16 %v381, %v380
  %v506 = vpack.c.b16 %v383, %v382
  %v507 = vpack.c.b16 %v385, %v384
  %v508 = vpack.c.b16 %v387, %v386
  %v509 = vpack.c.b16 %v389, %v388
  %v510 = vpack.c.b16 %v391, %v390
  %v511 = vpack.c.b16 %v393, %v392
  %v512 = vpack.c.b16 %v395, %v394
  %v513 = vpack.c.b16 %v397, %v396
  %v514 = vpack.c.b16 %v399, %v398
  %v515 = vpack.c.b16 %v401, %v400
  %v516 = vpack.c.b16 %v403, %v402
  %v517 = vpack.c.b16 %v405, %v404
  %v518 = vpack.c.b16 %v407, %v406
  %v519 = vpack.c.b16 %v409, %v408
  %v520 = vpack.c.b16 %v411, %v410
  %v521 = vpack.c.b16 %v413, %v412
  %v522 = vpack.c.b16 %v415, %v414
  %v523 = vpack.c.b16 %v417, %v416
  %v524 = vpack.c.b16 %v419, %v418
  %v525 = vpack.c.b16 %v421, %v420
  %v526 = vpack.c.b16 %v423, %v422
  %v527 = vpack.c.b16 %v425, %v424
  %v528 = vpack.c.b16 %v427, %v426
  %v529 = vpack.c.b16 %v429, %v428
  %v530 = vpack.c.b16 %v431, %v430
  %v531 = vpack.c.b16 %v433, %v432
  %v532 = vpack.c.b16 %v435, %v434
  %v533 = vpack.c.b16 %v437, %v436
  %v534 = vpack.c.b16 %v439, %v438
  %v535 = vpack.c.b16 %v441, %v440
  %v536 = vpack.c.b16 %v443, %v442
  %v537 = vpack.c.b16 %v445, %v444
  %v538 = vpack.c.b16 %v447, %v446
  %v539 = vpack.c.b16 %v449, %v448
  %v540 = vpack.c.b16 %v451, %v450
  %v541 = vpack.c.b16 %v453, %v452
  %v542 = vpack.c.b16 %v455, %v454
  %v543 = vpack.c.b16 %v457, %v456
  %v544 = vpack.c.b16 %v459, %v458
  %v545 = vpack.c.b16 %v461, %v460
  %v546 = vpack.c.b16 %v463, %v462
  %v547 = vpack.c.b16 %v465, %v464
  %v548 = vpack.c.b16 %v467, %v466
  %v549 = vpack.c.b16 %v469, %v468
  %v550 = vpack.c.b16 %v471, %v470
  %v551 = vpack.c.b16 %v473, %v472
  %v552 = vpack.c.b16 %v475, %v474
  %v553 = vpack.c.b16 %v477, %v476
  %v554 = vpack.c.b16 %v479, %v478
  %v555 = vpack.c.b16 %v481, %v480
  %v556 = vpack.c.b16 %v483, %v482
  %v557 = vpack.c.b16 %v485, %v484
  %v558 = vpack.c.b16 %v487, %v486
  %v559 = vpack.c.b16 %v489, %v488
  %v560 = vpack.c.b16 %v491, %v490
  %v561 = vpack.c.b16 %v493, %v492
  %v562 = vpack.c.b16 %v495, %v494
  %v563 = vpack.c.b16 %v497, %v496
  %v564 = vpack.c.b16 %v499, %v498
  %v565 = vpack.c.b16 %v501, %v500
  %630 = vmatprep.subr.bf16.mxu0 0
  %631 = vmatpush1.bf16.msra.mxu0 %v509
  %632 = vmatprep.subr.bf16.mxu0 0
  %633 = vmatpush1.bf16.msra.mxu0 %v508
  %634 = vmatprep.subr.bf16.mxu0 0
  %635 = vmatpush1.bf16.msra.mxu0 %v507
  %636 = vmatprep.subr.bf16.mxu0 0
  %637 = vmatpush1.bf16.msra.mxu0 %v506
  %638 = vmatprep.subr.bf16.mxu0 0
  %639 = vmatpush1.bf16.msra.mxu0 %v505
  %640 = vmatprep.subr.bf16.mxu0 0
  %641 = vmatpush1.bf16.msra.mxu0 %v504
  %642 = vmatprep.subr.bf16.mxu0 0
  %643 = vmatpush1.bf16.msra.mxu0 %v503
  %644 = vmatprep.subr.bf16.mxu0 0
  %645 = vmatpush1.bf16.msra.mxu0 %v502
  %646 = vmatprep.subr.bf16.mxu0 0
  %647 = vmatpush2.bf16.msra.mxu0 %v517
  %648 = vmatprep.subr.bf16.mxu0 0
  %649 = vmatpush2.bf16.msra.mxu0 %v516
  %650 = vmatprep.subr.bf16.mxu0 0
  %651 = vmatpush2.bf16.msra.mxu0 %v515
  %652 = vmatprep.subr.bf16.mxu0 0
  %653 = vmatpush2.bf16.msra.mxu0 %v514
  %654 = vmatprep.subr.bf16.mxu0 0
  %655 = vmatpush2.bf16.msra.mxu0 %v513
  %656 = vmatprep.subr.bf16.mxu0 0
  %657 = vmatpush2.bf16.msra.mxu0 %v512
  %658 = vmatprep.subr.bf16.mxu0 0
  %659 = vmatpush2.bf16.msra.mxu0 %v511
  %660 = vmatprep.subr.bf16.mxu0 0
  %661 = vmatpush2.bf16.msra.mxu0 %v510
  %662 = vmatprep.mubr.bf16.mxu0 %v215
  %663 = vmatmul.mubr.bf16.gmra.mxu0 %v214
  %v664 = vpop.f32.mrf.mxu0
  %v665 = vadd.f32 %v164, %v664
  %v666 = vpop.f32.mrf.mxu0
  %v667 = vpop.f32.mrf.mxu0
  %v668 = vadd.f32 %v164, %v667
  %v669 = vpop.f32.mrf.mxu0
  %670 = vmatprep.mubr.bf16.mxu0 %v223
  %671 = vmatmul.mubr.bf16.gmra.mxu0 %v222
  %v672 = vpop.f32.mrf.mxu0
  %v673 = vadd.f32 %v164, %v672
  %v674 = vpop.f32.mrf.mxu0
  %v675 = vpop.f32.mrf.mxu0
  %v676 = vadd.f32 %v164, %v675
  %v677 = vpop.f32.mrf.mxu0
  %678 = vdwg.mxu0
  %679 = vmatprep.subr.bf16.mxu0 0
  %680 = vmatpush1.bf16.msra.mxu0 %v525
  %681 = vmatprep.subr.bf16.mxu0 0
  %682 = vmatpush1.bf16.msra.mxu0 %v524
  %683 = vmatprep.subr.bf16.mxu0 0
  %684 = vmatpush1.bf16.msra.mxu0 %v523
  %685 = vmatprep.subr.bf16.mxu0 0
  %686 = vmatpush1.bf16.msra.mxu0 %v522
  %687 = vmatprep.subr.bf16.mxu0 0
  %688 = vmatpush1.bf16.msra.mxu0 %v521
  %689 = vmatprep.subr.bf16.mxu0 0
  %690 = vmatpush1.bf16.msra.mxu0 %v520
  %691 = vmatprep.subr.bf16.mxu0 0
  %692 = vmatpush1.bf16.msra.mxu0 %v519
  %693 = vmatprep.subr.bf16.mxu0 0
  %694 = vmatpush1.bf16.msra.mxu0 %v518
  %695 = vmatprep.subr.bf16.mxu0 0
  %696 = vmatpush2.bf16.msra.mxu0 %v533
  %697 = vmatprep.subr.bf16.mxu0 0
  %698 = vmatpush2.bf16.msra.mxu0 %v532
  %699 = vmatprep.subr.bf16.mxu0 0
  %700 = vmatpush2.bf16.msra.mxu0 %v531
  %701 = vmatprep.subr.bf16.mxu0 0
  %702 = vmatpush2.bf16.msra.mxu0 %v530
  %703 = vmatprep.subr.bf16.mxu0 0
  %704 = vmatpush2.bf16.msra.mxu0 %v529
  %705 = vmatprep.subr.bf16.mxu0 0
  %706 = vmatpush2.bf16.msra.mxu0 %v528
  %707 = vmatprep.subr.bf16.mxu0 0
  %708 = vmatpush2.bf16.msra.mxu0 %v527
  %709 = vmatprep.subr.bf16.mxu0 0
  %710 = vmatpush2.bf16.msra.mxu0 %v526
  %711 = vmatprep.mubr.bf16.mxu0 %v217
  %712 = vmatmul.mubr.bf16.gmra.mxu0 %v216
  %v713 = vpop.f32.mrf.mxu0
  %v714 = vadd.f32 %v665, %v713
  %v715 = vpop.f32.mrf.mxu0
  %v716 = vpop.f32.mrf.mxu0
  %v717 = vadd.f32 %v668, %v716
  %v718 = vpop.f32.mrf.mxu0
  %719 = vmatprep.mubr.bf16.mxu0 %v225
  %720 = vmatmul.mubr.bf16.gmra.mxu0 %v224
  %v721 = vpop.f32.mrf.mxu0
  %v722 = vadd.f32 %v673, %v721
  %v723 = vpop.f32.mrf.mxu0
  %v724 = vpop.f32.mrf.mxu0
  %v725 = vadd.f32 %v676, %v724
  %v726 = vpop.f32.mrf.mxu0
  %727 = vdwg.mxu0
  %728 = vmatprep.subr.bf16.mxu0 0
  %729 = vmatpush1.bf16.msra.mxu0 %v541
  %730 = vmatprep.subr.bf16.mxu0 0
  %731 = vmatpush1.bf16.msra.mxu0 %v540
  %732 = vmatprep.subr.bf16.mxu0 0
  %733 = vmatpush1.bf16.msra.mxu0 %v539
  %734 = vmatprep.subr.bf16.mxu0 0
  %735 = vmatpush1.bf16.msra.mxu0 %v538
  %736 = vmatprep.subr.bf16.mxu0 0
  %737 = vmatpush1.bf16.msra.mxu0 %v537
  %738 = vmatprep.subr.bf16.mxu0 0
  %739 = vmatpush1.bf16.msra.mxu0 %v536
  %740 = vmatprep.subr.bf16.mxu0 0
  %741 = vmatpush1.bf16.msra.mxu0 %v535
  %742 = vmatprep.subr.bf16.mxu0 0
  %743 = vmatpush1.bf16.msra.mxu0 %v534
  %744 = vmatprep.subr.bf16.mxu0 0
  %745 = vmatpush2.bf16.msra.mxu0 %v549
  %746 = vmatprep.subr.bf16.mxu0 0
  %747 = vmatpush2.bf16.msra.mxu0 %v548
  %748 = vmatprep.subr.bf16.mxu0 0
  %749 = vmatpush2.bf16.msra.mxu0 %v547
  %750 = vmatprep.subr.bf16.mxu0 0
  %751 = vmatpush2.bf16.msra.mxu0 %v546
  %752 = vmatprep.subr.bf16.mxu0 0
  %753 = vmatpush2.bf16.msra.mxu0 %v545
  %754 = vmatprep.subr.bf16.mxu0 0
  %755 = vmatpush2.bf16.msra.mxu0 %v544
  %756 = vmatprep.subr.bf16.mxu0 0
  %757 = vmatpush2.bf16.msra.mxu0 %v543
  %758 = vmatprep.subr.bf16.mxu0 0
  %759 = vmatpush2.bf16.msra.mxu0 %v542
  %760 = vmatprep.mubr.bf16.mxu0 %v219
  %761 = vmatmul.mubr.bf16.gmra.mxu0 %v218
  %v762 = vpop.f32.mrf.mxu0
  %v763 = vadd.f32 %v714, %v762
  %v764 = vpop.f32.mrf.mxu0
  %v765 = vpop.f32.mrf.mxu0
  %v766 = vadd.f32 %v717, %v765
  %v767 = vpop.f32.mrf.mxu0
  %768 = vmatprep.mubr.bf16.mxu0 %v227
  %769 = vmatmul.mubr.bf16.gmra.mxu0 %v226
  %v770 = vpop.f32.mrf.mxu0
  %v771 = vadd.f32 %v722, %v770
  %v772 = vpop.f32.mrf.mxu0
  %v773 = vpop.f32.mrf.mxu0
  %v774 = vadd.f32 %v725, %v773
  %v775 = vpop.f32.mrf.mxu0
  %776 = vdwg.mxu0
  %777 = vmatprep.subr.bf16.mxu0 0
  %778 = vmatpush1.bf16.msra.mxu0 %v557
  %779 = vmatprep.subr.bf16.mxu0 0
  %780 = vmatpush1.bf16.msra.mxu0 %v556
  %781 = vmatprep.subr.bf16.mxu0 0
  %782 = vmatpush1.bf16.msra.mxu0 %v555
  %783 = vmatprep.subr.bf16.mxu0 0
  %784 = vmatpush1.bf16.msra.mxu0 %v554
  %785 = vmatprep.subr.bf16.mxu0 0
  %786 = vmatpush1.bf16.msra.mxu0 %v553
  %787 = vmatprep.subr.bf16.mxu0 0
  %788 = vmatpush1.bf16.msra.mxu0 %v552
  %789 = vmatprep.subr.bf16.mxu0 0
  %790 = vmatpush1.bf16.msra.mxu0 %v551
  %791 = vmatprep.subr.bf16.mxu0 0
  %792 = vmatpush1.bf16.msra.mxu0 %v550
  %793 = vmatprep.subr.bf16.mxu0 0
  %794 = vmatpush2.bf16.msra.mxu0 %v565
  %795 = vmatprep.subr.bf16.mxu0 0
  %796 = vmatpush2.bf16.msra.mxu0 %v564
  %797 = vmatprep.subr.bf16.mxu0 0
  %798 = vmatpush2.bf16.msra.mxu0 %v563
  %799 = vmatprep.subr.bf16.mxu0 0
  %800 = vmatpush2.bf16.msra.mxu0 %v562
  %801 = vmatprep.subr.bf16.mxu0 0
  %802 = vmatpush2.bf16.msra.mxu0 %v561
  %803 = vmatprep.subr.bf16.mxu0 0
  %804 = vmatpush2.bf16.msra.mxu0 %v560
  %805 = vmatprep.subr.bf16.mxu0 0
  %806 = vmatpush2.bf16.msra.mxu0 %v559
  %807 = vmatprep.subr.bf16.mxu0 0
  %808 = vmatpush2.bf16.msra.mxu0 %v558
  %809 = vmatprep.mubr.bf16.mxu0 %v221
  %810 = vmatmul.mubr.bf16.gmra.mxu0 %v220
  %v811 = vpop.f32.mrf.mxu0
  %v812 = vadd.f32 %v763, %v811
  %v813 = vpop.f32.mrf.mxu0
  %v814 = vpop.f32.mrf.mxu0
  %v815 = vadd.f32 %v766, %v814
  %v816 = vpop.f32.mrf.mxu0
  %817 = vmatprep.mubr.bf16.mxu0 %v229
  %818 = vmatmul.mubr.bf16.gmra.mxu0 %v228
  %v819 = vpop.f32.mrf.mxu0
  %v820 = vadd.f32 %v771, %v819
  %v821 = vpop.f32.mrf.mxu0
  %v822 = vpop.f32.mrf.mxu0
  %v823 = vadd.f32 %v774, %v822
  %v824 = vpop.f32.mrf.mxu0
  %825 = vdwg.mxu0
  %v826 = vmax.f32 %v812, 0.0
  %v827 = vmax.f32 %v815, 0.0
  %v828 = vmax.f32 %v820, 0.0
  %v829 = vmax.f32 %v823, 0.0
  %830 = vst [vmem:[%s3] sm:$0xff] %v826
  %831 = vst [vmem:[%s3 + $0x8] sm:$0xff] %v827
  %832 = vst [vmem:[%s3 + $0x10] sm:$0xff] %v828
  %833 = vst [vmem:[%s3 + $0x18] sm:$0xff] %v829
  // Predicated region
  $region14: #{model_forward.12} parent=0 // pred_check
    _
  $region15: #{model_forward.12} parent=0 // pred_check_branch
    %835 = sbr.rel (0) target = $region17
  $region16: #{model_forward.12} parent=0 // pred_region
    _
  $region17: #{model_forward.12} parent=0 // pred_fallthru
    _
  // Predicated region
  $region18: #{model_forward.12} parent=0 // pred_check
    _
  $region19: #{model_forward.12} parent=0 // pred_check_branch
    %837 = sbr.rel (0) target = $region21
  $region20: #{model_forward.12} parent=0 // pred_region
    _
  $region21: #{model_forward.12} parent=0 // pred_fallthru
    _

// kernel: model_forward.13
$region0: #{model_forward.13}
  #allocation0 [shape = 'u32[]', space=smem, size = 0x4, offset = 0x4, fixed_abs, tag = 'smem constant byte address 0x4 - core index']
  #allocation1 [shape = 'u32[144,128]{1,0:T(1,128)}', space=vmem, size = 0x12000, scoped, tag = 'internal scratch']
  %s0 = inlined_call_operand.vmem [shape: f32[2,1024], index: 0, kind: input, shape index: {}]
  %s1 = inlined_call_operand.vmem [shape: f32[2,10], index: 1, kind: input, shape index: {}]
  %s2 = inlined_call_operand.vmem [shape: f32[1024,256], index: 2, kind: input, shape index: {}]
  %s3 = inlined_call_operand.vmem [shape: f32[1,256], index: 3, kind: input, shape index: {}]
  %s4 = inlined_call_operand.vmem [shape: f32[256,10], index: 4, kind: input, shape index: {}]
  %s5 = inlined_call_operand.vmem [shape: f32[1,10], index: 5, kind: input, shape index: {}]
  %s6 = inlined_call_operand.vmem [shape: f32[256,10], index: 6, kind: input, shape index: {}]
  %s7 = inlined_call_operand.vmem [shape: f32[1,10], index: 7, kind: input, shape index: {}]
  %s8 = inlined_call_operand.vmem [shape: f32[10,256], index: 8, kind: input, shape index: {}]
  %s9 = inlined_call_operand.vmem [shape: f32[1,256], index: 9, kind: input, shape index: {}]
  %s10 = inlined_call_operand.vmem [shape: f32[256,1024], index: 10, kind: input, shape index: {}]
  %s11 = inlined_call_operand.vmem [shape: f32[1,1024], index: 11, kind: input, shape index: {}]
  %s12 = inlined_call_operand.vmem [shape: f32[2,10], index: 12, kind: output, shape index: {0}]
  %s13 = inlined_call_operand.vmem [shape: f32[2,10], index: 13, kind: output, shape index: {1}]
  %s14 = inlined_call_operand.hbm [shape: f32[2,10], index: 14, kind: output, shape index: {2}]
  %s15 = inlined_call_operand.vmem [shape: f32[2,1024], index: 15, kind: output, shape index: {3}]
  %16 = xla_tuple %s12, %s13, %s14, %s15
  %s17 = sld [smem:[#allocation0]]
  $region82: #{model_forward.13} parent=0
    _
  %s19 = ssub.s32 1, %s17
  %s20 = scalar_select 0, %s19, %s17
  $region1: #{model_forward.13} parent=0
    #allocation2 [shape = 'u8[1024]{0}', space=vmem, size = 0x400, scoped, tag = 'output window, operand 2, single buffered']
    #allocation3 [shape = 's32[1]{0}', space=sflag, size = 0x4, scoped, tag = 'scoped memory for model_forward.13']
    %21 = vsyncpa [#allocation3], 0
    // Predicated region
    $region2: #{model_forward.13} parent=1 // pred_check
      _
    $region3: #{model_forward.13} parent=1 // pred_check_branch
      %23 = sbr.rel (0) target = $region5
    $region4: #{model_forward.13} parent=1 // pred_region
      _
    $region5: #{model_forward.13} parent=1 // pred_fallthru
      _
    // Predicated region
    $region6: #{model_forward.13} parent=1 // pred_check
      _
    $region7: #{model_forward.13} parent=1 // pred_check_branch
      %25 = sbr.rel (0) target = $region9
    $region8: #{model_forward.13} parent=1 // pred_region
      _
    $region9: #{model_forward.13} parent=1 // pred_fallthru
      _
    // Predicated region
    $region10: #{model_forward.13} parent=1 // pred_check
      _
    $region11: #{model_forward.13} parent=1 // pred_check_branch
      %27 = sbr.rel (0) target = $region13
    $region12: #{model_forward.13} parent=1 // pred_region
      _
    $region13: #{model_forward.13} parent=1 // pred_fallthru
      _
    // Predicated region
    $region14: #{model_forward.13} parent=1 // pred_check
      _
    $region15: #{model_forward.13} parent=1 // pred_check_branch
      %29 = sbr.rel (0) target = $region17
    $region16: #{model_forward.13} parent=1 // pred_region
      _
    $region17: #{model_forward.13} parent=1 // pred_fallthru
      _
    // Predicated region
    $region18: #{model_forward.13} parent=1 // pred_check
      _
    $region19: #{model_forward.13} parent=1 // pred_check_branch
      %31 = sbr.rel (0) target = $region21
    $region20: #{model_forward.13} parent=1 // pred_region
      _
    $region21: #{model_forward.13} parent=1 // pred_fallthru
      _
    // Predicated region
    $region22: #{model_forward.13} parent=1 // pred_check
      _
    $region23: #{model_forward.13} parent=1 // pred_check_branch
      %33 = sbr.rel (0) target = $region25
    $region24: #{model_forward.13} parent=1 // pred_region
      _
    $region25: #{model_forward.13} parent=1 // pred_fallthru
      _
    // Predicated region
    $region26: #{model_forward.13} parent=1 // pred_check
      _
    $region27: #{model_forward.13} parent=1 // pred_check_branch
      %35 = sbr.rel (0) target = $region29
    $region28: #{model_forward.13} parent=1 // pred_region
      _
    $region29: #{model_forward.13} parent=1 // pred_fallthru
      _
    // Predicated region
    $region30: #{model_forward.13} parent=1 // pred_check
      _
    $region31: #{model_forward.13} parent=1 // pred_check_branch
      %37 = sbr.rel (0) target = $region33
    $region32: #{model_forward.13} parent=1 // pred_region
      _
    $region33: #{model_forward.13} parent=1 // pred_fallthru
      _
    // Predicated region
    $region34: #{model_forward.13} parent=1 // pred_check
      _
    $region35: #{model_forward.13} parent=1 // pred_check_branch
      %39 = sbr.rel (0) target = $region37
    $region36: #{model_forward.13} parent=1 // pred_region
      _
    $region37: #{model_forward.13} parent=1 // pred_fallthru
      _
    // Predicated region
    $region38: #{model_forward.13} parent=1 // pred_check
      _
    $region39: #{model_forward.13} parent=1 // pred_check_branch
      %41 = sbr.rel (0) target = $region41
    $region40: #{model_forward.13} parent=1 // pred_region
      _
    $region41: #{model_forward.13} parent=1 // pred_fallthru
      _
    // Predicated region
    $region42: #{model_forward.13} parent=1 // pred_check
      _
    $region43: #{model_forward.13} parent=1 // pred_check_branch
      %43 = sbr.rel (0) target = $region45
    $region44: #{model_forward.13} parent=1 // pred_region
      _
    $region45: #{model_forward.13} parent=1 // pred_fallthru
      _
    // Predicated region
    $region46: #{model_forward.13} parent=1 // pred_check
      _
    $region47: #{model_forward.13} parent=1 // pred_check_branch
      %45 = sbr.rel (0) target = $region49
    $region48: #{model_forward.13} parent=1 // pred_region
      _
    $region49: #{model_forward.13} parent=1 // pred_fallthru
      _
    %v46 = vld [vmem:[%s0] sm:$0xff]
    %v47 = vld [vmem:[%s0 + $0x8] sm:$0xff]
    %v48 = vld [vmem:[%s2] sm:$0xff]
    %v49 = vld [vmem:[%s2 + $0x8] sm:$0xff]
    %v50 = vld [vmem:[%s2 + $0x10] sm:$0xff]
    %v51 = vld [vmem:[%s2 + $0x18] sm:$0xff]
    %v52 = vld [vmem:[%s2 + $0x20] sm:$0xff]
    %v53 = vld [vmem:[%s2 + $0x28] sm:$0xff]
    %v54 = vld [vmem:[%s2 + $0x30] sm:$0xff]
    %v55 = vld [vmem:[%s2 + $0x38] sm:$0xff]
    %v56 = vld [vmem:[%s2 + $0x40] sm:$0xff]
    %v57 = vld [vmem:[%s2 + $0x48] sm:$0xff]
    %v58 = vld [vmem:[%s2 + $0x50] sm:$0xff]
    %v59 = vld [vmem:[%s2 + $0x58] sm:$0xff]
    %v60 = vld [vmem:[%s2 + $0x60] sm:$0xff]
    %v61 = vld [vmem:[%s2 + $0x68] sm:$0xff]
    %v62 = vld [vmem:[%s2 + $0x70] sm:$0xff]
    %v63 = vld [vmem:[%s2 + $0x78] sm:$0xff]
    %v64 = vld [vmem:[%s2 + $0x80] sm:$0xff]
    %v65 = vld [vmem:[%s2 + $0x88] sm:$0xff]
    %v66 = vld [vmem:[%s2 + $0x90] sm:$0xff]
    %v67 = vld [vmem:[%s2 + $0x98] sm:$0xff]
    %v68 = vld [vmem:[%s2 + $0xa0] sm:$0xff]
    %v69 = vld [vmem:[%s2 + $0xa8] sm:$0xff]
    %v70 = vld [vmem:[%s2 + $0xb0] sm:$0xff]
    %v71 = vld [vmem:[%s2 + $0xb8] sm:$0xff]
    %v72 = vld [vmem:[%s2 + $0xc0] sm:$0xff]
    %v73 = vld [vmem:[%s2 + $0xc8] sm:$0xff]
    %v74 = vld [vmem:[%s2 + $0xd0] sm:$0xff]
    %v75 = vld [vmem:[%s2 + $0xd8] sm:$0xff]
    %v76 = vld [vmem:[%s2 + $0xe0] sm:$0xff]
    %v77 = vld [vmem:[%s2 + $0xe8] sm:$0xff]
    %v78 = vld [vmem:[%s2 + $0xf0] sm:$0xff]
    %v79 = vld [vmem:[%s2 + $0xf8] sm:$0xff]
    %v80 = vld [vmem:[%s2 + $0x100] sm:$0xff]
    %v81 = vld [vmem:[%s2 + $0x108] sm:$0xff]
    %v82 = vld [vmem:[%s2 + $0x110] sm:$0xff]
    %v83 = vld [vmem:[%s2 + $0x118] sm:$0xff]
    %v84 = vld [vmem:[%s2 + $0x120] sm:$0xff]
    %v85 = vld [vmem:[%s2 + $0x128] sm:$0xff]
    %v86 = vld [vmem:[%s2 + $0x130] sm:$0xff]
    %v87 = vld [vmem:[%s2 + $0x138] sm:$0xff]
    %v88 = vld [vmem:[%s2 + $0x140] sm:$0xff]
    %v89 = vld [vmem:[%s2 + $0x148] sm:$0xff]
    %v90 = vld [vmem:[%s2 + $0x150] sm:$0xff]
    %v91 = vld [vmem:[%s2 + $0x158] sm:$0xff]
    %v92 = vld [vmem:[%s2 + $0x160] sm:$0xff]
    %v93 = vld [vmem:[%s2 + $0x168] sm:$0xff]
    %v94 = vld [vmem:[%s2 + $0x170] sm:$0xff]
    %v95 = vld [vmem:[%s2 + $0x178] sm:$0xff]
    %v96 = vld [vmem:[%s2 + $0x180] sm:$0xff]
    %v97 = vld [vmem:[%s2 + $0x188] sm:$0xff]
    %v98 = vld [vmem:[%s2 + $0x190] sm:$0xff]
    %v99 = vld [vmem:[%s2 + $0x198] sm:$0xff]
    %v100 = vld [vmem:[%s2 + $0x1a0] sm:$0xff]
    %v101 = vld [vmem:[%s2 + $0x1a8] sm:$0xff]
    %v102 = vld [vmem:[%s2 + $0x1b0] sm:$0xff]
    %v103 = vld [vmem:[%s2 + $0x1b8] sm:$0xff]
    %v104 = vld [vmem:[%s2 + $0x1c0] sm:$0xff]
    %v105 = vld [vmem:[%s2 + $0x1c8] sm:$0xff]
    %v106 = vld [vmem:[%s2 + $0x1d0] sm:$0xff]
    %v107 = vld [vmem:[%s2 + $0x1d8] sm:$0xff]
    %v108 = vld [vmem:[%s2 + $0x1e0] sm:$0xff]
    %v109 = vld [vmem:[%s2 + $0x1e8] sm:$0xff]
    %v110 = vld [vmem:[%s2 + $0x1f0] sm:$0xff]
    %v111 = vld [vmem:[%s2 + $0x1f8] sm:$0xff]
    %v112 = vld [vmem:[%s2 + $0x200] sm:$0xff]
    %v113 = vld [vmem:[%s2 + $0x208] sm:$0xff]
    %v114 = vld [vmem:[%s2 + $0x210] sm:$0xff]
    %v115 = vld [vmem:[%s2 + $0x218] sm:$0xff]
    %v116 = vld [vmem:[%s2 + $0x220] sm:$0xff]
    %v117 = vld [vmem:[%s2 + $0x228] sm:$0xff]
    %v118 = vld [vmem:[%s2 + $0x230] sm:$0xff]
    %v119 = vld [vmem:[%s2 + $0x238] sm:$0xff]
    %v120 = vld [vmem:[%s2 + $0x240] sm:$0xff]
    %v121 = vld [vmem:[%s2 + $0x248] sm:$0xff]
    %v122 = vld [vmem:[%s2 + $0x250] sm:$0xff]
    %v123 = vld [vmem:[%s2 + $0x258] sm:$0xff]
    %v124 = vld [vmem:[%s2 + $0x260] sm:$0xff]
    %v125 = vld [vmem:[%s2 + $0x268] sm:$0xff]
    %v126 = vld [vmem:[%s2 + $0x270] sm:$0xff]
    %v127 = vld [vmem:[%s2 + $0x278] sm:$0xff]
    %v128 = vld [vmem:[%s2 + $0x280] sm:$0xff]
    %v129 = vld [vmem:[%s2 + $0x288] sm:$0xff]
    %v130 = vld [vmem:[%s2 + $0x290] sm:$0xff]
    %v131 = vld [vmem:[%s2 + $0x298] sm:$0xff]
    %v132 = vld [vmem:[%s2 + $0x2a0] sm:$0xff]
    %v133 = vld [vmem:[%s2 + $0x2a8] sm:$0xff]
    %v134 = vld [vmem:[%s2 + $0x2b0] sm:$0xff]
    %v135 = vld [vmem:[%s2 + $0x2b8] sm:$0xff]
    %v136 = vld [vmem:[%s2 + $0x2c0] sm:$0xff]
    %v137 = vld [vmem:[%s2 + $0x2c8] sm:$0xff]
    %v138 = vld [vmem:[%s2 + $0x2d0] sm:$0xff]
    %v139 = vld [vmem:[%s2 + $0x2d8] sm:$0xff]
    %v140 = vld [vmem:[%s2 + $0x2e0] sm:$0xff]
    %v141 = vld [vmem:[%s2 + $0x2e8] sm:$0xff]
    %v142 = vld [vmem:[%s2 + $0x2f0] sm:$0xff]
    %v143 = vld [vmem:[%s2 + $0x2f8] sm:$0xff]
    %v144 = vld [vmem:[%s2 + $0x300] sm:$0xff]
    %v145 = vld [vmem:[%s2 + $0x308] sm:$0xff]
    %v146 = vld [vmem:[%s2 + $0x310] sm:$0xff]
    %v147 = vld [vmem:[%s2 + $0x318] sm:$0xff]
    %v148 = vld [vmem:[%s2 + $0x320] sm:$0xff]
    %v149 = vld [vmem:[%s2 + $0x328] sm:$0xff]
    %v150 = vld [vmem:[%s2 + $0x330] sm:$0xff]
    %v151 = vld [vmem:[%s2 + $0x338] sm:$0xff]
    %v152 = vld [vmem:[%s2 + $0x340] sm:$0xff]
    %v153 = vld [vmem:[%s2 + $0x348] sm:$0xff]
    %v154 = vld [vmem:[%s2 + $0x350] sm:$0xff]
    %v155 = vld [vmem:[%s2 + $0x358] sm:$0xff]
    %v156 = vld [vmem:[%s2 + $0x360] sm:$0xff]
    %v157 = vld [vmem:[%s2 + $0x368] sm:$0xff]
    %v158 = vld [vmem:[%s2 + $0x370] sm:$0xff]
    %v159 = vld [vmem:[%s2 + $0x378] sm:$0xff]
    %v160 = vld [vmem:[%s2 + $0x380] sm:$0xff]
    %v161 = vld [vmem:[%s2 + $0x388] sm:$0xff]
    %v162 = vld [vmem:[%s2 + $0x390] sm:$0xff]
    %v163 = vld [vmem:[%s2 + $0x398] sm:$0xff]
    %v164 = vld [vmem:[%s2 + $0x3a0] sm:$0xff]
    %v165 = vld [vmem:[%s2 + $0x3a8] sm:$0xff]
    %v166 = vld [vmem:[%s2 + $0x3b0] sm:$0xff]
    %v167 = vld [vmem:[%s2 + $0x3b8] sm:$0xff]
    %v168 = vld [vmem:[%s2 + $0x3c0] sm:$0xff]
    %v169 = vld [vmem:[%s2 + $0x3c8] sm:$0xff]
    %v170 = vld [vmem:[%s2 + $0x3d0] sm:$0xff]
    %v171 = vld [vmem:[%s2 + $0x3d8] sm:$0xff]
    %v172 = vld [vmem:[%s2 + $0x3e0] sm:$0xff]
    %v173 = vld [vmem:[%s2 + $0x3e8] sm:$0xff]
    %v174 = vld [vmem:[%s2 + $0x3f0] sm:$0xff]
    %v175 = vld [vmem:[%s2 + $0x3f8] sm:$0xff]
    %v176 = vld [vmem:[%s2 + $0x400] sm:$0xff]
    %v177 = vld [vmem:[%s2 + $0x408] sm:$0xff]
    %v178 = vld [vmem:[%s2 + $0x410] sm:$0xff]
    %v179 = vld [vmem:[%s2 + $0x418] sm:$0xff]
    %v180 = vld [vmem:[%s2 + $0x420] sm:$0xff]
    %v181 = vld [vmem:[%s2 + $0x428] sm:$0xff]
    %v182 = vld [vmem:[%s2 + $0x430] sm:$0xff]
    %v183 = vld [vmem:[%s2 + $0x438] sm:$0xff]
    %v184 = vld [vmem:[%s2 + $0x440] sm:$0xff]
    %v185 = vld [vmem:[%s2 + $0x448] sm:$0xff]
    %v186 = vld [vmem:[%s2 + $0x450] sm:$0xff]
    %v187 = vld [vmem:[%s2 + $0x458] sm:$0xff]
    %v188 = vld [vmem:[%s2 + $0x460] sm:$0xff]
    %v189 = vld [vmem:[%s2 + $0x468] sm:$0xff]
    %v190 = vld [vmem:[%s2 + $0x470] sm:$0xff]
    %v191 = vld [vmem:[%s2 + $0x478] sm:$0xff]
    %v192 = vld [vmem:[%s2 + $0x480] sm:$0xff]
    %v193 = vld [vmem:[%s2 + $0x488] sm:$0xff]
    %v194 = vld [vmem:[%s2 + $0x490] sm:$0xff]
    %v195 = vld [vmem:[%s2 + $0x498] sm:$0xff]
    %v196 = vld [vmem:[%s2 + $0x4a0] sm:$0xff]
    %v197 = vld [vmem:[%s2 + $0x4a8] sm:$0xff]
    %v198 = vld [vmem:[%s2 + $0x4b0] sm:$0xff]
    %v199 = vld [vmem:[%s2 + $0x4b8] sm:$0xff]
    %v200 = vld [vmem:[%s2 + $0x4c0] sm:$0xff]
    %v201 = vld [vmem:[%s2 + $0x4c8] sm:$0xff]
    %v202 = vld [vmem:[%s2 + $0x4d0] sm:$0xff]
    %v203 = vld [vmem:[%s2 + $0x4d8] sm:$0xff]
    %v204 = vld [vmem:[%s2 + $0x4e0] sm:$0xff]
    %v205 = vld [vmem:[%s2 + $0x4e8] sm:$0xff]
    %v206 = vld [vmem:[%s2 + $0x4f0] sm:$0xff]
    %v207 = vld [vmem:[%s2 + $0x4f8] sm:$0xff]
    %v208 = vld [vmem:[%s2 + $0x500] sm:$0xff]
    %v209 = vld [vmem:[%s2 + $0x508] sm:$0xff]
    %v210 = vld [vmem:[%s2 + $0x510] sm:$0xff]
    %v211 = vld [vmem:[%s2 + $0x518] sm:$0xff]
    %v212 = vld [vmem:[%s2 + $0x520] sm:$0xff]
    %v213 = vld [vmem:[%s2 + $0x528] sm:$0xff]
    %v214 = vld [vmem:[%s2 + $0x530] sm:$0xff]
    %v215 = vld [vmem:[%s2 + $0x538] sm:$0xff]
    %v216 = vld [vmem:[%s2 + $0x540] sm:$0xff]
    %v217 = vld [vmem:[%s2 + $0x548] sm:$0xff]
    %v218 = vld [vmem:[%s2 + $0x550] sm:$0xff]
    %v219 = vld [vmem:[%s2 + $0x558] sm:$0xff]
    %v220 = vld [vmem:[%s2 + $0x560] sm:$0xff]
    %v221 = vld [vmem:[%s2 + $0x568] sm:$0xff]
    %v222 = vld [vmem:[%s2 + $0x570] sm:$0xff]
    %v223 = vld [vmem:[%s2 + $0x578] sm:$0xff]
    %v224 = vld [vmem:[%s2 + $0x580] sm:$0xff]
    %v225 = vld [vmem:[%s2 + $0x588] sm:$0xff]
    %v226 = vld [vmem:[%s2 + $0x590] sm:$0xff]
    %v227 = vld [vmem:[%s2 + $0x598] sm:$0xff]
    %v228 = vld [vmem:[%s2 + $0x5a0] sm:$0xff]
    %v229 = vld [vmem:[%s2 + $0x5a8] sm:$0xff]
    %v230 = vld [vmem:[%s2 + $0x5b0] sm:$0xff]
    %v231 = vld [vmem:[%s2 + $0x5b8] sm:$0xff]
    %v232 = vld [vmem:[%s2 + $0x5c0] sm:$0xff]
    %v233 = vld [vmem:[%s2 + $0x5c8] sm:$0xff]
    %v234 = vld [vmem:[%s2 + $0x5d0] sm:$0xff]
    %v235 = vld [vmem:[%s2 + $0x5d8] sm:$0xff]
    %v236 = vld [vmem:[%s2 + $0x5e0] sm:$0xff]
    %v237 = vld [vmem:[%s2 + $0x5e8] sm:$0xff]
    %v238 = vld [vmem:[%s2 + $0x5f0] sm:$0xff]
    %v239 = vld [vmem:[%s2 + $0x5f8] sm:$0xff]
    %v240 = vld [vmem:[%s2 + $0x600] sm:$0xff]
    %v241 = vld [vmem:[%s2 + $0x608] sm:$0xff]
    %v242 = vld [vmem:[%s2 + $0x610] sm:$0xff]
    %v243 = vld [vmem:[%s2 + $0x618] sm:$0xff]
    %v244 = vld [vmem:[%s2 + $0x620] sm:$0xff]
    %v245 = vld [vmem:[%s2 + $0x628] sm:$0xff]
    %v246 = vld [vmem:[%s2 + $0x630] sm:$0xff]
    %v247 = vld [vmem:[%s2 + $0x638] sm:$0xff]
    %v248 = vld [vmem:[%s2 + $0x640] sm:$0xff]
    %v249 = vld [vmem:[%s2 + $0x648] sm:$0xff]
    %v250 = vld [vmem:[%s2 + $0x650] sm:$0xff]
    %v251 = vld [vmem:[%s2 + $0x658] sm:$0xff]
    %v252 = vld [vmem:[%s2 + $0x660] sm:$0xff]
    %v253 = vld [vmem:[%s2 + $0x668] sm:$0xff]
    %v254 = vld [vmem:[%s2 + $0x670] sm:$0xff]
    %v255 = vld [vmem:[%s2 + $0x678] sm:$0xff]
    %v256 = vld [vmem:[%s2 + $0x680] sm:$0xff]
    %v257 = vld [vmem:[%s2 + $0x688] sm:$0xff]
    %v258 = vld [vmem:[%s2 + $0x690] sm:$0xff]
    %v259 = vld [vmem:[%s2 + $0x698] sm:$0xff]
    %v260 = vld [vmem:[%s2 + $0x6a0] sm:$0xff]
    %v261 = vld [vmem:[%s2 + $0x6a8] sm:$0xff]
    %v262 = vld [vmem:[%s2 + $0x6b0] sm:$0xff]
    %v263 = vld [vmem:[%s2 + $0x6b8] sm:$0xff]
    %v264 = vld [vmem:[%s2 + $0x6c0] sm:$0xff]
    %v265 = vld [vmem:[%s2 + $0x6c8] sm:$0xff]
    %v266 = vld [vmem:[%s2 + $0x6d0] sm:$0xff]
    %v267 = vld [vmem:[%s2 + $0x6d8] sm:$0xff]
    %v268 = vld [vmem:[%s2 + $0x6e0] sm:$0xff]
    %v269 = vld [vmem:[%s2 + $0x6e8] sm:$0xff]
    %v270 = vld [vmem:[%s2 + $0x6f0] sm:$0xff]
    %v271 = vld [vmem:[%s2 + $0x6f8] sm:$0xff]
    %v272 = vld [vmem:[%s2 + $0x700] sm:$0xff]
    %v273 = vld [vmem:[%s2 + $0x708] sm:$0xff]
    %v274 = vld [vmem:[%s2 + $0x710] sm:$0xff]
    %v275 = vld [vmem:[%s2 + $0x718] sm:$0xff]
    %v276 = vld [vmem:[%s2 + $0x720] sm:$0xff]
    %v277 = vld [vmem:[%s2 + $0x728] sm:$0xff]
    %v278 = vld [vmem:[%s2 + $0x730] sm:$0xff]
    %v279 = vld [vmem:[%s2 + $0x738] sm:$0xff]
    %v280 = vld [vmem:[%s2 + $0x740] sm:$0xff]
    %v281 = vld [vmem:[%s2 + $0x748] sm:$0xff]
    %v282 = vld [vmem:[%s2 + $0x750] sm:$0xff]
    %v283 = vld [vmem:[%s2 + $0x758] sm:$0xff]
    %v284 = vld [vmem:[%s2 + $0x760] sm:$0xff]
    %v285 = vld [vmem:[%s2 + $0x768] sm:$0xff]
    %v286 = vld [vmem:[%s2 + $0x770] sm:$0xff]
    %v287 = vld [vmem:[%s2 + $0x778] sm:$0xff]
    %v288 = vld [vmem:[%s2 + $0x780] sm:$0xff]
    %v289 = vld [vmem:[%s2 + $0x788] sm:$0xff]
    %v290 = vld [vmem:[%s2 + $0x790] sm:$0xff]
    %v291 = vld [vmem:[%s2 + $0x798] sm:$0xff]
    %v292 = vld [vmem:[%s2 + $0x7a0] sm:$0xff]
    %v293 = vld [vmem:[%s2 + $0x7a8] sm:$0xff]
    %v294 = vld [vmem:[%s2 + $0x7b0] sm:$0xff]
    %v295 = vld [vmem:[%s2 + $0x7b8] sm:$0xff]
    %v296 = vld [vmem:[%s2 + $0x7c0] sm:$0xff]
    %v297 = vld [vmem:[%s2 + $0x7c8] sm:$0xff]
    %v298 = vld [vmem:[%s2 + $0x7d0] sm:$0xff]
    %v299 = vld [vmem:[%s2 + $0x7d8] sm:$0xff]
    %v300 = vld [vmem:[%s2 + $0x7e0] sm:$0xff]
    %v301 = vld [vmem:[%s2 + $0x7e8] sm:$0xff]
    %v302 = vld [vmem:[%s2 + $0x7f0] sm:$0xff]
    %v303 = vld [vmem:[%s2 + $0x7f8] sm:$0xff]
    %v304 = vld [vmem:[%s3] sm:$0x3]
    %v306 = vlaneseq
    %v307 = vshrl.u32 %v306, 7
    %v308 = vsub.s32 0, %v307
    %v309 = vrot.slane %v304, %v308
    %v310 = vlaneseq
    %v311 = vshrl.u32 %v310, 7
    %v312 = vsub.s32 1, %v311
    %v313 = vrot.slane %v304, %v312
    %v318 = vcombine.high %v46, %v46
    %v320 = vunpack.c.l.s4 1983009808
    %v321 = vunpack.c.0.s8 %v320
    %v322 = vlaneseq
    %v323 = vshrl.u32 %v322, 7
    %v324 = vsub.s32 %v321, %v323
    %v325 = vrot.slane %v46, %v324
    %v327 = vunpack.c.l.s4 1983009808
    %v328 = vunpack.c.0.s8 %v327
    %v329 = vlaneseq
    %v330 = vshrl.u32 %v329, 7
    %v331 = vsub.s32 %v328, %v330
    %v332 = vrot.slane %v318, %v331
    %v333 = vcombine.high %v325, %v325
    %v334 = vcombine.high %v332, %v332
    %v335 = vcombine.high %v47, %v47
    %v337 = vunpack.c.l.s4 1983009808
    %v338 = vunpack.c.0.s8 %v337
    %v339 = vlaneseq
    %v340 = vshrl.u32 %v339, 7
    %v341 = vsub.s32 %v338, %v340
    %v342 = vrot.slane %v47, %v341
    %v344 = vunpack.c.l.s4 1983009808
    %v345 = vunpack.c.0.s8 %v344
    %v346 = vlaneseq
    %v347 = vshrl.u32 %v346, 7
    %v348 = vsub.s32 %v345, %v347
    %v349 = vrot.slane %v335, %v348
    %v350 = vcombine.high %v342, %v342
    %v351 = vcombine.high %v349, %v349
    %360 = vmatprep.subr.mxu0 %v79
    %361 = vmatpush1.msra.mxu0 %v78
    %362 = vmatprep.subr.mxu0 %v77
    %363 = vmatpush1.msra.mxu0 %v76
    %364 = vmatprep.subr.mxu0 %v75
    %365 = vmatpush1.msra.mxu0 %v74
    %366 = vmatprep.subr.mxu0 %v73
    %367 = vmatpush1.msra.mxu0 %v72
    %368 = vmatprep.subr.mxu0 %v71
    %369 = vmatpush1.msra.mxu0 %v70
    %370 = vmatprep.subr.mxu0 %v69
    %371 = vmatpush1.msra.mxu0 %v68
    %372 = vmatprep.subr.mxu0 %v67
    %373 = vmatpush1.msra.mxu0 %v66
    %374 = vmatprep.subr.mxu0 %v65
    %375 = vmatpush1.msra.mxu0 %v64
    %376 = vmatprep.subr.mxu0 %v63
    %377 = vmatpush1.msra.mxu0 %v62
    %378 = vmatprep.subr.mxu0 %v61
    %379 = vmatpush1.msra.mxu0 %v60
    %380 = vmatprep.subr.mxu0 %v59
    %381 = vmatpush1.msra.mxu0 %v58
    %382 = vmatprep.subr.mxu0 %v57
    %383 = vmatpush1.msra.mxu0 %v56
    %384 = vmatprep.subr.mxu0 %v55
    %385 = vmatpush1.msra.mxu0 %v54
    %386 = vmatprep.subr.mxu0 %v53
    %387 = vmatpush1.msra.mxu0 %v52
    %388 = vmatprep.subr.mxu0 %v51
    %389 = vmatpush1.msra.mxu0 %v50
    %390 = vmatprep.subr.mxu0 %v49
    %391 = vmatpush1.msra.mxu0 %v48
    %392 = vmatprep.subr.mxu0 %v111
    %393 = vmatpush2.msra.mxu0 %v110
    %394 = vmatprep.subr.mxu0 %v109
    %395 = vmatpush2.msra.mxu0 %v108
    %396 = vmatprep.subr.mxu0 %v107
    %397 = vmatpush2.msra.mxu0 %v106
    %398 = vmatprep.subr.mxu0 %v105
    %399 = vmatpush2.msra.mxu0 %v104
    %400 = vmatprep.subr.mxu0 %v103
    %401 = vmatpush2.msra.mxu0 %v102
    %402 = vmatprep.subr.mxu0 %v101
    %403 = vmatpush2.msra.mxu0 %v100
    %404 = vmatprep.subr.mxu0 %v99
    %405 = vmatpush2.msra.mxu0 %v98
    %406 = vmatprep.subr.mxu0 %v97
    %407 = vmatpush2.msra.mxu0 %v96
    %408 = vmatprep.subr.mxu0 %v95
    %409 = vmatpush2.msra.mxu0 %v94
    %410 = vmatprep.subr.mxu0 %v93
    %411 = vmatpush2.msra.mxu0 %v92
    %412 = vmatprep.subr.mxu0 %v91
    %413 = vmatpush2.msra.mxu0 %v90
    %414 = vmatprep.subr.mxu0 %v89
    %415 = vmatpush2.msra.mxu0 %v88
    %416 = vmatprep.subr.mxu0 %v87
    %417 = vmatpush2.msra.mxu0 %v86
    %418 = vmatprep.subr.mxu0 %v85
    %419 = vmatpush2.msra.mxu0 %v84
    %420 = vmatprep.subr.mxu0 %v83
    %421 = vmatpush2.msra.mxu0 %v82
    %422 = vmatprep.subr.mxu0 %v81
    %423 = vmatpush2.msra.mxu0 %v80
    %424 = vmatprep.mubr.f32.mxu0 %v333
    %425 = vmatmul.mubr.f32.gmra.mxu0 %v325
    %v426 = vpop.f32.mrf.mxu0
    %v427 = vadd.f32 %v309, %v426
    %v428 = vpop.f32.mrf.mxu0
    %v429 = vadd.f32 %v313, %v428
    %430 = vdwg.mxu0
    %431 = vmatprep.subr.mxu0 %v143
    %432 = vmatpush1.msra.mxu0 %v142
    %433 = vmatprep.subr.mxu0 %v141
    %434 = vmatpush1.msra.mxu0 %v140
    %435 = vmatprep.subr.mxu0 %v139
    %436 = vmatpush1.msra.mxu0 %v138
    %437 = vmatprep.subr.mxu0 %v137
    %438 = vmatpush1.msra.mxu0 %v136
    %439 = vmatprep.subr.mxu0 %v135
    %440 = vmatpush1.msra.mxu0 %v134
    %441 = vmatprep.subr.mxu0 %v133
    %442 = vmatpush1.msra.mxu0 %v132
    %443 = vmatprep.subr.mxu0 %v131
    %444 = vmatpush1.msra.mxu0 %v130
    %445 = vmatprep.subr.mxu0 %v129
    %446 = vmatpush1.msra.mxu0 %v128
    %447 = vmatprep.subr.mxu0 %v127
    %448 = vmatpush1.msra.mxu0 %v126
    %449 = vmatprep.subr.mxu0 %v125
    %450 = vmatpush1.msra.mxu0 %v124
    %451 = vmatprep.subr.mxu0 %v123
    %452 = vmatpush1.msra.mxu0 %v122
    %453 = vmatprep.subr.mxu0 %v121
    %454 = vmatpush1.msra.mxu0 %v120
    %455 = vmatprep.subr.mxu0 %v119
    %456 = vmatpush1.msra.mxu0 %v118
    %457 = vmatprep.subr.mxu0 %v117
    %458 = vmatpush1.msra.mxu0 %v116
    %459 = vmatprep.subr.mxu0 %v115
    %460 = vmatpush1.msra.mxu0 %v114
    %461 = vmatprep.subr.mxu0 %v113
    %462 = vmatpush1.msra.mxu0 %v112
    %463 = vmatprep.subr.mxu0 %v175
    %464 = vmatpush2.msra.mxu0 %v174
    %465 = vmatprep.subr.mxu0 %v173
    %466 = vmatpush2.msra.mxu0 %v172
    %467 = vmatprep.subr.mxu0 %v171
    %468 = vmatpush2.msra.mxu0 %v170
    %469 = vmatprep.subr.mxu0 %v169
    %470 = vmatpush2.msra.mxu0 %v168
    %471 = vmatprep.subr.mxu0 %v167
    %472 = vmatpush2.msra.mxu0 %v166
    %473 = vmatprep.subr.mxu0 %v165
    %474 = vmatpush2.msra.mxu0 %v164
    %475 = vmatprep.subr.mxu0 %v163
    %476 = vmatpush2.msra.mxu0 %v162
    %477 = vmatprep.subr.mxu0 %v161
    %478 = vmatpush2.msra.mxu0 %v160
    %479 = vmatprep.subr.mxu0 %v159
    %480 = vmatpush2.msra.mxu0 %v158
    %481 = vmatprep.subr.mxu0 %v157
    %482 = vmatpush2.msra.mxu0 %v156
    %483 = vmatprep.subr.mxu0 %v155
    %484 = vmatpush2.msra.mxu0 %v154
    %485 = vmatprep.subr.mxu0 %v153
    %486 = vmatpush2.msra.mxu0 %v152
    %487 = vmatprep.subr.mxu0 %v151
    %488 = vmatpush2.msra.mxu0 %v150
    %489 = vmatprep.subr.mxu0 %v149
    %490 = vmatpush2.msra.mxu0 %v148
    %491 = vmatprep.subr.mxu0 %v147
    %492 = vmatpush2.msra.mxu0 %v146
    %493 = vmatprep.subr.mxu0 %v145
    %494 = vmatpush2.msra.mxu0 %v144
    %495 = vmatprep.mubr.f32.mxu0 %v334
    %496 = vmatmul.mubr.f32.gmra.mxu0 %v332
    %v497 = vpop.f32.mrf.mxu0
    %v498 = vadd.f32 %v427, %v497
    %v499 = vpop.f32.mrf.mxu0
    %v500 = vadd.f32 %v429, %v499
    %501 = vdwg.mxu0
    %502 = vmatprep.subr.mxu0 %v207
    %503 = vmatpush1.msra.mxu0 %v206
    %504 = vmatprep.subr.mxu0 %v205
    %505 = vmatpush1.msra.mxu0 %v204
    %506 = vmatprep.subr.mxu0 %v203
    %507 = vmatpush1.msra.mxu0 %v202
    %508 = vmatprep.subr.mxu0 %v201
    %509 = vmatpush1.msra.mxu0 %v200
    %510 = vmatprep.subr.mxu0 %v199
    %511 = vmatpush1.msra.mxu0 %v198
    %512 = vmatprep.subr.mxu0 %v197
    %513 = vmatpush1.msra.mxu0 %v196
    %514 = vmatprep.subr.mxu0 %v195
    %515 = vmatpush1.msra.mxu0 %v194
    %516 = vmatprep.subr.mxu0 %v193
    %517 = vmatpush1.msra.mxu0 %v192
    %518 = vmatprep.subr.mxu0 %v191
    %519 = vmatpush1.msra.mxu0 %v190
    %520 = vmatprep.subr.mxu0 %v189
    %521 = vmatpush1.msra.mxu0 %v188
    %522 = vmatprep.subr.mxu0 %v187
    %523 = vmatpush1.msra.mxu0 %v186
    %524 = vmatprep.subr.mxu0 %v185
    %525 = vmatpush1.msra.mxu0 %v184
    %526 = vmatprep.subr.mxu0 %v183
    %527 = vmatpush1.msra.mxu0 %v182
    %528 = vmatprep.subr.mxu0 %v181
    %529 = vmatpush1.msra.mxu0 %v180
    %530 = vmatprep.subr.mxu0 %v179
    %531 = vmatpush1.msra.mxu0 %v178
    %532 = vmatprep.subr.mxu0 %v177
    %533 = vmatpush1.msra.mxu0 %v176
    %534 = vmatprep.subr.mxu0 %v239
    %535 = vmatpush2.msra.mxu0 %v238
    %536 = vmatprep.subr.mxu0 %v237
    %537 = vmatpush2.msra.mxu0 %v236
    %538 = vmatprep.subr.mxu0 %v235
    %539 = vmatpush2.msra.mxu0 %v234
    %540 = vmatprep.subr.mxu0 %v233
    %541 = vmatpush2.msra.mxu0 %v232
    %542 = vmatprep.subr.mxu0 %v231
    %543 = vmatpush2.msra.mxu0 %v230
    %544 = vmatprep.subr.mxu0 %v229
    %545 = vmatpush2.msra.mxu0 %v228
    %546 = vmatprep.subr.mxu0 %v227
    %547 = vmatpush2.msra.mxu0 %v226
    %548 = vmatprep.subr.mxu0 %v225
    %549 = vmatpush2.msra.mxu0 %v224
    %550 = vmatprep.subr.mxu0 %v223
    %551 = vmatpush2.msra.mxu0 %v222
    %552 = vmatprep.subr.mxu0 %v221
    %553 = vmatpush2.msra.mxu0 %v220
    %554 = vmatprep.subr.mxu0 %v219
    %555 = vmatpush2.msra.mxu0 %v218
    %556 = vmatprep.subr.mxu0 %v217
    %557 = vmatpush2.msra.mxu0 %v216
    %558 = vmatprep.subr.mxu0 %v215
    %559 = vmatpush2.msra.mxu0 %v214
    %560 = vmatprep.subr.mxu0 %v213
    %561 = vmatpush2.msra.mxu0 %v212
    %562 = vmatprep.subr.mxu0 %v211
    %563 = vmatpush2.msra.mxu0 %v210
    %564 = vmatprep.subr.mxu0 %v209
    %565 = vmatpush2.msra.mxu0 %v208
    %566 = vmatprep.mubr.f32.mxu0 %v350
    %567 = vmatmul.mubr.f32.gmra.mxu0 %v342
    %v568 = vpop.f32.mrf.mxu0
    %v569 = vadd.f32 %v498, %v568
    %v570 = vpop.f32.mrf.mxu0
    %v571 = vadd.f32 %v500, %v570
    %572 = vdwg.mxu0
    %573 = vmatprep.subr.mxu0 %v271
    %574 = vmatpush1.msra.mxu0 %v270
    %575 = vmatprep.subr.mxu0 %v269
    %576 = vmatpush1.msra.mxu0 %v268
    %577 = vmatprep.subr.mxu0 %v267
    %578 = vmatpush1.msra.mxu0 %v266
    %579 = vmatprep.subr.mxu0 %v265
    %580 = vmatpush1.msra.mxu0 %v264
    %581 = vmatprep.subr.mxu0 %v263
    %582 = vmatpush1.msra.mxu0 %v262
    %583 = vmatprep.subr.mxu0 %v261
    %584 = vmatpush1.msra.mxu0 %v260
    %585 = vmatprep.subr.mxu0 %v259
    %586 = vmatpush1.msra.mxu0 %v258
    %587 = vmatprep.subr.mxu0 %v257
    %588 = vmatpush1.msra.mxu0 %v256
    %589 = vmatprep.subr.mxu0 %v255
    %590 = vmatpush1.msra.mxu0 %v254
    %591 = vmatprep.subr.mxu0 %v253
    %592 = vmatpush1.msra.mxu0 %v252
    %593 = vmatprep.subr.mxu0 %v251
    %594 = vmatpush1.msra.mxu0 %v250
    %595 = vmatprep.subr.mxu0 %v249
    %596 = vmatpush1.msra.mxu0 %v248
    %597 = vmatprep.subr.mxu0 %v247
    %598 = vmatpush1.msra.mxu0 %v246
    %599 = vmatprep.subr.mxu0 %v245
    %600 = vmatpush1.msra.mxu0 %v244
    %601 = vmatprep.subr.mxu0 %v243
    %602 = vmatpush1.msra.mxu0 %v242
    %603 = vmatprep.subr.mxu0 %v241
    %604 = vmatpush1.msra.mxu0 %v240
    %605 = vmatprep.subr.mxu0 %v303
    %606 = vmatpush2.msra.mxu0 %v302
    %607 = vmatprep.subr.mxu0 %v301
    %608 = vmatpush2.msra.mxu0 %v300
    %609 = vmatprep.subr.mxu0 %v299
    %610 = vmatpush2.msra.mxu0 %v298
    %611 = vmatprep.subr.mxu0 %v297
    %612 = vmatpush2.msra.mxu0 %v296
    %613 = vmatprep.subr.mxu0 %v295
    %614 = vmatpush2.msra.mxu0 %v294
    %615 = vmatprep.subr.mxu0 %v293
    %616 = vmatpush2.msra.mxu0 %v292
    %617 = vmatprep.subr.mxu0 %v291
    %618 = vmatpush2.msra.mxu0 %v290
    %619 = vmatprep.subr.mxu0 %v289
    %620 = vmatpush2.msra.mxu0 %v288
    %621 = vmatprep.subr.mxu0 %v287
    %622 = vmatpush2.msra.mxu0 %v286
    %623 = vmatprep.subr.mxu0 %v285
    %624 = vmatpush2.msra.mxu0 %v284
    %625 = vmatprep.subr.mxu0 %v283
    %626 = vmatpush2.msra.mxu0 %v282
    %627 = vmatprep.subr.mxu0 %v281
    %628 = vmatpush2.msra.mxu0 %v280
    %629 = vmatprep.subr.mxu0 %v279
    %630 = vmatpush2.msra.mxu0 %v278
    %631 = vmatprep.subr.mxu0 %v277
    %632 = vmatpush2.msra.mxu0 %v276
    %633 = vmatprep.subr.mxu0 %v275
    %634 = vmatpush2.msra.mxu0 %v274
    %635 = vmatprep.subr.mxu0 %v273
    %636 = vmatpush2.msra.mxu0 %v272
    %637 = vmatprep.mubr.f32.mxu0 %v351
    %638 = vmatmul.mubr.f32.gmra.mxu0 %v349
    %v639 = vpop.f32.mrf.mxu0
    %v640 = vadd.f32 %v569, %v639
    %v641 = vpop.f32.mrf.mxu0
    %v642 = vadd.f32 %v571, %v641
    %643 = vdwg.mxu0
    %v644 = vmax.f32 %v640, 0.0
    %v645 = vmax.f32 %v642, 0.0
    %v646 = vld [vmem:[%s4] sm:$0xff]
    %v647 = vld [vmem:[%s4 + $0x8] sm:$0xff]
    %v648 = vld [vmem:[%s4 + $0x10] sm:$0xff]
    %v649 = vld [vmem:[%s4 + $0x18] sm:$0xff]
    %v650 = vld [vmem:[%s4 + $0x20] sm:$0xff]
    %v651 = vld [vmem:[%s4 + $0x28] sm:$0xff]
    %v652 = vld [vmem:[%s4 + $0x30] sm:$0xff]
    %v653 = vld [vmem:[%s4 + $0x38] sm:$0xff]
    %v654 = vld [vmem:[%s4 + $0x40] sm:$0xff]
    %v655 = vld [vmem:[%s4 + $0x48] sm:$0xff]
    %v656 = vld [vmem:[%s4 + $0x50] sm:$0xff]
    %v657 = vld [vmem:[%s4 + $0x58] sm:$0xff]
    %v658 = vld [vmem:[%s4 + $0x60] sm:$0xff]
    %v659 = vld [vmem:[%s4 + $0x68] sm:$0xff]
    %v660 = vld [vmem:[%s4 + $0x70] sm:$0xff]
    %v661 = vld [vmem:[%s4 + $0x78] sm:$0xff]
    %v662 = vld [vmem:[%s4 + $0x80] sm:$0xff]
    %v663 = vld [vmem:[%s4 + $0x88] sm:$0xff]
    %v664 = vld [vmem:[%s4 + $0x90] sm:$0xff]
    %v665 = vld [vmem:[%s4 + $0x98] sm:$0xff]
    %v666 = vld [vmem:[%s4 + $0xa0] sm:$0xff]
    %v667 = vld [vmem:[%s4 + $0xa8] sm:$0xff]
    %v668 = vld [vmem:[%s4 + $0xb0] sm:$0xff]
    %v669 = vld [vmem:[%s4 + $0xb8] sm:$0xff]
    %v670 = vld [vmem:[%s4 + $0xc0] sm:$0xff]
    %v671 = vld [vmem:[%s4 + $0xc8] sm:$0xff]
    %v672 = vld [vmem:[%s4 + $0xd0] sm:$0xff]
    %v673 = vld [vmem:[%s4 + $0xd8] sm:$0xff]
    %v674 = vld [vmem:[%s4 + $0xe0] sm:$0xff]
    %v675 = vld [vmem:[%s4 + $0xe8] sm:$0xff]
    %v676 = vld [vmem:[%s4 + $0xf0] sm:$0xff]
    %v677 = vld [vmem:[%s4 + $0xf8] sm:$0xff]
    %v678 = vld [vmem:[%s5] sm:$0x1]
    %v680 = vlaneseq
    %v681 = vshrl.u32 %v680, 7
    %v682 = vsub.s32 0, %v681
    %v683 = vrot.slane %v678, %v682
    %685 = vmatprep.subr.mxu0 0.0
    %686 = vmatpush1.msra.mxu0 %v661
    %687 = vmatprep.subr.mxu0 0.0
    %688 = vmatpush1.msra.mxu0 %v660
    %689 = vmatprep.subr.mxu0 0.0
    %690 = vmatpush1.msra.mxu0 %v659
    %691 = vmatprep.subr.mxu0 0.0
    %692 = vmatpush1.msra.mxu0 %v658
    %693 = vmatprep.subr.mxu0 0.0
    %694 = vmatpush1.msra.mxu0 %v657
    %695 = vmatprep.subr.mxu0 0.0
    %696 = vmatpush1.msra.mxu0 %v656
    %697 = vmatprep.subr.mxu0 0.0
    %698 = vmatpush1.msra.mxu0 %v655
    %699 = vmatprep.subr.mxu0 0.0
    %700 = vmatpush1.msra.mxu0 %v654
    %701 = vmatprep.subr.mxu0 0.0
    %702 = vmatpush1.msra.mxu0 %v653
    %703 = vmatprep.subr.mxu0 0.0
    %704 = vmatpush1.msra.mxu0 %v652
    %705 = vmatprep.subr.mxu0 0.0
    %706 = vmatpush1.msra.mxu0 %v651
    %707 = vmatprep.subr.mxu0 0.0
    %708 = vmatpush1.msra.mxu0 %v650
    %709 = vmatprep.subr.mxu0 0.0
    %710 = vmatpush1.msra.mxu0 %v649
    %711 = vmatprep.subr.mxu0 0.0
    %712 = vmatpush1.msra.mxu0 %v648
    %713 = vmatprep.subr.mxu0 0.0
    %714 = vmatpush1.msra.mxu0 %v647
    %715 = vmatprep.subr.mxu0 0.0
    %716 = vmatpush1.msra.mxu0 %v646
    %717 = vmatprep.subr.mxu0 0.0
    %718 = vmatpush2.msra.mxu0 %v677
    %719 = vmatprep.subr.mxu0 0.0
    %720 = vmatpush2.msra.mxu0 %v676
    %721 = vmatprep.subr.mxu0 0.0
    %722 = vmatpush2.msra.mxu0 %v675
    %723 = vmatprep.subr.mxu0 0.0
    %724 = vmatpush2.msra.mxu0 %v674
    %725 = vmatprep.subr.mxu0 0.0
    %726 = vmatpush2.msra.mxu0 %v673
    %727 = vmatprep.subr.mxu0 0.0
    %728 = vmatpush2.msra.mxu0 %v672
    %729 = vmatprep.subr.mxu0 0.0
    %730 = vmatpush2.msra.mxu0 %v671
    %731 = vmatprep.subr.mxu0 0.0
    %732 = vmatpush2.msra.mxu0 %v670
    %733 = vmatprep.subr.mxu0 0.0
    %734 = vmatpush2.msra.mxu0 %v669
    %735 = vmatprep.subr.mxu0 0.0
    %736 = vmatpush2.msra.mxu0 %v668
    %737 = vmatprep.subr.mxu0 0.0
    %738 = vmatpush2.msra.mxu0 %v667
    %739 = vmatprep.subr.mxu0 0.0
    %740 = vmatpush2.msra.mxu0 %v666
    %741 = vmatprep.subr.mxu0 0.0
    %742 = vmatpush2.msra.mxu0 %v665
    %743 = vmatprep.subr.mxu0 0.0
    %744 = vmatpush2.msra.mxu0 %v664
    %745 = vmatprep.subr.mxu0 0.0
    %746 = vmatpush2.msra.mxu0 %v663
    %747 = vmatprep.subr.mxu0 0.0
    %748 = vmatpush2.msra.mxu0 %v662
    %749 = vmatprep.mubr.f32.mxu0 %v645
    %750 = vmatmul.mubr.f32.gmra.mxu0 %v644
    %v751 = vpop.f32.mrf.mxu0
    %v752 = vadd.f32 %v683, %v751
    %v753 = vpop.f32.mrf.mxu0
    %754 = vdwg.mxu0
    %v755 = vld [vmem:[%s6] sm:$0xff]
    %v756 = vld [vmem:[%s6 + $0x8] sm:$0xff]
    %v757 = vld [vmem:[%s6 + $0x10] sm:$0xff]
    %v758 = vld [vmem:[%s6 + $0x18] sm:$0xff]
    %v759 = vld [vmem:[%s6 + $0x20] sm:$0xff]
    %v760 = vld [vmem:[%s6 + $0x28] sm:$0xff]
    %v761 = vld [vmem:[%s6 + $0x30] sm:$0xff]
    %v762 = vld [vmem:[%s6 + $0x38] sm:$0xff]
    %v763 = vld [vmem:[%s6 + $0x40] sm:$0xff]
    %v764 = vld [vmem:[%s6 + $0x48] sm:$0xff]
    %v765 = vld [vmem:[%s6 + $0x50] sm:$0xff]
    %v766 = vld [vmem:[%s6 + $0x58] sm:$0xff]
    %v767 = vld [vmem:[%s6 + $0x60] sm:$0xff]
    %v768 = vld [vmem:[%s6 + $0x68] sm:$0xff]
    %v769 = vld [vmem:[%s6 + $0x70] sm:$0xff]
    %v770 = vld [vmem:[%s6 + $0x78] sm:$0xff]
    %v771 = vld [vmem:[%s6 + $0x80] sm:$0xff]
    %v772 = vld [vmem:[%s6 + $0x88] sm:$0xff]
    %v773 = vld [vmem:[%s6 + $0x90] sm:$0xff]
    %v774 = vld [vmem:[%s6 + $0x98] sm:$0xff]
    %v775 = vld [vmem:[%s6 + $0xa0] sm:$0xff]
    %v776 = vld [vmem:[%s6 + $0xa8] sm:$0xff]
    %v777 = vld [vmem:[%s6 + $0xb0] sm:$0xff]
    %v778 = vld [vmem:[%s6 + $0xb8] sm:$0xff]
    %v779 = vld [vmem:[%s6 + $0xc0] sm:$0xff]
    %v780 = vld [vmem:[%s6 + $0xc8] sm:$0xff]
    %v781 = vld [vmem:[%s6 + $0xd0] sm:$0xff]
    %v782 = vld [vmem:[%s6 + $0xd8] sm:$0xff]
    %v783 = vld [vmem:[%s6 + $0xe0] sm:$0xff]
    %v784 = vld [vmem:[%s6 + $0xe8] sm:$0xff]
    %v785 = vld [vmem:[%s6 + $0xf0] sm:$0xff]
    %v786 = vld [vmem:[%s6 + $0xf8] sm:$0xff]
    %v787 = vld [vmem:[%s7] sm:$0x1]
    %v789 = vlaneseq
    %v790 = vshrl.u32 %v789, 7
    %v791 = vsub.s32 0, %v790
    %v792 = vrot.slane %v787, %v791
    %794 = vmatprep.subr.mxu0 0.0
    %795 = vmatpush1.msra.mxu0 %v770
    %796 = vmatprep.subr.mxu0 0.0
    %797 = vmatpush1.msra.mxu0 %v769
    %798 = vmatprep.subr.mxu0 0.0
    %799 = vmatpush1.msra.mxu0 %v768
    %800 = vmatprep.subr.mxu0 0.0
    %801 = vmatpush1.msra.mxu0 %v767
    %802 = vmatprep.subr.mxu0 0.0
    %803 = vmatpush1.msra.mxu0 %v766
    %804 = vmatprep.subr.mxu0 0.0
    %805 = vmatpush1.msra.mxu0 %v765
    %806 = vmatprep.subr.mxu0 0.0
    %807 = vmatpush1.msra.mxu0 %v764
    %808 = vmatprep.subr.mxu0 0.0
    %809 = vmatpush1.msra.mxu0 %v763
    %810 = vmatprep.subr.mxu0 0.0
    %811 = vmatpush1.msra.mxu0 %v762
    %812 = vmatprep.subr.mxu0 0.0
    %813 = vmatpush1.msra.mxu0 %v761
    %814 = vmatprep.subr.mxu0 0.0
    %815 = vmatpush1.msra.mxu0 %v760
    %816 = vmatprep.subr.mxu0 0.0
    %817 = vmatpush1.msra.mxu0 %v759
    %818 = vmatprep.subr.mxu0 0.0
    %819 = vmatpush1.msra.mxu0 %v758
    %820 = vmatprep.subr.mxu0 0.0
    %821 = vmatpush1.msra.mxu0 %v757
    %822 = vmatprep.subr.mxu0 0.0
    %823 = vmatpush1.msra.mxu0 %v756
    %824 = vmatprep.subr.mxu0 0.0
    %825 = vmatpush1.msra.mxu0 %v755
    %826 = vmatprep.subr.mxu0 0.0
    %827 = vmatpush2.msra.mxu0 %v786
    %828 = vmatprep.subr.mxu0 0.0
    %829 = vmatpush2.msra.mxu0 %v785
    %830 = vmatprep.subr.mxu0 0.0
    %831 = vmatpush2.msra.mxu0 %v784
    %832 = vmatprep.subr.mxu0 0.0
    %833 = vmatpush2.msra.mxu0 %v783
    %834 = vmatprep.subr.mxu0 0.0
    %835 = vmatpush2.msra.mxu0 %v782
    %836 = vmatprep.subr.mxu0 0.0
    %837 = vmatpush2.msra.mxu0 %v781
    %838 = vmatprep.subr.mxu0 0.0
    %839 = vmatpush2.msra.mxu0 %v780
    %840 = vmatprep.subr.mxu0 0.0
    %841 = vmatpush2.msra.mxu0 %v779
    %842 = vmatprep.subr.mxu0 0.0
    %843 = vmatpush2.msra.mxu0 %v778
    %844 = vmatprep.subr.mxu0 0.0
    %845 = vmatpush2.msra.mxu0 %v777
    %846 = vmatprep.subr.mxu0 0.0
    %847 = vmatpush2.msra.mxu0 %v776
    %848 = vmatprep.subr.mxu0 0.0
    %849 = vmatpush2.msra.mxu0 %v775
    %850 = vmatprep.subr.mxu0 0.0
    %851 = vmatpush2.msra.mxu0 %v774
    %852 = vmatprep.subr.mxu0 0.0
    %853 = vmatpush2.msra.mxu0 %v773
    %854 = vmatprep.subr.mxu0 0.0
    %855 = vmatpush2.msra.mxu0 %v772
    %856 = vmatprep.subr.mxu0 0.0
    %857 = vmatpush2.msra.mxu0 %v771
    %858 = vmatprep.mubr.f32.mxu0 %v645
    %859 = vmatmul.mubr.f32.gmra.mxu0 %v644
    %v860 = vpop.f32.mrf.mxu0
    %v861 = vadd.f32 %v792, %v860
    %v862 = vpop.f32.mrf.mxu0
    %863 = vdwg.mxu0
    %v864 = vmul.f32 %v861, 0.5
    %v865 = vmul.f32 %v864, 1.442695
    %v866 = vpow.pop %v865
    %v867 = vld [vmem:[%s1] sm:$0x3]
    %v868 = vmul.f32 %v866, %v867
    %v869 = vadd.f32 %v752, %v868
    %v870 = vld [vmem:[%s8] sm:$0xff]
    %v871 = vld [vmem:[%s8 + $0x8] sm:$0xff]
    %v872 = vld [vmem:[%s8 + $0x10] sm:$0x3]
    %v873 = vld [vmem:[%s8 + $0x18] sm:$0x3]
    %v874 = vld [vmem:[%s9] sm:$0x3]
    %v876 = vlaneseq
    %v877 = vshrl.u32 %v876, 7
    %v878 = vsub.s32 0, %v877
    %v879 = vrot.slane %v874, %v878
    %v880 = vlaneseq
    %v881 = vshrl.u32 %v880, 7
    %v882 = vsub.s32 1, %v881
    %v883 = vrot.slane %v874, %v882
    %vm886 = vcmask 80896
    %v888 = vsel %vm886, %v869, 0
    %vm890 = vcmask 1041408
    %v892 = vsel %vm890, %v872, 0
    %v895 = vsel %vm890, %v873, 0
    %897 = vmatprep.subr.mxu0 0.0
    %898 = vmatpush1.msra.mxu0 0.0
    %899 = vmatprep.subr.mxu0 0.0
    %900 = vmatpush1.msra.mxu0 0.0
    %901 = vmatprep.subr.mxu0 0.0
    %902 = vmatpush1.msra.mxu0 0.0
    %903 = vmatprep.subr.mxu0 0.0
    %904 = vmatpush1.msra.mxu0 0.0
    %905 = vmatprep.subr.mxu0 0.0
    %906 = vmatpush1.msra.mxu0 0.0
    %907 = vmatprep.subr.mxu0 0.0
    %908 = vmatpush1.msra.mxu0 0.0
    %909 = vmatprep.subr.mxu0 0.0
    %910 = vmatpush1.msra.mxu0 0.0
    %911 = vmatprep.subr.mxu0 0.0
    %912 = vmatpush1.msra.mxu0 0.0
    %913 = vmatprep.subr.mxu0 0.0
    %914 = vmatpush1.msra.mxu0 0.0
    %915 = vmatprep.subr.mxu0 0.0
    %916 = vmatpush1.msra.mxu0 0.0
    %917 = vmatprep.subr.mxu0 0.0
    %918 = vmatpush1.msra.mxu0 0.0
    %919 = vmatprep.subr.mxu0 0.0
    %920 = vmatpush1.msra.mxu0 0.0
    %921 = vmatprep.subr.mxu0 0.0
    %922 = vmatpush1.msra.mxu0 0.0
    %923 = vmatprep.subr.mxu0 0.0
    %924 = vmatpush1.msra.mxu0 0.0
    %925 = vmatprep.subr.mxu0 %v895
    %926 = vmatpush1.msra.mxu0 %v892
    %927 = vmatprep.subr.mxu0 %v871
    %928 = vmatpush1.msra.mxu0 %v870
    %929 = vmatprep.subr.mxu0 0.0
    %930 = vmatpush2.msra.mxu0 0.0
    %931 = vmatprep.subr.mxu0 0.0
    %932 = vmatpush2.msra.mxu0 0.0
    %933 = vmatprep.subr.mxu0 0.0
    %934 = vmatpush2.msra.mxu0 0.0
    %935 = vmatprep.subr.mxu0 0.0
    %936 = vmatpush2.msra.mxu0 0.0
    %937 = vmatprep.subr.mxu0 0.0
    %938 = vmatpush2.msra.mxu0 0.0
    %939 = vmatprep.subr.mxu0 0.0
    %940 = vmatpush2.msra.mxu0 0.0
    %941 = vmatprep.subr.mxu0 0.0
    %942 = vmatpush2.msra.mxu0 0.0
    %943 = vmatprep.subr.mxu0 0.0
    %944 = vmatpush2.msra.mxu0 0.0
    %945 = vmatprep.subr.mxu0 0.0
    %946 = vmatpush2.msra.mxu0 0.0
    %947 = vmatprep.subr.mxu0 0.0
    %948 = vmatpush2.msra.mxu0 0.0
    %949 = vmatprep.subr.mxu0 0.0
    %950 = vmatpush2.msra.mxu0 0.0
    %951 = vmatprep.subr.mxu0 0.0
    %952 = vmatpush2.msra.mxu0 0.0
    %953 = vmatprep.subr.mxu0 0.0
    %954 = vmatpush2.msra.mxu0 0.0
    %955 = vmatprep.subr.mxu0 0.0
    %956 = vmatpush2.msra.mxu0 0.0
    %957 = vmatprep.subr.mxu0 0.0
    %958 = vmatpush2.msra.mxu0 0.0
    %959 = vmatprep.subr.mxu0 0.0
    %960 = vmatpush2.msra.mxu0 0.0
    %961 = vmatprep.mubr.f32.mxu0 0.0
    %962 = vmatmul.mubr.f32.gmra.mxu0 %v888
    %v963 = vpop.f32.mrf.mxu0
    %v964 = vadd.f32 %v879, %v963
    %v965 = vpop.f32.mrf.mxu0
    %v966 = vadd.f32 %v883, %v965
    %967 = vdwg.mxu0
    %v968 = vmax.f32 %v964, 0.0
    %v969 = vmax.f32 %v966, 0.0
    %v970 = vld [vmem:[%s10] sm:$0xff]
    %v971 = vld [vmem:[%s10 + $0x8] sm:$0xff]
    %v972 = vld [vmem:[%s10 + $0x10] sm:$0xff]
    %v973 = vld [vmem:[%s10 + $0x18] sm:$0xff]
    %v974 = vld [vmem:[%s10 + $0x20] sm:$0xff]
    %v975 = vld [vmem:[%s10 + $0x28] sm:$0xff]
    %v976 = vld [vmem:[%s10 + $0x30] sm:$0xff]
    %v977 = vld [vmem:[%s10 + $0x38] sm:$0xff]
    %v978 = vld [vmem:[%s10 + $0x40] sm:$0xff]
    %v979 = vld [vmem:[%s10 + $0x48] sm:$0xff]
    %v980 = vld [vmem:[%s10 + $0x50] sm:$0xff]
    %v981 = vld [vmem:[%s10 + $0x58] sm:$0xff]
    %v982 = vld [vmem:[%s10 + $0x60] sm:$0xff]
    %v983 = vld [vmem:[%s10 + $0x68] sm:$0xff]
    %v984 = vld [vmem:[%s10 + $0x70] sm:$0xff]
    %v985 = vld [vmem:[%s10 + $0x78] sm:$0xff]
    %v986 = vld [vmem:[%s10 + $0x80] sm:$0xff]
    %v987 = vld [vmem:[%s10 + $0x88] sm:$0xff]
    %v988 = vld [vmem:[%s10 + $0x90] sm:$0xff]
    %v989 = vld [vmem:[%s10 + $0x98] sm:$0xff]
    %v990 = vld [vmem:[%s10 + $0xa0] sm:$0xff]
    %v991 = vld [vmem:[%s10 + $0xa8] sm:$0xff]
    %v992 = vld [vmem:[%s10 + $0xb0] sm:$0xff]
    %v993 = vld [vmem:[%s10 + $0xb8] sm:$0xff]
    %v994 = vld [vmem:[%s10 + $0xc0] sm:$0xff]
    %v995 = vld [vmem:[%s10 + $0xc8] sm:$0xff]
    %v996 = vld [vmem:[%s10 + $0xd0] sm:$0xff]
    %v997 = vld [vmem:[%s10 + $0xd8] sm:$0xff]
    %v998 = vld [vmem:[%s10 + $0xe0] sm:$0xff]
    %v999 = vld [vmem:[%s10 + $0xe8] sm:$0xff]
    %v1000 = vld [vmem:[%s10 + $0xf0] sm:$0xff]
    %v1001 = vld [vmem:[%s10 + $0xf8] sm:$0xff]
    %v1002 = vld [vmem:[%s10 + $0x100] sm:$0xff]
    %v1003 = vld [vmem:[%s10 + $0x108] sm:$0xff]
    %v1004 = vld [vmem:[%s10 + $0x110] sm:$0xff]
    %v1005 = vld [vmem:[%s10 + $0x118] sm:$0xff]
    %v1006 = vld [vmem:[%s10 + $0x120] sm:$0xff]
    %v1007 = vld [vmem:[%s10 + $0x128] sm:$0xff]
    %v1008 = vld [vmem:[%s10 + $0x130] sm:$0xff]
    %v1009 = vld [vmem:[%s10 + $0x138] sm:$0xff]
    %v1010 = vld [vmem:[%s10 + $0x140] sm:$0xff]
    %v1011 = vld [vmem:[%s10 + $0x148] sm:$0xff]
    %v1012 = vld [vmem:[%s10 + $0x150] sm:$0xff]
    %v1013 = vld [vmem:[%s10 + $0x158] sm:$0xff]
    %v1014 = vld [vmem:[%s10 + $0x160] sm:$0xff]
    %v1015 = vld [vmem:[%s10 + $0x168] sm:$0xff]
    %v1016 = vld [vmem:[%s10 + $0x170] sm:$0xff]
    %v1017 = vld [vmem:[%s10 + $0x178] sm:$0xff]
    %v1018 = vld [vmem:[%s10 + $0x180] sm:$0xff]
    %v1019 = vld [vmem:[%s10 + $0x188] sm:$0xff]
    %v1020 = vld [vmem:[%s10 + $0x190] sm:$0xff]
    %v1021 = vld [vmem:[%s10 + $0x198] sm:$0xff]
    %v1022 = vld [vmem:[%s10 + $0x1a0] sm:$0xff]
    %v1023 = vld [vmem:[%s10 + $0x1a8] sm:$0xff]
    %v1024 = vld [vmem:[%s10 + $0x1b0] sm:$0xff]
    %v1025 = vld [vmem:[%s10 + $0x1b8] sm:$0xff]
    %v1026 = vld [vmem:[%s10 + $0x1c0] sm:$0xff]
    %v1027 = vld [vmem:[%s10 + $0x1c8] sm:$0xff]
    %v1028 = vld [vmem:[%s10 + $0x1d0] sm:$0xff]
    %v1029 = vld [vmem:[%s10 + $0x1d8] sm:$0xff]
    %v1030 = vld [vmem:[%s10 + $0x1e0] sm:$0xff]
    %v1031 = vld [vmem:[%s10 + $0x1e8] sm:$0xff]
    %v1032 = vld [vmem:[%s10 + $0x1f0] sm:$0xff]
    %v1033 = vld [vmem:[%s10 + $0x1f8] sm:$0xff]
    %v1034 = vld [vmem:[%s10 + $0x200] sm:$0xff]
    %v1035 = vld [vmem:[%s10 + $0x208] sm:$0xff]
    %v1036 = vld [vmem:[%s10 + $0x210] sm:$0xff]
    %v1037 = vld [vmem:[%s10 + $0x218] sm:$0xff]
    %v1038 = vld [vmem:[%s10 + $0x220] sm:$0xff]
    %v1039 = vld [vmem:[%s10 + $0x228] sm:$0xff]
    %v1040 = vld [vmem:[%s10 + $0x230] sm:$0xff]
    %v1041 = vld [vmem:[%s10 + $0x238] sm:$0xff]
    %v1042 = vld [vmem:[%s10 + $0x240] sm:$0xff]
    %v1043 = vld [vmem:[%s10 + $0x248] sm:$0xff]
    %v1044 = vld [vmem:[%s10 + $0x250] sm:$0xff]
    %v1045 = vld [vmem:[%s10 + $0x258] sm:$0xff]
    %v1046 = vld [vmem:[%s10 + $0x260] sm:$0xff]
    %v1047 = vld [vmem:[%s10 + $0x268] sm:$0xff]
    %v1048 = vld [vmem:[%s10 + $0x270] sm:$0xff]
    %v1049 = vld [vmem:[%s10 + $0x278] sm:$0xff]
    %v1050 = vld [vmem:[%s10 + $0x280] sm:$0xff]
    %v1051 = vld [vmem:[%s10 + $0x288] sm:$0xff]
    %v1052 = vld [vmem:[%s10 + $0x290] sm:$0xff]
    %v1053 = vld [vmem:[%s10 + $0x298] sm:$0xff]
    %v1054 = vld [vmem:[%s10 + $0x2a0] sm:$0xff]
    %v1055 = vld [vmem:[%s10 + $0x2a8] sm:$0xff]
    %v1056 = vld [vmem:[%s10 + $0x2b0] sm:$0xff]
    %v1057 = vld [vmem:[%s10 + $0x2b8] sm:$0xff]
    %v1058 = vld [vmem:[%s10 + $0x2c0] sm:$0xff]
    %v1059 = vld [vmem:[%s10 + $0x2c8] sm:$0xff]
    %v1060 = vld [vmem:[%s10 + $0x2d0] sm:$0xff]
    %v1061 = vld [vmem:[%s10 + $0x2d8] sm:$0xff]
    %v1062 = vld [vmem:[%s10 + $0x2e0] sm:$0xff]
    %v1063 = vld [vmem:[%s10 + $0x2e8] sm:$0xff]
    %v1064 = vld [vmem:[%s10 + $0x2f0] sm:$0xff]
    %v1065 = vld [vmem:[%s10 + $0x2f8] sm:$0xff]
    %v1066 = vld [vmem:[%s10 + $0x300] sm:$0xff]
    %v1067 = vld [vmem:[%s10 + $0x308] sm:$0xff]
    %v1068 = vld [vmem:[%s10 + $0x310] sm:$0xff]
    %v1069 = vld [vmem:[%s10 + $0x318] sm:$0xff]
    %v1070 = vld [vmem:[%s10 + $0x320] sm:$0xff]
    %v1071 = vld [vmem:[%s10 + $0x328] sm:$0xff]
    %v1072 = vld [vmem:[%s10 + $0x330] sm:$0xff]
    %v1073 = vld [vmem:[%s10 + $0x338] sm:$0xff]
    %v1074 = vld [vmem:[%s10 + $0x340] sm:$0xff]
    %v1075 = vld [vmem:[%s10 + $0x348] sm:$0xff]
    %v1076 = vld [vmem:[%s10 + $0x350] sm:$0xff]
    %v1077 = vld [vmem:[%s10 + $0x358] sm:$0xff]
    %v1078 = vld [vmem:[%s10 + $0x360] sm:$0xff]
    %v1079 = vld [vmem:[%s10 + $0x368] sm:$0xff]
    %v1080 = vld [vmem:[%s10 + $0x370] sm:$0xff]
    %v1081 = vld [vmem:[%s10 + $0x378] sm:$0xff]
    %v1082 = vld [vmem:[%s10 + $0x380] sm:$0xff]
    %v1083 = vld [vmem:[%s10 + $0x388] sm:$0xff]
    %v1084 = vld [vmem:[%s10 + $0x390] sm:$0xff]
    %v1085 = vld [vmem:[%s10 + $0x398] sm:$0xff]
    %v1086 = vld [vmem:[%s10 + $0x3a0] sm:$0xff]
    %v1087 = vld [vmem:[%s10 + $0x3a8] sm:$0xff]
    %v1088 = vld [vmem:[%s10 + $0x3b0] sm:$0xff]
    %v1089 = vld [vmem:[%s10 + $0x3b8] sm:$0xff]
    %v1090 = vld [vmem:[%s10 + $0x3c0] sm:$0xff]
    %v1091 = vld [vmem:[%s10 + $0x3c8] sm:$0xff]
    %v1092 = vld [vmem:[%s10 + $0x3d0] sm:$0xff]
    %v1093 = vld [vmem:[%s10 + $0x3d8] sm:$0xff]
    %v1094 = vld [vmem:[%s10 + $0x3e0] sm:$0xff]
    %v1095 = vld [vmem:[%s10 + $0x3e8] sm:$0xff]
    %v1096 = vld [vmem:[%s10 + $0x3f0] sm:$0xff]
    %v1097 = vld [vmem:[%s10 + $0x3f8] sm:$0xff]
    %v1098 = vld [vmem:[%s10 + $0x400] sm:$0xff]
    %v1099 = vld [vmem:[%s10 + $0x408] sm:$0xff]
    %v1100 = vld [vmem:[%s10 + $0x410] sm:$0xff]
    %v1101 = vld [vmem:[%s10 + $0x418] sm:$0xff]
    %v1102 = vld [vmem:[%s10 + $0x420] sm:$0xff]
    %v1103 = vld [vmem:[%s10 + $0x428] sm:$0xff]
    %v1104 = vld [vmem:[%s10 + $0x430] sm:$0xff]
    %v1105 = vld [vmem:[%s10 + $0x438] sm:$0xff]
    %v1106 = vld [vmem:[%s10 + $0x440] sm:$0xff]
    %v1107 = vld [vmem:[%s10 + $0x448] sm:$0xff]
    %v1108 = vld [vmem:[%s10 + $0x450] sm:$0xff]
    %v1109 = vld [vmem:[%s10 + $0x458] sm:$0xff]
    %v1110 = vld [vmem:[%s10 + $0x460] sm:$0xff]
    %v1111 = vld [vmem:[%s10 + $0x468] sm:$0xff]
    %v1112 = vld [vmem:[%s10 + $0x470] sm:$0xff]
    %v1113 = vld [vmem:[%s10 + $0x478] sm:$0xff]
    %v1114 = vld [vmem:[%s10 + $0x480] sm:$0xff]
    %v1115 = vld [vmem:[%s10 + $0x488] sm:$0xff]
    %v1116 = vld [vmem:[%s10 + $0x490] sm:$0xff]
    %v1117 = vld [vmem:[%s10 + $0x498] sm:$0xff]
    %v1118 = vld [vmem:[%s10 + $0x4a0] sm:$0xff]
    %v1119 = vld [vmem:[%s10 + $0x4a8] sm:$0xff]
    %v1120 = vld [vmem:[%s10 + $0x4b0] sm:$0xff]
    %v1121 = vld [vmem:[%s10 + $0x4b8] sm:$0xff]
    %v1122 = vld [vmem:[%s10 + $0x4c0] sm:$0xff]
    %v1123 = vld [vmem:[%s10 + $0x4c8] sm:$0xff]
    %v1124 = vld [vmem:[%s10 + $0x4d0] sm:$0xff]
    %v1125 = vld [vmem:[%s10 + $0x4d8] sm:$0xff]
    %v1126 = vld [vmem:[%s10 + $0x4e0] sm:$0xff]
    %v1127 = vld [vmem:[%s10 + $0x4e8] sm:$0xff]
    %v1128 = vld [vmem:[%s10 + $0x4f0] sm:$0xff]
    %v1129 = vld [vmem:[%s10 + $0x4f8] sm:$0xff]
    %v1130 = vld [vmem:[%s10 + $0x500] sm:$0xff]
    %v1131 = vld [vmem:[%s10 + $0x508] sm:$0xff]
    %v1132 = vld [vmem:[%s10 + $0x510] sm:$0xff]
    %v1133 = vld [vmem:[%s10 + $0x518] sm:$0xff]
    %v1134 = vld [vmem:[%s10 + $0x520] sm:$0xff]
    %v1135 = vld [vmem:[%s10 + $0x528] sm:$0xff]
    %v1136 = vld [vmem:[%s10 + $0x530] sm:$0xff]
    %v1137 = vld [vmem:[%s10 + $0x538] sm:$0xff]
    %v1138 = vld [vmem:[%s10 + $0x540] sm:$0xff]
    %v1139 = vld [vmem:[%s10 + $0x548] sm:$0xff]
    %v1140 = vld [vmem:[%s10 + $0x550] sm:$0xff]
    %v1141 = vld [vmem:[%s10 + $0x558] sm:$0xff]
    %v1142 = vld [vmem:[%s10 + $0x560] sm:$0xff]
    %v1143 = vld [vmem:[%s10 + $0x568] sm:$0xff]
    %v1144 = vld [vmem:[%s10 + $0x570] sm:$0xff]
    %v1145 = vld [vmem:[%s10 + $0x578] sm:$0xff]
    %v1146 = vld [vmem:[%s10 + $0x580] sm:$0xff]
    %v1147 = vld [vmem:[%s10 + $0x588] sm:$0xff]
    %v1148 = vld [vmem:[%s10 + $0x590] sm:$0xff]
    %v1149 = vld [vmem:[%s10 + $0x598] sm:$0xff]
    %v1150 = vld [vmem:[%s10 + $0x5a0] sm:$0xff]
    %v1151 = vld [vmem:[%s10 + $0x5a8] sm:$0xff]
    %v1152 = vld [vmem:[%s10 + $0x5b0] sm:$0xff]
    %v1153 = vld [vmem:[%s10 + $0x5b8] sm:$0xff]
    %v1154 = vld [vmem:[%s10 + $0x5c0] sm:$0xff]
    %v1155 = vld [vmem:[%s10 + $0x5c8] sm:$0xff]
    %v1156 = vld [vmem:[%s10 + $0x5d0] sm:$0xff]
    %v1157 = vld [vmem:[%s10 + $0x5d8] sm:$0xff]
    %v1158 = vld [vmem:[%s10 + $0x5e0] sm:$0xff]
    %v1159 = vld [vmem:[%s10 + $0x5e8] sm:$0xff]
    %v1160 = vld [vmem:[%s10 + $0x5f0] sm:$0xff]
    %v1161 = vld [vmem:[%s10 + $0x5f8] sm:$0xff]
    %v1162 = vld [vmem:[%s10 + $0x600] sm:$0xff]
    %v1163 = vld [vmem:[%s10 + $0x608] sm:$0xff]
    %v1164 = vld [vmem:[%s10 + $0x610] sm:$0xff]
    %v1165 = vld [vmem:[%s10 + $0x618] sm:$0xff]
    %v1166 = vld [vmem:[%s10 + $0x620] sm:$0xff]
    %v1167 = vld [vmem:[%s10 + $0x628] sm:$0xff]
    %v1168 = vld [vmem:[%s10 + $0x630] sm:$0xff]
    %v1169 = vld [vmem:[%s10 + $0x638] sm:$0xff]
    %v1170 = vld [vmem:[%s10 + $0x640] sm:$0xff]
    %v1171 = vld [vmem:[%s10 + $0x648] sm:$0xff]
    %v1172 = vld [vmem:[%s10 + $0x650] sm:$0xff]
    %v1173 = vld [vmem:[%s10 + $0x658] sm:$0xff]
    %v1174 = vld [vmem:[%s10 + $0x660] sm:$0xff]
    %v1175 = vld [vmem:[%s10 + $0x668] sm:$0xff]
    %v1176 = vld [vmem:[%s10 + $0x670] sm:$0xff]
    %v1177 = vld [vmem:[%s10 + $0x678] sm:$0xff]
    %v1178 = vld [vmem:[%s10 + $0x680] sm:$0xff]
    %v1179 = vld [vmem:[%s10 + $0x688] sm:$0xff]
    %v1180 = vld [vmem:[%s10 + $0x690] sm:$0xff]
    %v1181 = vld [vmem:[%s10 + $0x698] sm:$0xff]
    %v1182 = vld [vmem:[%s10 + $0x6a0] sm:$0xff]
    %v1183 = vld [vmem:[%s10 + $0x6a8] sm:$0xff]
    %v1184 = vld [vmem:[%s10 + $0x6b0] sm:$0xff]
    %v1185 = vld [vmem:[%s10 + $0x6b8] sm:$0xff]
    %v1186 = vld [vmem:[%s10 + $0x6c0] sm:$0xff]
    %v1187 = vld [vmem:[%s10 + $0x6c8] sm:$0xff]
    %v1188 = vld [vmem:[%s10 + $0x6d0] sm:$0xff]
    %v1189 = vld [vmem:[%s10 + $0x6d8] sm:$0xff]
    %v1190 = vld [vmem:[%s10 + $0x6e0] sm:$0xff]
    %v1191 = vld [vmem:[%s10 + $0x6e8] sm:$0xff]
    %v1192 = vld [vmem:[%s10 + $0x6f0] sm:$0xff]
    %v1193 = vld [vmem:[%s10 + $0x6f8] sm:$0xff]
    %v1194 = vld [vmem:[%s10 + $0x700] sm:$0xff]
    %v1195 = vld [vmem:[%s10 + $0x708] sm:$0xff]
    %v1196 = vld [vmem:[%s10 + $0x710] sm:$0xff]
    %v1197 = vld [vmem:[%s10 + $0x718] sm:$0xff]
    %v1198 = vld [vmem:[%s10 + $0x720] sm:$0xff]
    %v1199 = vld [vmem:[%s10 + $0x728] sm:$0xff]
    %v1200 = vld [vmem:[%s10 + $0x730] sm:$0xff]
    %v1201 = vld [vmem:[%s10 + $0x738] sm:$0xff]
    %v1202 = vld [vmem:[%s10 + $0x740] sm:$0xff]
    %v1203 = vld [vmem:[%s10 + $0x748] sm:$0xff]
    %v1204 = vld [vmem:[%s10 + $0x750] sm:$0xff]
    %v1205 = vld [vmem:[%s10 + $0x758] sm:$0xff]
    %v1206 = vld [vmem:[%s10 + $0x760] sm:$0xff]
    %v1207 = vld [vmem:[%s10 + $0x768] sm:$0xff]
    %v1208 = vld [vmem:[%s10 + $0x770] sm:$0xff]
    %v1209 = vld [vmem:[%s10 + $0x778] sm:$0xff]
    %v1210 = vld [vmem:[%s10 + $0x780] sm:$0xff]
    %v1211 = vld [vmem:[%s10 + $0x788] sm:$0xff]
    %v1212 = vld [vmem:[%s10 + $0x790] sm:$0xff]
    %v1213 = vld [vmem:[%s10 + $0x798] sm:$0xff]
    %v1214 = vld [vmem:[%s10 + $0x7a0] sm:$0xff]
    %v1215 = vld [vmem:[%s10 + $0x7a8] sm:$0xff]
    %v1216 = vld [vmem:[%s10 + $0x7b0] sm:$0xff]
    %v1217 = vld [vmem:[%s10 + $0x7b8] sm:$0xff]
    %v1218 = vld [vmem:[%s10 + $0x7c0] sm:$0xff]
    %v1219 = vld [vmem:[%s10 + $0x7c8] sm:$0xff]
    %v1220 = vld [vmem:[%s10 + $0x7d0] sm:$0xff]
    %v1221 = vld [vmem:[%s10 + $0x7d8] sm:$0xff]
    %v1222 = vld [vmem:[%s10 + $0x7e0] sm:$0xff]
    %v1223 = vld [vmem:[%s10 + $0x7e8] sm:$0xff]
    %v1224 = vld [vmem:[%s10 + $0x7f0] sm:$0xff]
    %v1225 = vld [vmem:[%s10 + $0x7f8] sm:$0xff]
    %v1226 = vld [vmem:[%s11] sm:$0xff]
    %v1228 = vlaneseq
    %v1229 = vshrl.u32 %v1228, 7
    %v1230 = vsub.s32 0, %v1229
    %v1231 = vrot.slane %v1226, %v1230
    %v1232 = vlaneseq
    %v1233 = vshrl.u32 %v1232, 7
    %v1234 = vsub.s32 1, %v1233
    %v1235 = vrot.slane %v1226, %v1234
    %v1236 = vlaneseq
    %v1237 = vshrl.u32 %v1236, 7
    %v1238 = vsub.s32 2, %v1237
    %v1239 = vrot.slane %v1226, %v1238
    %v1240 = vlaneseq
    %v1241 = vshrl.u32 %v1240, 7
    %v1242 = vsub.s32 3, %v1241
    %v1243 = vrot.slane %v1226, %v1242
    %v1244 = vlaneseq
    %v1245 = vshrl.u32 %v1244, 7
    %v1246 = vsub.s32 4, %v1245
    %v1247 = vrot.slane %v1226, %v1246
    %v1248 = vlaneseq
    %v1249 = vshrl.u32 %v1248, 7
    %v1250 = vsub.s32 5, %v1249
    %v1251 = vrot.slane %v1226, %v1250
    %v1252 = vlaneseq
    %v1253 = vshrl.u32 %v1252, 7
    %v1254 = vsub.s32 6, %v1253
    %v1255 = vrot.slane %v1226, %v1254
    %v1256 = vlaneseq
    %v1257 = vshrl.u32 %v1256, 7
    %v1258 = vsub.s32 7, %v1257
    %v1259 = vrot.slane %v1226, %v1258
    %1268 = vmatprep.subr.mxu0 %v1091
    %1269 = vmatpush1.msra.mxu0 %v1090
    %1270 = vmatprep.subr.mxu0 %v1083
    %1271 = vmatpush1.msra.mxu0 %v1082
    %1272 = vmatprep.subr.mxu0 %v1075
    %1273 = vmatpush1.msra.mxu0 %v1074
    %1274 = vmatprep.subr.mxu0 %v1067
    %1275 = vmatpush1.msra.mxu0 %v1066
    %1276 = vmatprep.subr.mxu0 %v1059
    %1277 = vmatpush1.msra.mxu0 %v1058
    %1278 = vmatprep.subr.mxu0 %v1051
    %1279 = vmatpush1.msra.mxu0 %v1050
    %1280 = vmatprep.subr.mxu0 %v1043
    %1281 = vmatpush1.msra.mxu0 %v1042
    %1282 = vmatprep.subr.mxu0 %v1035
    %1283 = vmatpush1.msra.mxu0 %v1034
    %1284 = vmatprep.subr.mxu0 %v1027
    %1285 = vmatpush1.msra.mxu0 %v1026
    %1286 = vmatprep.subr.mxu0 %v1019
    %1287 = vmatpush1.msra.mxu0 %v1018
    %1288 = vmatprep.subr.mxu0 %v1011
    %1289 = vmatpush1.msra.mxu0 %v1010
    %1290 = vmatprep.subr.mxu0 %v1003
    %1291 = vmatpush1.msra.mxu0 %v1002
    %1292 = vmatprep.subr.mxu0 %v995
    %1293 = vmatpush1.msra.mxu0 %v994
    %1294 = vmatprep.subr.mxu0 %v987
    %1295 = vmatpush1.msra.mxu0 %v986
    %1296 = vmatprep.subr.mxu0 %v979
    %1297 = vmatpush1.msra.mxu0 %v978
    %1298 = vmatprep.subr.mxu0 %v971
    %1299 = vmatpush1.msra.mxu0 %v970
    %1300 = vmatprep.subr.mxu0 %v1219
    %1301 = vmatpush2.msra.mxu0 %v1218
    %1302 = vmatprep.subr.mxu0 %v1211
    %1303 = vmatpush2.msra.mxu0 %v1210
    %1304 = vmatprep.subr.mxu0 %v1203
    %1305 = vmatpush2.msra.mxu0 %v1202
    %1306 = vmatprep.subr.mxu0 %v1195
    %1307 = vmatpush2.msra.mxu0 %v1194
    %1308 = vmatprep.subr.mxu0 %v1187
    %1309 = vmatpush2.msra.mxu0 %v1186
    %1310 = vmatprep.subr.mxu0 %v1179
    %1311 = vmatpush2.msra.mxu0 %v1178
    %1312 = vmatprep.subr.mxu0 %v1171
    %1313 = vmatpush2.msra.mxu0 %v1170
    %1314 = vmatprep.subr.mxu0 %v1163
    %1315 = vmatpush2.msra.mxu0 %v1162
    %1316 = vmatprep.subr.mxu0 %v1155
    %1317 = vmatpush2.msra.mxu0 %v1154
    %1318 = vmatprep.subr.mxu0 %v1147
    %1319 = vmatpush2.msra.mxu0 %v1146
    %1320 = vmatprep.subr.mxu0 %v1139
    %1321 = vmatpush2.msra.mxu0 %v1138
    %1322 = vmatprep.subr.mxu0 %v1131
    %1323 = vmatpush2.msra.mxu0 %v1130
    %1324 = vmatprep.subr.mxu0 %v1123
    %1325 = vmatpush2.msra.mxu0 %v1122
    %1326 = vmatprep.subr.mxu0 %v1115
    %1327 = vmatpush2.msra.mxu0 %v1114
    %1328 = vmatprep.subr.mxu0 %v1107
    %1329 = vmatpush2.msra.mxu0 %v1106
    %1330 = vmatprep.subr.mxu0 %v1099
    %1331 = vmatpush2.msra.mxu0 %v1098
    %1332 = vmatprep.mubr.f32.mxu0 %v969
    %1333 = vmatmul.mubr.f32.gmra.mxu0 %v968
    %v1334 = vpop.f32.mrf.mxu0
    %v1335 = vadd.f32 %v1231, %v1334
    %v1336 = vpop.f32.mrf.mxu0
    %v1337 = vadd.f32 %v1235, %v1336
    %1338 = vdwg.mxu0
    %1339 = vmatprep.subr.mxu0 %v1093
    %1340 = vmatpush1.msra.mxu0 %v1092
    %1341 = vmatprep.subr.mxu0 %v1085
    %1342 = vmatpush1.msra.mxu0 %v1084
    %1343 = vmatprep.subr.mxu0 %v1077
    %1344 = vmatpush1.msra.mxu0 %v1076
    %1345 = vmatprep.subr.mxu0 %v1069
    %1346 = vmatpush1.msra.mxu0 %v1068
    %1347 = vmatprep.subr.mxu0 %v1061
    %1348 = vmatpush1.msra.mxu0 %v1060
    %1349 = vmatprep.subr.mxu0 %v1053
    %1350 = vmatpush1.msra.mxu0 %v1052
    %1351 = vmatprep.subr.mxu0 %v1045
    %1352 = vmatpush1.msra.mxu0 %v1044
    %1353 = vmatprep.subr.mxu0 %v1037
    %1354 = vmatpush1.msra.mxu0 %v1036
    %1355 = vmatprep.subr.mxu0 %v1029
    %1356 = vmatpush1.msra.mxu0 %v1028
    %1357 = vmatprep.subr.mxu0 %v1021
    %1358 = vmatpush1.msra.mxu0 %v1020
    %1359 = vmatprep.subr.mxu0 %v1013
    %1360 = vmatpush1.msra.mxu0 %v1012
    %1361 = vmatprep.subr.mxu0 %v1005
    %1362 = vmatpush1.msra.mxu0 %v1004
    %1363 = vmatprep.subr.mxu0 %v997
    %1364 = vmatpush1.msra.mxu0 %v996
    %1365 = vmatprep.subr.mxu0 %v989
    %1366 = vmatpush1.msra.mxu0 %v988
    %1367 = vmatprep.subr.mxu0 %v981
    %1368 = vmatpush1.msra.mxu0 %v980
    %1369 = vmatprep.subr.mxu0 %v973
    %1370 = vmatpush1.msra.mxu0 %v972
    %1371 = vmatprep.subr.mxu0 %v1221
    %1372 = vmatpush2.msra.mxu0 %v1220
    %1373 = vmatprep.subr.mxu0 %v1213
    %1374 = vmatpush2.msra.mxu0 %v1212
    %1375 = vmatprep.subr.mxu0 %v1205
    %1376 = vmatpush2.msra.mxu0 %v1204
    %1377 = vmatprep.subr.mxu0 %v1197
    %1378 = vmatpush2.msra.mxu0 %v1196
    %1379 = vmatprep.subr.mxu0 %v1189
    %1380 = vmatpush2.msra.mxu0 %v1188
    %1381 = vmatprep.subr.mxu0 %v1181
    %1382 = vmatpush2.msra.mxu0 %v1180
    %1383 = vmatprep.subr.mxu0 %v1173
    %1384 = vmatpush2.msra.mxu0 %v1172
    %1385 = vmatprep.subr.mxu0 %v1165
    %1386 = vmatpush2.msra.mxu0 %v1164
    %1387 = vmatprep.subr.mxu0 %v1157
    %1388 = vmatpush2.msra.mxu0 %v1156
    %1389 = vmatprep.subr.mxu0 %v1149
    %1390 = vmatpush2.msra.mxu0 %v1148
    %1391 = vmatprep.subr.mxu0 %v1141
    %1392 = vmatpush2.msra.mxu0 %v1140
    %1393 = vmatprep.subr.mxu0 %v1133
    %1394 = vmatpush2.msra.mxu0 %v1132
    %1395 = vmatprep.subr.mxu0 %v1125
    %1396 = vmatpush2.msra.mxu0 %v1124
    %1397 = vmatprep.subr.mxu0 %v1117
    %1398 = vmatpush2.msra.mxu0 %v1116
    %1399 = vmatprep.subr.mxu0 %v1109
    %1400 = vmatpush2.msra.mxu0 %v1108
    %1401 = vmatprep.subr.mxu0 %v1101
    %1402 = vmatpush2.msra.mxu0 %v1100
    %1403 = vmatprep.mubr.f32.mxu0 %v969
    %1404 = vmatmul.mubr.f32.gmra.mxu0 %v968
    %v1405 = vpop.f32.mrf.mxu0
    %v1406 = vadd.f32 %v1239, %v1405
    %v1407 = vpop.f32.mrf.mxu0
    %v1408 = vadd.f32 %v1243, %v1407
    %1409 = vdwg.mxu0
    %1410 = vmatprep.subr.mxu0 %v1095
    %1411 = vmatpush1.msra.mxu0 %v1094
    %1412 = vmatprep.subr.mxu0 %v1087
    %1413 = vmatpush1.msra.mxu0 %v1086
    %1414 = vmatprep.subr.mxu0 %v1079
    %1415 = vmatpush1.msra.mxu0 %v1078
    %1416 = vmatprep.subr.mxu0 %v1071
    %1417 = vmatpush1.msra.mxu0 %v1070
    %1418 = vmatprep.subr.mxu0 %v1063
    %1419 = vmatpush1.msra.mxu0 %v1062
    %1420 = vmatprep.subr.mxu0 %v1055
    %1421 = vmatpush1.msra.mxu0 %v1054
    %1422 = vmatprep.subr.mxu0 %v1047
    %1423 = vmatpush1.msra.mxu0 %v1046
    %1424 = vmatprep.subr.mxu0 %v1039
    %1425 = vmatpush1.msra.mxu0 %v1038
    %1426 = vmatprep.subr.mxu0 %v1031
    %1427 = vmatpush1.msra.mxu0 %v1030
    %1428 = vmatprep.subr.mxu0 %v1023
    %1429 = vmatpush1.msra.mxu0 %v1022
    %1430 = vmatprep.subr.mxu0 %v1015
    %1431 = vmatpush1.msra.mxu0 %v1014
    %1432 = vmatprep.subr.mxu0 %v1007
    %1433 = vmatpush1.msra.mxu0 %v1006
    %1434 = vmatprep.subr.mxu0 %v999
    %1435 = vmatpush1.msra.mxu0 %v998
    %1436 = vmatprep.subr.mxu0 %v991
    %1437 = vmatpush1.msra.mxu0 %v990
    %1438 = vmatprep.subr.mxu0 %v983
    %1439 = vmatpush1.msra.mxu0 %v982
    %1440 = vmatprep.subr.mxu0 %v975
    %1441 = vmatpush1.msra.mxu0 %v974
    %1442 = vmatprep.subr.mxu0 %v1223
    %1443 = vmatpush2.msra.mxu0 %v1222
    %1444 = vmatprep.subr.mxu0 %v1215
    %1445 = vmatpush2.msra.mxu0 %v1214
    %1446 = vmatprep.subr.mxu0 %v1207
    %1447 = vmatpush2.msra.mxu0 %v1206
    %1448 = vmatprep.subr.mxu0 %v1199
    %1449 = vmatpush2.msra.mxu0 %v1198
    %1450 = vmatprep.subr.mxu0 %v1191
    %1451 = vmatpush2.msra.mxu0 %v1190
    %1452 = vmatprep.subr.mxu0 %v1183
    %1453 = vmatpush2.msra.mxu0 %v1182
    %1454 = vmatprep.subr.mxu0 %v1175
    %1455 = vmatpush2.msra.mxu0 %v1174
    %1456 = vmatprep.subr.mxu0 %v1167
    %1457 = vmatpush2.msra.mxu0 %v1166
    %1458 = vmatprep.subr.mxu0 %v1159
    %1459 = vmatpush2.msra.mxu0 %v1158
    %1460 = vmatprep.subr.mxu0 %v1151
    %1461 = vmatpush2.msra.mxu0 %v1150
    %1462 = vmatprep.subr.mxu0 %v1143
    %1463 = vmatpush2.msra.mxu0 %v1142
    %1464 = vmatprep.subr.mxu0 %v1135
    %1465 = vmatpush2.msra.mxu0 %v1134
    %1466 = vmatprep.subr.mxu0 %v1127
    %1467 = vmatpush2.msra.mxu0 %v1126
    %1468 = vmatprep.subr.mxu0 %v1119
    %1469 = vmatpush2.msra.mxu0 %v1118
    %1470 = vmatprep.subr.mxu0 %v1111
    %1471 = vmatpush2.msra.mxu0 %v1110
    %1472 = vmatprep.subr.mxu0 %v1103
    %1473 = vmatpush2.msra.mxu0 %v1102
    %1474 = vmatprep.mubr.f32.mxu0 %v969
    %1475 = vmatmul.mubr.f32.gmra.mxu0 %v968
    %v1476 = vpop.f32.mrf.mxu0
    %v1477 = vadd.f32 %v1247, %v1476
    %v1478 = vpop.f32.mrf.mxu0
    %v1479 = vadd.f32 %v1251, %v1478
    %1480 = vdwg.mxu0
    %1481 = vmatprep.subr.mxu0 %v1097
    %1482 = vmatpush1.msra.mxu0 %v1096
    %1483 = vmatprep.subr.mxu0 %v1089
    %1484 = vmatpush1.msra.mxu0 %v1088
    %1485 = vmatprep.subr.mxu0 %v1081
    %1486 = vmatpush1.msra.mxu0 %v1080
    %1487 = vmatprep.subr.mxu0 %v1073
    %1488 = vmatpush1.msra.mxu0 %v1072
    %1489 = vmatprep.subr.mxu0 %v1065
    %1490 = vmatpush1.msra.mxu0 %v1064
    %1491 = vmatprep.subr.mxu0 %v1057
    %1492 = vmatpush1.msra.mxu0 %v1056
    %1493 = vmatprep.subr.mxu0 %v1049
    %1494 = vmatpush1.msra.mxu0 %v1048
    %1495 = vmatprep.subr.mxu0 %v1041
    %1496 = vmatpush1.msra.mxu0 %v1040
    %1497 = vmatprep.subr.mxu0 %v1033
    %1498 = vmatpush1.msra.mxu0 %v1032
    %1499 = vmatprep.subr.mxu0 %v1025
    %1500 = vmatpush1.msra.mxu0 %v1024
    %1501 = vmatprep.subr.mxu0 %v1017
    %1502 = vmatpush1.msra.mxu0 %v1016
    %1503 = vmatprep.subr.mxu0 %v1009
    %1504 = vmatpush1.msra.mxu0 %v1008
    %1505 = vmatprep.subr.mxu0 %v1001
    %1506 = vmatpush1.msra.mxu0 %v1000
    %1507 = vmatprep.subr.mxu0 %v993
    %1508 = vmatpush1.msra.mxu0 %v992
    %1509 = vmatprep.subr.mxu0 %v985
    %1510 = vmatpush1.msra.mxu0 %v984
    %1511 = vmatprep.subr.mxu0 %v977
    %1512 = vmatpush1.msra.mxu0 %v976
    %1513 = vmatprep.subr.mxu0 %v1225
    %1514 = vmatpush2.msra.mxu0 %v1224
    %1515 = vmatprep.subr.mxu0 %v1217
    %1516 = vmatpush2.msra.mxu0 %v1216
    %1517 = vmatprep.subr.mxu0 %v1209
    %1518 = vmatpush2.msra.mxu0 %v1208
    %1519 = vmatprep.subr.mxu0 %v1201
    %1520 = vmatpush2.msra.mxu0 %v1200
    %1521 = vmatprep.subr.mxu0 %v1193
    %1522 = vmatpush2.msra.mxu0 %v1192
    %1523 = vmatprep.subr.mxu0 %v1185
    %1524 = vmatpush2.msra.mxu0 %v1184
    %1525 = vmatprep.subr.mxu0 %v1177
    %1526 = vmatpush2.msra.mxu0 %v1176
    %1527 = vmatprep.subr.mxu0 %v1169
    %1528 = vmatpush2.msra.mxu0 %v1168
    %1529 = vmatprep.subr.mxu0 %v1161
    %1530 = vmatpush2.msra.mxu0 %v1160
    %1531 = vmatprep.subr.mxu0 %v1153
    %1532 = vmatpush2.msra.mxu0 %v1152
    %1533 = vmatprep.subr.mxu0 %v1145
    %1534 = vmatpush2.msra.mxu0 %v1144
    %1535 = vmatprep.subr.mxu0 %v1137
    %1536 = vmatpush2.msra.mxu0 %v1136
    %1537 = vmatprep.subr.mxu0 %v1129
    %1538 = vmatpush2.msra.mxu0 %v1128
    %1539 = vmatprep.subr.mxu0 %v1121
    %1540 = vmatpush2.msra.mxu0 %v1120
    %1541 = vmatprep.subr.mxu0 %v1113
    %1542 = vmatpush2.msra.mxu0 %v1112
    %1543 = vmatprep.subr.mxu0 %v1105
    %1544 = vmatpush2.msra.mxu0 %v1104
    %1545 = vmatprep.mubr.f32.mxu0 %v969
    %1546 = vmatmul.mubr.f32.gmra.mxu0 %v968
    %v1547 = vpop.f32.mrf.mxu0
    %v1548 = vadd.f32 %v1255, %v1547
    %v1549 = vpop.f32.mrf.mxu0
    %v1550 = vadd.f32 %v1259, %v1549
    %1551 = vdwg.mxu0
    %v1552 = vmax.f32 %v1335, 0.0
    %v1553 = vmax.f32 %v1337, 0.0
    %v1554 = vmax.f32 %v1406, 0.0
    %v1555 = vmax.f32 %v1408, 0.0
    %v1556 = vmax.f32 %v1477, 0.0
    %v1557 = vmax.f32 %v1479, 0.0
    %v1558 = vmax.f32 %v1548, 0.0
    %v1559 = vmax.f32 %v1550, 0.0
    %vm1560 = vcmask 74752
    %1561 = vst.msk [vmem:[%s12] sm:$0x3] %vm1560, %v752
    %1562 = vst.msk [vmem:[%s13] sm:$0x3] %vm1560, %v861
    %1563 = vst.msk [vmem:[#allocation2] sm:$0x3] %vm1560, %v869
    %v1572 = vcombine.low %v1552, %v1553
    %v1573 = vcombine.low %v1554, %v1555
    %v1575 = vunpack.c.l.s4 1983009808
    %v1576 = vunpack.c.0.s8 %v1575
    %v1577 = vlaneseq
    %v1578 = vshrl.u32 %v1577, 7
    %v1579 = vsub.s32 %v1576, %v1578
    %v1580 = vrot.slane %v1572, %v1579
    %v1582 = vunpack.c.l.s4 1983009808
    %v1583 = vunpack.c.0.s8 %v1582
    %v1584 = vlaneseq
    %v1585 = vshrl.u32 %v1584, 7
    %v1586 = vsub.s32 %v1583, %v1585
    %v1587 = vrot.slane %v1573, %v1586
    %v1588 = vcombine.low %v1580, %v1587
    %v1589 = vcombine.low %v1556, %v1557
    %v1590 = vcombine.low %v1558, %v1559
    %v1592 = vunpack.c.l.s4 1983009808
    %v1593 = vunpack.c.0.s8 %v1592
    %v1594 = vlaneseq
    %v1595 = vshrl.u32 %v1594, 7
    %v1596 = vsub.s32 %v1593, %v1595
    %v1597 = vrot.slane %v1589, %v1596
    %v1599 = vunpack.c.l.s4 1983009808
    %v1600 = vunpack.c.0.s8 %v1599
    %v1601 = vlaneseq
    %v1602 = vshrl.u32 %v1601, 7
    %v1603 = vsub.s32 %v1600, %v1602
    %v1604 = vrot.slane %v1590, %v1603
    %v1605 = vcombine.low %v1597, %v1604
    %1608 = vst [vmem:[%s15] sm:$0xff] %v1588
    %1609 = vst [vmem:[%s15 + $0x8] sm:$0xff] %v1605
    // Predicated region
    $region50: #{model_forward.13} parent=1 // pred_check
      _
    $region51: #{model_forward.13} parent=1 // pred_check_branch
      %1611 = sbr.rel (0) target = $region53
    $region52: #{model_forward.13} parent=1 // pred_region
      _
    $region53: #{model_forward.13} parent=1 // pred_fallthru
      _
    // Predicated region
    $region54: #{model_forward.13} parent=1 // pred_check
      _
    $region55: #{model_forward.13} parent=1 // pred_check_branch
      %1613 = sbr.rel (0) target = $region57
    $region56: #{model_forward.13} parent=1 // pred_region
      _
    $region57: #{model_forward.13} parent=1 // pred_fallthru
      _
    // Predicated region
    $region58: #{model_forward.13} parent=1 // pred_check
      _
    $region59: #{model_forward.13} parent=1 // pred_check_branch
      %1615 = sbr.rel (0) target = $region61
    $region60: #{model_forward.13} parent=1 // pred_region
      %s1617 = ssub.s32 32, 32
      %1618 = vsyncadd [#allocation3], %s1617
      %s1620 = sshll.u32 [#allocation2], 4
      %s1621 = int_to_ptr.vmem [resolvable:$true] %s1620
      %1623 = dma.vmem_to_hbm [thread:$0]  %s1621, 32, %s14, [#allocation3]
    $region61: #{model_forward.13} parent=1 // pred_fallthru
      _
    // Predicated region
    $region62: #{model_forward.13} parent=1 // pred_check
      _
    $region63: #{model_forward.13} parent=1 // pred_check_branch
      %1625 = sbr.rel (0) target = $region65
    $region64: #{model_forward.13} parent=1 // pred_region
      _
    $region65: #{model_forward.13} parent=1 // pred_fallthru
      _
    // Predicated region
    $region66: #{model_forward.13} parent=1 // pred_check
      _
    $region67: #{model_forward.13} parent=1 // pred_check_branch
      %1627 = sbr.rel (0) target = $region69
    $region68: #{model_forward.13} parent=1 // pred_region
      _
    $region69: #{model_forward.13} parent=1 // pred_fallthru
      _
    // Predicated region
    $region70: #{model_forward.13} parent=1 // pred_check
      _
    $region71: #{model_forward.13} parent=1 // pred_check_branch
      %1629 = sbr.rel (0) target = $region73
    $region72: #{model_forward.13} parent=1 // pred_region
      _
    $region73: #{model_forward.13} parent=1 // pred_fallthru
      _
    // Predicated region
    $region74: #{model_forward.13} parent=1 // pred_check
      _
    $region75: #{model_forward.13} parent=1 // pred_check_branch
      %1631 = sbr.rel (0) target = $region77
    $region76: #{model_forward.13} parent=1 // pred_region
      %1632 = dma.done [#allocation3], 32
    $region77: #{model_forward.13} parent=1 // pred_fallthru
      _
    // Predicated region
    $region78: #{model_forward.13} parent=1 // pred_check
      _
    $region79: #{model_forward.13} parent=1 // pred_check_branch
      %1634 = sbr.rel (0) target = $region81
    $region80: #{model_forward.13} parent=1 // pred_region
      _
    $region81: #{model_forward.13} parent=1 // pred_fallthru
      _
    %1635 = vsyncpa [#allocation3], 1

// kernel: model_forward.14
$region0: #{model_forward.14}
  #allocation0 [shape = 'u32[]', space=smem, size = 0x4, offset = 0x4, fixed_abs, tag = 'smem constant byte address 0x4 - core index']
  #allocation1 [shape = 'u32[144,128]{1,0:T(1,128)}', space=vmem, size = 0x12000, scoped, tag = 'internal scratch']
  %s0 = inlined_call_operand.vmem [shape: bf16[32,576], index: 0, kind: input, shape index: {}]
  %s1 = inlined_call_operand.vmem [shape: bf16[576,256], index: 1, kind: input, shape index: {}]
  %s2 = inlined_call_operand.vmem [shape: f32[1,256], index: 2, kind: input, shape index: {}]
  %s3 = inlined_call_operand.vmem [shape: bf16[32,256], index: 3, kind: output, shape index: {}]
  %s4 = sld [smem:[#allocation0]]
  $region22: #{model_forward.14} parent=0
    _
  %s6 = ssub.s32 1, %s4
  %s7 = scalar_select 0, %s6, %s4
  // Predicated region
  $region2: #{model_forward.14} parent=0 // pred_check
    _
  $region3: #{model_forward.14} parent=0 // pred_check_branch
    %9 = sbr.rel (0) target = $region5
  $region4: #{model_forward.14} parent=0 // pred_region
    _
  $region5: #{model_forward.14} parent=0 // pred_fallthru
    _
  // Predicated region
  $region6: #{model_forward.14} parent=0 // pred_check
    _
  $region7: #{model_forward.14} parent=0 // pred_check_branch
    %11 = sbr.rel (0) target = $region9
  $region8: #{model_forward.14} parent=0 // pred_region
    _
  $region9: #{model_forward.14} parent=0 // pred_fallthru
    _
  // Predicated region
  $region10: #{model_forward.14} parent=0 // pred_check
    _
  $region11: #{model_forward.14} parent=0 // pred_check_branch
    %13 = sbr.rel (0) target = $region13
  $region12: #{model_forward.14} parent=0 // pred_region
    _
  $region13: #{model_forward.14} parent=0 // pred_fallthru
    _
  %v15 = vld [vmem:[%s0] sm:$0xff]
  %v16 = vld [vmem:[%s0 + $0x8] sm:$0xff]
  %v17 = vld [vmem:[%s0 + $0x10] sm:$0xf]
  %v18 = vld [vmem:[%s0 + $0x14] sm:$0xff]
  %v19 = vld [vmem:[%s0 + $0x1c] sm:$0xff]
  %v20 = vld [vmem:[%s0 + $0x24] sm:$0xf]
  %v21 = vld [vmem:[%s0 + $0x28] sm:$0xff]
  %v22 = vld [vmem:[%s0 + $0x30] sm:$0xff]
  %v23 = vld [vmem:[%s0 + $0x38] sm:$0xf]
  %v24 = vld [vmem:[%s0 + $0x3c] sm:$0xff]
  %v25 = vld [vmem:[%s0 + $0x44] sm:$0xff]
  %v26 = vld [vmem:[%s0 + $0x4c] sm:$0xf]
  %v27 = vld [vmem:[%s1] sm:$0xff]
  %v28 = vld [vmem:[%s1 + $0x8] sm:$0xff]
  %v29 = vld [vmem:[%s1 + $0x10] sm:$0xff]
  %v30 = vld [vmem:[%s1 + $0x18] sm:$0xff]
  %v31 = vld [vmem:[%s1 + $0x20] sm:$0xff]
  %v32 = vld [vmem:[%s1 + $0x28] sm:$0xff]
  %v33 = vld [vmem:[%s1 + $0x30] sm:$0xff]
  %v34 = vld [vmem:[%s1 + $0x38] sm:$0xff]
  %v35 = vld [vmem:[%s1 + $0x40] sm:$0xff]
  %v36 = vld [vmem:[%s1 + $0x48] sm:$0xff]
  %v37 = vld [vmem:[%s1 + $0x50] sm:$0xff]
  %v38 = vld [vmem:[%s1 + $0x58] sm:$0xff]
  %v39 = vld [vmem:[%s1 + $0x60] sm:$0xff]
  %v40 = vld [vmem:[%s1 + $0x68] sm:$0xff]
  %v41 = vld [vmem:[%s1 + $0x70] sm:$0xff]
  %v42 = vld [vmem:[%s1 + $0x78] sm:$0xff]
  %v43 = vld [vmem:[%s1 + $0x80] sm:$0xff]
  %v44 = vld [vmem:[%s1 + $0x88] sm:$0xff]
  %v45 = vld [vmem:[%s1 + $0x90] sm:$0xff]
  %v46 = vld [vmem:[%s1 + $0x98] sm:$0xff]
  %v47 = vld [vmem:[%s1 + $0xa0] sm:$0xff]
  %v48 = vld [vmem:[%s1 + $0xa8] sm:$0xff]
  %v49 = vld [vmem:[%s1 + $0xb0] sm:$0xff]
  %v50 = vld [vmem:[%s1 + $0xb8] sm:$0xff]
  %v51 = vld [vmem:[%s1 + $0xc0] sm:$0xff]
  %v52 = vld [vmem:[%s1 + $0xc8] sm:$0xff]
  %v53 = vld [vmem:[%s1 + $0xd0] sm:$0xff]
  %v54 = vld [vmem:[%s1 + $0xd8] sm:$0xff]
  %v55 = vld [vmem:[%s1 + $0xe0] sm:$0xff]
  %v56 = vld [vmem:[%s1 + $0xe8] sm:$0xff]
  %v57 = vld [vmem:[%s1 + $0xf0] sm:$0xff]
  %v58 = vld [vmem:[%s1 + $0xf8] sm:$0xff]
  %v59 = vld [vmem:[%s1 + $0x100] sm:$0xff]
  %v60 = vld [vmem:[%s1 + $0x108] sm:$0xff]
  %v61 = vld [vmem:[%s1 + $0x110] sm:$0xff]
  %v62 = vld [vmem:[%s1 + $0x118] sm:$0xff]
  %v63 = vld [vmem:[%s1 + $0x120] sm:$0xff]
  %v64 = vld [vmem:[%s1 + $0x128] sm:$0xff]
  %v65 = vld [vmem:[%s1 + $0x130] sm:$0xff]
  %v66 = vld [vmem:[%s1 + $0x138] sm:$0xff]
  %v67 = vld [vmem:[%s1 + $0x140] sm:$0xff]
  %v68 = vld [vmem:[%s1 + $0x148] sm:$0xff]
  %v69 = vld [vmem:[%s1 + $0x150] sm:$0xff]
  %v70 = vld [vmem:[%s1 + $0x158] sm:$0xff]
  %v71 = vld [vmem:[%s1 + $0x160] sm:$0xff]
  %v72 = vld [vmem:[%s1 + $0x168] sm:$0xff]
  %v73 = vld [vmem:[%s1 + $0x170] sm:$0xff]
  %v74 = vld [vmem:[%s1 + $0x178] sm:$0xff]
  %v75 = vld [vmem:[%s1 + $0x180] sm:$0xff]
  %v76 = vld [vmem:[%s1 + $0x188] sm:$0xff]
  %v77 = vld [vmem:[%s1 + $0x190] sm:$0xff]
  %v78 = vld [vmem:[%s1 + $0x198] sm:$0xff]
  %v79 = vld [vmem:[%s1 + $0x1a0] sm:$0xff]
  %v80 = vld [vmem:[%s1 + $0x1a8] sm:$0xff]
  %v81 = vld [vmem:[%s1 + $0x1b0] sm:$0xff]
  %v82 = vld [vmem:[%s1 + $0x1b8] sm:$0xff]
  %v83 = vld [vmem:[%s1 + $0x1c0] sm:$0xff]
  %v84 = vld [vmem:[%s1 + $0x1c8] sm:$0xff]
  %v85 = vld [vmem:[%s1 + $0x1d0] sm:$0xff]
  %v86 = vld [vmem:[%s1 + $0x1d8] sm:$0xff]
  %v87 = vld [vmem:[%s1 + $0x1e0] sm:$0xff]
  %v88 = vld [vmem:[%s1 + $0x1e8] sm:$0xff]
  %v89 = vld [vmem:[%s1 + $0x1f0] sm:$0xff]
  %v90 = vld [vmem:[%s1 + $0x1f8] sm:$0xff]
  %v91 = vld [vmem:[%s1 + $0x200] sm:$0xff]
  %v92 = vld [vmem:[%s1 + $0x208] sm:$0xff]
  %v93 = vld [vmem:[%s1 + $0x210] sm:$0xff]
  %v94 = vld [vmem:[%s1 + $0x218] sm:$0xff]
  %v95 = vld [vmem:[%s1 + $0x220] sm:$0xff]
  %v96 = vld [vmem:[%s1 + $0x228] sm:$0xff]
  %v97 = vld [vmem:[%s1 + $0x230] sm:$0xff]
  %v98 = vld [vmem:[%s1 + $0x238] sm:$0xff]
  %v99 = vld [vmem:[%s2] sm:$0x3]
  %v101 = vlaneseq
  %v102 = vshrl.u32 %v101, 7
  %v103 = vsub.s32 0, %v102
  %v104 = vrot.slane %v99, %v103
  %v105 = vlaneseq
  %v106 = vshrl.u32 %v105, 7
  %v107 = vsub.s32 1, %v106
  %v108 = vrot.slane %v99, %v107
  %v123 = vunpack.c.l.b16 %v15
  %v124 = vunpack.c.h.b16 %v15
  %v125 = vunpack.c.l.b16 %v16
  %v126 = vunpack.c.h.b16 %v16
  %v127 = vunpack.c.l.b16 %v17
  %v128 = vunpack.c.l.b16 %v18
  %v129 = vunpack.c.h.b16 %v18
  %v130 = vunpack.c.l.b16 %v19
  %v131 = vunpack.c.h.b16 %v19
  %v132 = vunpack.c.l.b16 %v20
  %v133 = vunpack.c.l.b16 %v21
  %v134 = vunpack.c.h.b16 %v21
  %v135 = vunpack.c.l.b16 %v22
  %v136 = vunpack.c.h.b16 %v22
  %v137 = vunpack.c.l.b16 %v23
  %v138 = vunpack.c.l.b16 %v24
  %v139 = vunpack.c.h.b16 %v24
  %v140 = vunpack.c.l.b16 %v25
  %v141 = vunpack.c.h.b16 %v25
  %v142 = vunpack.c.l.b16 %v26
  %v143 = vpack.c.b16 %v128, %v123
  %v144 = vpack.c.b16 %v129, %v124
  %v145 = vpack.c.b16 %v130, %v125
  %v146 = vpack.c.b16 %v131, %v126
  %v147 = vpack.c.b16 %v132, %v127
  %v148 = vpack.c.b16 %v138, %v133
  %v149 = vpack.c.b16 %v139, %v134
  %v150 = vpack.c.b16 %v140, %v135
  %v151 = vpack.c.b16 %v141, %v136
  %v152 = vpack.c.b16 %v142, %v137
  %v233 = vunpack.c.l.b16 %v27
  %v234 = vunpack.c.h.b16 %v27
  %v235 = vunpack.c.l.b16 %v28
  %v236 = vunpack.c.h.b16 %v28
  %v237 = vunpack.c.l.b16 %v29
  %v238 = vunpack.c.h.b16 %v29
  %v239 = vunpack.c.l.b16 %v30
  %v240 = vunpack.c.h.b16 %v30
  %v241 = vunpack.c.l.b16 %v31
  %v242 = vunpack.c.h.b16 %v31
  %v243 = vunpack.c.l.b16 %v32
  %v244 = vunpack.c.h.b16 %v32
  %v245 = vunpack.c.l.b16 %v33
  %v246 = vunpack.c.h.b16 %v33
  %v247 = vunpack.c.l.b16 %v34
  %v248 = vunpack.c.h.b16 %v34
  %v249 = vunpack.c.l.b16 %v35
  %v250 = vunpack.c.h.b16 %v35
  %v251 = vunpack.c.l.b16 %v36
  %v252 = vunpack.c.h.b16 %v36
  %v253 = vunpack.c.l.b16 %v37
  %v254 = vunpack.c.h.b16 %v37
  %v255 = vunpack.c.l.b16 %v38
  %v256 = vunpack.c.h.b16 %v38
  %v257 = vunpack.c.l.b16 %v39
  %v258 = vunpack.c.h.b16 %v39
  %v259 = vunpack.c.l.b16 %v40
  %v260 = vunpack.c.h.b16 %v40
  %v261 = vunpack.c.l.b16 %v41
  %v262 = vunpack.c.h.b16 %v41
  %v263 = vunpack.c.l.b16 %v42
  %v264 = vunpack.c.h.b16 %v42
  %v265 = vunpack.c.l.b16 %v43
  %v266 = vunpack.c.h.b16 %v43
  %v267 = vunpack.c.l.b16 %v44
  %v268 = vunpack.c.h.b16 %v44
  %v269 = vunpack.c.l.b16 %v45
  %v270 = vunpack.c.h.b16 %v45
  %v271 = vunpack.c.l.b16 %v46
  %v272 = vunpack.c.h.b16 %v46
  %v273 = vunpack.c.l.b16 %v47
  %v274 = vunpack.c.h.b16 %v47
  %v275 = vunpack.c.l.b16 %v48
  %v276 = vunpack.c.h.b16 %v48
  %v277 = vunpack.c.l.b16 %v49
  %v278 = vunpack.c.h.b16 %v49
  %v279 = vunpack.c.l.b16 %v50
  %v280 = vunpack.c.h.b16 %v50
  %v281 = vunpack.c.l.b16 %v51
  %v282 = vunpack.c.h.b16 %v51
  %v283 = vunpack.c.l.b16 %v52
  %v284 = vunpack.c.h.b16 %v52
  %v285 = vunpack.c.l.b16 %v53
  %v286 = vunpack.c.h.b16 %v53
  %v287 = vunpack.c.l.b16 %v54
  %v288 = vunpack.c.h.b16 %v54
  %v289 = vunpack.c.l.b16 %v55
  %v290 = vunpack.c.h.b16 %v55
  %v291 = vunpack.c.l.b16 %v56
  %v292 = vunpack.c.h.b16 %v56
  %v293 = vunpack.c.l.b16 %v57
  %v294 = vunpack.c.h.b16 %v57
  %v295 = vunpack.c.l.b16 %v58
  %v296 = vunpack.c.h.b16 %v58
  %v297 = vunpack.c.l.b16 %v59
  %v298 = vunpack.c.h.b16 %v59
  %v299 = vunpack.c.l.b16 %v60
  %v300 = vunpack.c.h.b16 %v60
  %v301 = vunpack.c.l.b16 %v61
  %v302 = vunpack.c.h.b16 %v61
  %v303 = vunpack.c.l.b16 %v62
  %v304 = vunpack.c.h.b16 %v62
  %v305 = vunpack.c.l.b16 %v63
  %v306 = vunpack.c.h.b16 %v63
  %v307 = vunpack.c.l.b16 %v64
  %v308 = vunpack.c.h.b16 %v64
  %v309 = vunpack.c.l.b16 %v65
  %v310 = vunpack.c.h.b16 %v65
  %v311 = vunpack.c.l.b16 %v66
  %v312 = vunpack.c.h.b16 %v66
  %v313 = vunpack.c.l.b16 %v67
  %v314 = vunpack.c.h.b16 %v67
  %v315 = vunpack.c.l.b16 %v68
  %v316 = vunpack.c.h.b16 %v68
  %v317 = vunpack.c.l.b16 %v69
  %v318 = vunpack.c.h.b16 %v69
  %v319 = vunpack.c.l.b16 %v70
  %v320 = vunpack.c.h.b16 %v70
  %v321 = vunpack.c.l.b16 %v71
  %v322 = vunpack.c.h.b16 %v71
  %v323 = vunpack.c.l.b16 %v72
  %v324 = vunpack.c.h.b16 %v72
  %v325 = vunpack.c.l.b16 %v73
  %v326 = vunpack.c.h.b16 %v73
  %v327 = vunpack.c.l.b16 %v74
  %v328 = vunpack.c.h.b16 %v74
  %v329 = vunpack.c.l.b16 %v75
  %v330 = vunpack.c.h.b16 %v75
  %v331 = vunpack.c.l.b16 %v76
  %v332 = vunpack.c.h.b16 %v76
  %v333 = vunpack.c.l.b16 %v77
  %v334 = vunpack.c.h.b16 %v77
  %v335 = vunpack.c.l.b16 %v78
  %v336 = vunpack.c.h.b16 %v78
  %v337 = vunpack.c.l.b16 %v79
  %v338 = vunpack.c.h.b16 %v79
  %v339 = vunpack.c.l.b16 %v80
  %v340 = vunpack.c.h.b16 %v80
  %v341 = vunpack.c.l.b16 %v81
  %v342 = vunpack.c.h.b16 %v81
  %v343 = vunpack.c.l.b16 %v82
  %v344 = vunpack.c.h.b16 %v82
  %v345 = vunpack.c.l.b16 %v83
  %v346 = vunpack.c.h.b16 %v83
  %v347 = vunpack.c.l.b16 %v84
  %v348 = vunpack.c.h.b16 %v84
  %v349 = vunpack.c.l.b16 %v85
  %v350 = vunpack.c.h.b16 %v85
  %v351 = vunpack.c.l.b16 %v86
  %v352 = vunpack.c.h.b16 %v86
  %v353 = vunpack.c.l.b16 %v87
  %v354 = vunpack.c.h.b16 %v87
  %v355 = vunpack.c.l.b16 %v88
  %v356 = vunpack.c.h.b16 %v88
  %v357 = vunpack.c.l.b16 %v89
  %v358 = vunpack.c.h.b16 %v89
  %v359 = vunpack.c.l.b16 %v90
  %v360 = vunpack.c.h.b16 %v90
  %v361 = vunpack.c.l.b16 %v91
  %v362 = vunpack.c.h.b16 %v91
  %v363 = vunpack.c.l.b16 %v92
  %v364 = vunpack.c.h.b16 %v92
  %v365 = vunpack.c.l.b16 %v93
  %v366 = vunpack.c.h.b16 %v93
  %v367 = vunpack.c.l.b16 %v94
  %v368 = vunpack.c.h.b16 %v94
  %v369 = vunpack.c.l.b16 %v95
  %v370 = vunpack.c.h.b16 %v95
  %v371 = vunpack.c.l.b16 %v96
  %v372 = vunpack.c.h.b16 %v96
  %v373 = vunpack.c.l.b16 %v97
  %v374 = vunpack.c.h.b16 %v97
  %v375 = vunpack.c.l.b16 %v98
  %v376 = vunpack.c.h.b16 %v98
  %v377 = vpack.c.b16 %v235, %v233
  %v378 = vpack.c.b16 %v236, %v234
  %v379 = vpack.c.b16 %v239, %v237
  %v380 = vpack.c.b16 %v240, %v238
  %v381 = vpack.c.b16 %v243, %v241
  %v382 = vpack.c.b16 %v244, %v242
  %v383 = vpack.c.b16 %v247, %v245
  %v384 = vpack.c.b16 %v248, %v246
  %v385 = vpack.c.b16 %v251, %v249
  %v386 = vpack.c.b16 %v252, %v250
  %v387 = vpack.c.b16 %v255, %v253
  %v388 = vpack.c.b16 %v256, %v254
  %v389 = vpack.c.b16 %v259, %v257
  %v390 = vpack.c.b16 %v260, %v258
  %v391 = vpack.c.b16 %v263, %v261
  %v392 = vpack.c.b16 %v264, %v262
  %v393 = vpack.c.b16 %v267, %v265
  %v394 = vpack.c.b16 %v268, %v266
  %v395 = vpack.c.b16 %v271, %v269
  %v396 = vpack.c.b16 %v272, %v270
  %v397 = vpack.c.b16 %v275, %v273
  %v398 = vpack.c.b16 %v276, %v274
  %v399 = vpack.c.b16 %v279, %v277
  %v400 = vpack.c.b16 %v280, %v278
  %v401 = vpack.c.b16 %v283, %v281
  %v402 = vpack.c.b16 %v284, %v282
  %v403 = vpack.c.b16 %v287, %v285
  %v404 = vpack.c.b16 %v288, %v286
  %v405 = vpack.c.b16 %v291, %v289
  %v406 = vpack.c.b16 %v292, %v290
  %v407 = vpack.c.b16 %v295, %v293
  %v408 = vpack.c.b16 %v296, %v294
  %v409 = vpack.c.b16 %v299, %v297
  %v410 = vpack.c.b16 %v300, %v298
  %v411 = vpack.c.b16 %v303, %v301
  %v412 = vpack.c.b16 %v304, %v302
  %v413 = vpack.c.b16 %v307, %v305
  %v414 = vpack.c.b16 %v308, %v306
  %v415 = vpack.c.b16 %v311, %v309
  %v416 = vpack.c.b16 %v312, %v310
  %v417 = vpack.c.b16 %v315, %v313
  %v418 = vpack.c.b16 %v316, %v314
  %v419 = vpack.c.b16 %v319, %v317
  %v420 = vpack.c.b16 %v320, %v318
  %v421 = vpack.c.b16 %v323, %v321
  %v422 = vpack.c.b16 %v324, %v322
  %v423 = vpack.c.b16 %v327, %v325
  %v424 = vpack.c.b16 %v328, %v326
  %v425 = vpack.c.b16 %v331, %v329
  %v426 = vpack.c.b16 %v332, %v330
  %v427 = vpack.c.b16 %v335, %v333
  %v428 = vpack.c.b16 %v336, %v334
  %v429 = vpack.c.b16 %v339, %v337
  %v430 = vpack.c.b16 %v340, %v338
  %v431 = vpack.c.b16 %v343, %v341
  %v432 = vpack.c.b16 %v344, %v342
  %v433 = vpack.c.b16 %v347, %v345
  %v434 = vpack.c.b16 %v348, %v346
  %v435 = vpack.c.b16 %v351, %v349
  %v436 = vpack.c.b16 %v352, %v350
  %v437 = vpack.c.b16 %v355, %v353
  %v438 = vpack.c.b16 %v356, %v354
  %v439 = vpack.c.b16 %v359, %v357
  %v440 = vpack.c.b16 %v360, %v358
  %v441 = vpack.c.b16 %v363, %v361
  %v442 = vpack.c.b16 %v364, %v362
  %v443 = vpack.c.b16 %v367, %v365
  %v444 = vpack.c.b16 %v368, %v366
  %v445 = vpack.c.b16 %v371, %v369
  %v446 = vpack.c.b16 %v372, %v370
  %v447 = vpack.c.b16 %v375, %v373
  %v448 = vpack.c.b16 %v376, %v374
  %vm521 = vcmask 523264
  %v523 = vsel %vm521, %v147, 0
  %v526 = vsel %vm521, %v152, 0
  %528 = vmatprep.subr.bf16.mxu0 %v392
  %529 = vmatpush1.bf16.msra.mxu0 %v391
  %530 = vmatprep.subr.bf16.mxu0 %v390
  %531 = vmatpush1.bf16.msra.mxu0 %v389
  %532 = vmatprep.subr.bf16.mxu0 %v388
  %533 = vmatpush1.bf16.msra.mxu0 %v387
  %534 = vmatprep.subr.bf16.mxu0 %v386
  %535 = vmatpush1.bf16.msra.mxu0 %v385
  %536 = vmatprep.subr.bf16.mxu0 %v384
  %537 = vmatpush1.bf16.msra.mxu0 %v383
  %538 = vmatprep.subr.bf16.mxu0 %v382
  %539 = vmatpush1.bf16.msra.mxu0 %v381
  %540 = vmatprep.subr.bf16.mxu0 %v380
  %541 = vmatpush1.bf16.msra.mxu0 %v379
  %542 = vmatprep.subr.bf16.mxu0 %v378
  %543 = vmatpush1.bf16.msra.mxu0 %v377
  %544 = vmatprep.subr.bf16.mxu0 %v408
  %545 = vmatpush2.bf16.msra.mxu0 %v407
  %546 = vmatprep.subr.bf16.mxu0 %v406
  %547 = vmatpush2.bf16.msra.mxu0 %v405
  %548 = vmatprep.subr.bf16.mxu0 %v404
  %549 = vmatpush2.bf16.msra.mxu0 %v403
  %550 = vmatprep.subr.bf16.mxu0 %v402
  %551 = vmatpush2.bf16.msra.mxu0 %v401
  %552 = vmatprep.subr.bf16.mxu0 %v400
  %553 = vmatpush2.bf16.msra.mxu0 %v399
  %554 = vmatprep.subr.bf16.mxu0 %v398
  %555 = vmatpush2.bf16.msra.mxu0 %v397
  %556 = vmatprep.subr.bf16.mxu0 %v396
  %557 = vmatpush2.bf16.msra.mxu0 %v395
  %558 = vmatprep.subr.bf16.mxu0 %v394
  %559 = vmatpush2.bf16.msra.mxu0 %v393
  %560 = vmatprep.mubr.bf16.mxu0 %v144
  %561 = vmatmul.mubr.bf16.gmra.mxu0 %v143
  %v562 = vpop.f32.mrf.mxu0
  %v563 = vadd.f32 %v104, %v562
  %v564 = vpop.f32.mrf.mxu0
  %v565 = vadd.f32 %v108, %v564
  %v566 = vpop.f32.mrf.mxu0
  %v567 = vadd.f32 %v104, %v566
  %v568 = vpop.f32.mrf.mxu0
  %v569 = vadd.f32 %v108, %v568
  %570 = vmatprep.mubr.bf16.mxu0 %v149
  %571 = vmatmul.mubr.bf16.gmra.mxu0 %v148
  %v572 = vpop.f32.mrf.mxu0
  %v573 = vadd.f32 %v104, %v572
  %v574 = vpop.f32.mrf.mxu0
  %v575 = vadd.f32 %v108, %v574
  %v576 = vpop.f32.mrf.mxu0
  %v577 = vadd.f32 %v104, %v576
  %v578 = vpop.f32.mrf.mxu0
  %v579 = vadd.f32 %v108, %v578
  %580 = vdwg.mxu0
  %581 = vmatprep.subr.bf16.mxu0 %v424
  %582 = vmatpush1.bf16.msra.mxu0 %v423
  %583 = vmatprep.subr.bf16.mxu0 %v422
  %584 = vmatpush1.bf16.msra.mxu0 %v421
  %585 = vmatprep.subr.bf16.mxu0 %v420
  %586 = vmatpush1.bf16.msra.mxu0 %v419
  %587 = vmatprep.subr.bf16.mxu0 %v418
  %588 = vmatpush1.bf16.msra.mxu0 %v417
  %589 = vmatprep.subr.bf16.mxu0 %v416
  %590 = vmatpush1.bf16.msra.mxu0 %v415
  %591 = vmatprep.subr.bf16.mxu0 %v414
  %592 = vmatpush1.bf16.msra.mxu0 %v413
  %593 = vmatprep.subr.bf16.mxu0 %v412
  %594 = vmatpush1.bf16.msra.mxu0 %v411
  %595 = vmatprep.subr.bf16.mxu0 %v410
  %596 = vmatpush1.bf16.msra.mxu0 %v409
  %597 = vmatprep.subr.bf16.mxu0 %v440
  %598 = vmatpush2.bf16.msra.mxu0 %v439
  %599 = vmatprep.subr.bf16.mxu0 %v438
  %600 = vmatpush2.bf16.msra.mxu0 %v437
  %601 = vmatprep.subr.bf16.mxu0 %v436
  %602 = vmatpush2.bf16.msra.mxu0 %v435
  %603 = vmatprep.subr.bf16.mxu0 %v434
  %604 = vmatpush2.bf16.msra.mxu0 %v433
  %605 = vmatprep.subr.bf16.mxu0 %v432
  %606 = vmatpush2.bf16.msra.mxu0 %v431
  %607 = vmatprep.subr.bf16.mxu0 %v430
  %608 = vmatpush2.bf16.msra.mxu0 %v429
  %609 = vmatprep.subr.bf16.mxu0 %v428
  %610 = vmatpush2.bf16.msra.mxu0 %v427
  %611 = vmatprep.subr.bf16.mxu0 %v426
  %612 = vmatpush2.bf16.msra.mxu0 %v425
  %613 = vmatprep.mubr.bf16.mxu0 %v146
  %614 = vmatmul.mubr.bf16.gmra.mxu0 %v145
  %v615 = vpop.f32.mrf.mxu0
  %v616 = vadd.f32 %v563, %v615
  %v617 = vpop.f32.mrf.mxu0
  %v618 = vadd.f32 %v565, %v617
  %v619 = vpop.f32.mrf.mxu0
  %v620 = vadd.f32 %v567, %v619
  %v621 = vpop.f32.mrf.mxu0
  %v622 = vadd.f32 %v569, %v621
  %623 = vmatprep.mubr.bf16.mxu0 %v151
  %624 = vmatmul.mubr.bf16.gmra.mxu0 %v150
  %v625 = vpop.f32.mrf.mxu0
  %v626 = vadd.f32 %v573, %v625
  %v627 = vpop.f32.mrf.mxu0
  %v628 = vadd.f32 %v575, %v627
  %v629 = vpop.f32.mrf.mxu0
  %v630 = vadd.f32 %v577, %v629
  %v631 = vpop.f32.mrf.mxu0
  %v632 = vadd.f32 %v579, %v631
  %633 = vdwg.mxu0
  %634 = vmatprep.subr.bf16.mxu0 0
  %635 = vmatpush1.bf16.msra.mxu0 0
  %636 = vmatprep.subr.bf16.mxu0 0
  %637 = vmatpush1.bf16.msra.mxu0 0
  %638 = vmatprep.subr.bf16.mxu0 0
  %639 = vmatpush1.bf16.msra.mxu0 0
  %640 = vmatprep.subr.bf16.mxu0 0
  %641 = vmatpush1.bf16.msra.mxu0 0
  %642 = vmatprep.subr.bf16.mxu0 %v448
  %643 = vmatpush1.bf16.msra.mxu0 %v447
  %644 = vmatprep.subr.bf16.mxu0 %v446
  %645 = vmatpush1.bf16.msra.mxu0 %v445
  %646 = vmatprep.subr.bf16.mxu0 %v444
  %647 = vmatpush1.bf16.msra.mxu0 %v443
  %648 = vmatprep.subr.bf16.mxu0 %v442
  %649 = vmatpush1.bf16.msra.mxu0 %v441
  %650 = vmatprep.subr.bf16.mxu0 0
  %651 = vmatpush2.bf16.msra.mxu0 0
  %652 = vmatprep.subr.bf16.mxu0 0
  %653 = vmatpush2.bf16.msra.mxu0 0
  %654 = vmatprep.subr.bf16.mxu0 0
  %655 = vmatpush2.bf16.msra.mxu0 0
  %656 = vmatprep.subr.bf16.mxu0 0
  %657 = vmatpush2.bf16.msra.mxu0 0
  %658 = vmatprep.subr.bf16.mxu0 0
  %659 = vmatpush2.bf16.msra.mxu0 0
  %660 = vmatprep.subr.bf16.mxu0 0
  %661 = vmatpush2.bf16.msra.mxu0 0
  %662 = vmatprep.subr.bf16.mxu0 0
  %663 = vmatpush2.bf16.msra.mxu0 0
  %664 = vmatprep.subr.bf16.mxu0 0
  %665 = vmatpush2.bf16.msra.mxu0 0
  %666 = vmatprep.mubr.bf16.mxu0 0
  %667 = vmatmul.mubr.bf16.gmra.mxu0 %v523
  %v668 = vpop.f32.mrf.mxu0
  %v669 = vadd.f32 %v616, %v668
  %v670 = vpop.f32.mrf.mxu0
  %v671 = vadd.f32 %v618, %v670
  %v672 = vpop.f32.mrf.mxu0
  %v673 = vadd.f32 %v620, %v672
  %v674 = vpop.f32.mrf.mxu0
  %v675 = vadd.f32 %v622, %v674
  %676 = vmatprep.mubr.bf16.mxu0 0
  %677 = vmatmul.mubr.bf16.gmra.mxu0 %v526
  %v678 = vpop.f32.mrf.mxu0
  %v679 = vadd.f32 %v626, %v678
  %v680 = vpop.f32.mrf.mxu0
  %v681 = vadd.f32 %v628, %v680
  %v682 = vpop.f32.mrf.mxu0
  %v683 = vadd.f32 %v630, %v682
  %v684 = vpop.f32.mrf.mxu0
  %v685 = vadd.f32 %v632, %v684
  %686 = vdwg.mxu0
  %v687 = vmax.f32 %v669, 0.0
  %v688 = vmax.f32 %v671, 0.0
  %v689 = vmax.f32 %v673, 0.0
  %v690 = vmax.f32 %v675, 0.0
  %v691 = vmax.f32 %v679, 0.0
  %v692 = vmax.f32 %v681, 0.0
  %v693 = vmax.f32 %v683, 0.0
  %v694 = vmax.f32 %v685, 0.0
  %v695 = vpack.c.bf16 %v689, %v687
  %v696 = vpack.c.bf16 %v690, %v688
  %v697 = vpack.c.bf16 %v693, %v691
  %v698 = vpack.c.bf16 %v694, %v692
  %v703 = vunpack.c.l.b16 %v695
  %v704 = vunpack.c.l.b16 %v696
  %v705 = vunpack.c.h.b16 %v695
  %v706 = vunpack.c.h.b16 %v696
  %v707 = vunpack.c.l.b16 %v697
  %v708 = vunpack.c.l.b16 %v698
  %v709 = vunpack.c.h.b16 %v697
  %v710 = vunpack.c.h.b16 %v698
  %v711 = vpack.c.b16 %v704, %v703
  %v712 = vpack.c.b16 %v706, %v705
  %v713 = vpack.c.b16 %v708, %v707
  %v714 = vpack.c.b16 %v710, %v709
  %719 = vst [vmem:[%s3] sm:$0xff] %v711
  %720 = vst [vmem:[%s3 + $0x8] sm:$0xff] %v712
  %721 = vst [vmem:[%s3 + $0x10] sm:$0xff] %v713
  %722 = vst [vmem:[%s3 + $0x18] sm:$0xff] %v714
  // Predicated region
  $region14: #{model_forward.14} parent=0 // pred_check
    _
  $region15: #{model_forward.14} parent=0 // pred_check_branch
    %724 = sbr.rel (0) target = $region17
  $region16: #{model_forward.14} parent=0 // pred_region
    _
  $region17: #{model_forward.14} parent=0 // pred_fallthru
    _
  // Predicated region
  $region18: #{model_forward.14} parent=0 // pred_check
    _
  $region19: #{model_forward.14} parent=0 // pred_check_branch
    %726 = sbr.rel (0) target = $region21
  $region20: #{model_forward.14} parent=0 // pred_region
    _
  $region21: #{model_forward.14} parent=0 // pred_fallthru
    _

// kernel: model_forward.15
$region0: #{model_forward.15}
  #allocation0 [shape = 'u32[]', space=smem, size = 0x4, offset = 0x4, fixed_abs, tag = 'smem constant byte address 0x4 - core index']
  #allocation1 [shape = 'u32[144,128]{1,0:T(1,128)}', space=vmem, size = 0x12000, scoped, tag = 'internal scratch']
  %s0 = inlined_call_operand.vmem [shape: bf16[128,576], index: 0, kind: input, shape index: {}]
  %s1 = inlined_call_operand.vmem [shape: bf16[576,128], index: 1, kind: input, shape index: {}]
  %s2 = inlined_call_operand.vmem [shape: f32[1,128], index: 2, kind: input, shape index: {}]
  %s3 = inlined_call_operand.vmem [shape: bf16[128,128], index: 3, kind: output, shape index: {}]
  %s4 = sld [smem:[#allocation0]]
  $region22: #{model_forward.15} parent=0
    _
  %s6 = ssub.s32 1, %s4
  %s7 = scalar_select 0, %s6, %s4
  // Predicated region
  $region2: #{model_forward.15} parent=0 // pred_check
    _
  $region3: #{model_forward.15} parent=0 // pred_check_branch
    %9 = sbr.rel (0) target = $region5
  $region4: #{model_forward.15} parent=0 // pred_region
    _
  $region5: #{model_forward.15} parent=0 // pred_fallthru
    _
  // Predicated region
  $region6: #{model_forward.15} parent=0 // pred_check
    _
  $region7: #{model_forward.15} parent=0 // pred_check_branch
    %11 = sbr.rel (0) target = $region9
  $region8: #{model_forward.15} parent=0 // pred_region
    _
  $region9: #{model_forward.15} parent=0 // pred_fallthru
    _
  // Predicated region
  $region10: #{model_forward.15} parent=0 // pred_check
    _
  $region11: #{model_forward.15} parent=0 // pred_check_branch
    %13 = sbr.rel (0) target = $region13
  $region12: #{model_forward.15} parent=0 // pred_region
    _
  $region13: #{model_forward.15} parent=0 // pred_fallthru
    _
  %v15 = vld [vmem:[%s0] sm:$0xff]
  %v16 = vld [vmem:[%s0 + $0x8] sm:$0xff]
  %v17 = vld [vmem:[%s0 + $0x10] sm:$0xf]
  %v18 = vld [vmem:[%s0 + $0x14] sm:$0xff]
  %v19 = vld [vmem:[%s0 + $0x1c] sm:$0xff]
  %v20 = vld [vmem:[%s0 + $0x24] sm:$0xf]
  %v21 = vld [vmem:[%s0 + $0x28] sm:$0xff]
  %v22 = vld [vmem:[%s0 + $0x30] sm:$0xff]
  %v23 = vld [vmem:[%s0 + $0x38] sm:$0xf]
  %v24 = vld [vmem:[%s0 + $0x3c] sm:$0xff]
  %v25 = vld [vmem:[%s0 + $0x44] sm:$0xff]
  %v26 = vld [vmem:[%s0 + $0x4c] sm:$0xf]
  %v27 = vld [vmem:[%s0 + $0x50] sm:$0xff]
  %v28 = vld [vmem:[%s0 + $0x58] sm:$0xff]
  %v29 = vld [vmem:[%s0 + $0x60] sm:$0xf]
  %v30 = vld [vmem:[%s0 + $0x64] sm:$0xff]
  %v31 = vld [vmem:[%s0 + $0x6c] sm:$0xff]
  %v32 = vld [vmem:[%s0 + $0x74] sm:$0xf]
  %v33 = vld [vmem:[%s0 + $0x78] sm:$0xff]
  %v34 = vld [vmem:[%s0 + $0x80] sm:$0xff]
  %v35 = vld [vmem:[%s0 + $0x88] sm:$0xf]
  %v36 = vld [vmem:[%s0 + $0x8c] sm:$0xff]
  %v37 = vld [vmem:[%s0 + $0x94] sm:$0xff]
  %v38 = vld [vmem:[%s0 + $0x9c] sm:$0xf]
  %v39 = vld [vmem:[%s0 + $0xa0] sm:$0xff]
  %v40 = vld [vmem:[%s0 + $0xa8] sm:$0xff]
  %v41 = vld [vmem:[%s0 + $0xb0] sm:$0xf]
  %v42 = vld [vmem:[%s0 + $0xb4] sm:$0xff]
  %v43 = vld [vmem:[%s0 + $0xbc] sm:$0xff]
  %v44 = vld [vmem:[%s0 + $0xc4] sm:$0xf]
  %v45 = vld [vmem:[%s0 + $0xc8] sm:$0xff]
  %v46 = vld [vmem:[%s0 + $0xd0] sm:$0xff]
  %v47 = vld [vmem:[%s0 + $0xd8] sm:$0xf]
  %v48 = vld [vmem:[%s0 + $0xdc] sm:$0xff]
  %v49 = vld [vmem:[%s0 + $0xe4] sm:$0xff]
  %v50 = vld [vmem:[%s0 + $0xec] sm:$0xf]
  %v51 = vld [vmem:[%s0 + $0xf0] sm:$0xff]
  %v52 = vld [vmem:[%s0 + $0xf8] sm:$0xff]
  %v53 = vld [vmem:[%s0 + $0x100] sm:$0xf]
  %v54 = vld [vmem:[%s0 + $0x104] sm:$0xff]
  %v55 = vld [vmem:[%s0 + $0x10c] sm:$0xff]
  %v56 = vld [vmem:[%s0 + $0x114] sm:$0xf]
  %v57 = vld [vmem:[%s0 + $0x118] sm:$0xff]
  %v58 = vld [vmem:[%s0 + $0x120] sm:$0xff]
  %v59 = vld [vmem:[%s0 + $0x128] sm:$0xf]
  %v60 = vld [vmem:[%s0 + $0x12c] sm:$0xff]
  %v61 = vld [vmem:[%s0 + $0x134] sm:$0xff]
  %v62 = vld [vmem:[%s0 + $0x13c] sm:$0xf]
  %v63 = vld [vmem:[%s1] sm:$0xf]
  %v64 = vld [vmem:[%s1 + $0x4] sm:$0xf]
  %v65 = vld [vmem:[%s1 + $0x8] sm:$0xf]
  %v66 = vld [vmem:[%s1 + $0xc] sm:$0xf]
  %v67 = vld [vmem:[%s1 + $0x10] sm:$0xf]
  %v68 = vld [vmem:[%s1 + $0x14] sm:$0xf]
  %v69 = vld [vmem:[%s1 + $0x18] sm:$0xf]
  %v70 = vld [vmem:[%s1 + $0x1c] sm:$0xf]
  %v71 = vld [vmem:[%s1 + $0x20] sm:$0xf]
  %v72 = vld [vmem:[%s1 + $0x24] sm:$0xf]
  %v73 = vld [vmem:[%s1 + $0x28] sm:$0xf]
  %v74 = vld [vmem:[%s1 + $0x2c] sm:$0xf]
  %v75 = vld [vmem:[%s1 + $0x30] sm:$0xf]
  %v76 = vld [vmem:[%s1 + $0x34] sm:$0xf]
  %v77 = vld [vmem:[%s1 + $0x38] sm:$0xf]
  %v78 = vld [vmem:[%s1 + $0x3c] sm:$0xf]
  %v79 = vld [vmem:[%s1 + $0x40] sm:$0xf]
  %v80 = vld [vmem:[%s1 + $0x44] sm:$0xf]
  %v81 = vld [vmem:[%s1 + $0x48] sm:$0xf]
  %v82 = vld [vmem:[%s1 + $0x4c] sm:$0xf]
  %v83 = vld [vmem:[%s1 + $0x50] sm:$0xf]
  %v84 = vld [vmem:[%s1 + $0x54] sm:$0xf]
  %v85 = vld [vmem:[%s1 + $0x58] sm:$0xf]
  %v86 = vld [vmem:[%s1 + $0x5c] sm:$0xf]
  %v87 = vld [vmem:[%s1 + $0x60] sm:$0xf]
  %v88 = vld [vmem:[%s1 + $0x64] sm:$0xf]
  %v89 = vld [vmem:[%s1 + $0x68] sm:$0xf]
  %v90 = vld [vmem:[%s1 + $0x6c] sm:$0xf]
  %v91 = vld [vmem:[%s1 + $0x70] sm:$0xf]
  %v92 = vld [vmem:[%s1 + $0x74] sm:$0xf]
  %v93 = vld [vmem:[%s1 + $0x78] sm:$0xf]
  %v94 = vld [vmem:[%s1 + $0x7c] sm:$0xf]
  %v95 = vld [vmem:[%s1 + $0x80] sm:$0xf]
  %v96 = vld [vmem:[%s1 + $0x84] sm:$0xf]
  %v97 = vld [vmem:[%s1 + $0x88] sm:$0xf]
  %v98 = vld [vmem:[%s1 + $0x8c] sm:$0xf]
  %v99 = vld [vmem:[%s1 + $0x90] sm:$0xf]
  %v100 = vld [vmem:[%s1 + $0x94] sm:$0xf]
  %v101 = vld [vmem:[%s1 + $0x98] sm:$0xf]
  %v102 = vld [vmem:[%s1 + $0x9c] sm:$0xf]
  %v103 = vld [vmem:[%s1 + $0xa0] sm:$0xf]
  %v104 = vld [vmem:[%s1 + $0xa4] sm:$0xf]
  %v105 = vld [vmem:[%s1 + $0xa8] sm:$0xf]
  %v106 = vld [vmem:[%s1 + $0xac] sm:$0xf]
  %v107 = vld [vmem:[%s1 + $0xb0] sm:$0xf]
  %v108 = vld [vmem:[%s1 + $0xb4] sm:$0xf]
  %v109 = vld [vmem:[%s1 + $0xb8] sm:$0xf]
  %v110 = vld [vmem:[%s1 + $0xbc] sm:$0xf]
  %v111 = vld [vmem:[%s1 + $0xc0] sm:$0xf]
  %v112 = vld [vmem:[%s1 + $0xc4] sm:$0xf]
  %v113 = vld [vmem:[%s1 + $0xc8] sm:$0xf]
  %v114 = vld [vmem:[%s1 + $0xcc] sm:$0xf]
  %v115 = vld [vmem:[%s1 + $0xd0] sm:$0xf]
  %v116 = vld [vmem:[%s1 + $0xd4] sm:$0xf]
  %v117 = vld [vmem:[%s1 + $0xd8] sm:$0xf]
  %v118 = vld [vmem:[%s1 + $0xdc] sm:$0xf]
  %v119 = vld [vmem:[%s1 + $0xe0] sm:$0xf]
  %v120 = vld [vmem:[%s1 + $0xe4] sm:$0xf]
  %v121 = vld [vmem:[%s1 + $0xe8] sm:$0xf]
  %v122 = vld [vmem:[%s1 + $0xec] sm:$0xf]
  %v123 = vld [vmem:[%s1 + $0xf0] sm:$0xf]
  %v124 = vld [vmem:[%s1 + $0xf4] sm:$0xf]
  %v125 = vld [vmem:[%s1 + $0xf8] sm:$0xf]
  %v126 = vld [vmem:[%s1 + $0xfc] sm:$0xf]
  %v127 = vld [vmem:[%s1 + $0x100] sm:$0xf]
  %v128 = vld [vmem:[%s1 + $0x104] sm:$0xf]
  %v129 = vld [vmem:[%s1 + $0x108] sm:$0xf]
  %v130 = vld [vmem:[%s1 + $0x10c] sm:$0xf]
  %v131 = vld [vmem:[%s1 + $0x110] sm:$0xf]
  %v132 = vld [vmem:[%s1 + $0x114] sm:$0xf]
  %v133 = vld [vmem:[%s1 + $0x118] sm:$0xf]
  %v134 = vld [vmem:[%s1 + $0x11c] sm:$0xf]
  %v135 = vld [vmem:[%s2] sm:$0x1]
  %v137 = vlaneseq
  %v138 = vshrl.u32 %v137, 7
  %v139 = vsub.s32 0, %v138
  %v140 = vrot.slane %v135, %v139
  %v190 = vunpack.c.l.b16 %v15
  %v191 = vunpack.c.h.b16 %v15
  %v192 = vunpack.c.l.b16 %v16
  %v193 = vunpack.c.h.b16 %v16
  %v194 = vunpack.c.l.b16 %v17
  %v195 = vunpack.c.l.b16 %v18
  %v196 = vunpack.c.h.b16 %v18
  %v197 = vunpack.c.l.b16 %v19
  %v198 = vunpack.c.h.b16 %v19
  %v199 = vunpack.c.l.b16 %v20
  %v200 = vunpack.c.l.b16 %v21
  %v201 = vunpack.c.h.b16 %v21
  %v202 = vunpack.c.l.b16 %v22
  %v203 = vunpack.c.h.b16 %v22
  %v204 = vunpack.c.l.b16 %v23
  %v205 = vunpack.c.l.b16 %v24
  %v206 = vunpack.c.h.b16 %v24
  %v207 = vunpack.c.l.b16 %v25
  %v208 = vunpack.c.h.b16 %v25
  %v209 = vunpack.c.l.b16 %v26
  %v210 = vunpack.c.l.b16 %v27
  %v211 = vunpack.c.h.b16 %v27
  %v212 = vunpack.c.l.b16 %v28
  %v213 = vunpack.c.h.b16 %v28
  %v214 = vunpack.c.l.b16 %v29
  %v215 = vunpack.c.l.b16 %v30
  %v216 = vunpack.c.h.b16 %v30
  %v217 = vunpack.c.l.b16 %v31
  %v218 = vunpack.c.h.b16 %v31
  %v219 = vunpack.c.l.b16 %v32
  %v220 = vunpack.c.l.b16 %v33
  %v221 = vunpack.c.h.b16 %v33
  %v222 = vunpack.c.l.b16 %v34
  %v223 = vunpack.c.h.b16 %v34
  %v224 = vunpack.c.l.b16 %v35
  %v225 = vunpack.c.l.b16 %v36
  %v226 = vunpack.c.h.b16 %v36
  %v227 = vunpack.c.l.b16 %v37
  %v228 = vunpack.c.h.b16 %v37
  %v229 = vunpack.c.l.b16 %v38
  %v230 = vunpack.c.l.b16 %v39
  %v231 = vunpack.c.h.b16 %v39
  %v232 = vunpack.c.l.b16 %v40
  %v233 = vunpack.c.h.b16 %v40
  %v234 = vunpack.c.l.b16 %v41
  %v235 = vunpack.c.l.b16 %v42
  %v236 = vunpack.c.h.b16 %v42
  %v237 = vunpack.c.l.b16 %v43
  %v238 = vunpack.c.h.b16 %v43
  %v239 = vunpack.c.l.b16 %v44
  %v240 = vunpack.c.l.b16 %v45
  %v241 = vunpack.c.h.b16 %v45
  %v242 = vunpack.c.l.b16 %v46
  %v243 = vunpack.c.h.b16 %v46
  %v244 = vunpack.c.l.b16 %v47
  %v245 = vunpack.c.l.b16 %v48
  %v246 = vunpack.c.h.b16 %v48
  %v247 = vunpack.c.l.b16 %v49
  %v248 = vunpack.c.h.b16 %v49
  %v249 = vunpack.c.l.b16 %v50
  %v250 = vunpack.c.l.b16 %v51
  %v251 = vunpack.c.h.b16 %v51
  %v252 = vunpack.c.l.b16 %v52
  %v253 = vunpack.c.h.b16 %v52
  %v254 = vunpack.c.l.b16 %v53
  %v255 = vunpack.c.l.b16 %v54
  %v256 = vunpack.c.h.b16 %v54
  %v257 = vunpack.c.l.b16 %v55
  %v258 = vunpack.c.h.b16 %v55
  %v259 = vunpack.c.l.b16 %v56
  %v260 = vunpack.c.l.b16 %v57
  %v261 = vunpack.c.h.b16 %v57
  %v262 = vunpack.c.l.b16 %v58
  %v263 = vunpack.c.h.b16 %v58
  %v264 = vunpack.c.l.b16 %v59
  %v265 = vunpack.c.l.b16 %v60
  %v266 = vunpack.c.h.b16 %v60
  %v267 = vunpack.c.l.b16 %v61
  %v268 = vunpack.c.h.b16 %v61
  %v269 = vunpack.c.l.b16 %v62
  %v270 = vpack.c.b16 %v195, %v190
  %v271 = vpack.c.b16 %v196, %v191
  %v272 = vpack.c.b16 %v197, %v192
  %v273 = vpack.c.b16 %v198, %v193
  %v274 = vpack.c.b16 %v199, %v194
  %v275 = vpack.c.b16 %v205, %v200
  %v276 = vpack.c.b16 %v206, %v201
  %v277 = vpack.c.b16 %v207, %v202
  %v278 = vpack.c.b16 %v208, %v203
  %v279 = vpack.c.b16 %v209, %v204
  %v280 = vpack.c.b16 %v215, %v210
  %v281 = vpack.c.b16 %v216, %v211
  %v282 = vpack.c.b16 %v217, %v212
  %v283 = vpack.c.b16 %v218, %v213
  %v284 = vpack.c.b16 %v219, %v214
  %v285 = vpack.c.b16 %v225, %v220
  %v286 = vpack.c.b16 %v226, %v221
  %v287 = vpack.c.b16 %v227, %v222
  %v288 = vpack.c.b16 %v228, %v223
  %v289 = vpack.c.b16 %v229, %v224
  %v290 = vpack.c.b16 %v235, %v230
  %v291 = vpack.c.b16 %v236, %v231
  %v292 = vpack.c.b16 %v237, %v232
  %v293 = vpack.c.b16 %v238, %v233
  %v294 = vpack.c.b16 %v239, %v234
  %v295 = vpack.c.b16 %v245, %v240
  %v296 = vpack.c.b16 %v246, %v241
  %v297 = vpack.c.b16 %v247, %v242
  %v298 = vpack.c.b16 %v248, %v243
  %v299 = vpack.c.b16 %v249, %v244
  %v300 = vpack.c.b16 %v255, %v250
  %v301 = vpack.c.b16 %v256, %v251
  %v302 = vpack.c.b16 %v257, %v252
  %v303 = vpack.c.b16 %v258, %v253
  %v304 = vpack.c.b16 %v259, %v254
  %v305 = vpack.c.b16 %v265, %v260
  %v306 = vpack.c.b16 %v266, %v261
  %v307 = vpack.c.b16 %v267, %v262
  %v308 = vpack.c.b16 %v268, %v263
  %v309 = vpack.c.b16 %v269, %v264
  %v414 = vunpack.c.l.b16 %v63
  %v415 = vunpack.c.l.b16 %v64
  %v416 = vunpack.c.l.b16 %v65
  %v417 = vunpack.c.l.b16 %v66
  %v418 = vunpack.c.l.b16 %v67
  %v419 = vunpack.c.l.b16 %v68
  %v420 = vunpack.c.l.b16 %v69
  %v421 = vunpack.c.l.b16 %v70
  %v422 = vunpack.c.l.b16 %v71
  %v423 = vunpack.c.l.b16 %v72
  %v424 = vunpack.c.l.b16 %v73
  %v425 = vunpack.c.l.b16 %v74
  %v426 = vunpack.c.l.b16 %v75
  %v427 = vunpack.c.l.b16 %v76
  %v428 = vunpack.c.l.b16 %v77
  %v429 = vunpack.c.l.b16 %v78
  %v430 = vunpack.c.l.b16 %v79
  %v431 = vunpack.c.l.b16 %v80
  %v432 = vunpack.c.l.b16 %v81
  %v433 = vunpack.c.l.b16 %v82
  %v434 = vunpack.c.l.b16 %v83
  %v435 = vunpack.c.l.b16 %v84
  %v436 = vunpack.c.l.b16 %v85
  %v437 = vunpack.c.l.b16 %v86
  %v438 = vunpack.c.l.b16 %v87
  %v439 = vunpack.c.l.b16 %v88
  %v440 = vunpack.c.l.b16 %v89
  %v441 = vunpack.c.l.b16 %v90
  %v442 = vunpack.c.l.b16 %v91
  %v443 = vunpack.c.l.b16 %v92
  %v444 = vunpack.c.l.b16 %v93
  %v445 = vunpack.c.l.b16 %v94
  %v446 = vunpack.c.l.b16 %v95
  %v447 = vunpack.c.l.b16 %v96
  %v448 = vunpack.c.l.b16 %v97
  %v449 = vunpack.c.l.b16 %v98
  %v450 = vunpack.c.l.b16 %v99
  %v451 = vunpack.c.l.b16 %v100
  %v452 = vunpack.c.l.b16 %v101
  %v453 = vunpack.c.l.b16 %v102
  %v454 = vunpack.c.l.b16 %v103
  %v455 = vunpack.c.l.b16 %v104
  %v456 = vunpack.c.l.b16 %v105
  %v457 = vunpack.c.l.b16 %v106
  %v458 = vunpack.c.l.b16 %v107
  %v459 = vunpack.c.l.b16 %v108
  %v460 = vunpack.c.l.b16 %v109
  %v461 = vunpack.c.l.b16 %v110
  %v462 = vunpack.c.l.b16 %v111
  %v463 = vunpack.c.l.b16 %v112
  %v464 = vunpack.c.l.b16 %v113
  %v465 = vunpack.c.l.b16 %v114
  %v466 = vunpack.c.l.b16 %v115
  %v467 = vunpack.c.l.b16 %v116
  %v468 = vunpack.c.l.b16 %v117
  %v469 = vunpack.c.l.b16 %v118
  %v470 = vunpack.c.l.b16 %v119
  %v471 = vunpack.c.l.b16 %v120
  %v472 = vunpack.c.l.b16 %v121
  %v473 = vunpack.c.l.b16 %v122
  %v474 = vunpack.c.l.b16 %v123
  %v475 = vunpack.c.l.b16 %v124
  %v476 = vunpack.c.l.b16 %v125
  %v477 = vunpack.c.l.b16 %v126
  %v478 = vunpack.c.l.b16 %v127
  %v479 = vunpack.c.l.b16 %v128
  %v480 = vunpack.c.l.b16 %v129
  %v481 = vunpack.c.l.b16 %v130
  %v482 = vunpack.c.l.b16 %v131
  %v483 = vunpack.c.l.b16 %v132
  %v484 = vunpack.c.l.b16 %v133
  %v485 = vunpack.c.l.b16 %v134
  %v486 = vpack.c.b16 %v415, %v414
  %v487 = vpack.c.b16 %v417, %v416
  %v488 = vpack.c.b16 %v419, %v418
  %v489 = vpack.c.b16 %v421, %v420
  %v490 = vpack.c.b16 %v423, %v422
  %v491 = vpack.c.b16 %v425, %v424
  %v492 = vpack.c.b16 %v427, %v426
  %v493 = vpack.c.b16 %v429, %v428
  %v494 = vpack.c.b16 %v431, %v430
  %v495 = vpack.c.b16 %v433, %v432
  %v496 = vpack.c.b16 %v435, %v434
  %v497 = vpack.c.b16 %v437, %v436
  %v498 = vpack.c.b16 %v439, %v438
  %v499 = vpack.c.b16 %v441, %v440
  %v500 = vpack.c.b16 %v443, %v442
  %v501 = vpack.c.b16 %v445, %v444
  %v502 = vpack.c.b16 %v447, %v446
  %v503 = vpack.c.b16 %v449, %v448
  %v504 = vpack.c.b16 %v451, %v450
  %v505 = vpack.c.b16 %v453, %v452
  %v506 = vpack.c.b16 %v455, %v454
  %v507 = vpack.c.b16 %v457, %v456
  %v508 = vpack.c.b16 %v459, %v458
  %v509 = vpack.c.b16 %v461, %v460
  %v510 = vpack.c.b16 %v463, %v462
  %v511 = vpack.c.b16 %v465, %v464
  %v512 = vpack.c.b16 %v467, %v466
  %v513 = vpack.c.b16 %v469, %v468
  %v514 = vpack.c.b16 %v471, %v470
  %v515 = vpack.c.b16 %v473, %v472
  %v516 = vpack.c.b16 %v475, %v474
  %v517 = vpack.c.b16 %v477, %v476
  %v518 = vpack.c.b16 %v479, %v478
  %v519 = vpack.c.b16 %v481, %v480
  %v520 = vpack.c.b16 %v483, %v482
  %v521 = vpack.c.b16 %v485, %v484
  %vm558 = vcmask 523264
  %v560 = vsel %vm558, %v274, 0
  %v563 = vsel %vm558, %v279, 0
  %v566 = vsel %vm558, %v284, 0
  %v569 = vsel %vm558, %v289, 0
  %v572 = vsel %vm558, %v294, 0
  %v575 = vsel %vm558, %v299, 0
  %v578 = vsel %vm558, %v304, 0
  %v581 = vsel %vm558, %v309, 0
  %583 = vmatprep.subr.bf16.mxu0 0
  %584 = vmatpush1.bf16.msra.mxu0 %v493
  %585 = vmatprep.subr.bf16.mxu0 0
  %586 = vmatpush1.bf16.msra.mxu0 %v492
  %587 = vmatprep.subr.bf16.mxu0 0
  %588 = vmatpush1.bf16.msra.mxu0 %v491
  %589 = vmatprep.subr.bf16.mxu0 0
  %590 = vmatpush1.bf16.msra.mxu0 %v490
  %591 = vmatprep.subr.bf16.mxu0 0
  %592 = vmatpush1.bf16.msra.mxu0 %v489
  %593 = vmatprep.subr.bf16.mxu0 0
  %594 = vmatpush1.bf16.msra.mxu0 %v488
  %595 = vmatprep.subr.bf16.mxu0 0
  %596 = vmatpush1.bf16.msra.mxu0 %v487
  %597 = vmatprep.subr.bf16.mxu0 0
  %598 = vmatpush1.bf16.msra.mxu0 %v486
  %599 = vmatprep.subr.bf16.mxu0 0
  %600 = vmatpush2.bf16.msra.mxu0 %v501
  %601 = vmatprep.subr.bf16.mxu0 0
  %602 = vmatpush2.bf16.msra.mxu0 %v500
  %603 = vmatprep.subr.bf16.mxu0 0
  %604 = vmatpush2.bf16.msra.mxu0 %v499
  %605 = vmatprep.subr.bf16.mxu0 0
  %606 = vmatpush2.bf16.msra.mxu0 %v498
  %607 = vmatprep.subr.bf16.mxu0 0
  %608 = vmatpush2.bf16.msra.mxu0 %v497
  %609 = vmatprep.subr.bf16.mxu0 0
  %610 = vmatpush2.bf16.msra.mxu0 %v496
  %611 = vmatprep.subr.bf16.mxu0 0
  %612 = vmatpush2.bf16.msra.mxu0 %v495
  %613 = vmatprep.subr.bf16.mxu0 0
  %614 = vmatpush2.bf16.msra.mxu0 %v494
  %615 = vmatprep.mubr.bf16.mxu0 %v271
  %616 = vmatmul.mubr.bf16.gmra.mxu0 %v270
  %v617 = vpop.f32.mrf.mxu0
  %v618 = vadd.f32 %v140, %v617
  %v619 = vpop.f32.mrf.mxu0
  %v620 = vpop.f32.mrf.mxu0
  %v621 = vadd.f32 %v140, %v620
  %v622 = vpop.f32.mrf.mxu0
  %623 = vmatprep.mubr.bf16.mxu0 %v276
  %624 = vmatmul.mubr.bf16.gmra.mxu0 %v275
  %v625 = vpop.f32.mrf.mxu0
  %v626 = vadd.f32 %v140, %v625
  %v627 = vpop.f32.mrf.mxu0
  %v628 = vpop.f32.mrf.mxu0
  %v629 = vadd.f32 %v140, %v628
  %v630 = vpop.f32.mrf.mxu0
  %631 = vmatprep.mubr.bf16.mxu0 %v281
  %632 = vmatmul.mubr.bf16.gmra.mxu0 %v280
  %v633 = vpop.f32.mrf.mxu0
  %v634 = vadd.f32 %v140, %v633
  %v635 = vpop.f32.mrf.mxu0
  %v636 = vpop.f32.mrf.mxu0
  %v637 = vadd.f32 %v140, %v636
  %v638 = vpop.f32.mrf.mxu0
  %639 = vmatprep.mubr.bf16.mxu0 %v286
  %640 = vmatmul.mubr.bf16.gmra.mxu0 %v285
  %v641 = vpop.f32.mrf.mxu0
  %v642 = vadd.f32 %v140, %v641
  %v643 = vpop.f32.mrf.mxu0
  %v644 = vpop.f32.mrf.mxu0
  %v645 = vadd.f32 %v140, %v644
  %v646 = vpop.f32.mrf.mxu0
  %647 = vmatprep.mubr.bf16.mxu0 %v291
  %648 = vmatmul.mubr.bf16.gmra.mxu0 %v290
  %v649 = vpop.f32.mrf.mxu0
  %v650 = vadd.f32 %v140, %v649
  %v651 = vpop.f32.mrf.mxu0
  %v652 = vpop.f32.mrf.mxu0
  %v653 = vadd.f32 %v140, %v652
  %v654 = vpop.f32.mrf.mxu0
  %655 = vmatprep.mubr.bf16.mxu0 %v296
  %656 = vmatmul.mubr.bf16.gmra.mxu0 %v295
  %v657 = vpop.f32.mrf.mxu0
  %v658 = vadd.f32 %v140, %v657
  %v659 = vpop.f32.mrf.mxu0
  %v660 = vpop.f32.mrf.mxu0
  %v661 = vadd.f32 %v140, %v660
  %v662 = vpop.f32.mrf.mxu0
  %663 = vmatprep.mubr.bf16.mxu0 %v301
  %664 = vmatmul.mubr.bf16.gmra.mxu0 %v300
  %v665 = vpop.f32.mrf.mxu0
  %v666 = vadd.f32 %v140, %v665
  %v667 = vpop.f32.mrf.mxu0
  %v668 = vpop.f32.mrf.mxu0
  %v669 = vadd.f32 %v140, %v668
  %v670 = vpop.f32.mrf.mxu0
  %671 = vmatprep.mubr.bf16.mxu0 %v306
  %672 = vmatmul.mubr.bf16.gmra.mxu0 %v305
  %v673 = vpop.f32.mrf.mxu0
  %v674 = vadd.f32 %v140, %v673
  %v675 = vpop.f32.mrf.mxu0
  %v676 = vpop.f32.mrf.mxu0
  %v677 = vadd.f32 %v140, %v676
  %v678 = vpop.f32.mrf.mxu0
  %679 = vdwg.mxu0
  %680 = vmatprep.subr.bf16.mxu0 0
  %681 = vmatpush1.bf16.msra.mxu0 %v509
  %682 = vmatprep.subr.bf16.mxu0 0
  %683 = vmatpush1.bf16.msra.mxu0 %v508
  %684 = vmatprep.subr.bf16.mxu0 0
  %685 = vmatpush1.bf16.msra.mxu0 %v507
  %686 = vmatprep.subr.bf16.mxu0 0
  %687 = vmatpush1.bf16.msra.mxu0 %v506
  %688 = vmatprep.subr.bf16.mxu0 0
  %689 = vmatpush1.bf16.msra.mxu0 %v505
  %690 = vmatprep.subr.bf16.mxu0 0
  %691 = vmatpush1.bf16.msra.mxu0 %v504
  %692 = vmatprep.subr.bf16.mxu0 0
  %693 = vmatpush1.bf16.msra.mxu0 %v503
  %694 = vmatprep.subr.bf16.mxu0 0
  %695 = vmatpush1.bf16.msra.mxu0 %v502
  %696 = vmatprep.subr.bf16.mxu0 0
  %697 = vmatpush2.bf16.msra.mxu0 %v517
  %698 = vmatprep.subr.bf16.mxu0 0
  %699 = vmatpush2.bf16.msra.mxu0 %v516
  %700 = vmatprep.subr.bf16.mxu0 0
  %701 = vmatpush2.bf16.msra.mxu0 %v515
  %702 = vmatprep.subr.bf16.mxu0 0
  %703 = vmatpush2.bf16.msra.mxu0 %v514
  %704 = vmatprep.subr.bf16.mxu0 0
  %705 = vmatpush2.bf16.msra.mxu0 %v513
  %706 = vmatprep.subr.bf16.mxu0 0
  %707 = vmatpush2.bf16.msra.mxu0 %v512
  %708 = vmatprep.subr.bf16.mxu0 0
  %709 = vmatpush2.bf16.msra.mxu0 %v511
  %710 = vmatprep.subr.bf16.mxu0 0
  %711 = vmatpush2.bf16.msra.mxu0 %v510
  %712 = vmatprep.mubr.bf16.mxu0 %v273
  %713 = vmatmul.mubr.bf16.gmra.mxu0 %v272
  %v714 = vpop.f32.mrf.mxu0
  %v715 = vadd.f32 %v618, %v714
  %v716 = vpop.f32.mrf.mxu0
  %v717 = vpop.f32.mrf.mxu0
  %v718 = vadd.f32 %v621, %v717
  %v719 = vpop.f32.mrf.mxu0
  %720 = vmatprep.mubr.bf16.mxu0 %v278
  %721 = vmatmul.mubr.bf16.gmra.mxu0 %v277
  %v722 = vpop.f32.mrf.mxu0
  %v723 = vadd.f32 %v626, %v722
  %v724 = vpop.f32.mrf.mxu0
  %v725 = vpop.f32.mrf.mxu0
  %v726 = vadd.f32 %v629, %v725
  %v727 = vpop.f32.mrf.mxu0
  %728 = vmatprep.mubr.bf16.mxu0 %v283
  %729 = vmatmul.mubr.bf16.gmra.mxu0 %v282
  %v730 = vpop.f32.mrf.mxu0
  %v731 = vadd.f32 %v634, %v730
  %v732 = vpop.f32.mrf.mxu0
  %v733 = vpop.f32.mrf.mxu0
  %v734 = vadd.f32 %v637, %v733
  %v735 = vpop.f32.mrf.mxu0
  %736 = vmatprep.mubr.bf16.mxu0 %v288
  %737 = vmatmul.mubr.bf16.gmra.mxu0 %v287
  %v738 = vpop.f32.mrf.mxu0
  %v739 = vadd.f32 %v642, %v738
  %v740 = vpop.f32.mrf.mxu0
  %v741 = vpop.f32.mrf.mxu0
  %v742 = vadd.f32 %v645, %v741
  %v743 = vpop.f32.mrf.mxu0
  %744 = vmatprep.mubr.bf16.mxu0 %v293
  %745 = vmatmul.mubr.bf16.gmra.mxu0 %v292
  %v746 = vpop.f32.mrf.mxu0
  %v747 = vadd.f32 %v650, %v746
  %v748 = vpop.f32.mrf.mxu0
  %v749 = vpop.f32.mrf.mxu0
  %v750 = vadd.f32 %v653, %v749
  %v751 = vpop.f32.mrf.mxu0
  %752 = vmatprep.mubr.bf16.mxu0 %v298
  %753 = vmatmul.mubr.bf16.gmra.mxu0 %v297
  %v754 = vpop.f32.mrf.mxu0
  %v755 = vadd.f32 %v658, %v754
  %v756 = vpop.f32.mrf.mxu0
  %v757 = vpop.f32.mrf.mxu0
  %v758 = vadd.f32 %v661, %v757
  %v759 = vpop.f32.mrf.mxu0
  %760 = vmatprep.mubr.bf16.mxu0 %v303
  %761 = vmatmul.mubr.bf16.gmra.mxu0 %v302
  %v762 = vpop.f32.mrf.mxu0
  %v763 = vadd.f32 %v666, %v762
  %v764 = vpop.f32.mrf.mxu0
  %v765 = vpop.f32.mrf.mxu0
  %v766 = vadd.f32 %v669, %v765
  %v767 = vpop.f32.mrf.mxu0
  %768 = vmatprep.mubr.bf16.mxu0 %v308
  %769 = vmatmul.mubr.bf16.gmra.mxu0 %v307
  %v770 = vpop.f32.mrf.mxu0
  %v771 = vadd.f32 %v674, %v770
  %v772 = vpop.f32.mrf.mxu0
  %v773 = vpop.f32.mrf.mxu0
  %v774 = vadd.f32 %v677, %v773
  %v775 = vpop.f32.mrf.mxu0
  %776 = vdwg.mxu0
  %777 = vmatprep.subr.bf16.mxu0 0
  %778 = vmatpush1.bf16.msra.mxu0 0
  %779 = vmatprep.subr.bf16.mxu0 0
  %780 = vmatpush1.bf16.msra.mxu0 0
  %781 = vmatprep.subr.bf16.mxu0 0
  %782 = vmatpush1.bf16.msra.mxu0 0
  %783 = vmatprep.subr.bf16.mxu0 0
  %784 = vmatpush1.bf16.msra.mxu0 0
  %785 = vmatprep.subr.bf16.mxu0 0
  %786 = vmatpush1.bf16.msra.mxu0 %v521
  %787 = vmatprep.subr.bf16.mxu0 0
  %788 = vmatpush1.bf16.msra.mxu0 %v520
  %789 = vmatprep.subr.bf16.mxu0 0
  %790 = vmatpush1.bf16.msra.mxu0 %v519
  %791 = vmatprep.subr.bf16.mxu0 0
  %792 = vmatpush1.bf16.msra.mxu0 %v518
  %793 = vmatprep.subr.bf16.mxu0 0
  %794 = vmatpush2.bf16.msra.mxu0 0
  %795 = vmatprep.subr.bf16.mxu0 0
  %796 = vmatpush2.bf16.msra.mxu0 0
  %797 = vmatprep.subr.bf16.mxu0 0
  %798 = vmatpush2.bf16.msra.mxu0 0
  %799 = vmatprep.subr.bf16.mxu0 0
  %800 = vmatpush2.bf16.msra.mxu0 0
  %801 = vmatprep.subr.bf16.mxu0 0
  %802 = vmatpush2.bf16.msra.mxu0 0
  %803 = vmatprep.subr.bf16.mxu0 0
  %804 = vmatpush2.bf16.msra.mxu0 0
  %805 = vmatprep.subr.bf16.mxu0 0
  %806 = vmatpush2.bf16.msra.mxu0 0
  %807 = vmatprep.subr.bf16.mxu0 0
  %808 = vmatpush2.bf16.msra.mxu0 0
  %809 = vmatprep.mubr.bf16.mxu0 0
  %810 = vmatmul.mubr.bf16.gmra.mxu0 %v560
  %v811 = vpop.f32.mrf.mxu0
  %v812 = vadd.f32 %v715, %v811
  %v813 = vpop.f32.mrf.mxu0
  %v814 = vpop.f32.mrf.mxu0
  %v815 = vadd.f32 %v718, %v814
  %v816 = vpop.f32.mrf.mxu0
  %817 = vmatprep.mubr.bf16.mxu0 0
  %818 = vmatmul.mubr.bf16.gmra.mxu0 %v563
  %v819 = vpop.f32.mrf.mxu0
  %v820 = vadd.f32 %v723, %v819
  %v821 = vpop.f32.mrf.mxu0
  %v822 = vpop.f32.mrf.mxu0
  %v823 = vadd.f32 %v726, %v822
  %v824 = vpop.f32.mrf.mxu0
  %825 = vmatprep.mubr.bf16.mxu0 0
  %826 = vmatmul.mubr.bf16.gmra.mxu0 %v566
  %v827 = vpop.f32.mrf.mxu0
  %v828 = vadd.f32 %v731, %v827
  %v829 = vpop.f32.mrf.mxu0
  %v830 = vpop.f32.mrf.mxu0
  %v831 = vadd.f32 %v734, %v830
  %v832 = vpop.f32.mrf.mxu0
  %833 = vmatprep.mubr.bf16.mxu0 0
  %834 = vmatmul.mubr.bf16.gmra.mxu0 %v569
  %v835 = vpop.f32.mrf.mxu0
  %v836 = vadd.f32 %v739, %v835
  %v837 = vpop.f32.mrf.mxu0
  %v838 = vpop.f32.mrf.mxu0
  %v839 = vadd.f32 %v742, %v838
  %v840 = vpop.f32.mrf.mxu0
  %841 = vmatprep.mubr.bf16.mxu0 0
  %842 = vmatmul.mubr.bf16.gmra.mxu0 %v572
  %v843 = vpop.f32.mrf.mxu0
  %v844 = vadd.f32 %v747, %v843
  %v845 = vpop.f32.mrf.mxu0
  %v846 = vpop.f32.mrf.mxu0
  %v847 = vadd.f32 %v750, %v846
  %v848 = vpop.f32.mrf.mxu0
  %849 = vmatprep.mubr.bf16.mxu0 0
  %850 = vmatmul.mubr.bf16.gmra.mxu0 %v575
  %v851 = vpop.f32.mrf.mxu0
  %v852 = vadd.f32 %v755, %v851
  %v853 = vpop.f32.mrf.mxu0
  %v854 = vpop.f32.mrf.mxu0
  %v855 = vadd.f32 %v758, %v854
  %v856 = vpop.f32.mrf.mxu0
  %857 = vmatprep.mubr.bf16.mxu0 0
  %858 = vmatmul.mubr.bf16.gmra.mxu0 %v578
  %v859 = vpop.f32.mrf.mxu0
  %v860 = vadd.f32 %v763, %v859
  %v861 = vpop.f32.mrf.mxu0
  %v862 = vpop.f32.mrf.mxu0
  %v863 = vadd.f32 %v766, %v862
  %v864 = vpop.f32.mrf.mxu0
  %865 = vmatprep.mubr.bf16.mxu0 0
  %866 = vmatmul.mubr.bf16.gmra.mxu0 %v581
  %v867 = vpop.f32.mrf.mxu0
  %v868 = vadd.f32 %v771, %v867
  %v869 = vpop.f32.mrf.mxu0
  %v870 = vpop.f32.mrf.mxu0
  %v871 = vadd.f32 %v774, %v870
  %v872 = vpop.f32.mrf.mxu0
  %873 = vdwg.mxu0
  %v874 = vmax.f32 %v812, 0.0
  %v875 = vmax.f32 %v815, 0.0
  %v876 = vmax.f32 %v820, 0.0
  %v877 = vmax.f32 %v823, 0.0
  %v878 = vmax.f32 %v828, 0.0
  %v879 = vmax.f32 %v831, 0.0
  %v880 = vmax.f32 %v836, 0.0
  %v881 = vmax.f32 %v839, 0.0
  %v882 = vmax.f32 %v844, 0.0
  %v883 = vmax.f32 %v847, 0.0
  %v884 = vmax.f32 %v852, 0.0
  %v885 = vmax.f32 %v855, 0.0
  %v886 = vmax.f32 %v860, 0.0
  %v887 = vmax.f32 %v863, 0.0
  %v888 = vmax.f32 %v868, 0.0
  %v889 = vmax.f32 %v871, 0.0
  %v890 = vpack.c.bf16 %v875, %v874
  %v891 = vpack.c.bf16 %v877, %v876
  %v892 = vpack.c.bf16 %v879, %v878
  %v893 = vpack.c.bf16 %v881, %v880
  %v894 = vpack.c.bf16 %v883, %v882
  %v895 = vpack.c.bf16 %v885, %v884
  %v896 = vpack.c.bf16 %v887, %v886
  %v897 = vpack.c.bf16 %v889, %v888
  %v906 = vunpack.c.l.b16 %v890
  %v907 = vunpack.c.h.b16 %v890
  %v908 = vunpack.c.l.b16 %v891
  %v909 = vunpack.c.h.b16 %v891
  %v910 = vunpack.c.l.b16 %v892
  %v911 = vunpack.c.h.b16 %v892
  %v912 = vunpack.c.l.b16 %v893
  %v913 = vunpack.c.h.b16 %v893
  %v914 = vunpack.c.l.b16 %v894
  %v915 = vunpack.c.h.b16 %v894
  %v916 = vunpack.c.l.b16 %v895
  %v917 = vunpack.c.h.b16 %v895
  %v918 = vunpack.c.l.b16 %v896
  %v919 = vunpack.c.h.b16 %v896
  %v920 = vunpack.c.l.b16 %v897
  %v921 = vunpack.c.h.b16 %v897
  %v922 = vpack.c.b16 %v906, %v906
  %v923 = vpack.c.b16 %v907, %v907
  %v924 = vpack.c.b16 %v908, %v908
  %v925 = vpack.c.b16 %v909, %v909
  %v926 = vpack.c.b16 %v910, %v910
  %v927 = vpack.c.b16 %v911, %v911
  %v928 = vpack.c.b16 %v912, %v912
  %v929 = vpack.c.b16 %v913, %v913
  %v930 = vpack.c.b16 %v914, %v914
  %v931 = vpack.c.b16 %v915, %v915
  %v932 = vpack.c.b16 %v916, %v916
  %v933 = vpack.c.b16 %v917, %v917
  %v934 = vpack.c.b16 %v918, %v918
  %v935 = vpack.c.b16 %v919, %v919
  %v936 = vpack.c.b16 %v920, %v920
  %v937 = vpack.c.b16 %v921, %v921
  %954 = vst [vmem:[%s3] sm:$0xf] %v922
  %955 = vst [vmem:[%s3 + $0x4] sm:$0xf] %v923
  %956 = vst [vmem:[%s3 + $0x8] sm:$0xf] %v924
  %957 = vst [vmem:[%s3 + $0xc] sm:$0xf] %v925
  %958 = vst [vmem:[%s3 + $0x10] sm:$0xf] %v926
  %959 = vst [vmem:[%s3 + $0x14] sm:$0xf] %v927
  %960 = vst [vmem:[%s3 + $0x18] sm:$0xf] %v928
  %961 = vst [vmem:[%s3 + $0x1c] sm:$0xf] %v929
  %962 = vst [vmem:[%s3 + $0x20] sm:$0xf] %v930
  %963 = vst [vmem:[%s3 + $0x24] sm:$0xf] %v931
  %964 = vst [vmem:[%s3 + $0x28] sm:$0xf] %v932
  %965 = vst [vmem:[%s3 + $0x2c] sm:$0xf] %v933
  %966 = vst [vmem:[%s3 + $0x30] sm:$0xf] %v934
  %967 = vst [vmem:[%s3 + $0x34] sm:$0xf] %v935
  %968 = vst [vmem:[%s3 + $0x38] sm:$0xf] %v936
  %969 = vst [vmem:[%s3 + $0x3c] sm:$0xf] %v937
  // Predicated region
  $region14: #{model_forward.15} parent=0 // pred_check
    _
  $region15: #{model_forward.15} parent=0 // pred_check_branch
    %971 = sbr.rel (0) target = $region17
  $region16: #{model_forward.15} parent=0 // pred_region
    _
  $region17: #{model_forward.15} parent=0 // pred_fallthru
    _
  // Predicated region
  $region18: #{model_forward.15} parent=0 // pred_check
    _
  $region19: #{model_forward.15} parent=0 // pred_check_branch
    %973 = sbr.rel (0) target = $region21
  $region20: #{model_forward.15} parent=0 // pred_region
    _
  $region21: #{model_forward.15} parent=0 // pred_fallthru
    _

// kernel: model_forward.16
$region0: #{model_forward.16}
  #allocation0 [shape = 'u32[]', space=smem, size = 0x4, offset = 0x4, fixed_abs, tag = 'smem constant byte address 0x4 - core index']
  #allocation1 [shape = 'u32[144,128]{1,0:T(1,128)}', space=vmem, size = 0x12000, scoped, tag = 'internal scratch']
  %s0 = inlined_call_operand.vmem [shape: bf16[512,288], index: 0, kind: input, shape index: {}]
  %s1 = inlined_call_operand.vmem [shape: bf16[288,128], index: 1, kind: input, shape index: {}]
  %s2 = inlined_call_operand.vmem [shape: f32[1,128], index: 2, kind: input, shape index: {}]
  %s3 = inlined_call_operand.vmem [shape: bf16[512,128], index: 3, kind: output, shape index: {}]
  %s4 = sld [smem:[#allocation0]]
  $region22: #{model_forward.16} parent=0
    _
  %s6 = ssub.s32 1, %s4
  %s7 = scalar_select 0, %s6, %s4
  // Predicated region
  $region2: #{model_forward.16} parent=0 // pred_check
    _
  $region3: #{model_forward.16} parent=0 // pred_check_branch
    %9 = sbr.rel (0) target = $region5
  $region4: #{model_forward.16} parent=0 // pred_region
    _
  $region5: #{model_forward.16} parent=0 // pred_fallthru
    _
  // Predicated region
  $region6: #{model_forward.16} parent=0 // pred_check
    _
  $region7: #{model_forward.16} parent=0 // pred_check_branch
    %11 = sbr.rel (0) target = $region9
  $region8: #{model_forward.16} parent=0 // pred_region
    _
  $region9: #{model_forward.16} parent=0 // pred_fallthru
    _
  // Predicated region
  $region10: #{model_forward.16} parent=0 // pred_check
    _
  $region11: #{model_forward.16} parent=0 // pred_check_branch
    %13 = sbr.rel (0) target = $region13
  $region12: #{model_forward.16} parent=0 // pred_region
    _
  $region13: #{model_forward.16} parent=0 // pred_fallthru
    _
  %v15 = vld [vmem:[%s0] sm:$0xff]
  %v16 = vld [vmem:[%s0 + $0x8] sm:$0xf]
  %v17 = vld [vmem:[%s0 + $0xc] sm:$0xff]
  %v18 = vld [vmem:[%s0 + $0x14] sm:$0xf]
  %v19 = vld [vmem:[%s0 + $0x18] sm:$0xff]
  %v20 = vld [vmem:[%s0 + $0x20] sm:$0xf]
  %v21 = vld [vmem:[%s0 + $0x24] sm:$0xff]
  %v22 = vld [vmem:[%s0 + $0x2c] sm:$0xf]
  %v23 = vld [vmem:[%s0 + $0x30] sm:$0xff]
  %v24 = vld [vmem:[%s0 + $0x38] sm:$0xf]
  %v25 = vld [vmem:[%s0 + $0x3c] sm:$0xff]
  %v26 = vld [vmem:[%s0 + $0x44] sm:$0xf]
  %v27 = vld [vmem:[%s0 + $0x48] sm:$0xff]
  %v28 = vld [vmem:[%s0 + $0x50] sm:$0xf]
  %v29 = vld [vmem:[%s0 + $0x54] sm:$0xff]
  %v30 = vld [vmem:[%s0 + $0x5c] sm:$0xf]
  %v31 = vld [vmem:[%s0 + $0x60] sm:$0xff]
  %v32 = vld [vmem:[%s0 + $0x68] sm:$0xf]
  %v33 = vld [vmem:[%s0 + $0x6c] sm:$0xff]
  %v34 = vld [vmem:[%s0 + $0x74] sm:$0xf]
  %v35 = vld [vmem:[%s0 + $0x78] sm:$0xff]
  %v36 = vld [vmem:[%s0 + $0x80] sm:$0xf]
  %v37 = vld [vmem:[%s0 + $0x84] sm:$0xff]
  %v38 = vld [vmem:[%s0 + $0x8c] sm:$0xf]
  %v39 = vld [vmem:[%s0 + $0x90] sm:$0xff]
  %v40 = vld [vmem:[%s0 + $0x98] sm:$0xf]
  %v41 = vld [vmem:[%s0 + $0x9c] sm:$0xff]
  %v42 = vld [vmem:[%s0 + $0xa4] sm:$0xf]
  %v43 = vld [vmem:[%s0 + $0xa8] sm:$0xff]
  %v44 = vld [vmem:[%s0 + $0xb0] sm:$0xf]
  %v45 = vld [vmem:[%s0 + $0xb4] sm:$0xff]
  %v46 = vld [vmem:[%s0 + $0xbc] sm:$0xf]
  %v47 = vld [vmem:[%s0 + $0xc0] sm:$0xff]
  %v48 = vld [vmem:[%s0 + $0xc8] sm:$0xf]
  %v49 = vld [vmem:[%s0 + $0xcc] sm:$0xff]
  %v50 = vld [vmem:[%s0 + $0xd4] sm:$0xf]
  %v51 = vld [vmem:[%s0 + $0xd8] sm:$0xff]
  %v52 = vld [vmem:[%s0 + $0xe0] sm:$0xf]
  %v53 = vld [vmem:[%s0 + $0xe4] sm:$0xff]
  %v54 = vld [vmem:[%s0 + $0xec] sm:$0xf]
  %v55 = vld [vmem:[%s0 + $0xf0] sm:$0xff]
  %v56 = vld [vmem:[%s0 + $0xf8] sm:$0xf]
  %v57 = vld [vmem:[%s0 + $0xfc] sm:$0xff]
  %v58 = vld [vmem:[%s0 + $0x104] sm:$0xf]
  %v59 = vld [vmem:[%s0 + $0x108] sm:$0xff]
  %v60 = vld [vmem:[%s0 + $0x110] sm:$0xf]
  %v61 = vld [vmem:[%s0 + $0x114] sm:$0xff]
  %v62 = vld [vmem:[%s0 + $0x11c] sm:$0xf]
  %v63 = vld [vmem:[%s0 + $0x120] sm:$0xff]
  %v64 = vld [vmem:[%s0 + $0x128] sm:$0xf]
  %v65 = vld [vmem:[%s0 + $0x12c] sm:$0xff]
  %v66 = vld [vmem:[%s0 + $0x134] sm:$0xf]
  %v67 = vld [vmem:[%s0 + $0x138] sm:$0xff]
  %v68 = vld [vmem:[%s0 + $0x140] sm:$0xf]
  %v69 = vld [vmem:[%s0 + $0x144] sm:$0xff]
  %v70 = vld [vmem:[%s0 + $0x14c] sm:$0xf]
  %v71 = vld [vmem:[%s0 + $0x150] sm:$0xff]
  %v72 = vld [vmem:[%s0 + $0x158] sm:$0xf]
  %v73 = vld [vmem:[%s0 + $0x15c] sm:$0xff]
  %v74 = vld [vmem:[%s0 + $0x164] sm:$0xf]
  %v75 = vld [vmem:[%s0 + $0x168] sm:$0xff]
  %v76 = vld [vmem:[%s0 + $0x170] sm:$0xf]
  %v77 = vld [vmem:[%s0 + $0x174] sm:$0xff]
  %v78 = vld [vmem:[%s0 + $0x17c] sm:$0xf]
  %v79 = vld [vmem:[%s0 + $0x180] sm:$0xff]
  %v80 = vld [vmem:[%s0 + $0x188] sm:$0xf]
  %v81 = vld [vmem:[%s0 + $0x18c] sm:$0xff]
  %v82 = vld [vmem:[%s0 + $0x194] sm:$0xf]
  %v83 = vld [vmem:[%s0 + $0x198] sm:$0xff]
  %v84 = vld [vmem:[%s0 + $0x1a0] sm:$0xf]
  %v85 = vld [vmem:[%s0 + $0x1a4] sm:$0xff]
  %v86 = vld [vmem:[%s0 + $0x1ac] sm:$0xf]
  %v87 = vld [vmem:[%s0 + $0x1b0] sm:$0xff]
  %v88 = vld [vmem:[%s0 + $0x1b8] sm:$0xf]
  %v89 = vld [vmem:[%s0 + $0x1bc] sm:$0xff]
  %v90 = vld [vmem:[%s0 + $0x1c4] sm:$0xf]
  %v91 = vld [vmem:[%s0 + $0x1c8] sm:$0xff]
  %v92 = vld [vmem:[%s0 + $0x1d0] sm:$0xf]
  %v93 = vld [vmem:[%s0 + $0x1d4] sm:$0xff]
  %v94 = vld [vmem:[%s0 + $0x1dc] sm:$0xf]
  %v95 = vld [vmem:[%s0 + $0x1e0] sm:$0xff]
  %v96 = vld [vmem:[%s0 + $0x1e8] sm:$0xf]
  %v97 = vld [vmem:[%s0 + $0x1ec] sm:$0xff]
  %v98 = vld [vmem:[%s0 + $0x1f4] sm:$0xf]
  %v99 = vld [vmem:[%s0 + $0x1f8] sm:$0xff]
  %v100 = vld [vmem:[%s0 + $0x200] sm:$0xf]
  %v101 = vld [vmem:[%s0 + $0x204] sm:$0xff]
  %v102 = vld [vmem:[%s0 + $0x20c] sm:$0xf]
  %v103 = vld [vmem:[%s0 + $0x210] sm:$0xff]
  %v104 = vld [vmem:[%s0 + $0x218] sm:$0xf]
  %v105 = vld [vmem:[%s0 + $0x21c] sm:$0xff]
  %v106 = vld [vmem:[%s0 + $0x224] sm:$0xf]
  %v107 = vld [vmem:[%s0 + $0x228] sm:$0xff]
  %v108 = vld [vmem:[%s0 + $0x230] sm:$0xf]
  %v109 = vld [vmem:[%s0 + $0x234] sm:$0xff]
  %v110 = vld [vmem:[%s0 + $0x23c] sm:$0xf]
  %v111 = vld [vmem:[%s0 + $0x240] sm:$0xff]
  %v112 = vld [vmem:[%s0 + $0x248] sm:$0xf]
  %v113 = vld [vmem:[%s0 + $0x24c] sm:$0xff]
  %v114 = vld [vmem:[%s0 + $0x254] sm:$0xf]
  %v115 = vld [vmem:[%s0 + $0x258] sm:$0xff]
  %v116 = vld [vmem:[%s0 + $0x260] sm:$0xf]
  %v117 = vld [vmem:[%s0 + $0x264] sm:$0xff]
  %v118 = vld [vmem:[%s0 + $0x26c] sm:$0xf]
  %v119 = vld [vmem:[%s0 + $0x270] sm:$0xff]
  %v120 = vld [vmem:[%s0 + $0x278] sm:$0xf]
  %v121 = vld [vmem:[%s0 + $0x27c] sm:$0xff]
  %v122 = vld [vmem:[%s0 + $0x284] sm:$0xf]
  %v123 = vld [vmem:[%s0 + $0x288] sm:$0xff]
  %v124 = vld [vmem:[%s0 + $0x290] sm:$0xf]
  %v125 = vld [vmem:[%s0 + $0x294] sm:$0xff]
  %v126 = vld [vmem:[%s0 + $0x29c] sm:$0xf]
  %v127 = vld [vmem:[%s0 + $0x2a0] sm:$0xff]
  %v128 = vld [vmem:[%s0 + $0x2a8] sm:$0xf]
  %v129 = vld [vmem:[%s0 + $0x2ac] sm:$0xff]
  %v130 = vld [vmem:[%s0 + $0x2b4] sm:$0xf]
  %v131 = vld [vmem:[%s0 + $0x2b8] sm:$0xff]
  %v132 = vld [vmem:[%s0 + $0x2c0] sm:$0xf]
  %v133 = vld [vmem:[%s0 + $0x2c4] sm:$0xff]
  %v134 = vld [vmem:[%s0 + $0x2cc] sm:$0xf]
  %v135 = vld [vmem:[%s0 + $0x2d0] sm:$0xff]
  %v136 = vld [vmem:[%s0 + $0x2d8] sm:$0xf]
  %v137 = vld [vmem:[%s0 + $0x2dc] sm:$0xff]
  %v138 = vld [vmem:[%s0 + $0x2e4] sm:$0xf]
  %v139 = vld [vmem:[%s0 + $0x2e8] sm:$0xff]
  %v140 = vld [vmem:[%s0 + $0x2f0] sm:$0xf]
  %v141 = vld [vmem:[%s0 + $0x2f4] sm:$0xff]
  %v142 = vld [vmem:[%s0 + $0x2fc] sm:$0xf]
  %v143 = vld [vmem:[%s1] sm:$0xf]
  %v144 = vld [vmem:[%s1 + $0x4] sm:$0xf]
  %v145 = vld [vmem:[%s1 + $0x8] sm:$0xf]
  %v146 = vld [vmem:[%s1 + $0xc] sm:$0xf]
  %v147 = vld [vmem:[%s1 + $0x10] sm:$0xf]
  %v148 = vld [vmem:[%s1 + $0x14] sm:$0xf]
  %v149 = vld [vmem:[%s1 + $0x18] sm:$0xf]
  %v150 = vld [vmem:[%s1 + $0x1c] sm:$0xf]
  %v151 = vld [vmem:[%s1 + $0x20] sm:$0xf]
  %v152 = vld [vmem:[%s1 + $0x24] sm:$0xf]
  %v153 = vld [vmem:[%s1 + $0x28] sm:$0xf]
  %v154 = vld [vmem:[%s1 + $0x2c] sm:$0xf]
  %v155 = vld [vmem:[%s1 + $0x30] sm:$0xf]
  %v156 = vld [vmem:[%s1 + $0x34] sm:$0xf]
  %v157 = vld [vmem:[%s1 + $0x38] sm:$0xf]
  %v158 = vld [vmem:[%s1 + $0x3c] sm:$0xf]
  %v159 = vld [vmem:[%s1 + $0x40] sm:$0xf]
  %v160 = vld [vmem:[%s1 + $0x44] sm:$0xf]
  %v161 = vld [vmem:[%s1 + $0x48] sm:$0xf]
  %v162 = vld [vmem:[%s1 + $0x4c] sm:$0xf]
  %v163 = vld [vmem:[%s1 + $0x50] sm:$0xf]
  %v164 = vld [vmem:[%s1 + $0x54] sm:$0xf]
  %v165 = vld [vmem:[%s1 + $0x58] sm:$0xf]
  %v166 = vld [vmem:[%s1 + $0x5c] sm:$0xf]
  %v167 = vld [vmem:[%s1 + $0x60] sm:$0xf]
  %v168 = vld [vmem:[%s1 + $0x64] sm:$0xf]
  %v169 = vld [vmem:[%s1 + $0x68] sm:$0xf]
  %v170 = vld [vmem:[%s1 + $0x6c] sm:$0xf]
  %v171 = vld [vmem:[%s1 + $0x70] sm:$0xf]
  %v172 = vld [vmem:[%s1 + $0x74] sm:$0xf]
  %v173 = vld [vmem:[%s1 + $0x78] sm:$0xf]
  %v174 = vld [vmem:[%s1 + $0x7c] sm:$0xf]
  %v175 = vld [vmem:[%s1 + $0x80] sm:$0xf]
  %v176 = vld [vmem:[%s1 + $0x84] sm:$0xf]
  %v177 = vld [vmem:[%s1 + $0x88] sm:$0xf]
  %v178 = vld [vmem:[%s1 + $0x8c] sm:$0xf]
  %v179 = vld [vmem:[%s2] sm:$0x1]
  %v181 = vlaneseq
  %v182 = vshrl.u32 %v181, 7
  %v183 = vsub.s32 0, %v182
  %v184 = vrot.slane %v179, %v183
  %v314 = vunpack.c.l.b16 %v15
  %v315 = vunpack.c.h.b16 %v15
  %v316 = vunpack.c.l.b16 %v16
  %v317 = vunpack.c.l.b16 %v17
  %v318 = vunpack.c.h.b16 %v17
  %v319 = vunpack.c.l.b16 %v18
  %v320 = vunpack.c.l.b16 %v19
  %v321 = vunpack.c.h.b16 %v19
  %v322 = vunpack.c.l.b16 %v20
  %v323 = vunpack.c.l.b16 %v21
  %v324 = vunpack.c.h.b16 %v21
  %v325 = vunpack.c.l.b16 %v22
  %v326 = vunpack.c.l.b16 %v23
  %v327 = vunpack.c.h.b16 %v23
  %v328 = vunpack.c.l.b16 %v24
  %v329 = vunpack.c.l.b16 %v25
  %v330 = vunpack.c.h.b16 %v25
  %v331 = vunpack.c.l.b16 %v26
  %v332 = vunpack.c.l.b16 %v27
  %v333 = vunpack.c.h.b16 %v27
  %v334 = vunpack.c.l.b16 %v28
  %v335 = vunpack.c.l.b16 %v29
  %v336 = vunpack.c.h.b16 %v29
  %v337 = vunpack.c.l.b16 %v30
  %v338 = vunpack.c.l.b16 %v31
  %v339 = vunpack.c.h.b16 %v31
  %v340 = vunpack.c.l.b16 %v32
  %v341 = vunpack.c.l.b16 %v33
  %v342 = vunpack.c.h.b16 %v33
  %v343 = vunpack.c.l.b16 %v34
  %v344 = vunpack.c.l.b16 %v35
  %v345 = vunpack.c.h.b16 %v35
  %v346 = vunpack.c.l.b16 %v36
  %v347 = vunpack.c.l.b16 %v37
  %v348 = vunpack.c.h.b16 %v37
  %v349 = vunpack.c.l.b16 %v38
  %v350 = vunpack.c.l.b16 %v39
  %v351 = vunpack.c.h.b16 %v39
  %v352 = vunpack.c.l.b16 %v40
  %v353 = vunpack.c.l.b16 %v41
  %v354 = vunpack.c.h.b16 %v41
  %v355 = vunpack.c.l.b16 %v42
  %v356 = vunpack.c.l.b16 %v43
  %v357 = vunpack.c.h.b16 %v43
  %v358 = vunpack.c.l.b16 %v44
  %v359 = vunpack.c.l.b16 %v45
  %v360 = vunpack.c.h.b16 %v45
  %v361 = vunpack.c.l.b16 %v46
  %v362 = vunpack.c.l.b16 %v47
  %v363 = vunpack.c.h.b16 %v47
  %v364 = vunpack.c.l.b16 %v48
  %v365 = vunpack.c.l.b16 %v49
  %v366 = vunpack.c.h.b16 %v49
  %v367 = vunpack.c.l.b16 %v50
  %v368 = vunpack.c.l.b16 %v51
  %v369 = vunpack.c.h.b16 %v51
  %v370 = vunpack.c.l.b16 %v52
  %v371 = vunpack.c.l.b16 %v53
  %v372 = vunpack.c.h.b16 %v53
  %v373 = vunpack.c.l.b16 %v54
  %v374 = vunpack.c.l.b16 %v55
  %v375 = vunpack.c.h.b16 %v55
  %v376 = vunpack.c.l.b16 %v56
  %v377 = vunpack.c.l.b16 %v57
  %v378 = vunpack.c.h.b16 %v57
  %v379 = vunpack.c.l.b16 %v58
  %v380 = vunpack.c.l.b16 %v59
  %v381 = vunpack.c.h.b16 %v59
  %v382 = vunpack.c.l.b16 %v60
  %v383 = vunpack.c.l.b16 %v61
  %v384 = vunpack.c.h.b16 %v61
  %v385 = vunpack.c.l.b16 %v62
  %v386 = vunpack.c.l.b16 %v63
  %v387 = vunpack.c.h.b16 %v63
  %v388 = vunpack.c.l.b16 %v64
  %v389 = vunpack.c.l.b16 %v65
  %v390 = vunpack.c.h.b16 %v65
  %v391 = vunpack.c.l.b16 %v66
  %v392 = vunpack.c.l.b16 %v67
  %v393 = vunpack.c.h.b16 %v67
  %v394 = vunpack.c.l.b16 %v68
  %v395 = vunpack.c.l.b16 %v69
  %v396 = vunpack.c.h.b16 %v69
  %v397 = vunpack.c.l.b16 %v70
  %v398 = vunpack.c.l.b16 %v71
  %v399 = vunpack.c.h.b16 %v71
  %v400 = vunpack.c.l.b16 %v72
  %v401 = vunpack.c.l.b16 %v73
  %v402 = vunpack.c.h.b16 %v73
  %v403 = vunpack.c.l.b16 %v74
  %v404 = vunpack.c.l.b16 %v75
  %v405 = vunpack.c.h.b16 %v75
  %v406 = vunpack.c.l.b16 %v76
  %v407 = vunpack.c.l.b16 %v77
  %v408 = vunpack.c.h.b16 %v77
  %v409 = vunpack.c.l.b16 %v78
  %v410 = vunpack.c.l.b16 %v79
  %v411 = vunpack.c.h.b16 %v79
  %v412 = vunpack.c.l.b16 %v80
  %v413 = vunpack.c.l.b16 %v81
  %v414 = vunpack.c.h.b16 %v81
  %v415 = vunpack.c.l.b16 %v82
  %v416 = vunpack.c.l.b16 %v83
  %v417 = vunpack.c.h.b16 %v83
  %v418 = vunpack.c.l.b16 %v84
  %v419 = vunpack.c.l.b16 %v85
  %v420 = vunpack.c.h.b16 %v85
  %v421 = vunpack.c.l.b16 %v86
  %v422 = vunpack.c.l.b16 %v87
  %v423 = vunpack.c.h.b16 %v87
  %v424 = vunpack.c.l.b16 %v88
  %v425 = vunpack.c.l.b16 %v89
  %v426 = vunpack.c.h.b16 %v89
  %v427 = vunpack.c.l.b16 %v90
  %v428 = vunpack.c.l.b16 %v91
  %v429 = vunpack.c.h.b16 %v91
  %v430 = vunpack.c.l.b16 %v92
  %v431 = vunpack.c.l.b16 %v93
  %v432 = vunpack.c.h.b16 %v93
  %v433 = vunpack.c.l.b16 %v94
  %v434 = vunpack.c.l.b16 %v95
  %v435 = vunpack.c.h.b16 %v95
  %v436 = vunpack.c.l.b16 %v96
  %v437 = vunpack.c.l.b16 %v97
  %v438 = vunpack.c.h.b16 %v97
  %v439 = vunpack.c.l.b16 %v98
  %v440 = vunpack.c.l.b16 %v99
  %v441 = vunpack.c.h.b16 %v99
  %v442 = vunpack.c.l.b16 %v100
  %v443 = vunpack.c.l.b16 %v101
  %v444 = vunpack.c.h.b16 %v101
  %v445 = vunpack.c.l.b16 %v102
  %v446 = vunpack.c.l.b16 %v103
  %v447 = vunpack.c.h.b16 %v103
  %v448 = vunpack.c.l.b16 %v104
  %v449 = vunpack.c.l.b16 %v105
  %v450 = vunpack.c.h.b16 %v105
  %v451 = vunpack.c.l.b16 %v106
  %v452 = vunpack.c.l.b16 %v107
  %v453 = vunpack.c.h.b16 %v107
  %v454 = vunpack.c.l.b16 %v108
  %v455 = vunpack.c.l.b16 %v109
  %v456 = vunpack.c.h.b16 %v109
  %v457 = vunpack.c.l.b16 %v110
  %v458 = vunpack.c.l.b16 %v111
  %v459 = vunpack.c.h.b16 %v111
  %v460 = vunpack.c.l.b16 %v112
  %v461 = vunpack.c.l.b16 %v113
  %v462 = vunpack.c.h.b16 %v113
  %v463 = vunpack.c.l.b16 %v114
  %v464 = vunpack.c.l.b16 %v115
  %v465 = vunpack.c.h.b16 %v115
  %v466 = vunpack.c.l.b16 %v116
  %v467 = vunpack.c.l.b16 %v117
  %v468 = vunpack.c.h.b16 %v117
  %v469 = vunpack.c.l.b16 %v118
  %v470 = vunpack.c.l.b16 %v119
  %v471 = vunpack.c.h.b16 %v119
  %v472 = vunpack.c.l.b16 %v120
  %v473 = vunpack.c.l.b16 %v121
  %v474 = vunpack.c.h.b16 %v121
  %v475 = vunpack.c.l.b16 %v122
  %v476 = vunpack.c.l.b16 %v123
  %v477 = vunpack.c.h.b16 %v123
  %v478 = vunpack.c.l.b16 %v124
  %v479 = vunpack.c.l.b16 %v125
  %v480 = vunpack.c.h.b16 %v125
  %v481 = vunpack.c.l.b16 %v126
  %v482 = vunpack.c.l.b16 %v127
  %v483 = vunpack.c.h.b16 %v127
  %v484 = vunpack.c.l.b16 %v128
  %v485 = vunpack.c.l.b16 %v129
  %v486 = vunpack.c.h.b16 %v129
  %v487 = vunpack.c.l.b16 %v130
  %v488 = vunpack.c.l.b16 %v131
  %v489 = vunpack.c.h.b16 %v131
  %v490 = vunpack.c.l.b16 %v132
  %v491 = vunpack.c.l.b16 %v133
  %v492 = vunpack.c.h.b16 %v133
  %v493 = vunpack.c.l.b16 %v134
  %v494 = vunpack.c.l.b16 %v135
  %v495 = vunpack.c.h.b16 %v135
  %v496 = vunpack.c.l.b16 %v136
  %v497 = vunpack.c.l.b16 %v137
  %v498 = vunpack.c.h.b16 %v137
  %v499 = vunpack.c.l.b16 %v138
  %v500 = vunpack.c.l.b16 %v139
  %v501 = vunpack.c.h.b16 %v139
  %v502 = vunpack.c.l.b16 %v140
  %v503 = vunpack.c.l.b16 %v141
  %v504 = vunpack.c.h.b16 %v141
  %v505 = vunpack.c.l.b16 %v142
  %v506 = vpack.c.b16 %v317, %v314
  %v507 = vpack.c.b16 %v318, %v315
  %v508 = vpack.c.b16 %v319, %v316
  %v509 = vpack.c.b16 %v323, %v320
  %v510 = vpack.c.b16 %v324, %v321
  %v511 = vpack.c.b16 %v325, %v322
  %v512 = vpack.c.b16 %v329, %v326
  %v513 = vpack.c.b16 %v330, %v327
  %v514 = vpack.c.b16 %v331, %v328
  %v515 = vpack.c.b16 %v335, %v332
  %v516 = vpack.c.b16 %v336, %v333
  %v517 = vpack.c.b16 %v337, %v334
  %v518 = vpack.c.b16 %v341, %v338
  %v519 = vpack.c.b16 %v342, %v339
  %v520 = vpack.c.b16 %v343, %v340
  %v521 = vpack.c.b16 %v347, %v344
  %v522 = vpack.c.b16 %v348, %v345
  %v523 = vpack.c.b16 %v349, %v346
  %v524 = vpack.c.b16 %v353, %v350
  %v525 = vpack.c.b16 %v354, %v351
  %v526 = vpack.c.b16 %v355, %v352
  %v527 = vpack.c.b16 %v359, %v356
  %v528 = vpack.c.b16 %v360, %v357
  %v529 = vpack.c.b16 %v361, %v358
  %v530 = vpack.c.b16 %v365, %v362
  %v531 = vpack.c.b16 %v366, %v363
  %v532 = vpack.c.b16 %v367, %v364
  %v533 = vpack.c.b16 %v371, %v368
  %v534 = vpack.c.b16 %v372, %v369
  %v535 = vpack.c.b16 %v373, %v370
  %v536 = vpack.c.b16 %v377, %v374
  %v537 = vpack.c.b16 %v378, %v375
  %v538 = vpack.c.b16 %v379, %v376
  %v539 = vpack.c.b16 %v383, %v380
  %v540 = vpack.c.b16 %v384, %v381
  %v541 = vpack.c.b16 %v385, %v382
  %v542 = vpack.c.b16 %v389, %v386
  %v543 = vpack.c.b16 %v390, %v387
  %v544 = vpack.c.b16 %v391, %v388
  %v545 = vpack.c.b16 %v395, %v392
  %v546 = vpack.c.b16 %v396, %v393
  %v547 = vpack.c.b16 %v397, %v394
  %v548 = vpack.c.b16 %v401, %v398
  %v549 = vpack.c.b16 %v402, %v399
  %v550 = vpack.c.b16 %v403, %v400
  %v551 = vpack.c.b16 %v407, %v404
  %v552 = vpack.c.b16 %v408, %v405
  %v553 = vpack.c.b16 %v409, %v406
  %v554 = vpack.c.b16 %v413, %v410
  %v555 = vpack.c.b16 %v414, %v411
  %v556 = vpack.c.b16 %v415, %v412
  %v557 = vpack.c.b16 %v419, %v416
  %v558 = vpack.c.b16 %v420, %v417
  %v559 = vpack.c.b16 %v421, %v418
  %v560 = vpack.c.b16 %v425, %v422
  %v561 = vpack.c.b16 %v426, %v423
  %v562 = vpack.c.b16 %v427, %v424
  %v563 = vpack.c.b16 %v431, %v428
  %v564 = vpack.c.b16 %v432, %v429
  %v565 = vpack.c.b16 %v433, %v430
  %v566 = vpack.c.b16 %v437, %v434
  %v567 = vpack.c.b16 %v438, %v435
  %v568 = vpack.c.b16 %v439, %v436
  %v569 = vpack.c.b16 %v443, %v440
  %v570 = vpack.c.b16 %v444, %v441
  %v571 = vpack.c.b16 %v445, %v442
  %v572 = vpack.c.b16 %v449, %v446
  %v573 = vpack.c.b16 %v450, %v447
  %v574 = vpack.c.b16 %v451, %v448
  %v575 = vpack.c.b16 %v455, %v452
  %v576 = vpack.c.b16 %v456, %v453
  %v577 = vpack.c.b16 %v457, %v454
  %v578 = vpack.c.b16 %v461, %v458
  %v579 = vpack.c.b16 %v462, %v459
  %v580 = vpack.c.b16 %v463, %v460
  %v581 = vpack.c.b16 %v467, %v464
  %v582 = vpack.c.b16 %v468, %v465
  %v583 = vpack.c.b16 %v469, %v466
  %v584 = vpack.c.b16 %v473, %v470
  %v585 = vpack.c.b16 %v474, %v471
  %v586 = vpack.c.b16 %v475, %v472
  %v587 = vpack.c.b16 %v479, %v476
  %v588 = vpack.c.b16 %v480, %v477
  %v589 = vpack.c.b16 %v481, %v478
  %v590 = vpack.c.b16 %v485, %v482
  %v591 = vpack.c.b16 %v486, %v483
  %v592 = vpack.c.b16 %v487, %v484
  %v593 = vpack.c.b16 %v491, %v488
  %v594 = vpack.c.b16 %v492, %v489
  %v595 = vpack.c.b16 %v493, %v490
  %v596 = vpack.c.b16 %v497, %v494
  %v597 = vpack.c.b16 %v498, %v495
  %v598 = vpack.c.b16 %v499, %v496
  %v599 = vpack.c.b16 %v503, %v500
  %v600 = vpack.c.b16 %v504, %v501
  %v601 = vpack.c.b16 %v505, %v502
  %v702 = vunpack.c.l.b16 %v143
  %v703 = vunpack.c.l.b16 %v144
  %v704 = vunpack.c.l.b16 %v145
  %v705 = vunpack.c.l.b16 %v146
  %v706 = vunpack.c.l.b16 %v147
  %v707 = vunpack.c.l.b16 %v148
  %v708 = vunpack.c.l.b16 %v149
  %v709 = vunpack.c.l.b16 %v150
  %v710 = vunpack.c.l.b16 %v151
  %v711 = vunpack.c.l.b16 %v152
  %v712 = vunpack.c.l.b16 %v153
  %v713 = vunpack.c.l.b16 %v154
  %v714 = vunpack.c.l.b16 %v155
  %v715 = vunpack.c.l.b16 %v156
  %v716 = vunpack.c.l.b16 %v157
  %v717 = vunpack.c.l.b16 %v158
  %v718 = vunpack.c.l.b16 %v159
  %v719 = vunpack.c.l.b16 %v160
  %v720 = vunpack.c.l.b16 %v161
  %v721 = vunpack.c.l.b16 %v162
  %v722 = vunpack.c.l.b16 %v163
  %v723 = vunpack.c.l.b16 %v164
  %v724 = vunpack.c.l.b16 %v165
  %v725 = vunpack.c.l.b16 %v166
  %v726 = vunpack.c.l.b16 %v167
  %v727 = vunpack.c.l.b16 %v168
  %v728 = vunpack.c.l.b16 %v169
  %v729 = vunpack.c.l.b16 %v170
  %v730 = vunpack.c.l.b16 %v171
  %v731 = vunpack.c.l.b16 %v172
  %v732 = vunpack.c.l.b16 %v173
  %v733 = vunpack.c.l.b16 %v174
  %v734 = vunpack.c.l.b16 %v175
  %v735 = vunpack.c.l.b16 %v176
  %v736 = vunpack.c.l.b16 %v177
  %v737 = vunpack.c.l.b16 %v178
  %v738 = vpack.c.b16 %v703, %v702
  %v739 = vpack.c.b16 %v705, %v704
  %v740 = vpack.c.b16 %v707, %v706
  %v741 = vpack.c.b16 %v709, %v708
  %v742 = vpack.c.b16 %v711, %v710
  %v743 = vpack.c.b16 %v713, %v712
  %v744 = vpack.c.b16 %v715, %v714
  %v745 = vpack.c.b16 %v717, %v716
  %v746 = vpack.c.b16 %v719, %v718
  %v747 = vpack.c.b16 %v721, %v720
  %v748 = vpack.c.b16 %v723, %v722
  %v749 = vpack.c.b16 %v725, %v724
  %v750 = vpack.c.b16 %v727, %v726
  %v751 = vpack.c.b16 %v729, %v728
  %v752 = vpack.c.b16 %v731, %v730
  %v753 = vpack.c.b16 %v733, %v732
  %v754 = vpack.c.b16 %v735, %v734
  %v755 = vpack.c.b16 %v737, %v736
  %vm774 = vcmask 261120
  %v776 = vsel %vm774, %v508, 0
  %v779 = vsel %vm774, %v511, 0
  %v782 = vsel %vm774, %v514, 0
  %v785 = vsel %vm774, %v517, 0
  %v788 = vsel %vm774, %v520, 0
  %v791 = vsel %vm774, %v523, 0
  %v794 = vsel %vm774, %v526, 0
  %v797 = vsel %vm774, %v529, 0
  %v800 = vsel %vm774, %v532, 0
  %v803 = vsel %vm774, %v535, 0
  %v806 = vsel %vm774, %v538, 0
  %v809 = vsel %vm774, %v541, 0
  %v812 = vsel %vm774, %v544, 0
  %v815 = vsel %vm774, %v547, 0
  %v818 = vsel %vm774, %v550, 0
  %v821 = vsel %vm774, %v553, 0
  %v824 = vsel %vm774, %v556, 0
  %v827 = vsel %vm774, %v559, 0
  %v830 = vsel %vm774, %v562, 0
  %v833 = vsel %vm774, %v565, 0
  %v836 = vsel %vm774, %v568, 0
  %v839 = vsel %vm774, %v571, 0
  %v842 = vsel %vm774, %v574, 0
  %v845 = vsel %vm774, %v577, 0
  %v848 = vsel %vm774, %v580, 0
  %v851 = vsel %vm774, %v583, 0
  %v854 = vsel %vm774, %v586, 0
  %v857 = vsel %vm774, %v589, 0
  %v860 = vsel %vm774, %v592, 0
  %v863 = vsel %vm774, %v595, 0
  %v866 = vsel %vm774, %v598, 0
  %v869 = vsel %vm774, %v601, 0
  %871 = vmatprep.subr.bf16.mxu0 0
  %872 = vmatpush1.bf16.msra.mxu0 %v745
  %873 = vmatprep.subr.bf16.mxu0 0
  %874 = vmatpush1.bf16.msra.mxu0 %v744
  %875 = vmatprep.subr.bf16.mxu0 0
  %876 = vmatpush1.bf16.msra.mxu0 %v743
  %877 = vmatprep.subr.bf16.mxu0 0
  %878 = vmatpush1.bf16.msra.mxu0 %v742
  %879 = vmatprep.subr.bf16.mxu0 0
  %880 = vmatpush1.bf16.msra.mxu0 %v741
  %881 = vmatprep.subr.bf16.mxu0 0
  %882 = vmatpush1.bf16.msra.mxu0 %v740
  %883 = vmatprep.subr.bf16.mxu0 0
  %884 = vmatpush1.bf16.msra.mxu0 %v739
  %885 = vmatprep.subr.bf16.mxu0 0
  %886 = vmatpush1.bf16.msra.mxu0 %v738
  %887 = vmatprep.subr.bf16.mxu0 0
  %888 = vmatpush2.bf16.msra.mxu0 %v753
  %889 = vmatprep.subr.bf16.mxu0 0
  %890 = vmatpush2.bf16.msra.mxu0 %v752
  %891 = vmatprep.subr.bf16.mxu0 0
  %892 = vmatpush2.bf16.msra.mxu0 %v751
  %893 = vmatprep.subr.bf16.mxu0 0
  %894 = vmatpush2.bf16.msra.mxu0 %v750
  %895 = vmatprep.subr.bf16.mxu0 0
  %896 = vmatpush2.bf16.msra.mxu0 %v749
  %897 = vmatprep.subr.bf16.mxu0 0
  %898 = vmatpush2.bf16.msra.mxu0 %v748
  %899 = vmatprep.subr.bf16.mxu0 0
  %900 = vmatpush2.bf16.msra.mxu0 %v747
  %901 = vmatprep.subr.bf16.mxu0 0
  %902 = vmatpush2.bf16.msra.mxu0 %v746
  %903 = vmatprep.mubr.bf16.mxu0 %v507
  %904 = vmatmul.mubr.bf16.gmra.mxu0 %v506
  %v905 = vpop.f32.mrf.mxu0
  %v906 = vadd.f32 %v184, %v905
  %v907 = vpop.f32.mrf.mxu0
  %v908 = vpop.f32.mrf.mxu0
  %v909 = vadd.f32 %v184, %v908
  %v910 = vpop.f32.mrf.mxu0
  %911 = vmatprep.mubr.bf16.mxu0 %v510
  %912 = vmatmul.mubr.bf16.gmra.mxu0 %v509
  %v913 = vpop.f32.mrf.mxu0
  %v914 = vadd.f32 %v184, %v913
  %v915 = vpop.f32.mrf.mxu0
  %v916 = vpop.f32.mrf.mxu0
  %v917 = vadd.f32 %v184, %v916
  %v918 = vpop.f32.mrf.mxu0
  %919 = vmatprep.mubr.bf16.mxu0 %v513
  %920 = vmatmul.mubr.bf16.gmra.mxu0 %v512
  %v921 = vpop.f32.mrf.mxu0
  %v922 = vadd.f32 %v184, %v921
  %v923 = vpop.f32.mrf.mxu0
  %v924 = vpop.f32.mrf.mxu0
  %v925 = vadd.f32 %v184, %v924
  %v926 = vpop.f32.mrf.mxu0
  %927 = vmatprep.mubr.bf16.mxu0 %v516
  %928 = vmatmul.mubr.bf16.gmra.mxu0 %v515
  %v929 = vpop.f32.mrf.mxu0
  %v930 = vadd.f32 %v184, %v929
  %v931 = vpop.f32.mrf.mxu0
  %v932 = vpop.f32.mrf.mxu0
  %v933 = vadd.f32 %v184, %v932
  %v934 = vpop.f32.mrf.mxu0
  %935 = vmatprep.mubr.bf16.mxu0 %v519
  %936 = vmatmul.mubr.bf16.gmra.mxu0 %v518
  %v937 = vpop.f32.mrf.mxu0
  %v938 = vadd.f32 %v184, %v937
  %v939 = vpop.f32.mrf.mxu0
  %v940 = vpop.f32.mrf.mxu0
  %v941 = vadd.f32 %v184, %v940
  %v942 = vpop.f32.mrf.mxu0
  %943 = vmatprep.mubr.bf16.mxu0 %v522
  %944 = vmatmul.mubr.bf16.gmra.mxu0 %v521
  %v945 = vpop.f32.mrf.mxu0
  %v946 = vadd.f32 %v184, %v945
  %v947 = vpop.f32.mrf.mxu0
  %v948 = vpop.f32.mrf.mxu0
  %v949 = vadd.f32 %v184, %v948
  %v950 = vpop.f32.mrf.mxu0
  %951 = vmatprep.mubr.bf16.mxu0 %v525
  %952 = vmatmul.mubr.bf16.gmra.mxu0 %v524
  %v953 = vpop.f32.mrf.mxu0
  %v954 = vadd.f32 %v184, %v953
  %v955 = vpop.f32.mrf.mxu0
  %v956 = vpop.f32.mrf.mxu0
  %v957 = vadd.f32 %v184, %v956
  %v958 = vpop.f32.mrf.mxu0
  %959 = vmatprep.mubr.bf16.mxu0 %v528
  %960 = vmatmul.mubr.bf16.gmra.mxu0 %v527
  %v961 = vpop.f32.mrf.mxu0
  %v962 = vadd.f32 %v184, %v961
  %v963 = vpop.f32.mrf.mxu0
  %v964 = vpop.f32.mrf.mxu0
  %v965 = vadd.f32 %v184, %v964
  %v966 = vpop.f32.mrf.mxu0
  %967 = vmatprep.mubr.bf16.mxu0 %v531
  %968 = vmatmul.mubr.bf16.gmra.mxu0 %v530
  %v969 = vpop.f32.mrf.mxu0
  %v970 = vadd.f32 %v184, %v969
  %v971 = vpop.f32.mrf.mxu0
  %v972 = vpop.f32.mrf.mxu0
  %v973 = vadd.f32 %v184, %v972
  %v974 = vpop.f32.mrf.mxu0
  %975 = vmatprep.mubr.bf16.mxu0 %v534
  %976 = vmatmul.mubr.bf16.gmra.mxu0 %v533
  %v977 = vpop.f32.mrf.mxu0
  %v978 = vadd.f32 %v184, %v977
  %v979 = vpop.f32.mrf.mxu0
  %v980 = vpop.f32.mrf.mxu0
  %v981 = vadd.f32 %v184, %v980
  %v982 = vpop.f32.mrf.mxu0
  %983 = vmatprep.mubr.bf16.mxu0 %v537
  %984 = vmatmul.mubr.bf16.gmra.mxu0 %v536
  %v985 = vpop.f32.mrf.mxu0
  %v986 = vadd.f32 %v184, %v985
  %v987 = vpop.f32.mrf.mxu0
  %v988 = vpop.f32.mrf.mxu0
  %v989 = vadd.f32 %v184, %v988
  %v990 = vpop.f32.mrf.mxu0
  %991 = vmatprep.mubr.bf16.mxu0 %v540
  %992 = vmatmul.mubr.bf16.gmra.mxu0 %v539
  %v993 = vpop.f32.mrf.mxu0
  %v994 = vadd.f32 %v184, %v993
  %v995 = vpop.f32.mrf.mxu0
  %v996 = vpop.f32.mrf.mxu0
  %v997 = vadd.f32 %v184, %v996
  %v998 = vpop.f32.mrf.mxu0
  %999 = vmatprep.mubr.bf16.mxu0 %v543
  %1000 = vmatmul.mubr.bf16.gmra.mxu0 %v542
  %v1001 = vpop.f32.mrf.mxu0
  %v1002 = vadd.f32 %v184, %v1001
  %v1003 = vpop.f32.mrf.mxu0
  %v1004 = vpop.f32.mrf.mxu0
  %v1005 = vadd.f32 %v184, %v1004
  %v1006 = vpop.f32.mrf.mxu0
  %1007 = vmatprep.mubr.bf16.mxu0 %v546
  %1008 = vmatmul.mubr.bf16.gmra.mxu0 %v545
  %v1009 = vpop.f32.mrf.mxu0
  %v1010 = vadd.f32 %v184, %v1009
  %v1011 = vpop.f32.mrf.mxu0
  %v1012 = vpop.f32.mrf.mxu0
  %v1013 = vadd.f32 %v184, %v1012
  %v1014 = vpop.f32.mrf.mxu0
  %1015 = vmatprep.mubr.bf16.mxu0 %v549
  %1016 = vmatmul.mubr.bf16.gmra.mxu0 %v548
  %v1017 = vpop.f32.mrf.mxu0
  %v1018 = vadd.f32 %v184, %v1017
  %v1019 = vpop.f32.mrf.mxu0
  %v1020 = vpop.f32.mrf.mxu0
  %v1021 = vadd.f32 %v184, %v1020
  %v1022 = vpop.f32.mrf.mxu0
  %1023 = vmatprep.mubr.bf16.mxu0 %v552
  %1024 = vmatmul.mubr.bf16.gmra.mxu0 %v551
  %v1025 = vpop.f32.mrf.mxu0
  %v1026 = vadd.f32 %v184, %v1025
  %v1027 = vpop.f32.mrf.mxu0
  %v1028 = vpop.f32.mrf.mxu0
  %v1029 = vadd.f32 %v184, %v1028
  %v1030 = vpop.f32.mrf.mxu0
  %1031 = vmatprep.mubr.bf16.mxu0 %v555
  %1032 = vmatmul.mubr.bf16.gmra.mxu0 %v554
  %v1033 = vpop.f32.mrf.mxu0
  %v1034 = vadd.f32 %v184, %v1033
  %v1035 = vpop.f32.mrf.mxu0
  %v1036 = vpop.f32.mrf.mxu0
  %v1037 = vadd.f32 %v184, %v1036
  %v1038 = vpop.f32.mrf.mxu0
  %1039 = vmatprep.mubr.bf16.mxu0 %v558
  %1040 = vmatmul.mubr.bf16.gmra.mxu0 %v557
  %v1041 = vpop.f32.mrf.mxu0
  %v1042 = vadd.f32 %v184, %v1041
  %v1043 = vpop.f32.mrf.mxu0
  %v1044 = vpop.f32.mrf.mxu0
  %v1045 = vadd.f32 %v184, %v1044
  %v1046 = vpop.f32.mrf.mxu0
  %1047 = vmatprep.mubr.bf16.mxu0 %v561
  %1048 = vmatmul.mubr.bf16.gmra.mxu0 %v560
  %v1049 = vpop.f32.mrf.mxu0
  %v1050 = vadd.f32 %v184, %v1049
  %v1051 = vpop.f32.mrf.mxu0
  %v1052 = vpop.f32.mrf.mxu0
  %v1053 = vadd.f32 %v184, %v1052
  %v1054 = vpop.f32.mrf.mxu0
  %1055 = vmatprep.mubr.bf16.mxu0 %v564
  %1056 = vmatmul.mubr.bf16.gmra.mxu0 %v563
  %v1057 = vpop.f32.mrf.mxu0
  %v1058 = vadd.f32 %v184, %v1057
  %v1059 = vpop.f32.mrf.mxu0
  %v1060 = vpop.f32.mrf.mxu0
  %v1061 = vadd.f32 %v184, %v1060
  %v1062 = vpop.f32.mrf.mxu0
  %1063 = vmatprep.mubr.bf16.mxu0 %v567
  %1064 = vmatmul.mubr.bf16.gmra.mxu0 %v566
  %v1065 = vpop.f32.mrf.mxu0
  %v1066 = vadd.f32 %v184, %v1065
  %v1067 = vpop.f32.mrf.mxu0
  %v1068 = vpop.f32.mrf.mxu0
  %v1069 = vadd.f32 %v184, %v1068
  %v1070 = vpop.f32.mrf.mxu0
  %1071 = vmatprep.mubr.bf16.mxu0 %v570
  %1072 = vmatmul.mubr.bf16.gmra.mxu0 %v569
  %v1073 = vpop.f32.mrf.mxu0
  %v1074 = vadd.f32 %v184, %v1073
  %v1075 = vpop.f32.mrf.mxu0
  %v1076 = vpop.f32.mrf.mxu0
  %v1077 = vadd.f32 %v184, %v1076
  %v1078 = vpop.f32.mrf.mxu0
  %1079 = vmatprep.mubr.bf16.mxu0 %v573
  %1080 = vmatmul.mubr.bf16.gmra.mxu0 %v572
  %v1081 = vpop.f32.mrf.mxu0
  %v1082 = vadd.f32 %v184, %v1081
  %v1083 = vpop.f32.mrf.mxu0
  %v1084 = vpop.f32.mrf.mxu0
  %v1085 = vadd.f32 %v184, %v1084
  %v1086 = vpop.f32.mrf.mxu0
  %1087 = vmatprep.mubr.bf16.mxu0 %v576
  %1088 = vmatmul.mubr.bf16.gmra.mxu0 %v575
  %v1089 = vpop.f32.mrf.mxu0
  %v1090 = vadd.f32 %v184, %v1089
  %v1091 = vpop.f32.mrf.mxu0
  %v1092 = vpop.f32.mrf.mxu0
  %v1093 = vadd.f32 %v184, %v1092
  %v1094 = vpop.f32.mrf.mxu0
  %1095 = vmatprep.mubr.bf16.mxu0 %v579
  %1096 = vmatmul.mubr.bf16.gmra.mxu0 %v578
  %v1097 = vpop.f32.mrf.mxu0
  %v1098 = vadd.f32 %v184, %v1097
  %v1099 = vpop.f32.mrf.mxu0
  %v1100 = vpop.f32.mrf.mxu0
  %v1101 = vadd.f32 %v184, %v1100
  %v1102 = vpop.f32.mrf.mxu0
  %1103 = vmatprep.mubr.bf16.mxu0 %v582
  %1104 = vmatmul.mubr.bf16.gmra.mxu0 %v581
  %v1105 = vpop.f32.mrf.mxu0
  %v1106 = vadd.f32 %v184, %v1105
  %v1107 = vpop.f32.mrf.mxu0
  %v1108 = vpop.f32.mrf.mxu0
  %v1109 = vadd.f32 %v184, %v1108
  %v1110 = vpop.f32.mrf.mxu0
  %1111 = vmatprep.mubr.bf16.mxu0 %v585
  %1112 = vmatmul.mubr.bf16.gmra.mxu0 %v584
  %v1113 = vpop.f32.mrf.mxu0
  %v1114 = vadd.f32 %v184, %v1113
  %v1115 = vpop.f32.mrf.mxu0
  %v1116 = vpop.f32.mrf.mxu0
  %v1117 = vadd.f32 %v184, %v1116
  %v1118 = vpop.f32.mrf.mxu0
  %1119 = vmatprep.mubr.bf16.mxu0 %v588
  %1120 = vmatmul.mubr.bf16.gmra.mxu0 %v587
  %v1121 = vpop.f32.mrf.mxu0
  %v1122 = vadd.f32 %v184, %v1121
  %v1123 = vpop.f32.mrf.mxu0
  %v1124 = vpop.f32.mrf.mxu0
  %v1125 = vadd.f32 %v184, %v1124
  %v1126 = vpop.f32.mrf.mxu0
  %1127 = vmatprep.mubr.bf16.mxu0 %v591
  %1128 = vmatmul.mubr.bf16.gmra.mxu0 %v590
  %v1129 = vpop.f32.mrf.mxu0
  %v1130 = vadd.f32 %v184, %v1129
  %v1131 = vpop.f32.mrf.mxu0
  %v1132 = vpop.f32.mrf.mxu0
  %v1133 = vadd.f32 %v184, %v1132
  %v1134 = vpop.f32.mrf.mxu0
  %1135 = vmatprep.mubr.bf16.mxu0 %v594
  %1136 = vmatmul.mubr.bf16.gmra.mxu0 %v593
  %v1137 = vpop.f32.mrf.mxu0
  %v1138 = vadd.f32 %v184, %v1137
  %v1139 = vpop.f32.mrf.mxu0
  %v1140 = vpop.f32.mrf.mxu0
  %v1141 = vadd.f32 %v184, %v1140
  %v1142 = vpop.f32.mrf.mxu0
  %1143 = vmatprep.mubr.bf16.mxu0 %v597
  %1144 = vmatmul.mubr.bf16.gmra.mxu0 %v596
  %v1145 = vpop.f32.mrf.mxu0
  %v1146 = vadd.f32 %v184, %v1145
  %v1147 = vpop.f32.mrf.mxu0
  %v1148 = vpop.f32.mrf.mxu0
  %v1149 = vadd.f32 %v184, %v1148
  %v1150 = vpop.f32.mrf.mxu0
  %1151 = vmatprep.mubr.bf16.mxu0 %v600
  %1152 = vmatmul.mubr.bf16.gmra.mxu0 %v599
  %v1153 = vpop.f32.mrf.mxu0
  %v1154 = vadd.f32 %v184, %v1153
  %v1155 = vpop.f32.mrf.mxu0
  %v1156 = vpop.f32.mrf.mxu0
  %v1157 = vadd.f32 %v184, %v1156
  %v1158 = vpop.f32.mrf.mxu0
  %1159 = vdwg.mxu0
  %1160 = vmatprep.subr.bf16.mxu0 0
  %1161 = vmatpush1.bf16.msra.mxu0 0
  %1162 = vmatprep.subr.bf16.mxu0 0
  %1163 = vmatpush1.bf16.msra.mxu0 0
  %1164 = vmatprep.subr.bf16.mxu0 0
  %1165 = vmatpush1.bf16.msra.mxu0 0
  %1166 = vmatprep.subr.bf16.mxu0 0
  %1167 = vmatpush1.bf16.msra.mxu0 0
  %1168 = vmatprep.subr.bf16.mxu0 0
  %1169 = vmatpush1.bf16.msra.mxu0 0
  %1170 = vmatprep.subr.bf16.mxu0 0
  %1171 = vmatpush1.bf16.msra.mxu0 0
  %1172 = vmatprep.subr.bf16.mxu0 0
  %1173 = vmatpush1.bf16.msra.mxu0 %v755
  %1174 = vmatprep.subr.bf16.mxu0 0
  %1175 = vmatpush1.bf16.msra.mxu0 %v754
  %1176 = vmatprep.subr.bf16.mxu0 0
  %1177 = vmatpush2.bf16.msra.mxu0 0
  %1178 = vmatprep.subr.bf16.mxu0 0
  %1179 = vmatpush2.bf16.msra.mxu0 0
  %1180 = vmatprep.subr.bf16.mxu0 0
  %1181 = vmatpush2.bf16.msra.mxu0 0
  %1182 = vmatprep.subr.bf16.mxu0 0
  %1183 = vmatpush2.bf16.msra.mxu0 0
  %1184 = vmatprep.subr.bf16.mxu0 0
  %1185 = vmatpush2.bf16.msra.mxu0 0
  %1186 = vmatprep.subr.bf16.mxu0 0
  %1187 = vmatpush2.bf16.msra.mxu0 0
  %1188 = vmatprep.subr.bf16.mxu0 0
  %1189 = vmatpush2.bf16.msra.mxu0 0
  %1190 = vmatprep.subr.bf16.mxu0 0
  %1191 = vmatpush2.bf16.msra.mxu0 0
  %1192 = vmatprep.mubr.bf16.mxu0 0
  %1193 = vmatmul.mubr.bf16.gmra.mxu0 %v776
  %v1194 = vpop.f32.mrf.mxu0
  %v1195 = vadd.f32 %v906, %v1194
  %v1196 = vpop.f32.mrf.mxu0
  %v1197 = vpop.f32.mrf.mxu0
  %v1198 = vadd.f32 %v909, %v1197
  %v1199 = vpop.f32.mrf.mxu0
  %1200 = vmatprep.mubr.bf16.mxu0 0
  %1201 = vmatmul.mubr.bf16.gmra.mxu0 %v779
  %v1202 = vpop.f32.mrf.mxu0
  %v1203 = vadd.f32 %v914, %v1202
  %v1204 = vpop.f32.mrf.mxu0
  %v1205 = vpop.f32.mrf.mxu0
  %v1206 = vadd.f32 %v917, %v1205
  %v1207 = vpop.f32.mrf.mxu0
  %1208 = vmatprep.mubr.bf16.mxu0 0
  %1209 = vmatmul.mubr.bf16.gmra.mxu0 %v782
  %v1210 = vpop.f32.mrf.mxu0
  %v1211 = vadd.f32 %v922, %v1210
  %v1212 = vpop.f32.mrf.mxu0
  %v1213 = vpop.f32.mrf.mxu0
  %v1214 = vadd.f32 %v925, %v1213
  %v1215 = vpop.f32.mrf.mxu0
  %1216 = vmatprep.mubr.bf16.mxu0 0
  %1217 = vmatmul.mubr.bf16.gmra.mxu0 %v785
  %v1218 = vpop.f32.mrf.mxu0
  %v1219 = vadd.f32 %v930, %v1218
  %v1220 = vpop.f32.mrf.mxu0
  %v1221 = vpop.f32.mrf.mxu0
  %v1222 = vadd.f32 %v933, %v1221
  %v1223 = vpop.f32.mrf.mxu0
  %1224 = vmatprep.mubr.bf16.mxu0 0
  %1225 = vmatmul.mubr.bf16.gmra.mxu0 %v788
  %v1226 = vpop.f32.mrf.mxu0
  %v1227 = vadd.f32 %v938, %v1226
  %v1228 = vpop.f32.mrf.mxu0
  %v1229 = vpop.f32.mrf.mxu0
  %v1230 = vadd.f32 %v941, %v1229
  %v1231 = vpop.f32.mrf.mxu0
  %1232 = vmatprep.mubr.bf16.mxu0 0
  %1233 = vmatmul.mubr.bf16.gmra.mxu0 %v791
  %v1234 = vpop.f32.mrf.mxu0
  %v1235 = vadd.f32 %v946, %v1234
  %v1236 = vpop.f32.mrf.mxu0
  %v1237 = vpop.f32.mrf.mxu0
  %v1238 = vadd.f32 %v949, %v1237
  %v1239 = vpop.f32.mrf.mxu0
  %1240 = vmatprep.mubr.bf16.mxu0 0
  %1241 = vmatmul.mubr.bf16.gmra.mxu0 %v794
  %v1242 = vpop.f32.mrf.mxu0
  %v1243 = vadd.f32 %v954, %v1242
  %v1244 = vpop.f32.mrf.mxu0
  %v1245 = vpop.f32.mrf.mxu0
  %v1246 = vadd.f32 %v957, %v1245
  %v1247 = vpop.f32.mrf.mxu0
  %1248 = vmatprep.mubr.bf16.mxu0 0
  %1249 = vmatmul.mubr.bf16.gmra.mxu0 %v797
  %v1250 = vpop.f32.mrf.mxu0
  %v1251 = vadd.f32 %v962, %v1250
  %v1252 = vpop.f32.mrf.mxu0
  %v1253 = vpop.f32.mrf.mxu0
  %v1254 = vadd.f32 %v965, %v1253
  %v1255 = vpop.f32.mrf.mxu0
  %1256 = vmatprep.mubr.bf16.mxu0 0
  %1257 = vmatmul.mubr.bf16.gmra.mxu0 %v800
  %v1258 = vpop.f32.mrf.mxu0
  %v1259 = vadd.f32 %v970, %v1258
  %v1260 = vpop.f32.mrf.mxu0
  %v1261 = vpop.f32.mrf.mxu0
  %v1262 = vadd.f32 %v973, %v1261
  %v1263 = vpop.f32.mrf.mxu0
  %1264 = vmatprep.mubr.bf16.mxu0 0
  %1265 = vmatmul.mubr.bf16.gmra.mxu0 %v803
  %v1266 = vpop.f32.mrf.mxu0
  %v1267 = vadd.f32 %v978, %v1266
  %v1268 = vpop.f32.mrf.mxu0
  %v1269 = vpop.f32.mrf.mxu0
  %v1270 = vadd.f32 %v981, %v1269
  %v1271 = vpop.f32.mrf.mxu0
  %1272 = vmatprep.mubr.bf16.mxu0 0
  %1273 = vmatmul.mubr.bf16.gmra.mxu0 %v806
  %v1274 = vpop.f32.mrf.mxu0
  %v1275 = vadd.f32 %v986, %v1274
  %v1276 = vpop.f32.mrf.mxu0
  %v1277 = vpop.f32.mrf.mxu0
  %v1278 = vadd.f32 %v989, %v1277
  %v1279 = vpop.f32.mrf.mxu0
  %1280 = vmatprep.mubr.bf16.mxu0 0
  %1281 = vmatmul.mubr.bf16.gmra.mxu0 %v809
  %v1282 = vpop.f32.mrf.mxu0
  %v1283 = vadd.f32 %v994, %v1282
  %v1284 = vpop.f32.mrf.mxu0
  %v1285 = vpop.f32.mrf.mxu0
  %v1286 = vadd.f32 %v997, %v1285
  %v1287 = vpop.f32.mrf.mxu0
  %1288 = vmatprep.mubr.bf16.mxu0 0
  %1289 = vmatmul.mubr.bf16.gmra.mxu0 %v812
  %v1290 = vpop.f32.mrf.mxu0
  %v1291 = vadd.f32 %v1002, %v1290
  %v1292 = vpop.f32.mrf.mxu0
  %v1293 = vpop.f32.mrf.mxu0
  %v1294 = vadd.f32 %v1005, %v1293
  %v1295 = vpop.f32.mrf.mxu0
  %1296 = vmatprep.mubr.bf16.mxu0 0
  %1297 = vmatmul.mubr.bf16.gmra.mxu0 %v815
  %v1298 = vpop.f32.mrf.mxu0
  %v1299 = vadd.f32 %v1010, %v1298
  %v1300 = vpop.f32.mrf.mxu0
  %v1301 = vpop.f32.mrf.mxu0
  %v1302 = vadd.f32 %v1013, %v1301
  %v1303 = vpop.f32.mrf.mxu0
  %1304 = vmatprep.mubr.bf16.mxu0 0
  %1305 = vmatmul.mubr.bf16.gmra.mxu0 %v818
  %v1306 = vpop.f32.mrf.mxu0
  %v1307 = vadd.f32 %v1018, %v1306
  %v1308 = vpop.f32.mrf.mxu0
  %v1309 = vpop.f32.mrf.mxu0
  %v1310 = vadd.f32 %v1021, %v1309
  %v1311 = vpop.f32.mrf.mxu0
  %1312 = vmatprep.mubr.bf16.mxu0 0
  %1313 = vmatmul.mubr.bf16.gmra.mxu0 %v821
  %v1314 = vpop.f32.mrf.mxu0
  %v1315 = vadd.f32 %v1026, %v1314
  %v1316 = vpop.f32.mrf.mxu0
  %v1317 = vpop.f32.mrf.mxu0
  %v1318 = vadd.f32 %v1029, %v1317
  %v1319 = vpop.f32.mrf.mxu0
  %1320 = vmatprep.mubr.bf16.mxu0 0
  %1321 = vmatmul.mubr.bf16.gmra.mxu0 %v824
  %v1322 = vpop.f32.mrf.mxu0
  %v1323 = vadd.f32 %v1034, %v1322
  %v1324 = vpop.f32.mrf.mxu0
  %v1325 = vpop.f32.mrf.mxu0
  %v1326 = vadd.f32 %v1037, %v1325
  %v1327 = vpop.f32.mrf.mxu0
  %1328 = vmatprep.mubr.bf16.mxu0 0
  %1329 = vmatmul.mubr.bf16.gmra.mxu0 %v827
  %v1330 = vpop.f32.mrf.mxu0
  %v1331 = vadd.f32 %v1042, %v1330
  %v1332 = vpop.f32.mrf.mxu0
  %v1333 = vpop.f32.mrf.mxu0
  %v1334 = vadd.f32 %v1045, %v1333
  %v1335 = vpop.f32.mrf.mxu0
  %1336 = vmatprep.mubr.bf16.mxu0 0
  %1337 = vmatmul.mubr.bf16.gmra.mxu0 %v830
  %v1338 = vpop.f32.mrf.mxu0
  %v1339 = vadd.f32 %v1050, %v1338
  %v1340 = vpop.f32.mrf.mxu0
  %v1341 = vpop.f32.mrf.mxu0
  %v1342 = vadd.f32 %v1053, %v1341
  %v1343 = vpop.f32.mrf.mxu0
  %1344 = vmatprep.mubr.bf16.mxu0 0
  %1345 = vmatmul.mubr.bf16.gmra.mxu0 %v833
  %v1346 = vpop.f32.mrf.mxu0
  %v1347 = vadd.f32 %v1058, %v1346
  %v1348 = vpop.f32.mrf.mxu0
  %v1349 = vpop.f32.mrf.mxu0
  %v1350 = vadd.f32 %v1061, %v1349
  %v1351 = vpop.f32.mrf.mxu0
  %1352 = vmatprep.mubr.bf16.mxu0 0
  %1353 = vmatmul.mubr.bf16.gmra.mxu0 %v836
  %v1354 = vpop.f32.mrf.mxu0
  %v1355 = vadd.f32 %v1066, %v1354
  %v1356 = vpop.f32.mrf.mxu0
  %v1357 = vpop.f32.mrf.mxu0
  %v1358 = vadd.f32 %v1069, %v1357
  %v1359 = vpop.f32.mrf.mxu0
  %1360 = vmatprep.mubr.bf16.mxu0 0
  %1361 = vmatmul.mubr.bf16.gmra.mxu0 %v839
  %v1362 = vpop.f32.mrf.mxu0
  %v1363 = vadd.f32 %v1074, %v1362
  %v1364 = vpop.f32.mrf.mxu0
  %v1365 = vpop.f32.mrf.mxu0
  %v1366 = vadd.f32 %v1077, %v1365
  %v1367 = vpop.f32.mrf.mxu0
  %1368 = vmatprep.mubr.bf16.mxu0 0
  %1369 = vmatmul.mubr.bf16.gmra.mxu0 %v842
  %v1370 = vpop.f32.mrf.mxu0
  %v1371 = vadd.f32 %v1082, %v1370
  %v1372 = vpop.f32.mrf.mxu0
  %v1373 = vpop.f32.mrf.mxu0
  %v1374 = vadd.f32 %v1085, %v1373
  %v1375 = vpop.f32.mrf.mxu0
  %1376 = vmatprep.mubr.bf16.mxu0 0
  %1377 = vmatmul.mubr.bf16.gmra.mxu0 %v845
  %v1378 = vpop.f32.mrf.mxu0
  %v1379 = vadd.f32 %v1090, %v1378
  %v1380 = vpop.f32.mrf.mxu0
  %v1381 = vpop.f32.mrf.mxu0
  %v1382 = vadd.f32 %v1093, %v1381
  %v1383 = vpop.f32.mrf.mxu0
  %1384 = vmatprep.mubr.bf16.mxu0 0
  %1385 = vmatmul.mubr.bf16.gmra.mxu0 %v848
  %v1386 = vpop.f32.mrf.mxu0
  %v1387 = vadd.f32 %v1098, %v1386
  %v1388 = vpop.f32.mrf.mxu0
  %v1389 = vpop.f32.mrf.mxu0
  %v1390 = vadd.f32 %v1101, %v1389
  %v1391 = vpop.f32.mrf.mxu0
  %1392 = vmatprep.mubr.bf16.mxu0 0
  %1393 = vmatmul.mubr.bf16.gmra.mxu0 %v851
  %v1394 = vpop.f32.mrf.mxu0
  %v1395 = vadd.f32 %v1106, %v1394
  %v1396 = vpop.f32.mrf.mxu0
  %v1397 = vpop.f32.mrf.mxu0
  %v1398 = vadd.f32 %v1109, %v1397
  %v1399 = vpop.f32.mrf.mxu0
  %1400 = vmatprep.mubr.bf16.mxu0 0
  %1401 = vmatmul.mubr.bf16.gmra.mxu0 %v854
  %v1402 = vpop.f32.mrf.mxu0
  %v1403 = vadd.f32 %v1114, %v1402
  %v1404 = vpop.f32.mrf.mxu0
  %v1405 = vpop.f32.mrf.mxu0
  %v1406 = vadd.f32 %v1117, %v1405
  %v1407 = vpop.f32.mrf.mxu0
  %1408 = vmatprep.mubr.bf16.mxu0 0
  %1409 = vmatmul.mubr.bf16.gmra.mxu0 %v857
  %v1410 = vpop.f32.mrf.mxu0
  %v1411 = vadd.f32 %v1122, %v1410
  %v1412 = vpop.f32.mrf.mxu0
  %v1413 = vpop.f32.mrf.mxu0
  %v1414 = vadd.f32 %v1125, %v1413
  %v1415 = vpop.f32.mrf.mxu0
  %1416 = vmatprep.mubr.bf16.mxu0 0
  %1417 = vmatmul.mubr.bf16.gmra.mxu0 %v860
  %v1418 = vpop.f32.mrf.mxu0
  %v1419 = vadd.f32 %v1130, %v1418
  %v1420 = vpop.f32.mrf.mxu0
  %v1421 = vpop.f32.mrf.mxu0
  %v1422 = vadd.f32 %v1133, %v1421
  %v1423 = vpop.f32.mrf.mxu0
  %1424 = vmatprep.mubr.bf16.mxu0 0
  %1425 = vmatmul.mubr.bf16.gmra.mxu0 %v863
  %v1426 = vpop.f32.mrf.mxu0
  %v1427 = vadd.f32 %v1138, %v1426
  %v1428 = vpop.f32.mrf.mxu0
  %v1429 = vpop.f32.mrf.mxu0
  %v1430 = vadd.f32 %v1141, %v1429
  %v1431 = vpop.f32.mrf.mxu0
  %1432 = vmatprep.mubr.bf16.mxu0 0
  %1433 = vmatmul.mubr.bf16.gmra.mxu0 %v866
  %v1434 = vpop.f32.mrf.mxu0
  %v1435 = vadd.f32 %v1146, %v1434
  %v1436 = vpop.f32.mrf.mxu0
  %v1437 = vpop.f32.mrf.mxu0
  %v1438 = vadd.f32 %v1149, %v1437
  %v1439 = vpop.f32.mrf.mxu0
  %1440 = vmatprep.mubr.bf16.mxu0 0
  %1441 = vmatmul.mubr.bf16.gmra.mxu0 %v869
  %v1442 = vpop.f32.mrf.mxu0
  %v1443 = vadd.f32 %v1154, %v1442
  %v1444 = vpop.f32.mrf.mxu0
  %v1445 = vpop.f32.mrf.mxu0
  %v1446 = vadd.f32 %v1157, %v1445
  %v1447 = vpop.f32.mrf.mxu0
  %1448 = vdwg.mxu0
  %v1449 = vmax.f32 %v1195, 0.0
  %v1450 = vmax.f32 %v1198, 0.0
  %v1451 = vmax.f32 %v1203, 0.0
  %v1452 = vmax.f32 %v1206, 0.0
  %v1453 = vmax.f32 %v1211, 0.0
  %v1454 = vmax.f32 %v1214, 0.0
  %v1455 = vmax.f32 %v1219, 0.0
  %v1456 = vmax.f32 %v1222, 0.0
  %v1457 = vmax.f32 %v1227, 0.0
  %v1458 = vmax.f32 %v1230, 0.0
  %v1459 = vmax.f32 %v1235, 0.0
  %v1460 = vmax.f32 %v1238, 0.0
  %v1461 = vmax.f32 %v1243, 0.0
  %v1462 = vmax.f32 %v1246, 0.0
  %v1463 = vmax.f32 %v1251, 0.0
  %v1464 = vmax.f32 %v1254, 0.0
  %v1465 = vmax.f32 %v1259, 0.0
  %v1466 = vmax.f32 %v1262, 0.0
  %v1467 = vmax.f32 %v1267, 0.0
  %v1468 = vmax.f32 %v1270, 0.0
  %v1469 = vmax.f32 %v1275, 0.0
  %v1470 = vmax.f32 %v1278, 0.0
  %v1471 = vmax.f32 %v1283, 0.0
  %v1472 = vmax.f32 %v1286, 0.0
  %v1473 = vmax.f32 %v1291, 0.0
  %v1474 = vmax.f32 %v1294, 0.0
  %v1475 = vmax.f32 %v1299, 0.0
  %v1476 = vmax.f32 %v1302, 0.0
  %v1477 = vmax.f32 %v1307, 0.0
  %v1478 = vmax.f32 %v1310, 0.0
  %v1479 = vmax.f32 %v1315, 0.0
  %v1480 = vmax.f32 %v1318, 0.0
  %v1481 = vmax.f32 %v1323, 0.0
  %v1482 = vmax.f32 %v1326, 0.0
  %v1483 = vmax.f32 %v1331, 0.0
  %v1484 = vmax.f32 %v1334, 0.0
  %v1485 = vmax.f32 %v1339, 0.0
  %v1486 = vmax.f32 %v1342, 0.0
  %v1487 = vmax.f32 %v1347, 0.0
  %v1488 = vmax.f32 %v1350, 0.0
  %v1489 = vmax.f32 %v1355, 0.0
  %v1490 = vmax.f32 %v1358, 0.0
  %v1491 = vmax.f32 %v1363, 0.0
  %v1492 = vmax.f32 %v1366, 0.0
  %v1493 = vmax.f32 %v1371, 0.0
  %v1494 = vmax.f32 %v1374, 0.0
  %v1495 = vmax.f32 %v1379, 0.0
  %v1496 = vmax.f32 %v1382, 0.0
  %v1497 = vmax.f32 %v1387, 0.0
  %v1498 = vmax.f32 %v1390, 0.0
  %v1499 = vmax.f32 %v1395, 0.0
  %v1500 = vmax.f32 %v1398, 0.0
  %v1501 = vmax.f32 %v1403, 0.0
  %v1502 = vmax.f32 %v1406, 0.0
  %v1503 = vmax.f32 %v1411, 0.0
  %v1504 = vmax.f32 %v1414, 0.0
  %v1505 = vmax.f32 %v1419, 0.0
  %v1506 = vmax.f32 %v1422, 0.0
  %v1507 = vmax.f32 %v1427, 0.0
  %v1508 = vmax.f32 %v1430, 0.0
  %v1509 = vmax.f32 %v1435, 0.0
  %v1510 = vmax.f32 %v1438, 0.0
  %v1511 = vmax.f32 %v1443, 0.0
  %v1512 = vmax.f32 %v1446, 0.0
  %v1513 = vpack.c.bf16 %v1450, %v1449
  %v1514 = vpack.c.bf16 %v1452, %v1451
  %v1515 = vpack.c.bf16 %v1454, %v1453
  %v1516 = vpack.c.bf16 %v1456, %v1455
  %v1517 = vpack.c.bf16 %v1458, %v1457
  %v1518 = vpack.c.bf16 %v1460, %v1459
  %v1519 = vpack.c.bf16 %v1462, %v1461
  %v1520 = vpack.c.bf16 %v1464, %v1463
  %v1521 = vpack.c.bf16 %v1466, %v1465
  %v1522 = vpack.c.bf16 %v1468, %v1467
  %v1523 = vpack.c.bf16 %v1470, %v1469
  %v1524 = vpack.c.bf16 %v1472, %v1471
  %v1525 = vpack.c.bf16 %v1474, %v1473
  %v1526 = vpack.c.bf16 %v1476, %v1475
  %v1527 = vpack.c.bf16 %v1478, %v1477
  %v1528 = vpack.c.bf16 %v1480, %v1479
  %v1529 = vpack.c.bf16 %v1482, %v1481
  %v1530 = vpack.c.bf16 %v1484, %v1483
  %v1531 = vpack.c.bf16 %v1486, %v1485
  %v1532 = vpack.c.bf16 %v1488, %v1487
  %v1533 = vpack.c.bf16 %v1490, %v1489
  %v1534 = vpack.c.bf16 %v1492, %v1491
  %v1535 = vpack.c.bf16 %v1494, %v1493
  %v1536 = vpack.c.bf16 %v1496, %v1495
  %v1537 = vpack.c.bf16 %v1498, %v1497
  %v1538 = vpack.c.bf16 %v1500, %v1499
  %v1539 = vpack.c.bf16 %v1502, %v1501
  %v1540 = vpack.c.bf16 %v1504, %v1503
  %v1541 = vpack.c.bf16 %v1506, %v1505
  %v1542 = vpack.c.bf16 %v1508, %v1507
  %v1543 = vpack.c.bf16 %v1510, %v1509
  %v1544 = vpack.c.bf16 %v1512, %v1511
  %v1577 = vunpack.c.l.b16 %v1513
  %v1578 = vunpack.c.h.b16 %v1513
  %v1579 = vunpack.c.l.b16 %v1514
  %v1580 = vunpack.c.h.b16 %v1514
  %v1581 = vunpack.c.l.b16 %v1515
  %v1582 = vunpack.c.h.b16 %v1515
  %v1583 = vunpack.c.l.b16 %v1516
  %v1584 = vunpack.c.h.b16 %v1516
  %v1585 = vunpack.c.l.b16 %v1517
  %v1586 = vunpack.c.h.b16 %v1517
  %v1587 = vunpack.c.l.b16 %v1518
  %v1588 = vunpack.c.h.b16 %v1518
  %v1589 = vunpack.c.l.b16 %v1519
  %v1590 = vunpack.c.h.b16 %v1519
  %v1591 = vunpack.c.l.b16 %v1520
  %v1592 = vunpack.c.h.b16 %v1520
  %v1593 = vunpack.c.l.b16 %v1521
  %v1594 = vunpack.c.h.b16 %v1521
  %v1595 = vunpack.c.l.b16 %v1522
  %v1596 = vunpack.c.h.b16 %v1522
  %v1597 = vunpack.c.l.b16 %v1523
  %v1598 = vunpack.c.h.b16 %v1523
  %v1599 = vunpack.c.l.b16 %v1524
  %v1600 = vunpack.c.h.b16 %v1524
  %v1601 = vunpack.c.l.b16 %v1525
  %v1602 = vunpack.c.h.b16 %v1525
  %v1603 = vunpack.c.l.b16 %v1526
  %v1604 = vunpack.c.h.b16 %v1526
  %v1605 = vunpack.c.l.b16 %v1527
  %v1606 = vunpack.c.h.b16 %v1527
  %v1607 = vunpack.c.l.b16 %v1528
  %v1608 = vunpack.c.h.b16 %v1528
  %v1609 = vunpack.c.l.b16 %v1529
  %v1610 = vunpack.c.h.b16 %v1529
  %v1611 = vunpack.c.l.b16 %v1530
  %v1612 = vunpack.c.h.b16 %v1530
  %v1613 = vunpack.c.l.b16 %v1531
  %v1614 = vunpack.c.h.b16 %v1531
  %v1615 = vunpack.c.l.b16 %v1532
  %v1616 = vunpack.c.h.b16 %v1532
  %v1617 = vunpack.c.l.b16 %v1533
  %v1618 = vunpack.c.h.b16 %v1533
  %v1619 = vunpack.c.l.b16 %v1534
  %v1620 = vunpack.c.h.b16 %v1534
  %v1621 = vunpack.c.l.b16 %v1535
  %v1622 = vunpack.c.h.b16 %v1535
  %v1623 = vunpack.c.l.b16 %v1536
  %v1624 = vunpack.c.h.b16 %v1536
  %v1625 = vunpack.c.l.b16 %v1537
  %v1626 = vunpack.c.h.b16 %v1537
  %v1627 = vunpack.c.l.b16 %v1538
  %v1628 = vunpack.c.h.b16 %v1538
  %v1629 = vunpack.c.l.b16 %v1539
  %v1630 = vunpack.c.h.b16 %v1539
  %v1631 = vunpack.c.l.b16 %v1540
  %v1632 = vunpack.c.h.b16 %v1540
  %v1633 = vunpack.c.l.b16 %v1541
  %v1634 = vunpack.c.h.b16 %v1541
  %v1635 = vunpack.c.l.b16 %v1542
  %v1636 = vunpack.c.h.b16 %v1542
  %v1637 = vunpack.c.l.b16 %v1543
  %v1638 = vunpack.c.h.b16 %v1543
  %v1639 = vunpack.c.l.b16 %v1544
  %v1640 = vunpack.c.h.b16 %v1544
  %v1641 = vpack.c.b16 %v1577, %v1577
  %v1642 = vpack.c.b16 %v1578, %v1578
  %v1643 = vpack.c.b16 %v1579, %v1579
  %v1644 = vpack.c.b16 %v1580, %v1580
  %v1645 = vpack.c.b16 %v1581, %v1581
  %v1646 = vpack.c.b16 %v1582, %v1582
  %v1647 = vpack.c.b16 %v1583, %v1583
  %v1648 = vpack.c.b16 %v1584, %v1584
  %v1649 = vpack.c.b16 %v1585, %v1585
  %v1650 = vpack.c.b16 %v1586, %v1586
  %v1651 = vpack.c.b16 %v1587, %v1587
  %v1652 = vpack.c.b16 %v1588, %v1588
  %v1653 = vpack.c.b16 %v1589, %v1589
  %v1654 = vpack.c.b16 %v1590, %v1590
  %v1655 = vpack.c.b16 %v1591, %v1591
  %v1656 = vpack.c.b16 %v1592, %v1592
  %v1657 = vpack.c.b16 %v1593, %v1593
  %v1658 = vpack.c.b16 %v1594, %v1594
  %v1659 = vpack.c.b16 %v1595, %v1595
  %v1660 = vpack.c.b16 %v1596, %v1596
  %v1661 = vpack.c.b16 %v1597, %v1597
  %v1662 = vpack.c.b16 %v1598, %v1598
  %v1663 = vpack.c.b16 %v1599, %v1599
  %v1664 = vpack.c.b16 %v1600, %v1600
  %v1665 = vpack.c.b16 %v1601, %v1601
  %v1666 = vpack.c.b16 %v1602, %v1602
  %v1667 = vpack.c.b16 %v1603, %v1603
  %v1668 = vpack.c.b16 %v1604, %v1604
  %v1669 = vpack.c.b16 %v1605, %v1605
  %v1670 = vpack.c.b16 %v1606, %v1606
  %v1671 = vpack.c.b16 %v1607, %v1607
  %v1672 = vpack.c.b16 %v1608, %v1608
  %v1673 = vpack.c.b16 %v1609, %v1609
  %v1674 = vpack.c.b16 %v1610, %v1610
  %v1675 = vpack.c.b16 %v1611, %v1611
  %v1676 = vpack.c.b16 %v1612, %v1612
  %v1677 = vpack.c.b16 %v1613, %v1613
  %v1678 = vpack.c.b16 %v1614, %v1614
  %v1679 = vpack.c.b16 %v1615, %v1615
  %v1680 = vpack.c.b16 %v1616, %v1616
  %v1681 = vpack.c.b16 %v1617, %v1617
  %v1682 = vpack.c.b16 %v1618, %v1618
  %v1683 = vpack.c.b16 %v1619, %v1619
  %v1684 = vpack.c.b16 %v1620, %v1620
  %v1685 = vpack.c.b16 %v1621, %v1621
  %v1686 = vpack.c.b16 %v1622, %v1622
  %v1687 = vpack.c.b16 %v1623, %v1623
  %v1688 = vpack.c.b16 %v1624, %v1624
  %v1689 = vpack.c.b16 %v1625, %v1625
  %v1690 = vpack.c.b16 %v1626, %v1626
  %v1691 = vpack.c.b16 %v1627, %v1627
  %v1692 = vpack.c.b16 %v1628, %v1628
  %v1693 = vpack.c.b16 %v1629, %v1629
  %v1694 = vpack.c.b16 %v1630, %v1630
  %v1695 = vpack.c.b16 %v1631, %v1631
  %v1696 = vpack.c.b16 %v1632, %v1632
  %v1697 = vpack.c.b16 %v1633, %v1633
  %v1698 = vpack.c.b16 %v1634, %v1634
  %v1699 = vpack.c.b16 %v1635, %v1635
  %v1700 = vpack.c.b16 %v1636, %v1636
  %v1701 = vpack.c.b16 %v1637, %v1637
  %v1702 = vpack.c.b16 %v1638, %v1638
  %v1703 = vpack.c.b16 %v1639, %v1639
  %v1704 = vpack.c.b16 %v1640, %v1640
  %1769 = vst [vmem:[%s3] sm:$0xf] %v1641
  %1770 = vst [vmem:[%s3 + $0x4] sm:$0xf] %v1642
  %1771 = vst [vmem:[%s3 + $0x8] sm:$0xf] %v1643
  %1772 = vst [vmem:[%s3 + $0xc] sm:$0xf] %v1644
  %1773 = vst [vmem:[%s3 + $0x10] sm:$0xf] %v1645
  %1774 = vst [vmem:[%s3 + $0x14] sm:$0xf] %v1646
  %1775 = vst [vmem:[%s3 + $0x18] sm:$0xf] %v1647
  %1776 = vst [vmem:[%s3 + $0x1c] sm:$0xf] %v1648
  %1777 = vst [vmem:[%s3 + $0x20] sm:$0xf] %v1649
  %1778 = vst [vmem:[%s3 + $0x24] sm:$0xf] %v1650
  %1779 = vst [vmem:[%s3 + $0x28] sm:$0xf] %v1651
  %1780 = vst [vmem:[%s3 + $0x2c] sm:$0xf] %v1652
  %1781 = vst [vmem:[%s3 + $0x30] sm:$0xf] %v1653
  %1782 = vst [vmem:[%s3 + $0x34] sm:$0xf] %v1654
  %1783 = vst [vmem:[%s3 + $0x38] sm:$0xf] %v1655
  %1784 = vst [vmem:[%s3 + $0x3c] sm:$0xf] %v1656
  %1785 = vst [vmem:[%s3 + $0x40] sm:$0xf] %v1657
  %1786 = vst [vmem:[%s3 + $0x44] sm:$0xf] %v1658
  %1787 = vst [vmem:[%s3 + $0x48] sm:$0xf] %v1659
  %1788 = vst [vmem:[%s3 + $0x4c] sm:$0xf] %v1660
  %1789 = vst [vmem:[%s3 + $0x50] sm:$0xf] %v1661
  %1790 = vst [vmem:[%s3 + $0x54] sm:$0xf] %v1662
  %1791 = vst [vmem:[%s3 + $0x58] sm:$0xf] %v1663
  %1792 = vst [vmem:[%s3 + $0x5c] sm:$0xf] %v1664
  %1793 = vst [vmem:[%s3 + $0x60] sm:$0xf] %v1665
  %1794 = vst [vmem:[%s3 + $0x64] sm:$0xf] %v1666
  %1795 = vst [vmem:[%s3 + $0x68] sm:$0xf] %v1667
  %1796 = vst [vmem:[%s3 + $0x6c] sm:$0xf] %v1668
  %1797 = vst [vmem:[%s3 + $0x70] sm:$0xf] %v1669
  %1798 = vst [vmem:[%s3 + $0x74] sm:$0xf] %v1670
  %1799 = vst [vmem:[%s3 + $0x78] sm:$0xf] %v1671
  %1800 = vst [vmem:[%s3 + $0x7c] sm:$0xf] %v1672
  %1801 = vst [vmem:[%s3 + $0x80] sm:$0xf] %v1673
  %1802 = vst [vmem:[%s3 + $0x84] sm:$0xf] %v1674
  %1803 = vst [vmem:[%s3 + $0x88] sm:$0xf] %v1675
  %1804 = vst [vmem:[%s3 + $0x8c] sm:$0xf] %v1676
  %1805 = vst [vmem:[%s3 + $0x90] sm:$0xf] %v1677
  %1806 = vst [vmem:[%s3 + $0x94] sm:$0xf] %v1678
  %1807 = vst [vmem:[%s3 + $0x98] sm:$0xf] %v1679
  %1808 = vst [vmem:[%s3 + $0x9c] sm:$0xf] %v1680
  %1809 = vst [vmem:[%s3 + $0xa0] sm:$0xf] %v1681
  %1810 = vst [vmem:[%s3 + $0xa4] sm:$0xf] %v1682
  %1811 = vst [vmem:[%s3 + $0xa8] sm:$0xf] %v1683
  %1812 = vst [vmem:[%s3 + $0xac] sm:$0xf] %v1684
  %1813 = vst [vmem:[%s3 + $0xb0] sm:$0xf] %v1685
  %1814 = vst [vmem:[%s3 + $0xb4] sm:$0xf] %v1686
  %1815 = vst [vmem:[%s3 + $0xb8] sm:$0xf] %v1687
  %1816 = vst [vmem:[%s3 + $0xbc] sm:$0xf] %v1688
  %1817 = vst [vmem:[%s3 + $0xc0] sm:$0xf] %v1689
  %1818 = vst [vmem:[%s3 + $0xc4] sm:$0xf] %v1690
  %1819 = vst [vmem:[%s3 + $0xc8] sm:$0xf] %v1691
  %1820 = vst [vmem:[%s3 + $0xcc] sm:$0xf] %v1692
  %1821 = vst [vmem:[%s3 + $0xd0] sm:$0xf] %v1693
  %1822 = vst [vmem:[%s3 + $0xd4] sm:$0xf] %v1694
  %1823 = vst [vmem:[%s3 + $0xd8] sm:$0xf] %v1695
  %1824 = vst [vmem:[%s3 + $0xdc] sm:$0xf] %v1696
  %1825 = vst [vmem:[%s3 + $0xe0] sm:$0xf] %v1697
  %1826 = vst [vmem:[%s3 + $0xe4] sm:$0xf] %v1698
  %1827 = vst [vmem:[%s3 + $0xe8] sm:$0xf] %v1699
  %1828 = vst [vmem:[%s3 + $0xec] sm:$0xf] %v1700
  %1829 = vst [vmem:[%s3 + $0xf0] sm:$0xf] %v1701
  %1830 = vst [vmem:[%s3 + $0xf4] sm:$0xf] %v1702
  %1831 = vst [vmem:[%s3 + $0xf8] sm:$0xf] %v1703
  %1832 = vst [vmem:[%s3 + $0xfc] sm:$0xf] %v1704
  // Predicated region
  $region14: #{model_forward.16} parent=0 // pred_check
    _
  $region15: #{model_forward.16} parent=0 // pred_check_branch
    %1834 = sbr.rel (0) target = $region17
  $region16: #{model_forward.16} parent=0 // pred_region
    _
  $region17: #{model_forward.16} parent=0 // pred_fallthru
    _
  // Predicated region
  $region18: #{model_forward.16} parent=0 // pred_check
    _
  $region19: #{model_forward.16} parent=0 // pred_check_branch
    %1836 = sbr.rel (0) target = $region21
  $region20: #{model_forward.16} parent=0 // pred_region
    _
  $region21: #{model_forward.16} parent=0 // pred_fallthru
    _

// kernel: model_forward.17
$region0: #{model_forward.17}
  #allocation0 [shape = 'u32[]', space=smem, size = 0x4, offset = 0x4, fixed_abs, tag = 'smem constant byte address 0x4 - core index']
  #allocation1 [shape = 'u32[144,128]{1,0:T(1,128)}', space=vmem, size = 0x12000, scoped, tag = 'internal scratch']
  %s0 = inlined_call_operand.vmem [shape: bf16[2048,288], index: 0, kind: input, shape index: {}]
  %s1 = inlined_call_operand.vmem [shape: bf16[288,128], index: 1, kind: input, shape index: {}]
  %s2 = inlined_call_operand.vmem [shape: f32[1,128], index: 2, kind: input, shape index: {}]
  %s3 = inlined_call_operand.vmem [shape: f32[2048,128], index: 3, kind: output, shape index: {}]
  %s4 = sld [smem:[#allocation0]]
  $region45: #{model_forward.17} parent=0
    _
  %s6 = ssub.s32 1, %s4
  %s7 = scalar_select 0, %s6, %s4
  loop: start=0, step=1, limit=6
  $region2: #{model_forward.17} parent=0 // loop_pre_header
    _
  $region3: #{model_forward.17} parent=0 // loop_header
    %s9 = sphi 0, %s13
    %p10 = scmp.ge.s32.totalorder %s9, 6
    %s19 = sphi 0, %s21
    %s22 = sphi 0, %s19
    %s23 = sphi 0, %s22
    %s39 = sphi 0, %s23
    %s43 = sphi 0, %s43
    %s45 = sphi 0, %s43
    %s46 = sphi 0, %s45
    %s60 = sphi 0, %s46
    %s64 = sphi 0, %s64
    %s66 = sphi 0, %s64
    %s67 = sphi 0, %s66
    %s81 = sphi 0, %s67
    %s87 = sphi 0, %s89
    %s90 = sphi 0, %s87
    %s91 = sphi 0, %s90
    %s107 = sphi 0, %s91
  $region4: #{model_forward.17} parent=0 // loop_header_branch
    %12 = sbr.rel (%p10) target = $region8
  $region5: #{model_forward.17} parent=0 // loop_body
    %s14 = ssub.s32 %s9, 1
    %s15 = ssub.s32 %s9, 2
    %s16 = sadd.s32 %s9, 1
    %s17 = ssub.s32 %s9, %s16
    %p18 = scmp.eq.s32.totalorder %s17, 0
    %s20 = sadd.s32 %s19, 1
    %s21 = scalar_select %p18, %s19, %s20
    %p24 = pneg %p18
    %p25 = scmp.eq.s32.totalorder %s9, 3
    %p26 = por %p24, %p25
    %p27 = scmp.ne.s32.totalorder %s19, %s22
    %p28 = scmp.eq.s32.totalorder %s9, 0
    %p29 = por %p27, %p28
    %p30 = scmp.ne.s32.totalorder %s19, %s22
    %p31 = scmp.eq.s32.totalorder %s14, 3
    %p32 = por %p30, %p31
    %p33 = scmp.ne.s32.totalorder %s22, %s23
    %p34 = scmp.eq.s32.totalorder %s14, 0
    %p35 = por %p33, %p34
    %p36 = scmp.ne.s32.totalorder %s22, %s23
    %p37 = scmp.eq.s32.totalorder %s15, 3
    %p38 = por %p36, %p37
    %p40 = scmp.ne.s32.totalorder %s23, %s39
    %p41 = scmp.eq.s32.totalorder %s15, 0
    %p42 = por %p40, %p41
    %s44 = sadd.s32 %s43, 1
    %p47 = scmp.eq.s32.totalorder %s9, 3
    %p48 = scmp.ne.s32.totalorder %s43, %s45
    %p49 = scmp.eq.s32.totalorder %s9, 0
    %p50 = por %p48, %p49
    %p51 = scmp.ne.s32.totalorder %s43, %s45
    %p52 = scmp.eq.s32.totalorder %s14, 3
    %p53 = por %p51, %p52
    %p54 = scmp.ne.s32.totalorder %s45, %s46
    %p55 = scmp.eq.s32.totalorder %s14, 0
    %p56 = por %p54, %p55
    %p57 = scmp.ne.s32.totalorder %s45, %s46
    %p58 = scmp.eq.s32.totalorder %s15, 3
    %p59 = por %p57, %p58
    %p61 = scmp.ne.s32.totalorder %s46, %s60
    %p62 = scmp.eq.s32.totalorder %s15, 0
    %p63 = por %p61, %p62
    %s65 = sadd.s32 %s64, 1
    %p68 = scmp.eq.s32.totalorder %s9, 3
    %p69 = scmp.ne.s32.totalorder %s64, %s66
    %p70 = scmp.eq.s32.totalorder %s9, 0
    %p71 = por %p69, %p70
    %p72 = scmp.ne.s32.totalorder %s64, %s66
    %p73 = scmp.eq.s32.totalorder %s14, 3
    %p74 = por %p72, %p73
    %p75 = scmp.ne.s32.totalorder %s66, %s67
    %p76 = scmp.eq.s32.totalorder %s14, 0
    %p77 = por %p75, %p76
    %p78 = scmp.ne.s32.totalorder %s66, %s67
    %p79 = scmp.eq.s32.totalorder %s15, 3
    %p80 = por %p78, %p79
    %p82 = scmp.ne.s32.totalorder %s67, %s81
    %p83 = scmp.eq.s32.totalorder %s15, 0
    %p84 = por %p82, %p83
    %s85 = ssub.s32 %s9, %s16
    %p86 = scmp.eq.s32.totalorder %s85, 0
    %s88 = sadd.s32 %s87, 1
    %s89 = scalar_select %p86, %s87, %s88
    %p92 = pneg %p86
    %p93 = scmp.eq.s32.totalorder %s9, 3
    %p94 = por %p92, %p93
    %p95 = scmp.ne.s32.totalorder %s87, %s90
    %p96 = scmp.eq.s32.totalorder %s9, 0
    %p97 = por %p95, %p96
    %p98 = scmp.ne.s32.totalorder %s87, %s90
    %p99 = scmp.eq.s32.totalorder %s14, 3
    %p100 = por %p98, %p99
    %p101 = scmp.ne.s32.totalorder %s90, %s91
    %p102 = scmp.eq.s32.totalorder %s14, 0
    %p103 = por %p101, %p102
    %p104 = scmp.ne.s32.totalorder %s90, %s91
    %p105 = scmp.eq.s32.totalorder %s15, 3
    %p106 = por %p104, %p105
    %p108 = scmp.ne.s32.totalorder %s91, %s107
    %p109 = scmp.eq.s32.totalorder %s15, 0
    %p110 = por %p108, %p109
    %p111 = scmp.le.s32.totalorder 1, %s9
    %p112 = scmp.lt.s32.totalorder %s9, 5
    %p113 = pnand %p111, %p112
    %p114 = pneg %p113
    // Predicated region
    $region9: #{model_forward.17} parent=5 // pred_check
      _
    $region10: #{model_forward.17} parent=5 // pred_check_branch
      %116 = sbr.rel (%p113) target = $region12
    $region11: #{model_forward.17} parent=5 // pred_region
      %s117 = ssub.s32 %s9, 1
      // Predicated region
      $region13: #{model_forward.17} parent=11 // pred_check
        %p118 = pneg %p56
      $region14: #{model_forward.17} parent=11 // pred_check_branch
        %120 = sbr.rel (%p118) target = $region16
      $region15: #{model_forward.17} parent=11 // pred_region
        _
      $region16: #{model_forward.17} parent=11 // pred_fallthru
        _
      // Predicated region
      $region17: #{model_forward.17} parent=11 // pred_check
        %p121 = pneg %p77
      $region18: #{model_forward.17} parent=11 // pred_check_branch
        %123 = sbr.rel (%p121) target = $region20
      $region19: #{model_forward.17} parent=11 // pred_region
        _
      $region20: #{model_forward.17} parent=11 // pred_fallthru
        _
    $region12: #{model_forward.17} parent=5 // pred_fallthru
      _
    %p124 = scmp.lt.s32.totalorder %s9, 4
    // Predicated region
    $region21: #{model_forward.17} parent=5 // pred_check
      %p125 = pneg %p124
    $region22: #{model_forward.17} parent=5 // pred_check_branch
      %127 = sbr.rel (%p125) target = $region24
    $region23: #{model_forward.17} parent=5 // pred_region
      // Predicated region
      $region25: #{model_forward.17} parent=23 // pred_check
        %p128 = pneg %p29
      $region26: #{model_forward.17} parent=23 // pred_check_branch
        %130 = sbr.rel (%p128) target = $region28
      $region27: #{model_forward.17} parent=23 // pred_region
        %s131 = smul.u32 64, %s9
        %p132 = scmp.lt.s32.totalorder %s131, 255
        %s133 = scalar_select %p132, %s131, 255
        %s134 = smul.addr %s133, 3
        %s135 = smul.addr %s134, 4
        %s136 = scalar_lea.vmem %s0, %s135
        %s137 = smul.u32 64, %s9
      $region28: #{model_forward.17} parent=23 // pred_fallthru
        _
    $region24: #{model_forward.17} parent=5 // pred_fallthru
      _
    %p138 = scmp.le.s32.totalorder 1, %s9
    %p139 = scmp.lt.s32.totalorder %s9, 5
    %p140 = pnand %p138, %p139
    %p141 = pneg %p140
    // Predicated region
    $region29: #{model_forward.17} parent=5 // pred_check
      _
    $region30: #{model_forward.17} parent=5 // pred_check_branch
      %143 = sbr.rel (%p140) target = $region32
    $region31: #{model_forward.17} parent=5 // pred_region
      %s144 = ssub.s32 %s9, 1
      %s145 = smul.u32 64, %s14
      %p146 = scmp.lt.s32.totalorder %s145, 255
      %s147 = scalar_select %p146, %s145, 255
      %s148 = smul.addr %s147, 3
      %s149 = smul.addr %s148, 4
      %s150 = scalar_lea.vmem %s0, %s149
      %p151 = pneg %p35
      %p152 = pneg %p32
      %p153 = pneg %p56
      %p154 = pneg %p53
      %p155 = pneg %p77
      %p156 = pneg %p74
      %p157 = pneg %p103
      %p158 = pneg %p100
      %s159 = smul.u32 64, %s14
      %p160 = scmp.lt.s32.totalorder %s159, 255
      %s161 = scalar_select %p160, %s159, 255
      %s162 = smul.addr %s161, 8
      %s163 = scalar_lea.vmem %s3, %s162
      %s164 = smul.u32 64, %s14
      %p165 = scmp.lt.s32.totalorder %s164, 255
      %s166 = scalar_select %p165, %s164, 255
      %s167 = smul.addr %s166, 3
      %s168 = smul.addr %s167, 4
      %s169 = scalar_lea.vmem %s0, %s168
      %s170 = smul.u32 64, %s14
      %s171 = smul.u32 64, %s14
      %p172 = scmp.lt.s32.totalorder %s171, 255
      %s173 = scalar_select %p172, %s171, 255
      %s174 = smul.addr %s173, 8
      %s175 = scalar_lea.vmem %s3, %s174
      %s176 = smul.u32 64, %s14
      %v178 = vld [vmem:[%s169] sm:$0xff]
      %v179 = vld [vmem:[%s169 + $0x8] sm:$0xf]
      %v180 = vld [vmem:[%s169 + $0xc] sm:$0xff]
      %v181 = vld [vmem:[%s169 + $0x14] sm:$0xf]
      %v182 = vld [vmem:[%s169 + $0x18] sm:$0xff]
      %v183 = vld [vmem:[%s169 + $0x20] sm:$0xf]
      %v184 = vld [vmem:[%s169 + $0x24] sm:$0xff]
      %v185 = vld [vmem:[%s169 + $0x2c] sm:$0xf]
      %v186 = vld [vmem:[%s169 + $0x30] sm:$0xff]
      %v187 = vld [vmem:[%s169 + $0x38] sm:$0xf]
      %v188 = vld [vmem:[%s169 + $0x3c] sm:$0xff]
      %v189 = vld [vmem:[%s169 + $0x44] sm:$0xf]
      %v190 = vld [vmem:[%s169 + $0x48] sm:$0xff]
      %v191 = vld [vmem:[%s169 + $0x50] sm:$0xf]
      %v192 = vld [vmem:[%s169 + $0x54] sm:$0xff]
      %v193 = vld [vmem:[%s169 + $0x5c] sm:$0xf]
      %v194 = vld [vmem:[%s169 + $0x60] sm:$0xff]
      %v195 = vld [vmem:[%s169 + $0x68] sm:$0xf]
      %v196 = vld [vmem:[%s169 + $0x6c] sm:$0xff]
      %v197 = vld [vmem:[%s169 + $0x74] sm:$0xf]
      %v198 = vld [vmem:[%s169 + $0x78] sm:$0xff]
      %v199 = vld [vmem:[%s169 + $0x80] sm:$0xf]
      %v200 = vld [vmem:[%s169 + $0x84] sm:$0xff]
      %v201 = vld [vmem:[%s169 + $0x8c] sm:$0xf]
      %v202 = vld [vmem:[%s169 + $0x90] sm:$0xff]
      %v203 = vld [vmem:[%s169 + $0x98] sm:$0xf]
      %v204 = vld [vmem:[%s169 + $0x9c] sm:$0xff]
      %v205 = vld [vmem:[%s169 + $0xa4] sm:$0xf]
      %v206 = vld [vmem:[%s169 + $0xa8] sm:$0xff]
      %v207 = vld [vmem:[%s169 + $0xb0] sm:$0xf]
      %v208 = vld [vmem:[%s169 + $0xb4] sm:$0xff]
      %v209 = vld [vmem:[%s169 + $0xbc] sm:$0xf]
      %v210 = vld [vmem:[%s169 + $0xc0] sm:$0xff]
      %v211 = vld [vmem:[%s169 + $0xc8] sm:$0xf]
      %v212 = vld [vmem:[%s169 + $0xcc] sm:$0xff]
      %v213 = vld [vmem:[%s169 + $0xd4] sm:$0xf]
      %v214 = vld [vmem:[%s169 + $0xd8] sm:$0xff]
      %v215 = vld [vmem:[%s169 + $0xe0] sm:$0xf]
      %v216 = vld [vmem:[%s169 + $0xe4] sm:$0xff]
      %v217 = vld [vmem:[%s169 + $0xec] sm:$0xf]
      %v218 = vld [vmem:[%s169 + $0xf0] sm:$0xff]
      %v219 = vld [vmem:[%s169 + $0xf8] sm:$0xf]
      %v220 = vld [vmem:[%s169 + $0xfc] sm:$0xff]
      %v221 = vld [vmem:[%s169 + $0x104] sm:$0xf]
      %v222 = vld [vmem:[%s169 + $0x108] sm:$0xff]
      %v223 = vld [vmem:[%s169 + $0x110] sm:$0xf]
      %v224 = vld [vmem:[%s169 + $0x114] sm:$0xff]
      %v225 = vld [vmem:[%s169 + $0x11c] sm:$0xf]
      %v226 = vld [vmem:[%s169 + $0x120] sm:$0xff]
      %v227 = vld [vmem:[%s169 + $0x128] sm:$0xf]
      %v228 = vld [vmem:[%s169 + $0x12c] sm:$0xff]
      %v229 = vld [vmem:[%s169 + $0x134] sm:$0xf]
      %v230 = vld [vmem:[%s169 + $0x138] sm:$0xff]
      %v231 = vld [vmem:[%s169 + $0x140] sm:$0xf]
      %v232 = vld [vmem:[%s169 + $0x144] sm:$0xff]
      %v233 = vld [vmem:[%s169 + $0x14c] sm:$0xf]
      %v234 = vld [vmem:[%s169 + $0x150] sm:$0xff]
      %v235 = vld [vmem:[%s169 + $0x158] sm:$0xf]
      %v236 = vld [vmem:[%s169 + $0x15c] sm:$0xff]
      %v237 = vld [vmem:[%s169 + $0x164] sm:$0xf]
      %v238 = vld [vmem:[%s169 + $0x168] sm:$0xff]
      %v239 = vld [vmem:[%s169 + $0x170] sm:$0xf]
      %v240 = vld [vmem:[%s169 + $0x174] sm:$0xff]
      %v241 = vld [vmem:[%s169 + $0x17c] sm:$0xf]
      %v242 = vld [vmem:[%s169 + $0x180] sm:$0xff]
      %v243 = vld [vmem:[%s169 + $0x188] sm:$0xf]
      %v244 = vld [vmem:[%s169 + $0x18c] sm:$0xff]
      %v245 = vld [vmem:[%s169 + $0x194] sm:$0xf]
      %v246 = vld [vmem:[%s169 + $0x198] sm:$0xff]
      %v247 = vld [vmem:[%s169 + $0x1a0] sm:$0xf]
      %v248 = vld [vmem:[%s169 + $0x1a4] sm:$0xff]
      %v249 = vld [vmem:[%s169 + $0x1ac] sm:$0xf]
      %v250 = vld [vmem:[%s169 + $0x1b0] sm:$0xff]
      %v251 = vld [vmem:[%s169 + $0x1b8] sm:$0xf]
      %v252 = vld [vmem:[%s169 + $0x1bc] sm:$0xff]
      %v253 = vld [vmem:[%s169 + $0x1c4] sm:$0xf]
      %v254 = vld [vmem:[%s169 + $0x1c8] sm:$0xff]
      %v255 = vld [vmem:[%s169 + $0x1d0] sm:$0xf]
      %v256 = vld [vmem:[%s169 + $0x1d4] sm:$0xff]
      %v257 = vld [vmem:[%s169 + $0x1dc] sm:$0xf]
      %v258 = vld [vmem:[%s169 + $0x1e0] sm:$0xff]
      %v259 = vld [vmem:[%s169 + $0x1e8] sm:$0xf]
      %v260 = vld [vmem:[%s169 + $0x1ec] sm:$0xff]
      %v261 = vld [vmem:[%s169 + $0x1f4] sm:$0xf]
      %v262 = vld [vmem:[%s169 + $0x1f8] sm:$0xff]
      %v263 = vld [vmem:[%s169 + $0x200] sm:$0xf]
      %v264 = vld [vmem:[%s169 + $0x204] sm:$0xff]
      %v265 = vld [vmem:[%s169 + $0x20c] sm:$0xf]
      %v266 = vld [vmem:[%s169 + $0x210] sm:$0xff]
      %v267 = vld [vmem:[%s169 + $0x218] sm:$0xf]
      %v268 = vld [vmem:[%s169 + $0x21c] sm:$0xff]
      %v269 = vld [vmem:[%s169 + $0x224] sm:$0xf]
      %v270 = vld [vmem:[%s169 + $0x228] sm:$0xff]
      %v271 = vld [vmem:[%s169 + $0x230] sm:$0xf]
      %v272 = vld [vmem:[%s169 + $0x234] sm:$0xff]
      %v273 = vld [vmem:[%s169 + $0x23c] sm:$0xf]
      %v274 = vld [vmem:[%s169 + $0x240] sm:$0xff]
      %v275 = vld [vmem:[%s169 + $0x248] sm:$0xf]
      %v276 = vld [vmem:[%s169 + $0x24c] sm:$0xff]
      %v277 = vld [vmem:[%s169 + $0x254] sm:$0xf]
      %v278 = vld [vmem:[%s169 + $0x258] sm:$0xff]
      %v279 = vld [vmem:[%s169 + $0x260] sm:$0xf]
      %v280 = vld [vmem:[%s169 + $0x264] sm:$0xff]
      %v281 = vld [vmem:[%s169 + $0x26c] sm:$0xf]
      %v282 = vld [vmem:[%s169 + $0x270] sm:$0xff]
      %v283 = vld [vmem:[%s169 + $0x278] sm:$0xf]
      %v284 = vld [vmem:[%s169 + $0x27c] sm:$0xff]
      %v285 = vld [vmem:[%s169 + $0x284] sm:$0xf]
      %v286 = vld [vmem:[%s169 + $0x288] sm:$0xff]
      %v287 = vld [vmem:[%s169 + $0x290] sm:$0xf]
      %v288 = vld [vmem:[%s169 + $0x294] sm:$0xff]
      %v289 = vld [vmem:[%s169 + $0x29c] sm:$0xf]
      %v290 = vld [vmem:[%s169 + $0x2a0] sm:$0xff]
      %v291 = vld [vmem:[%s169 + $0x2a8] sm:$0xf]
      %v292 = vld [vmem:[%s169 + $0x2ac] sm:$0xff]
      %v293 = vld [vmem:[%s169 + $0x2b4] sm:$0xf]
      %v294 = vld [vmem:[%s169 + $0x2b8] sm:$0xff]
      %v295 = vld [vmem:[%s169 + $0x2c0] sm:$0xf]
      %v296 = vld [vmem:[%s169 + $0x2c4] sm:$0xff]
      %v297 = vld [vmem:[%s169 + $0x2cc] sm:$0xf]
      %v298 = vld [vmem:[%s169 + $0x2d0] sm:$0xff]
      %v299 = vld [vmem:[%s169 + $0x2d8] sm:$0xf]
      %v300 = vld [vmem:[%s169 + $0x2dc] sm:$0xff]
      %v301 = vld [vmem:[%s169 + $0x2e4] sm:$0xf]
      %v302 = vld [vmem:[%s169 + $0x2e8] sm:$0xff]
      %v303 = vld [vmem:[%s169 + $0x2f0] sm:$0xf]
      %v304 = vld [vmem:[%s169 + $0x2f4] sm:$0xff]
      %v305 = vld [vmem:[%s169 + $0x2fc] sm:$0xf]
      %v306 = vld [vmem:[%s1] sm:$0xf]
      %v307 = vld [vmem:[%s1 + $0x4] sm:$0xf]
      %v308 = vld [vmem:[%s1 + $0x8] sm:$0xf]
      %v309 = vld [vmem:[%s1 + $0xc] sm:$0xf]
      %v310 = vld [vmem:[%s1 + $0x10] sm:$0xf]
      %v311 = vld [vmem:[%s1 + $0x14] sm:$0xf]
      %v312 = vld [vmem:[%s1 + $0x18] sm:$0xf]
      %v313 = vld [vmem:[%s1 + $0x1c] sm:$0xf]
      %v314 = vld [vmem:[%s1 + $0x20] sm:$0xf]
      %v315 = vld [vmem:[%s1 + $0x24] sm:$0xf]
      %v316 = vld [vmem:[%s1 + $0x28] sm:$0xf]
      %v317 = vld [vmem:[%s1 + $0x2c] sm:$0xf]
      %v318 = vld [vmem:[%s1 + $0x30] sm:$0xf]
      %v319 = vld [vmem:[%s1 + $0x34] sm:$0xf]
      %v320 = vld [vmem:[%s1 + $0x38] sm:$0xf]
      %v321 = vld [vmem:[%s1 + $0x3c] sm:$0xf]
      %v322 = vld [vmem:[%s1 + $0x40] sm:$0xf]
      %v323 = vld [vmem:[%s1 + $0x44] sm:$0xf]
      %v324 = vld [vmem:[%s1 + $0x48] sm:$0xf]
      %v325 = vld [vmem:[%s1 + $0x4c] sm:$0xf]
      %v326 = vld [vmem:[%s1 + $0x50] sm:$0xf]
      %v327 = vld [vmem:[%s1 + $0x54] sm:$0xf]
      %v328 = vld [vmem:[%s1 + $0x58] sm:$0xf]
      %v329 = vld [vmem:[%s1 + $0x5c] sm:$0xf]
      %v330 = vld [vmem:[%s1 + $0x60] sm:$0xf]
      %v331 = vld [vmem:[%s1 + $0x64] sm:$0xf]
      %v332 = vld [vmem:[%s1 + $0x68] sm:$0xf]
      %v333 = vld [vmem:[%s1 + $0x6c] sm:$0xf]
      %v334 = vld [vmem:[%s1 + $0x70] sm:$0xf]
      %v335 = vld [vmem:[%s1 + $0x74] sm:$0xf]
      %v336 = vld [vmem:[%s1 + $0x78] sm:$0xf]
      %v337 = vld [vmem:[%s1 + $0x7c] sm:$0xf]
      %v338 = vld [vmem:[%s1 + $0x80] sm:$0xf]
      %v339 = vld [vmem:[%s1 + $0x84] sm:$0xf]
      %v340 = vld [vmem:[%s1 + $0x88] sm:$0xf]
      %v341 = vld [vmem:[%s1 + $0x8c] sm:$0xf]
      %v342 = vld [vmem:[%s2] sm:$0x1]
      %v344 = vlaneseq
      %v345 = vshrl.u32 %v344, 7
      %v346 = vsub.s32 0, %v345
      %v347 = vrot.slane %v342, %v346
      %v477 = vunpack.c.l.b16 %v178
      %v478 = vunpack.c.h.b16 %v178
      %v479 = vunpack.c.l.b16 %v179
      %v480 = vunpack.c.l.b16 %v180
      %v481 = vunpack.c.h.b16 %v180
      %v482 = vunpack.c.l.b16 %v181
      %v483 = vunpack.c.l.b16 %v182
      %v484 = vunpack.c.h.b16 %v182
      %v485 = vunpack.c.l.b16 %v183
      %v486 = vunpack.c.l.b16 %v184
      %v487 = vunpack.c.h.b16 %v184
      %v488 = vunpack.c.l.b16 %v185
      %v489 = vunpack.c.l.b16 %v186
      %v490 = vunpack.c.h.b16 %v186
      %v491 = vunpack.c.l.b16 %v187
      %v492 = vunpack.c.l.b16 %v188
      %v493 = vunpack.c.h.b16 %v188
      %v494 = vunpack.c.l.b16 %v189
      %v495 = vunpack.c.l.b16 %v190
      %v496 = vunpack.c.h.b16 %v190
      %v497 = vunpack.c.l.b16 %v191
      %v498 = vunpack.c.l.b16 %v192
      %v499 = vunpack.c.h.b16 %v192
      %v500 = vunpack.c.l.b16 %v193
      %v501 = vunpack.c.l.b16 %v194
      %v502 = vunpack.c.h.b16 %v194
      %v503 = vunpack.c.l.b16 %v195
      %v504 = vunpack.c.l.b16 %v196
      %v505 = vunpack.c.h.b16 %v196
      %v506 = vunpack.c.l.b16 %v197
      %v507 = vunpack.c.l.b16 %v198
      %v508 = vunpack.c.h.b16 %v198
      %v509 = vunpack.c.l.b16 %v199
      %v510 = vunpack.c.l.b16 %v200
      %v511 = vunpack.c.h.b16 %v200
      %v512 = vunpack.c.l.b16 %v201
      %v513 = vunpack.c.l.b16 %v202
      %v514 = vunpack.c.h.b16 %v202
      %v515 = vunpack.c.l.b16 %v203
      %v516 = vunpack.c.l.b16 %v204
      %v517 = vunpack.c.h.b16 %v204
      %v518 = vunpack.c.l.b16 %v205
      %v519 = vunpack.c.l.b16 %v206
      %v520 = vunpack.c.h.b16 %v206
      %v521 = vunpack.c.l.b16 %v207
      %v522 = vunpack.c.l.b16 %v208
      %v523 = vunpack.c.h.b16 %v208
      %v524 = vunpack.c.l.b16 %v209
      %v525 = vunpack.c.l.b16 %v210
      %v526 = vunpack.c.h.b16 %v210
      %v527 = vunpack.c.l.b16 %v211
      %v528 = vunpack.c.l.b16 %v212
      %v529 = vunpack.c.h.b16 %v212
      %v530 = vunpack.c.l.b16 %v213
      %v531 = vunpack.c.l.b16 %v214
      %v532 = vunpack.c.h.b16 %v214
      %v533 = vunpack.c.l.b16 %v215
      %v534 = vunpack.c.l.b16 %v216
      %v535 = vunpack.c.h.b16 %v216
      %v536 = vunpack.c.l.b16 %v217
      %v537 = vunpack.c.l.b16 %v218
      %v538 = vunpack.c.h.b16 %v218
      %v539 = vunpack.c.l.b16 %v219
      %v540 = vunpack.c.l.b16 %v220
      %v541 = vunpack.c.h.b16 %v220
      %v542 = vunpack.c.l.b16 %v221
      %v543 = vunpack.c.l.b16 %v222
      %v544 = vunpack.c.h.b16 %v222
      %v545 = vunpack.c.l.b16 %v223
      %v546 = vunpack.c.l.b16 %v224
      %v547 = vunpack.c.h.b16 %v224
      %v548 = vunpack.c.l.b16 %v225
      %v549 = vunpack.c.l.b16 %v226
      %v550 = vunpack.c.h.b16 %v226
      %v551 = vunpack.c.l.b16 %v227
      %v552 = vunpack.c.l.b16 %v228
      %v553 = vunpack.c.h.b16 %v228
      %v554 = vunpack.c.l.b16 %v229
      %v555 = vunpack.c.l.b16 %v230
      %v556 = vunpack.c.h.b16 %v230
      %v557 = vunpack.c.l.b16 %v231
      %v558 = vunpack.c.l.b16 %v232
      %v559 = vunpack.c.h.b16 %v232
      %v560 = vunpack.c.l.b16 %v233
      %v561 = vunpack.c.l.b16 %v234
      %v562 = vunpack.c.h.b16 %v234
      %v563 = vunpack.c.l.b16 %v235
      %v564 = vunpack.c.l.b16 %v236
      %v565 = vunpack.c.h.b16 %v236
      %v566 = vunpack.c.l.b16 %v237
      %v567 = vunpack.c.l.b16 %v238
      %v568 = vunpack.c.h.b16 %v238
      %v569 = vunpack.c.l.b16 %v239
      %v570 = vunpack.c.l.b16 %v240
      %v571 = vunpack.c.h.b16 %v240
      %v572 = vunpack.c.l.b16 %v241
      %v573 = vunpack.c.l.b16 %v242
      %v574 = vunpack.c.h.b16 %v242
      %v575 = vunpack.c.l.b16 %v243
      %v576 = vunpack.c.l.b16 %v244
      %v577 = vunpack.c.h.b16 %v244
      %v578 = vunpack.c.l.b16 %v245
      %v579 = vunpack.c.l.b16 %v246
      %v580 = vunpack.c.h.b16 %v246
      %v581 = vunpack.c.l.b16 %v247
      %v582 = vunpack.c.l.b16 %v248
      %v583 = vunpack.c.h.b16 %v248
      %v584 = vunpack.c.l.b16 %v249
      %v585 = vunpack.c.l.b16 %v250
      %v586 = vunpack.c.h.b16 %v250
      %v587 = vunpack.c.l.b16 %v251
      %v588 = vunpack.c.l.b16 %v252
      %v589 = vunpack.c.h.b16 %v252
      %v590 = vunpack.c.l.b16 %v253
      %v591 = vunpack.c.l.b16 %v254
      %v592 = vunpack.c.h.b16 %v254
      %v593 = vunpack.c.l.b16 %v255
      %v594 = vunpack.c.l.b16 %v256
      %v595 = vunpack.c.h.b16 %v256
      %v596 = vunpack.c.l.b16 %v257
      %v597 = vunpack.c.l.b16 %v258
      %v598 = vunpack.c.h.b16 %v258
      %v599 = vunpack.c.l.b16 %v259
      %v600 = vunpack.c.l.b16 %v260
      %v601 = vunpack.c.h.b16 %v260
      %v602 = vunpack.c.l.b16 %v261
      %v603 = vunpack.c.l.b16 %v262
      %v604 = vunpack.c.h.b16 %v262
      %v605 = vunpack.c.l.b16 %v263
      %v606 = vunpack.c.l.b16 %v264
      %v607 = vunpack.c.h.b16 %v264
      %v608 = vunpack.c.l.b16 %v265
      %v609 = vunpack.c.l.b16 %v266
      %v610 = vunpack.c.h.b16 %v266
      %v611 = vunpack.c.l.b16 %v267
      %v612 = vunpack.c.l.b16 %v268
      %v613 = vunpack.c.h.b16 %v268
      %v614 = vunpack.c.l.b16 %v269
      %v615 = vunpack.c.l.b16 %v270
      %v616 = vunpack.c.h.b16 %v270
      %v617 = vunpack.c.l.b16 %v271
      %v618 = vunpack.c.l.b16 %v272
      %v619 = vunpack.c.h.b16 %v272
      %v620 = vunpack.c.l.b16 %v273
      %v621 = vunpack.c.l.b16 %v274
      %v622 = vunpack.c.h.b16 %v274
      %v623 = vunpack.c.l.b16 %v275
      %v624 = vunpack.c.l.b16 %v276
      %v625 = vunpack.c.h.b16 %v276
      %v626 = vunpack.c.l.b16 %v277
      %v627 = vunpack.c.l.b16 %v278
      %v628 = vunpack.c.h.b16 %v278
      %v629 = vunpack.c.l.b16 %v279
      %v630 = vunpack.c.l.b16 %v280
      %v631 = vunpack.c.h.b16 %v280
      %v632 = vunpack.c.l.b16 %v281
      %v633 = vunpack.c.l.b16 %v282
      %v634 = vunpack.c.h.b16 %v282
      %v635 = vunpack.c.l.b16 %v283
      %v636 = vunpack.c.l.b16 %v284
      %v637 = vunpack.c.h.b16 %v284
      %v638 = vunpack.c.l.b16 %v285
      %v639 = vunpack.c.l.b16 %v286
      %v640 = vunpack.c.h.b16 %v286
      %v641 = vunpack.c.l.b16 %v287
      %v642 = vunpack.c.l.b16 %v288
      %v643 = vunpack.c.h.b16 %v288
      %v644 = vunpack.c.l.b16 %v289
      %v645 = vunpack.c.l.b16 %v290
      %v646 = vunpack.c.h.b16 %v290
      %v647 = vunpack.c.l.b16 %v291
      %v648 = vunpack.c.l.b16 %v292
      %v649 = vunpack.c.h.b16 %v292
      %v650 = vunpack.c.l.b16 %v293
      %v651 = vunpack.c.l.b16 %v294
      %v652 = vunpack.c.h.b16 %v294
      %v653 = vunpack.c.l.b16 %v295
      %v654 = vunpack.c.l.b16 %v296
      %v655 = vunpack.c.h.b16 %v296
      %v656 = vunpack.c.l.b16 %v297
      %v657 = vunpack.c.l.b16 %v298
      %v658 = vunpack.c.h.b16 %v298
      %v659 = vunpack.c.l.b16 %v299
      %v660 = vunpack.c.l.b16 %v300
      %v661 = vunpack.c.h.b16 %v300
      %v662 = vunpack.c.l.b16 %v301
      %v663 = vunpack.c.l.b16 %v302
      %v664 = vunpack.c.h.b16 %v302
      %v665 = vunpack.c.l.b16 %v303
      %v666 = vunpack.c.l.b16 %v304
      %v667 = vunpack.c.h.b16 %v304
      %v668 = vunpack.c.l.b16 %v305
      %v669 = vpack.c.b16 %v480, %v477
      %v670 = vpack.c.b16 %v481, %v478
      %v671 = vpack.c.b16 %v482, %v479
      %v672 = vpack.c.b16 %v486, %v483
      %v673 = vpack.c.b16 %v487, %v484
      %v674 = vpack.c.b16 %v488, %v485
      %v675 = vpack.c.b16 %v492, %v489
      %v676 = vpack.c.b16 %v493, %v490
      %v677 = vpack.c.b16 %v494, %v491
      %v678 = vpack.c.b16 %v498, %v495
      %v679 = vpack.c.b16 %v499, %v496
      %v680 = vpack.c.b16 %v500, %v497
      %v681 = vpack.c.b16 %v504, %v501
      %v682 = vpack.c.b16 %v505, %v502
      %v683 = vpack.c.b16 %v506, %v503
      %v684 = vpack.c.b16 %v510, %v507
      %v685 = vpack.c.b16 %v511, %v508
      %v686 = vpack.c.b16 %v512, %v509
      %v687 = vpack.c.b16 %v516, %v513
      %v688 = vpack.c.b16 %v517, %v514
      %v689 = vpack.c.b16 %v518, %v515
      %v690 = vpack.c.b16 %v522, %v519
      %v691 = vpack.c.b16 %v523, %v520
      %v692 = vpack.c.b16 %v524, %v521
      %v693 = vpack.c.b16 %v528, %v525
      %v694 = vpack.c.b16 %v529, %v526
      %v695 = vpack.c.b16 %v530, %v527
      %v696 = vpack.c.b16 %v534, %v531
      %v697 = vpack.c.b16 %v535, %v532
      %v698 = vpack.c.b16 %v536, %v533
      %v699 = vpack.c.b16 %v540, %v537
      %v700 = vpack.c.b16 %v541, %v538
      %v701 = vpack.c.b16 %v542, %v539
      %v702 = vpack.c.b16 %v546, %v543
      %v703 = vpack.c.b16 %v547, %v544
      %v704 = vpack.c.b16 %v548, %v545
      %v705 = vpack.c.b16 %v552, %v549
      %v706 = vpack.c.b16 %v553, %v550
      %v707 = vpack.c.b16 %v554, %v551
      %v708 = vpack.c.b16 %v558, %v555
      %v709 = vpack.c.b16 %v559, %v556
      %v710 = vpack.c.b16 %v560, %v557
      %v711 = vpack.c.b16 %v564, %v561
      %v712 = vpack.c.b16 %v565, %v562
      %v713 = vpack.c.b16 %v566, %v563
      %v714 = vpack.c.b16 %v570, %v567
      %v715 = vpack.c.b16 %v571, %v568
      %v716 = vpack.c.b16 %v572, %v569
      %v717 = vpack.c.b16 %v576, %v573
      %v718 = vpack.c.b16 %v577, %v574
      %v719 = vpack.c.b16 %v578, %v575
      %v720 = vpack.c.b16 %v582, %v579
      %v721 = vpack.c.b16 %v583, %v580
      %v722 = vpack.c.b16 %v584, %v581
      %v723 = vpack.c.b16 %v588, %v585
      %v724 = vpack.c.b16 %v589, %v586
      %v725 = vpack.c.b16 %v590, %v587
      %v726 = vpack.c.b16 %v594, %v591
      %v727 = vpack.c.b16 %v595, %v592
      %v728 = vpack.c.b16 %v596, %v593
      %v729 = vpack.c.b16 %v600, %v597
      %v730 = vpack.c.b16 %v601, %v598
      %v731 = vpack.c.b16 %v602, %v599
      %v732 = vpack.c.b16 %v606, %v603
      %v733 = vpack.c.b16 %v607, %v604
      %v734 = vpack.c.b16 %v608, %v605
      %v735 = vpack.c.b16 %v612, %v609
      %v736 = vpack.c.b16 %v613, %v610
      %v737 = vpack.c.b16 %v614, %v611
      %v738 = vpack.c.b16 %v618, %v615
      %v739 = vpack.c.b16 %v619, %v616
      %v740 = vpack.c.b16 %v620, %v617
      %v741 = vpack.c.b16 %v624, %v621
      %v742 = vpack.c.b16 %v625, %v622
      %v743 = vpack.c.b16 %v626, %v623
      %v744 = vpack.c.b16 %v630, %v627
      %v745 = vpack.c.b16 %v631, %v628
      %v746 = vpack.c.b16 %v632, %v629
      %v747 = vpack.c.b16 %v636, %v633
      %v748 = vpack.c.b16 %v637, %v634
      %v749 = vpack.c.b16 %v638, %v635
      %v750 = vpack.c.b16 %v642, %v639
      %v751 = vpack.c.b16 %v643, %v640
      %v752 = vpack.c.b16 %v644, %v641
      %v753 = vpack.c.b16 %v648, %v645
      %v754 = vpack.c.b16 %v649, %v646
      %v755 = vpack.c.b16 %v650, %v647
      %v756 = vpack.c.b16 %v654, %v651
      %v757 = vpack.c.b16 %v655, %v652
      %v758 = vpack.c.b16 %v656, %v653
      %v759 = vpack.c.b16 %v660, %v657
      %v760 = vpack.c.b16 %v661, %v658
      %v761 = vpack.c.b16 %v662, %v659
      %v762 = vpack.c.b16 %v666, %v663
      %v763 = vpack.c.b16 %v667, %v664
      %v764 = vpack.c.b16 %v668, %v665
      %v865 = vunpack.c.l.b16 %v306
      %v866 = vunpack.c.l.b16 %v307
      %v867 = vunpack.c.l.b16 %v308
      %v868 = vunpack.c.l.b16 %v309
      %v869 = vunpack.c.l.b16 %v310
      %v870 = vunpack.c.l.b16 %v311
      %v871 = vunpack.c.l.b16 %v312
      %v872 = vunpack.c.l.b16 %v313
      %v873 = vunpack.c.l.b16 %v314
      %v874 = vunpack.c.l.b16 %v315
      %v875 = vunpack.c.l.b16 %v316
      %v876 = vunpack.c.l.b16 %v317
      %v877 = vunpack.c.l.b16 %v318
      %v878 = vunpack.c.l.b16 %v319
      %v879 = vunpack.c.l.b16 %v320
      %v880 = vunpack.c.l.b16 %v321
      %v881 = vunpack.c.l.b16 %v322
      %v882 = vunpack.c.l.b16 %v323
      %v883 = vunpack.c.l.b16 %v324
      %v884 = vunpack.c.l.b16 %v325
      %v885 = vunpack.c.l.b16 %v326
      %v886 = vunpack.c.l.b16 %v327
      %v887 = vunpack.c.l.b16 %v328
      %v888 = vunpack.c.l.b16 %v329
      %v889 = vunpack.c.l.b16 %v330
      %v890 = vunpack.c.l.b16 %v331
      %v891 = vunpack.c.l.b16 %v332
      %v892 = vunpack.c.l.b16 %v333
      %v893 = vunpack.c.l.b16 %v334
      %v894 = vunpack.c.l.b16 %v335
      %v895 = vunpack.c.l.b16 %v336
      %v896 = vunpack.c.l.b16 %v337
      %v897 = vunpack.c.l.b16 %v338
      %v898 = vunpack.c.l.b16 %v339
      %v899 = vunpack.c.l.b16 %v340
      %v900 = vunpack.c.l.b16 %v341
      %v901 = vpack.c.b16 %v866, %v865
      %v902 = vpack.c.b16 %v868, %v867
      %v903 = vpack.c.b16 %v870, %v869
      %v904 = vpack.c.b16 %v872, %v871
      %v905 = vpack.c.b16 %v874, %v873
      %v906 = vpack.c.b16 %v876, %v875
      %v907 = vpack.c.b16 %v878, %v877
      %v908 = vpack.c.b16 %v880, %v879
      %v909 = vpack.c.b16 %v882, %v881
      %v910 = vpack.c.b16 %v884, %v883
      %v911 = vpack.c.b16 %v886, %v885
      %v912 = vpack.c.b16 %v888, %v887
      %v913 = vpack.c.b16 %v890, %v889
      %v914 = vpack.c.b16 %v892, %v891
      %v915 = vpack.c.b16 %v894, %v893
      %v916 = vpack.c.b16 %v896, %v895
      %v917 = vpack.c.b16 %v898, %v897
      %v918 = vpack.c.b16 %v900, %v899
      %vm937 = vcmask 261120
      %v939 = vsel %vm937, %v671, 0
      %v942 = vsel %vm937, %v674, 0
      %v945 = vsel %vm937, %v677, 0
      %v948 = vsel %vm937, %v680, 0
      %v951 = vsel %vm937, %v683, 0
      %v954 = vsel %vm937, %v686, 0
      %v957 = vsel %vm937, %v689, 0
      %v960 = vsel %vm937, %v692, 0
      %v963 = vsel %vm937, %v695, 0
      %v966 = vsel %vm937, %v698, 0
      %v969 = vsel %vm937, %v701, 0
      %v972 = vsel %vm937, %v704, 0
      %v975 = vsel %vm937, %v707, 0
      %v978 = vsel %vm937, %v710, 0
      %v981 = vsel %vm937, %v713, 0
      %v984 = vsel %vm937, %v716, 0
      %v987 = vsel %vm937, %v719, 0
      %v990 = vsel %vm937, %v722, 0
      %v993 = vsel %vm937, %v725, 0
      %v996 = vsel %vm937, %v728, 0
      %v999 = vsel %vm937, %v731, 0
      %v1002 = vsel %vm937, %v734, 0
      %v1005 = vsel %vm937, %v737, 0
      %v1008 = vsel %vm937, %v740, 0
      %v1011 = vsel %vm937, %v743, 0
      %v1014 = vsel %vm937, %v746, 0
      %v1017 = vsel %vm937, %v749, 0
      %v1020 = vsel %vm937, %v752, 0
      %v1023 = vsel %vm937, %v755, 0
      %v1026 = vsel %vm937, %v758, 0
      %v1029 = vsel %vm937, %v761, 0
      %v1032 = vsel %vm937, %v764, 0
      %1034 = vmatprep.subr.bf16.mxu0 0
      %1035 = vmatpush1.bf16.msra.mxu0 %v908
      %1036 = vmatprep.subr.bf16.mxu0 0
      %1037 = vmatpush1.bf16.msra.mxu0 %v907
      %1038 = vmatprep.subr.bf16.mxu0 0
      %1039 = vmatpush1.bf16.msra.mxu0 %v906
      %1040 = vmatprep.subr.bf16.mxu0 0
      %1041 = vmatpush1.bf16.msra.mxu0 %v905
      %1042 = vmatprep.subr.bf16.mxu0 0
      %1043 = vmatpush1.bf16.msra.mxu0 %v904
      %1044 = vmatprep.subr.bf16.mxu0 0
      %1045 = vmatpush1.bf16.msra.mxu0 %v903
      %1046 = vmatprep.subr.bf16.mxu0 0
      %1047 = vmatpush1.bf16.msra.mxu0 %v902
      %1048 = vmatprep.subr.bf16.mxu0 0
      %1049 = vmatpush1.bf16.msra.mxu0 %v901
      %1050 = vmatprep.subr.bf16.mxu0 0
      %1051 = vmatpush2.bf16.msra.mxu0 %v916
      %1052 = vmatprep.subr.bf16.mxu0 0
      %1053 = vmatpush2.bf16.msra.mxu0 %v915
      %1054 = vmatprep.subr.bf16.mxu0 0
      %1055 = vmatpush2.bf16.msra.mxu0 %v914
      %1056 = vmatprep.subr.bf16.mxu0 0
      %1057 = vmatpush2.bf16.msra.mxu0 %v913
      %1058 = vmatprep.subr.bf16.mxu0 0
      %1059 = vmatpush2.bf16.msra.mxu0 %v912
      %1060 = vmatprep.subr.bf16.mxu0 0
      %1061 = vmatpush2.bf16.msra.mxu0 %v911
      %1062 = vmatprep.subr.bf16.mxu0 0
      %1063 = vmatpush2.bf16.msra.mxu0 %v910
      %1064 = vmatprep.subr.bf16.mxu0 0
      %1065 = vmatpush2.bf16.msra.mxu0 %v909
      %1066 = vmatprep.mubr.bf16.mxu0 %v670
      %1067 = vmatmul.mubr.bf16.gmra.mxu0 %v669
      %v1068 = vpop.f32.mrf.mxu0
      %v1069 = vadd.f32 %v347, %v1068
      %v1070 = vpop.f32.mrf.mxu0
      %v1071 = vpop.f32.mrf.mxu0
      %v1072 = vadd.f32 %v347, %v1071
      %v1073 = vpop.f32.mrf.mxu0
      %1074 = vmatprep.mubr.bf16.mxu0 %v673
      %1075 = vmatmul.mubr.bf16.gmra.mxu0 %v672
      %v1076 = vpop.f32.mrf.mxu0
      %v1077 = vadd.f32 %v347, %v1076
      %v1078 = vpop.f32.mrf.mxu0
      %v1079 = vpop.f32.mrf.mxu0
      %v1080 = vadd.f32 %v347, %v1079
      %v1081 = vpop.f32.mrf.mxu0
      %1082 = vmatprep.mubr.bf16.mxu0 %v676
      %1083 = vmatmul.mubr.bf16.gmra.mxu0 %v675
      %v1084 = vpop.f32.mrf.mxu0
      %v1085 = vadd.f32 %v347, %v1084
      %v1086 = vpop.f32.mrf.mxu0
      %v1087 = vpop.f32.mrf.mxu0
      %v1088 = vadd.f32 %v347, %v1087
      %v1089 = vpop.f32.mrf.mxu0
      %1090 = vmatprep.mubr.bf16.mxu0 %v679
      %1091 = vmatmul.mubr.bf16.gmra.mxu0 %v678
      %v1092 = vpop.f32.mrf.mxu0
      %v1093 = vadd.f32 %v347, %v1092
      %v1094 = vpop.f32.mrf.mxu0
      %v1095 = vpop.f32.mrf.mxu0
      %v1096 = vadd.f32 %v347, %v1095
      %v1097 = vpop.f32.mrf.mxu0
      %1098 = vmatprep.mubr.bf16.mxu0 %v682
      %1099 = vmatmul.mubr.bf16.gmra.mxu0 %v681
      %v1100 = vpop.f32.mrf.mxu0
      %v1101 = vadd.f32 %v347, %v1100
      %v1102 = vpop.f32.mrf.mxu0
      %v1103 = vpop.f32.mrf.mxu0
      %v1104 = vadd.f32 %v347, %v1103
      %v1105 = vpop.f32.mrf.mxu0
      %1106 = vmatprep.mubr.bf16.mxu0 %v685
      %1107 = vmatmul.mubr.bf16.gmra.mxu0 %v684
      %v1108 = vpop.f32.mrf.mxu0
      %v1109 = vadd.f32 %v347, %v1108
      %v1110 = vpop.f32.mrf.mxu0
      %v1111 = vpop.f32.mrf.mxu0
      %v1112 = vadd.f32 %v347, %v1111
      %v1113 = vpop.f32.mrf.mxu0
      %1114 = vmatprep.mubr.bf16.mxu0 %v688
      %1115 = vmatmul.mubr.bf16.gmra.mxu0 %v687
      %v1116 = vpop.f32.mrf.mxu0
      %v1117 = vadd.f32 %v347, %v1116
      %v1118 = vpop.f32.mrf.mxu0
      %v1119 = vpop.f32.mrf.mxu0
      %v1120 = vadd.f32 %v347, %v1119
      %v1121 = vpop.f32.mrf.mxu0
      %1122 = vmatprep.mubr.bf16.mxu0 %v691
      %1123 = vmatmul.mubr.bf16.gmra.mxu0 %v690
      %v1124 = vpop.f32.mrf.mxu0
      %v1125 = vadd.f32 %v347, %v1124
      %v1126 = vpop.f32.mrf.mxu0
      %v1127 = vpop.f32.mrf.mxu0
      %v1128 = vadd.f32 %v347, %v1127
      %v1129 = vpop.f32.mrf.mxu0
      %1130 = vmatprep.mubr.bf16.mxu0 %v694
      %1131 = vmatmul.mubr.bf16.gmra.mxu0 %v693
      %v1132 = vpop.f32.mrf.mxu0
      %v1133 = vadd.f32 %v347, %v1132
      %v1134 = vpop.f32.mrf.mxu0
      %v1135 = vpop.f32.mrf.mxu0
      %v1136 = vadd.f32 %v347, %v1135
      %v1137 = vpop.f32.mrf.mxu0
      %1138 = vmatprep.mubr.bf16.mxu0 %v697
      %1139 = vmatmul.mubr.bf16.gmra.mxu0 %v696
      %v1140 = vpop.f32.mrf.mxu0
      %v1141 = vadd.f32 %v347, %v1140
      %v1142 = vpop.f32.mrf.mxu0
      %v1143 = vpop.f32.mrf.mxu0
      %v1144 = vadd.f32 %v347, %v1143
      %v1145 = vpop.f32.mrf.mxu0
      %1146 = vmatprep.mubr.bf16.mxu0 %v700
      %1147 = vmatmul.mubr.bf16.gmra.mxu0 %v699
      %v1148 = vpop.f32.mrf.mxu0
      %v1149 = vadd.f32 %v347, %v1148
      %v1150 = vpop.f32.mrf.mxu0
      %v1151 = vpop.f32.mrf.mxu0
      %v1152 = vadd.f32 %v347, %v1151
      %v1153 = vpop.f32.mrf.mxu0
      %1154 = vmatprep.mubr.bf16.mxu0 %v703
      %1155 = vmatmul.mubr.bf16.gmra.mxu0 %v702
      %v1156 = vpop.f32.mrf.mxu0
      %v1157 = vadd.f32 %v347, %v1156
      %v1158 = vpop.f32.mrf.mxu0
      %v1159 = vpop.f32.mrf.mxu0
      %v1160 = vadd.f32 %v347, %v1159
      %v1161 = vpop.f32.mrf.mxu0
      %1162 = vmatprep.mubr.bf16.mxu0 %v706
      %1163 = vmatmul.mubr.bf16.gmra.mxu0 %v705
      %v1164 = vpop.f32.mrf.mxu0
      %v1165 = vadd.f32 %v347, %v1164
      %v1166 = vpop.f32.mrf.mxu0
      %v1167 = vpop.f32.mrf.mxu0
      %v1168 = vadd.f32 %v347, %v1167
      %v1169 = vpop.f32.mrf.mxu0
      %1170 = vmatprep.mubr.bf16.mxu0 %v709
      %1171 = vmatmul.mubr.bf16.gmra.mxu0 %v708
      %v1172 = vpop.f32.mrf.mxu0
      %v1173 = vadd.f32 %v347, %v1172
      %v1174 = vpop.f32.mrf.mxu0
      %v1175 = vpop.f32.mrf.mxu0
      %v1176 = vadd.f32 %v347, %v1175
      %v1177 = vpop.f32.mrf.mxu0
      %1178 = vmatprep.mubr.bf16.mxu0 %v712
      %1179 = vmatmul.mubr.bf16.gmra.mxu0 %v711
      %v1180 = vpop.f32.mrf.mxu0
      %v1181 = vadd.f32 %v347, %v1180
      %v1182 = vpop.f32.mrf.mxu0
      %v1183 = vpop.f32.mrf.mxu0
      %v1184 = vadd.f32 %v347, %v1183
      %v1185 = vpop.f32.mrf.mxu0
      %1186 = vmatprep.mubr.bf16.mxu0 %v715
      %1187 = vmatmul.mubr.bf16.gmra.mxu0 %v714
      %v1188 = vpop.f32.mrf.mxu0
      %v1189 = vadd.f32 %v347, %v1188
      %v1190 = vpop.f32.mrf.mxu0
      %v1191 = vpop.f32.mrf.mxu0
      %v1192 = vadd.f32 %v347, %v1191
      %v1193 = vpop.f32.mrf.mxu0
      %1194 = vmatprep.mubr.bf16.mxu0 %v718
      %1195 = vmatmul.mubr.bf16.gmra.mxu0 %v717
      %v1196 = vpop.f32.mrf.mxu0
      %v1197 = vadd.f32 %v347, %v1196
      %v1198 = vpop.f32.mrf.mxu0
      %v1199 = vpop.f32.mrf.mxu0
      %v1200 = vadd.f32 %v347, %v1199
      %v1201 = vpop.f32.mrf.mxu0
      %1202 = vmatprep.mubr.bf16.mxu0 %v721
      %1203 = vmatmul.mubr.bf16.gmra.mxu0 %v720
      %v1204 = vpop.f32.mrf.mxu0
      %v1205 = vadd.f32 %v347, %v1204
      %v1206 = vpop.f32.mrf.mxu0
      %v1207 = vpop.f32.mrf.mxu0
      %v1208 = vadd.f32 %v347, %v1207
      %v1209 = vpop.f32.mrf.mxu0
      %1210 = vmatprep.mubr.bf16.mxu0 %v724
      %1211 = vmatmul.mubr.bf16.gmra.mxu0 %v723
      %v1212 = vpop.f32.mrf.mxu0
      %v1213 = vadd.f32 %v347, %v1212
      %v1214 = vpop.f32.mrf.mxu0
      %v1215 = vpop.f32.mrf.mxu0
      %v1216 = vadd.f32 %v347, %v1215
      %v1217 = vpop.f32.mrf.mxu0
      %1218 = vmatprep.mubr.bf16.mxu0 %v727
      %1219 = vmatmul.mubr.bf16.gmra.mxu0 %v726
      %v1220 = vpop.f32.mrf.mxu0
      %v1221 = vadd.f32 %v347, %v1220
      %v1222 = vpop.f32.mrf.mxu0
      %v1223 = vpop.f32.mrf.mxu0
      %v1224 = vadd.f32 %v347, %v1223
      %v1225 = vpop.f32.mrf.mxu0
      %1226 = vmatprep.mubr.bf16.mxu0 %v730
      %1227 = vmatmul.mubr.bf16.gmra.mxu0 %v729
      %v1228 = vpop.f32.mrf.mxu0
      %v1229 = vadd.f32 %v347, %v1228
      %v1230 = vpop.f32.mrf.mxu0
      %v1231 = vpop.f32.mrf.mxu0
      %v1232 = vadd.f32 %v347, %v1231
      %v1233 = vpop.f32.mrf.mxu0
      %1234 = vmatprep.mubr.bf16.mxu0 %v733
      %1235 = vmatmul.mubr.bf16.gmra.mxu0 %v732
      %v1236 = vpop.f32.mrf.mxu0
      %v1237 = vadd.f32 %v347, %v1236
      %v1238 = vpop.f32.mrf.mxu0
      %v1239 = vpop.f32.mrf.mxu0
      %v1240 = vadd.f32 %v347, %v1239
      %v1241 = vpop.f32.mrf.mxu0
      %1242 = vmatprep.mubr.bf16.mxu0 %v736
      %1243 = vmatmul.mubr.bf16.gmra.mxu0 %v735
      %v1244 = vpop.f32.mrf.mxu0
      %v1245 = vadd.f32 %v347, %v1244
      %v1246 = vpop.f32.mrf.mxu0
      %v1247 = vpop.f32.mrf.mxu0
      %v1248 = vadd.f32 %v347, %v1247
      %v1249 = vpop.f32.mrf.mxu0
      %1250 = vmatprep.mubr.bf16.mxu0 %v739
      %1251 = vmatmul.mubr.bf16.gmra.mxu0 %v738
      %v1252 = vpop.f32.mrf.mxu0
      %v1253 = vadd.f32 %v347, %v1252
      %v1254 = vpop.f32.mrf.mxu0
      %v1255 = vpop.f32.mrf.mxu0
      %v1256 = vadd.f32 %v347, %v1255
      %v1257 = vpop.f32.mrf.mxu0
      %1258 = vmatprep.mubr.bf16.mxu0 %v742
      %1259 = vmatmul.mubr.bf16.gmra.mxu0 %v741
      %v1260 = vpop.f32.mrf.mxu0
      %v1261 = vadd.f32 %v347, %v1260
      %v1262 = vpop.f32.mrf.mxu0
      %v1263 = vpop.f32.mrf.mxu0
      %v1264 = vadd.f32 %v347, %v1263
      %v1265 = vpop.f32.mrf.mxu0
      %1266 = vmatprep.mubr.bf16.mxu0 %v745
      %1267 = vmatmul.mubr.bf16.gmra.mxu0 %v744
      %v1268 = vpop.f32.mrf.mxu0
      %v1269 = vadd.f32 %v347, %v1268
      %v1270 = vpop.f32.mrf.mxu0
      %v1271 = vpop.f32.mrf.mxu0
      %v1272 = vadd.f32 %v347, %v1271
      %v1273 = vpop.f32.mrf.mxu0
      %1274 = vmatprep.mubr.bf16.mxu0 %v748
      %1275 = vmatmul.mubr.bf16.gmra.mxu0 %v747
      %v1276 = vpop.f32.mrf.mxu0
      %v1277 = vadd.f32 %v347, %v1276
      %v1278 = vpop.f32.mrf.mxu0
      %v1279 = vpop.f32.mrf.mxu0
      %v1280 = vadd.f32 %v347, %v1279
      %v1281 = vpop.f32.mrf.mxu0
      %1282 = vmatprep.mubr.bf16.mxu0 %v751
      %1283 = vmatmul.mubr.bf16.gmra.mxu0 %v750
      %v1284 = vpop.f32.mrf.mxu0
      %v1285 = vadd.f32 %v347, %v1284
      %v1286 = vpop.f32.mrf.mxu0
      %v1287 = vpop.f32.mrf.mxu0
      %v1288 = vadd.f32 %v347, %v1287
      %v1289 = vpop.f32.mrf.mxu0
      %1290 = vmatprep.mubr.bf16.mxu0 %v754
      %1291 = vmatmul.mubr.bf16.gmra.mxu0 %v753
      %v1292 = vpop.f32.mrf.mxu0
      %v1293 = vadd.f32 %v347, %v1292
      %v1294 = vpop.f32.mrf.mxu0
      %v1295 = vpop.f32.mrf.mxu0
      %v1296 = vadd.f32 %v347, %v1295
      %v1297 = vpop.f32.mrf.mxu0
      %1298 = vmatprep.mubr.bf16.mxu0 %v757
      %1299 = vmatmul.mubr.bf16.gmra.mxu0 %v756
      %v1300 = vpop.f32.mrf.mxu0
      %v1301 = vadd.f32 %v347, %v1300
      %v1302 = vpop.f32.mrf.mxu0
      %v1303 = vpop.f32.mrf.mxu0
      %v1304 = vadd.f32 %v347, %v1303
      %v1305 = vpop.f32.mrf.mxu0
      %1306 = vmatprep.mubr.bf16.mxu0 %v760
      %1307 = vmatmul.mubr.bf16.gmra.mxu0 %v759
      %v1308 = vpop.f32.mrf.mxu0
      %v1309 = vadd.f32 %v347, %v1308
      %v1310 = vpop.f32.mrf.mxu0
      %v1311 = vpop.f32.mrf.mxu0
      %v1312 = vadd.f32 %v347, %v1311
      %v1313 = vpop.f32.mrf.mxu0
      %1314 = vmatprep.mubr.bf16.mxu0 %v763
      %1315 = vmatmul.mubr.bf16.gmra.mxu0 %v762
      %v1316 = vpop.f32.mrf.mxu0
      %v1317 = vadd.f32 %v347, %v1316
      %v1318 = vpop.f32.mrf.mxu0
      %v1319 = vpop.f32.mrf.mxu0
      %v1320 = vadd.f32 %v347, %v1319
      %v1321 = vpop.f32.mrf.mxu0
      %1322 = vdwg.mxu0
      %1323 = vmatprep.subr.bf16.mxu0 0
      %1324 = vmatpush1.bf16.msra.mxu0 0
      %1325 = vmatprep.subr.bf16.mxu0 0
      %1326 = vmatpush1.bf16.msra.mxu0 0
      %1327 = vmatprep.subr.bf16.mxu0 0
      %1328 = vmatpush1.bf16.msra.mxu0 0
      %1329 = vmatprep.subr.bf16.mxu0 0
      %1330 = vmatpush1.bf16.msra.mxu0 0
      %1331 = vmatprep.subr.bf16.mxu0 0
      %1332 = vmatpush1.bf16.msra.mxu0 0
      %1333 = vmatprep.subr.bf16.mxu0 0
      %1334 = vmatpush1.bf16.msra.mxu0 0
      %1335 = vmatprep.subr.bf16.mxu0 0
      %1336 = vmatpush1.bf16.msra.mxu0 %v918
      %1337 = vmatprep.subr.bf16.mxu0 0
      %1338 = vmatpush1.bf16.msra.mxu0 %v917
      %1339 = vmatprep.subr.bf16.mxu0 0
      %1340 = vmatpush2.bf16.msra.mxu0 0
      %1341 = vmatprep.subr.bf16.mxu0 0
      %1342 = vmatpush2.bf16.msra.mxu0 0
      %1343 = vmatprep.subr.bf16.mxu0 0
      %1344 = vmatpush2.bf16.msra.mxu0 0
      %1345 = vmatprep.subr.bf16.mxu0 0
      %1346 = vmatpush2.bf16.msra.mxu0 0
      %1347 = vmatprep.subr.bf16.mxu0 0
      %1348 = vmatpush2.bf16.msra.mxu0 0
      %1349 = vmatprep.subr.bf16.mxu0 0
      %1350 = vmatpush2.bf16.msra.mxu0 0
      %1351 = vmatprep.subr.bf16.mxu0 0
      %1352 = vmatpush2.bf16.msra.mxu0 0
      %1353 = vmatprep.subr.bf16.mxu0 0
      %1354 = vmatpush2.bf16.msra.mxu0 0
      %1355 = vmatprep.mubr.bf16.mxu0 0
      %1356 = vmatmul.mubr.bf16.gmra.mxu0 %v939
      %v1357 = vpop.f32.mrf.mxu0
      %v1358 = vadd.f32 %v1069, %v1357
      %v1359 = vpop.f32.mrf.mxu0
      %v1360 = vpop.f32.mrf.mxu0
      %v1361 = vadd.f32 %v1072, %v1360
      %v1362 = vpop.f32.mrf.mxu0
      %1363 = vmatprep.mubr.bf16.mxu0 0
      %1364 = vmatmul.mubr.bf16.gmra.mxu0 %v942
      %v1365 = vpop.f32.mrf.mxu0
      %v1366 = vadd.f32 %v1077, %v1365
      %v1367 = vpop.f32.mrf.mxu0
      %v1368 = vpop.f32.mrf.mxu0
      %v1369 = vadd.f32 %v1080, %v1368
      %v1370 = vpop.f32.mrf.mxu0
      %1371 = vmatprep.mubr.bf16.mxu0 0
      %1372 = vmatmul.mubr.bf16.gmra.mxu0 %v945
      %v1373 = vpop.f32.mrf.mxu0
      %v1374 = vadd.f32 %v1085, %v1373
      %v1375 = vpop.f32.mrf.mxu0
      %v1376 = vpop.f32.mrf.mxu0
      %v1377 = vadd.f32 %v1088, %v1376
      %v1378 = vpop.f32.mrf.mxu0
      %1379 = vmatprep.mubr.bf16.mxu0 0
      %1380 = vmatmul.mubr.bf16.gmra.mxu0 %v948
      %v1381 = vpop.f32.mrf.mxu0
      %v1382 = vadd.f32 %v1093, %v1381
      %v1383 = vpop.f32.mrf.mxu0
      %v1384 = vpop.f32.mrf.mxu0
      %v1385 = vadd.f32 %v1096, %v1384
      %v1386 = vpop.f32.mrf.mxu0
      %1387 = vmatprep.mubr.bf16.mxu0 0
      %1388 = vmatmul.mubr.bf16.gmra.mxu0 %v951
      %v1389 = vpop.f32.mrf.mxu0
      %v1390 = vadd.f32 %v1101, %v1389
      %v1391 = vpop.f32.mrf.mxu0
      %v1392 = vpop.f32.mrf.mxu0
      %v1393 = vadd.f32 %v1104, %v1392
      %v1394 = vpop.f32.mrf.mxu0
      %1395 = vmatprep.mubr.bf16.mxu0 0
      %1396 = vmatmul.mubr.bf16.gmra.mxu0 %v954
      %v1397 = vpop.f32.mrf.mxu0
      %v1398 = vadd.f32 %v1109, %v1397
      %v1399 = vpop.f32.mrf.mxu0
      %v1400 = vpop.f32.mrf.mxu0
      %v1401 = vadd.f32 %v1112, %v1400
      %v1402 = vpop.f32.mrf.mxu0
      %1403 = vmatprep.mubr.bf16.mxu0 0
      %1404 = vmatmul.mubr.bf16.gmra.mxu0 %v957
      %v1405 = vpop.f32.mrf.mxu0
      %v1406 = vadd.f32 %v1117, %v1405
      %v1407 = vpop.f32.mrf.mxu0
      %v1408 = vpop.f32.mrf.mxu0
      %v1409 = vadd.f32 %v1120, %v1408
      %v1410 = vpop.f32.mrf.mxu0
      %1411 = vmatprep.mubr.bf16.mxu0 0
      %1412 = vmatmul.mubr.bf16.gmra.mxu0 %v960
      %v1413 = vpop.f32.mrf.mxu0
      %v1414 = vadd.f32 %v1125, %v1413
      %v1415 = vpop.f32.mrf.mxu0
      %v1416 = vpop.f32.mrf.mxu0
      %v1417 = vadd.f32 %v1128, %v1416
      %v1418 = vpop.f32.mrf.mxu0
      %1419 = vmatprep.mubr.bf16.mxu0 0
      %1420 = vmatmul.mubr.bf16.gmra.mxu0 %v963
      %v1421 = vpop.f32.mrf.mxu0
      %v1422 = vadd.f32 %v1133, %v1421
      %v1423 = vpop.f32.mrf.mxu0
      %v1424 = vpop.f32.mrf.mxu0
      %v1425 = vadd.f32 %v1136, %v1424
      %v1426 = vpop.f32.mrf.mxu0
      %1427 = vmatprep.mubr.bf16.mxu0 0
      %1428 = vmatmul.mubr.bf16.gmra.mxu0 %v966
      %v1429 = vpop.f32.mrf.mxu0
      %v1430 = vadd.f32 %v1141, %v1429
      %v1431 = vpop.f32.mrf.mxu0
      %v1432 = vpop.f32.mrf.mxu0
      %v1433 = vadd.f32 %v1144, %v1432
      %v1434 = vpop.f32.mrf.mxu0
      %1435 = vmatprep.mubr.bf16.mxu0 0
      %1436 = vmatmul.mubr.bf16.gmra.mxu0 %v969
      %v1437 = vpop.f32.mrf.mxu0
      %v1438 = vadd.f32 %v1149, %v1437
      %v1439 = vpop.f32.mrf.mxu0
      %v1440 = vpop.f32.mrf.mxu0
      %v1441 = vadd.f32 %v1152, %v1440
      %v1442 = vpop.f32.mrf.mxu0
      %1443 = vmatprep.mubr.bf16.mxu0 0
      %1444 = vmatmul.mubr.bf16.gmra.mxu0 %v972
      %v1445 = vpop.f32.mrf.mxu0
      %v1446 = vadd.f32 %v1157, %v1445
      %v1447 = vpop.f32.mrf.mxu0
      %v1448 = vpop.f32.mrf.mxu0
      %v1449 = vadd.f32 %v1160, %v1448
      %v1450 = vpop.f32.mrf.mxu0
      %1451 = vmatprep.mubr.bf16.mxu0 0
      %1452 = vmatmul.mubr.bf16.gmra.mxu0 %v975
      %v1453 = vpop.f32.mrf.mxu0
      %v1454 = vadd.f32 %v1165, %v1453
      %v1455 = vpop.f32.mrf.mxu0
      %v1456 = vpop.f32.mrf.mxu0
      %v1457 = vadd.f32 %v1168, %v1456
      %v1458 = vpop.f32.mrf.mxu0
      %1459 = vmatprep.mubr.bf16.mxu0 0
      %1460 = vmatmul.mubr.bf16.gmra.mxu0 %v978
      %v1461 = vpop.f32.mrf.mxu0
      %v1462 = vadd.f32 %v1173, %v1461
      %v1463 = vpop.f32.mrf.mxu0
      %v1464 = vpop.f32.mrf.mxu0
      %v1465 = vadd.f32 %v1176, %v1464
      %v1466 = vpop.f32.mrf.mxu0
      %1467 = vmatprep.mubr.bf16.mxu0 0
      %1468 = vmatmul.mubr.bf16.gmra.mxu0 %v981
      %v1469 = vpop.f32.mrf.mxu0
      %v1470 = vadd.f32 %v1181, %v1469
      %v1471 = vpop.f32.mrf.mxu0
      %v1472 = vpop.f32.mrf.mxu0
      %v1473 = vadd.f32 %v1184, %v1472
      %v1474 = vpop.f32.mrf.mxu0
      %1475 = vmatprep.mubr.bf16.mxu0 0
      %1476 = vmatmul.mubr.bf16.gmra.mxu0 %v984
      %v1477 = vpop.f32.mrf.mxu0
      %v1478 = vadd.f32 %v1189, %v1477
      %v1479 = vpop.f32.mrf.mxu0
      %v1480 = vpop.f32.mrf.mxu0
      %v1481 = vadd.f32 %v1192, %v1480
      %v1482 = vpop.f32.mrf.mxu0
      %1483 = vmatprep.mubr.bf16.mxu0 0
      %1484 = vmatmul.mubr.bf16.gmra.mxu0 %v987
      %v1485 = vpop.f32.mrf.mxu0
      %v1486 = vadd.f32 %v1197, %v1485
      %v1487 = vpop.f32.mrf.mxu0
      %v1488 = vpop.f32.mrf.mxu0
      %v1489 = vadd.f32 %v1200, %v1488
      %v1490 = vpop.f32.mrf.mxu0
      %1491 = vmatprep.mubr.bf16.mxu0 0
      %1492 = vmatmul.mubr.bf16.gmra.mxu0 %v990
      %v1493 = vpop.f32.mrf.mxu0
      %v1494 = vadd.f32 %v1205, %v1493
      %v1495 = vpop.f32.mrf.mxu0
      %v1496 = vpop.f32.mrf.mxu0
      %v1497 = vadd.f32 %v1208, %v1496
      %v1498 = vpop.f32.mrf.mxu0
      %1499 = vmatprep.mubr.bf16.mxu0 0
      %1500 = vmatmul.mubr.bf16.gmra.mxu0 %v993
      %v1501 = vpop.f32.mrf.mxu0
      %v1502 = vadd.f32 %v1213, %v1501
      %v1503 = vpop.f32.mrf.mxu0
      %v1504 = vpop.f32.mrf.mxu0
      %v1505 = vadd.f32 %v1216, %v1504
      %v1506 = vpop.f32.mrf.mxu0
      %1507 = vmatprep.mubr.bf16.mxu0 0
      %1508 = vmatmul.mubr.bf16.gmra.mxu0 %v996
      %v1509 = vpop.f32.mrf.mxu0
      %v1510 = vadd.f32 %v1221, %v1509
      %v1511 = vpop.f32.mrf.mxu0
      %v1512 = vpop.f32.mrf.mxu0
      %v1513 = vadd.f32 %v1224, %v1512
      %v1514 = vpop.f32.mrf.mxu0
      %1515 = vmatprep.mubr.bf16.mxu0 0
      %1516 = vmatmul.mubr.bf16.gmra.mxu0 %v999
      %v1517 = vpop.f32.mrf.mxu0
      %v1518 = vadd.f32 %v1229, %v1517
      %v1519 = vpop.f32.mrf.mxu0
      %v1520 = vpop.f32.mrf.mxu0
      %v1521 = vadd.f32 %v1232, %v1520
      %v1522 = vpop.f32.mrf.mxu0
      %1523 = vmatprep.mubr.bf16.mxu0 0
      %1524 = vmatmul.mubr.bf16.gmra.mxu0 %v1002
      %v1525 = vpop.f32.mrf.mxu0
      %v1526 = vadd.f32 %v1237, %v1525
      %v1527 = vpop.f32.mrf.mxu0
      %v1528 = vpop.f32.mrf.mxu0
      %v1529 = vadd.f32 %v1240, %v1528
      %v1530 = vpop.f32.mrf.mxu0
      %1531 = vmatprep.mubr.bf16.mxu0 0
      %1532 = vmatmul.mubr.bf16.gmra.mxu0 %v1005
      %v1533 = vpop.f32.mrf.mxu0
      %v1534 = vadd.f32 %v1245, %v1533
      %v1535 = vpop.f32.mrf.mxu0
      %v1536 = vpop.f32.mrf.mxu0
      %v1537 = vadd.f32 %v1248, %v1536
      %v1538 = vpop.f32.mrf.mxu0
      %1539 = vmatprep.mubr.bf16.mxu0 0
      %1540 = vmatmul.mubr.bf16.gmra.mxu0 %v1008
      %v1541 = vpop.f32.mrf.mxu0
      %v1542 = vadd.f32 %v1253, %v1541
      %v1543 = vpop.f32.mrf.mxu0
      %v1544 = vpop.f32.mrf.mxu0
      %v1545 = vadd.f32 %v1256, %v1544
      %v1546 = vpop.f32.mrf.mxu0
      %1547 = vmatprep.mubr.bf16.mxu0 0
      %1548 = vmatmul.mubr.bf16.gmra.mxu0 %v1011
      %v1549 = vpop.f32.mrf.mxu0
      %v1550 = vadd.f32 %v1261, %v1549
      %v1551 = vpop.f32.mrf.mxu0
      %v1552 = vpop.f32.mrf.mxu0
      %v1553 = vadd.f32 %v1264, %v1552
      %v1554 = vpop.f32.mrf.mxu0
      %1555 = vmatprep.mubr.bf16.mxu0 0
      %1556 = vmatmul.mubr.bf16.gmra.mxu0 %v1014
      %v1557 = vpop.f32.mrf.mxu0
      %v1558 = vadd.f32 %v1269, %v1557
      %v1559 = vpop.f32.mrf.mxu0
      %v1560 = vpop.f32.mrf.mxu0
      %v1561 = vadd.f32 %v1272, %v1560
      %v1562 = vpop.f32.mrf.mxu0
      %1563 = vmatprep.mubr.bf16.mxu0 0
      %1564 = vmatmul.mubr.bf16.gmra.mxu0 %v1017
      %v1565 = vpop.f32.mrf.mxu0
      %v1566 = vadd.f32 %v1277, %v1565
      %v1567 = vpop.f32.mrf.mxu0
      %v1568 = vpop.f32.mrf.mxu0
      %v1569 = vadd.f32 %v1280, %v1568
      %v1570 = vpop.f32.mrf.mxu0
      %1571 = vmatprep.mubr.bf16.mxu0 0
      %1572 = vmatmul.mubr.bf16.gmra.mxu0 %v1020
      %v1573 = vpop.f32.mrf.mxu0
      %v1574 = vadd.f32 %v1285, %v1573
      %v1575 = vpop.f32.mrf.mxu0
      %v1576 = vpop.f32.mrf.mxu0
      %v1577 = vadd.f32 %v1288, %v1576
      %v1578 = vpop.f32.mrf.mxu0
      %1579 = vmatprep.mubr.bf16.mxu0 0
      %1580 = vmatmul.mubr.bf16.gmra.mxu0 %v1023
      %v1581 = vpop.f32.mrf.mxu0
      %v1582 = vadd.f32 %v1293, %v1581
      %v1583 = vpop.f32.mrf.mxu0
      %v1584 = vpop.f32.mrf.mxu0
      %v1585 = vadd.f32 %v1296, %v1584
      %v1586 = vpop.f32.mrf.mxu0
      %1587 = vmatprep.mubr.bf16.mxu0 0
      %1588 = vmatmul.mubr.bf16.gmra.mxu0 %v1026
      %v1589 = vpop.f32.mrf.mxu0
      %v1590 = vadd.f32 %v1301, %v1589
      %v1591 = vpop.f32.mrf.mxu0
      %v1592 = vpop.f32.mrf.mxu0
      %v1593 = vadd.f32 %v1304, %v1592
      %v1594 = vpop.f32.mrf.mxu0
      %1595 = vmatprep.mubr.bf16.mxu0 0
      %1596 = vmatmul.mubr.bf16.gmra.mxu0 %v1029
      %v1597 = vpop.f32.mrf.mxu0
      %v1598 = vadd.f32 %v1309, %v1597
      %v1599 = vpop.f32.mrf.mxu0
      %v1600 = vpop.f32.mrf.mxu0
      %v1601 = vadd.f32 %v1312, %v1600
      %v1602 = vpop.f32.mrf.mxu0
      %1603 = vmatprep.mubr.bf16.mxu0 0
      %1604 = vmatmul.mubr.bf16.gmra.mxu0 %v1032
      %v1605 = vpop.f32.mrf.mxu0
      %v1606 = vadd.f32 %v1317, %v1605
      %v1607 = vpop.f32.mrf.mxu0
      %v1608 = vpop.f32.mrf.mxu0
      %v1609 = vadd.f32 %v1320, %v1608
      %v1610 = vpop.f32.mrf.mxu0
      %1611 = vdwg.mxu0
      %v1612 = vsub.f32 0.0, %v1358
      %v1613 = vsub.f32 0.0, %v1361
      %v1614 = vsub.f32 0.0, %v1366
      %v1615 = vsub.f32 0.0, %v1369
      %v1616 = vsub.f32 0.0, %v1374
      %v1617 = vsub.f32 0.0, %v1377
      %v1618 = vsub.f32 0.0, %v1382
      %v1619 = vsub.f32 0.0, %v1385
      %v1620 = vsub.f32 0.0, %v1390
      %v1621 = vsub.f32 0.0, %v1393
      %v1622 = vsub.f32 0.0, %v1398
      %v1623 = vsub.f32 0.0, %v1401
      %v1624 = vsub.f32 0.0, %v1406
      %v1625 = vsub.f32 0.0, %v1409
      %v1626 = vsub.f32 0.0, %v1414
      %v1627 = vsub.f32 0.0, %v1417
      %v1628 = vsub.f32 0.0, %v1422
      %v1629 = vsub.f32 0.0, %v1425
      %v1630 = vsub.f32 0.0, %v1430
      %v1631 = vsub.f32 0.0, %v1433
      %v1632 = vsub.f32 0.0, %v1438
      %v1633 = vsub.f32 0.0, %v1441
      %v1634 = vsub.f32 0.0, %v1446
      %v1635 = vsub.f32 0.0, %v1449
      %v1636 = vsub.f32 0.0, %v1454
      %v1637 = vsub.f32 0.0, %v1457
      %v1638 = vsub.f32 0.0, %v1462
      %v1639 = vsub.f32 0.0, %v1465
      %v1640 = vsub.f32 0.0, %v1470
      %v1641 = vsub.f32 0.0, %v1473
      %v1642 = vsub.f32 0.0, %v1478
      %v1643 = vsub.f32 0.0, %v1481
      %v1644 = vsub.f32 0.0, %v1486
      %v1645 = vsub.f32 0.0, %v1489
      %v1646 = vsub.f32 0.0, %v1494
      %v1647 = vsub.f32 0.0, %v1497
      %v1648 = vsub.f32 0.0, %v1502
      %v1649 = vsub.f32 0.0, %v1505
      %v1650 = vsub.f32 0.0, %v1510
      %v1651 = vsub.f32 0.0, %v1513
      %v1652 = vsub.f32 0.0, %v1518
      %v1653 = vsub.f32 0.0, %v1521
      %v1654 = vsub.f32 0.0, %v1526
      %v1655 = vsub.f32 0.0, %v1529
      %v1656 = vsub.f32 0.0, %v1534
      %v1657 = vsub.f32 0.0, %v1537
      %v1658 = vsub.f32 0.0, %v1542
      %v1659 = vsub.f32 0.0, %v1545
      %v1660 = vsub.f32 0.0, %v1550
      %v1661 = vsub.f32 0.0, %v1553
      %v1662 = vsub.f32 0.0, %v1558
      %v1663 = vsub.f32 0.0, %v1561
      %v1664 = vsub.f32 0.0, %v1566
      %v1665 = vsub.f32 0.0, %v1569
      %v1666 = vsub.f32 0.0, %v1574
      %v1667 = vsub.f32 0.0, %v1577
      %v1668 = vsub.f32 0.0, %v1582
      %v1669 = vsub.f32 0.0, %v1585
      %v1670 = vsub.f32 0.0, %v1590
      %v1671 = vsub.f32 0.0, %v1593
      %v1672 = vsub.f32 0.0, %v1598
      %v1673 = vsub.f32 0.0, %v1601
      %v1674 = vsub.f32 0.0, %v1606
      %v1675 = vsub.f32 0.0, %v1609
      %v1676 = vmul.f32 %v1612, 1.442695
      %v1677 = vpow.pop %v1676
      %v1678 = vmul.f32 %v1613, 1.442695
      %v1679 = vpow.pop %v1678
      %v1680 = vmul.f32 %v1614, 1.442695
      %v1681 = vpow.pop %v1680
      %v1682 = vmul.f32 %v1615, 1.442695
      %v1683 = vpow.pop %v1682
      %v1684 = vmul.f32 %v1616, 1.442695
      %v1685 = vpow.pop %v1684
      %v1686 = vmul.f32 %v1617, 1.442695
      %v1687 = vpow.pop %v1686
      %v1688 = vmul.f32 %v1618, 1.442695
      %v1689 = vpow.pop %v1688
      %v1690 = vmul.f32 %v1619, 1.442695
      %v1691 = vpow.pop %v1690
      %v1692 = vmul.f32 %v1620, 1.442695
      %v1693 = vpow.pop %v1692
      %v1694 = vmul.f32 %v1621, 1.442695
      %v1695 = vpow.pop %v1694
      %v1696 = vmul.f32 %v1622, 1.442695
      %v1697 = vpow.pop %v1696
      %v1698 = vmul.f32 %v1623, 1.442695
      %v1699 = vpow.pop %v1698
      %v1700 = vmul.f32 %v1624, 1.442695
      %v1701 = vpow.pop %v1700
      %v1702 = vmul.f32 %v1625, 1.442695
      %v1703 = vpow.pop %v1702
      %v1704 = vmul.f32 %v1626, 1.442695
      %v1705 = vpow.pop %v1704
      %v1706 = vmul.f32 %v1627, 1.442695
      %v1707 = vpow.pop %v1706
      %v1708 = vmul.f32 %v1628, 1.442695
      %v1709 = vpow.pop %v1708
      %v1710 = vmul.f32 %v1629, 1.442695
      %v1711 = vpow.pop %v1710
      %v1712 = vmul.f32 %v1630, 1.442695
      %v1713 = vpow.pop %v1712
      %v1714 = vmul.f32 %v1631, 1.442695
      %v1715 = vpow.pop %v1714
      %v1716 = vmul.f32 %v1632, 1.442695
      %v1717 = vpow.pop %v1716
      %v1718 = vmul.f32 %v1633, 1.442695
      %v1719 = vpow.pop %v1718
      %v1720 = vmul.f32 %v1634, 1.442695
      %v1721 = vpow.pop %v1720
      %v1722 = vmul.f32 %v1635, 1.442695
      %v1723 = vpow.pop %v1722
      %v1724 = vmul.f32 %v1636, 1.442695
      %v1725 = vpow.pop %v1724
      %v1726 = vmul.f32 %v1637, 1.442695
      %v1727 = vpow.pop %v1726
      %v1728 = vmul.f32 %v1638, 1.442695
      %v1729 = vpow.pop %v1728
      %v1730 = vmul.f32 %v1639, 1.442695
      %v1731 = vpow.pop %v1730
      %v1732 = vmul.f32 %v1640, 1.442695
      %v1733 = vpow.pop %v1732
      %v1734 = vmul.f32 %v1641, 1.442695
      %v1735 = vpow.pop %v1734
      %v1736 = vmul.f32 %v1642, 1.442695
      %v1737 = vpow.pop %v1736
      %v1738 = vmul.f32 %v1643, 1.442695
      %v1739 = vpow.pop %v1738
      %v1740 = vmul.f32 %v1644, 1.442695
      %v1741 = vpow.pop %v1740
      %v1742 = vmul.f32 %v1645, 1.442695
      %v1743 = vpow.pop %v1742
      %v1744 = vmul.f32 %v1646, 1.442695
      %v1745 = vpow.pop %v1744
      %v1746 = vmul.f32 %v1647, 1.442695
      %v1747 = vpow.pop %v1746
      %v1748 = vmul.f32 %v1648, 1.442695
      %v1749 = vpow.pop %v1748
      %v1750 = vmul.f32 %v1649, 1.442695
      %v1751 = vpow.pop %v1750
      %v1752 = vmul.f32 %v1650, 1.442695
      %v1753 = vpow.pop %v1752
      %v1754 = vmul.f32 %v1651, 1.442695
      %v1755 = vpow.pop %v1754
      %v1756 = vmul.f32 %v1652, 1.442695
      %v1757 = vpow.pop %v1756
      %v1758 = vmul.f32 %v1653, 1.442695
      %v1759 = vpow.pop %v1758
      %v1760 = vmul.f32 %v1654, 1.442695
      %v1761 = vpow.pop %v1760
      %v1762 = vmul.f32 %v1655, 1.442695
      %v1763 = vpow.pop %v1762
      %v1764 = vmul.f32 %v1656, 1.442695
      %v1765 = vpow.pop %v1764
      %v1766 = vmul.f32 %v1657, 1.442695
      %v1767 = vpow.pop %v1766
      %v1768 = vmul.f32 %v1658, 1.442695
      %v1769 = vpow.pop %v1768
      %v1770 = vmul.f32 %v1659, 1.442695
      %v1771 = vpow.pop %v1770
      %v1772 = vmul.f32 %v1660, 1.442695
      %v1773 = vpow.pop %v1772
      %v1774 = vmul.f32 %v1661, 1.442695
      %v1775 = vpow.pop %v1774
      %v1776 = vmul.f32 %v1662, 1.442695
      %v1777 = vpow.pop %v1776
      %v1778 = vmul.f32 %v1663, 1.442695
      %v1779 = vpow.pop %v1778
      %v1780 = vmul.f32 %v1664, 1.442695
      %v1781 = vpow.pop %v1780
      %v1782 = vmul.f32 %v1665, 1.442695
      %v1783 = vpow.pop %v1782
      %v1784 = vmul.f32 %v1666, 1.442695
      %v1785 = vpow.pop %v1784
      %v1786 = vmul.f32 %v1667, 1.442695
      %v1787 = vpow.pop %v1786
      %v1788 = vmul.f32 %v1668, 1.442695
      %v1789 = vpow.pop %v1788
      %v1790 = vmul.f32 %v1669, 1.442695
      %v1791 = vpow.pop %v1790
      %v1792 = vmul.f32 %v1670, 1.442695
      %v1793 = vpow.pop %v1792
      %v1794 = vmul.f32 %v1671, 1.442695
      %v1795 = vpow.pop %v1794
      %v1796 = vmul.f32 %v1672, 1.442695
      %v1797 = vpow.pop %v1796
      %v1798 = vmul.f32 %v1673, 1.442695
      %v1799 = vpow.pop %v1798
      %v1800 = vmul.f32 %v1674, 1.442695
      %v1801 = vpow.pop %v1800
      %v1802 = vmul.f32 %v1675, 1.442695
      %v1803 = vpow.pop %v1802
      %v1804 = vadd.f32 %v1677, 1.0
      %v1805 = vadd.f32 %v1679, 1.0
      %v1806 = vadd.f32 %v1681, 1.0
      %v1807 = vadd.f32 %v1683, 1.0
      %v1808 = vadd.f32 %v1685, 1.0
      %v1809 = vadd.f32 %v1687, 1.0
      %v1810 = vadd.f32 %v1689, 1.0
      %v1811 = vadd.f32 %v1691, 1.0
      %v1812 = vadd.f32 %v1693, 1.0
      %v1813 = vadd.f32 %v1695, 1.0
      %v1814 = vadd.f32 %v1697, 1.0
      %v1815 = vadd.f32 %v1699, 1.0
      %v1816 = vadd.f32 %v1701, 1.0
      %v1817 = vadd.f32 %v1703, 1.0
      %v1818 = vadd.f32 %v1705, 1.0
      %v1819 = vadd.f32 %v1707, 1.0
      %v1820 = vadd.f32 %v1709, 1.0
      %v1821 = vadd.f32 %v1711, 1.0
      %v1822 = vadd.f32 %v1713, 1.0
      %v1823 = vadd.f32 %v1715, 1.0
      %v1824 = vadd.f32 %v1717, 1.0
      %v1825 = vadd.f32 %v1719, 1.0
      %v1826 = vadd.f32 %v1721, 1.0
      %v1827 = vadd.f32 %v1723, 1.0
      %v1828 = vadd.f32 %v1725, 1.0
      %v1829 = vadd.f32 %v1727, 1.0
      %v1830 = vadd.f32 %v1729, 1.0
      %v1831 = vadd.f32 %v1731, 1.0
      %v1832 = vadd.f32 %v1733, 1.0
      %v1833 = vadd.f32 %v1735, 1.0
      %v1834 = vadd.f32 %v1737, 1.0
      %v1835 = vadd.f32 %v1739, 1.0
      %v1836 = vadd.f32 %v1741, 1.0
      %v1837 = vadd.f32 %v1743, 1.0
      %v1838 = vadd.f32 %v1745, 1.0
      %v1839 = vadd.f32 %v1747, 1.0
      %v1840 = vadd.f32 %v1749, 1.0
      %v1841 = vadd.f32 %v1751, 1.0
      %v1842 = vadd.f32 %v1753, 1.0
      %v1843 = vadd.f32 %v1755, 1.0
      %v1844 = vadd.f32 %v1757, 1.0
      %v1845 = vadd.f32 %v1759, 1.0
      %v1846 = vadd.f32 %v1761, 1.0
      %v1847 = vadd.f32 %v1763, 1.0
      %v1848 = vadd.f32 %v1765, 1.0
      %v1849 = vadd.f32 %v1767, 1.0
      %v1850 = vadd.f32 %v1769, 1.0
      %v1851 = vadd.f32 %v1771, 1.0
      %v1852 = vadd.f32 %v1773, 1.0
      %v1853 = vadd.f32 %v1775, 1.0
      %v1854 = vadd.f32 %v1777, 1.0
      %v1855 = vadd.f32 %v1779, 1.0
      %v1856 = vadd.f32 %v1781, 1.0
      %v1857 = vadd.f32 %v1783, 1.0
      %v1858 = vadd.f32 %v1785, 1.0
      %v1859 = vadd.f32 %v1787, 1.0
      %v1860 = vadd.f32 %v1789, 1.0
      %v1861 = vadd.f32 %v1791, 1.0
      %v1862 = vadd.f32 %v1793, 1.0
      %v1863 = vadd.f32 %v1795, 1.0
      %v1864 = vadd.f32 %v1797, 1.0
      %v1865 = vadd.f32 %v1799, 1.0
      %v1866 = vadd.f32 %v1801, 1.0
      %v1867 = vadd.f32 %v1803, 1.0
      %v1868 = vrcp.pop %v1804
      %v1869 = vrcp.pop %v1805
      %v1870 = vrcp.pop %v1806
      %v1871 = vrcp.pop %v1807
      %v1872 = vrcp.pop %v1808
      %v1873 = vrcp.pop %v1809
      %v1874 = vrcp.pop %v1810
      %v1875 = vrcp.pop %v1811
      %v1876 = vrcp.pop %v1812
      %v1877 = vrcp.pop %v1813
      %v1878 = vrcp.pop %v1814
      %v1879 = vrcp.pop %v1815
      %v1880 = vrcp.pop %v1816
      %v1881 = vrcp.pop %v1817
      %v1882 = vrcp.pop %v1818
      %v1883 = vrcp.pop %v1819
      %v1884 = vrcp.pop %v1820
      %v1885 = vrcp.pop %v1821
      %v1886 = vrcp.pop %v1822
      %v1887 = vrcp.pop %v1823
      %v1888 = vrcp.pop %v1824
      %v1889 = vrcp.pop %v1825
      %v1890 = vrcp.pop %v1826
      %v1891 = vrcp.pop %v1827
      %v1892 = vrcp.pop %v1828
      %v1893 = vrcp.pop %v1829
      %v1894 = vrcp.pop %v1830
      %v1895 = vrcp.pop %v1831
      %v1896 = vrcp.pop %v1832
      %v1897 = vrcp.pop %v1833
      %v1898 = vrcp.pop %v1834
      %v1899 = vrcp.pop %v1835
      %v1900 = vrcp.pop %v1836
      %v1901 = vrcp.pop %v1837
      %v1902 = vrcp.pop %v1838
      %v1903 = vrcp.pop %v1839
      %v1904 = vrcp.pop %v1840
      %v1905 = vrcp.pop %v1841
      %v1906 = vrcp.pop %v1842
      %v1907 = vrcp.pop %v1843
      %v1908 = vrcp.pop %v1844
      %v1909 = vrcp.pop %v1845
      %v1910 = vrcp.pop %v1846
      %v1911 = vrcp.pop %v1847
      %v1912 = vrcp.pop %v1848
      %v1913 = vrcp.pop %v1849
      %v1914 = vrcp.pop %v1850
      %v1915 = vrcp.pop %v1851
      %v1916 = vrcp.pop %v1852
      %v1917 = vrcp.pop %v1853
      %v1918 = vrcp.pop %v1854
      %v1919 = vrcp.pop %v1855
      %v1920 = vrcp.pop %v1856
      %v1921 = vrcp.pop %v1857
      %v1922 = vrcp.pop %v1858
      %v1923 = vrcp.pop %v1859
      %v1924 = vrcp.pop %v1860
      %v1925 = vrcp.pop %v1861
      %v1926 = vrcp.pop %v1862
      %v1927 = vrcp.pop %v1863
      %v1928 = vrcp.pop %v1864
      %v1929 = vrcp.pop %v1865
      %v1930 = vrcp.pop %v1866
      %v1931 = vrcp.pop %v1867
      %1932 = vst [vmem:[%s175] sm:$0xff] %v1868
      %1933 = vst [vmem:[%s175 + $0x8] sm:$0xff] %v1869
      %1934 = vst [vmem:[%s175 + $0x10] sm:$0xff] %v1870
      %1935 = vst [vmem:[%s175 + $0x18] sm:$0xff] %v1871
      %1936 = vst [vmem:[%s175 + $0x20] sm:$0xff] %v1872
      %1937 = vst [vmem:[%s175 + $0x28] sm:$0xff] %v1873
      %1938 = vst [vmem:[%s175 + $0x30] sm:$0xff] %v1874
      %1939 = vst [vmem:[%s175 + $0x38] sm:$0xff] %v1875
      %1940 = vst [vmem:[%s175 + $0x40] sm:$0xff] %v1876
      %1941 = vst [vmem:[%s175 + $0x48] sm:$0xff] %v1877
      %1942 = vst [vmem:[%s175 + $0x50] sm:$0xff] %v1878
      %1943 = vst [vmem:[%s175 + $0x58] sm:$0xff] %v1879
      %1944 = vst [vmem:[%s175 + $0x60] sm:$0xff] %v1880
      %1945 = vst [vmem:[%s175 + $0x68] sm:$0xff] %v1881
      %1946 = vst [vmem:[%s175 + $0x70] sm:$0xff] %v1882
      %1947 = vst [vmem:[%s175 + $0x78] sm:$0xff] %v1883
      %1948 = vst [vmem:[%s175 + $0x80] sm:$0xff] %v1884
      %1949 = vst [vmem:[%s175 + $0x88] sm:$0xff] %v1885
      %1950 = vst [vmem:[%s175 + $0x90] sm:$0xff] %v1886
      %1951 = vst [vmem:[%s175 + $0x98] sm:$0xff] %v1887
      %1952 = vst [vmem:[%s175 + $0xa0] sm:$0xff] %v1888
      %1953 = vst [vmem:[%s175 + $0xa8] sm:$0xff] %v1889
      %1954 = vst [vmem:[%s175 + $0xb0] sm:$0xff] %v1890
      %1955 = vst [vmem:[%s175 + $0xb8] sm:$0xff] %v1891
      %1956 = vst [vmem:[%s175 + $0xc0] sm:$0xff] %v1892
      %1957 = vst [vmem:[%s175 + $0xc8] sm:$0xff] %v1893
      %1958 = vst [vmem:[%s175 + $0xd0] sm:$0xff] %v1894
      %1959 = vst [vmem:[%s175 + $0xd8] sm:$0xff] %v1895
      %1960 = vst [vmem:[%s175 + $0xe0] sm:$0xff] %v1896
      %1961 = vst [vmem:[%s175 + $0xe8] sm:$0xff] %v1897
      %1962 = vst [vmem:[%s175 + $0xf0] sm:$0xff] %v1898
      %1963 = vst [vmem:[%s175 + $0xf8] sm:$0xff] %v1899
      %1964 = vst [vmem:[%s175 + $0x100] sm:$0xff] %v1900
      %1965 = vst [vmem:[%s175 + $0x108] sm:$0xff] %v1901
      %1966 = vst [vmem:[%s175 + $0x110] sm:$0xff] %v1902
      %1967 = vst [vmem:[%s175 + $0x118] sm:$0xff] %v1903
      %1968 = vst [vmem:[%s175 + $0x120] sm:$0xff] %v1904
      %1969 = vst [vmem:[%s175 + $0x128] sm:$0xff] %v1905
      %1970 = vst [vmem:[%s175 + $0x130] sm:$0xff] %v1906
      %1971 = vst [vmem:[%s175 + $0x138] sm:$0xff] %v1907
      %1972 = vst [vmem:[%s175 + $0x140] sm:$0xff] %v1908
      %1973 = vst [vmem:[%s175 + $0x148] sm:$0xff] %v1909
      %1974 = vst [vmem:[%s175 + $0x150] sm:$0xff] %v1910
      %1975 = vst [vmem:[%s175 + $0x158] sm:$0xff] %v1911
      %1976 = vst [vmem:[%s175 + $0x160] sm:$0xff] %v1912
      %1977 = vst [vmem:[%s175 + $0x168] sm:$0xff] %v1913
      %1978 = vst [vmem:[%s175 + $0x170] sm:$0xff] %v1914
      %1979 = vst [vmem:[%s175 + $0x178] sm:$0xff] %v1915
      %1980 = vst [vmem:[%s175 + $0x180] sm:$0xff] %v1916
      %1981 = vst [vmem:[%s175 + $0x188] sm:$0xff] %v1917
      %1982 = vst [vmem:[%s175 + $0x190] sm:$0xff] %v1918
      %1983 = vst [vmem:[%s175 + $0x198] sm:$0xff] %v1919
      %1984 = vst [vmem:[%s175 + $0x1a0] sm:$0xff] %v1920
      %1985 = vst [vmem:[%s175 + $0x1a8] sm:$0xff] %v1921
      %1986 = vst [vmem:[%s175 + $0x1b0] sm:$0xff] %v1922
      %1987 = vst [vmem:[%s175 + $0x1b8] sm:$0xff] %v1923
      %1988 = vst [vmem:[%s175 + $0x1c0] sm:$0xff] %v1924
      %1989 = vst [vmem:[%s175 + $0x1c8] sm:$0xff] %v1925
      %1990 = vst [vmem:[%s175 + $0x1d0] sm:$0xff] %v1926
      %1991 = vst [vmem:[%s175 + $0x1d8] sm:$0xff] %v1927
      %1992 = vst [vmem:[%s175 + $0x1e0] sm:$0xff] %v1928
      %1993 = vst [vmem:[%s175 + $0x1e8] sm:$0xff] %v1929
      %1994 = vst [vmem:[%s175 + $0x1f0] sm:$0xff] %v1930
      %1995 = vst [vmem:[%s175 + $0x1f8] sm:$0xff] %v1931
      %s1996 = smul.u32 64, %s14
      %p1997 = scmp.lt.s32.totalorder %s1996, 255
      %s1998 = scalar_select %p1997, %s1996, 255
      %s1999 = smul.addr %s1998, 8
      %s2000 = scalar_lea.vmem %s3, %s1999
      // Predicated region
      $region33: #{model_forward.17} parent=31 // pred_check
        %p2001 = pneg %p100
      $region34: #{model_forward.17} parent=31 // pred_check_branch
        %2003 = sbr.rel (%p2001) target = $region36
      $region35: #{model_forward.17} parent=31 // pred_region
        %s2004 = smul.u32 64, %s14
      $region36: #{model_forward.17} parent=31 // pred_fallthru
        _
    $region32: #{model_forward.17} parent=5 // pred_fallthru
      _
    %p2005 = scmp.le.s32.totalorder 2, %s9
    // Predicated region
    $region37: #{model_forward.17} parent=5 // pred_check
      %p2006 = pneg %p2005
    $region38: #{model_forward.17} parent=5 // pred_check_branch
      %2008 = sbr.rel (%p2006) target = $region40
    $region39: #{model_forward.17} parent=5 // pred_region
      %s2009 = ssub.s32 %s9, 2
      // Predicated region
      $region41: #{model_forward.17} parent=39 // pred_check
        %p2010 = pneg %p106
      $region42: #{model_forward.17} parent=39 // pred_check_branch
        %2012 = sbr.rel (%p2010) target = $region44
      $region43: #{model_forward.17} parent=39 // pred_region
        %s2013 = smul.u32 64, %s15
        %p2014 = scmp.lt.s32.totalorder %s2013, 255
        %s2015 = scalar_select %p2014, %s2013, 255
        %s2016 = smul.addr %s2015, 8
        %s2017 = scalar_lea.vmem %s3, %s2016
      $region44: #{model_forward.17} parent=39 // pred_fallthru
        _
    $region40: #{model_forward.17} parent=5 // pred_fallthru
      _
  $region6: #{model_forward.17} parent=0 // loop_footer
    %s13 = sadd.s32 1, %s9
  $region7: #{model_forward.17} parent=0 // loop_footer_branch
    %8 = sbr.rel target = $region3
  $region8: #{model_forward.17} parent=0 // loop_exit
    _

</llo_original>
